<compile_context>
chip_gen: v6e
topology: v6e:2x2x1
jax: 0.10.0
libtpu: 0.0.40
codegen_flags: <defaults>
</compile_context>

<pallas_src>
import functools

import jax
import jax.numpy as jnp
import numpy as np
from jax import lax
from jax.experimental import pallas as pl
from jax.experimental.pallas import tpu as pltpu


# ----------------------------------------------------------------------------
# Fused block kernel
# ----------------------------------------------------------------------------
def _fused_block_kernel(*refs, HO, WO, Cin, Cout, TR, has_shortcut):
    """One TransposeResNetBasicBlock for one (batch, output-row-tile) grid cell.

    Layouts:
      * conv inputs (up2 / dil2) are channels-last (channels on the lane axis).
      * conv1 is a single im2col matmul producing (rows, Cout).
      * conv2 / shortcut use pre-transposed weights so their result is
        (Cout, rows): flattened spatial on the 128-lane axis -> the
        BN / residual / ReLU epilogue and the store are lane-dense.
    """
    if has_shortcut:
        (x_ref, d_ref, w1_ref, w2t_ref, wsct_ref, bncl_ref, bncf_ref,
         o_ref, ye_ref) = refs
    else:
        (x_ref, r_ref, w1_ref, w2t_ref, bncl_ref, bncf_ref,
         o_ref, ye_ref) = refs

    r0 = pl.multiple_of(pl.program_id(1) * TR, TR)
    bncl = bncl_ref[...]                       # (2, Cout)  rows = [s1, b1]
    bncf = bncf_ref[...]                       # (Cout, R)  cols = [s2, b2, (ssc, bsc)]

    # ---- conv1 (+BN+ReLU): one (rows, 9*Cin) x (9*Cin, Cout) MXU matmul -----
    us = x_ref[0, pl.ds(r0, TR + 4)].astype(jnp.float32)      # (TR+4, WO+4, Cin)
    p1 = jnp.concatenate(
        [us[ky:ky + TR + 2, kx:kx + WO + 2, :]
         for ky in range(3) for kx in range(3)], axis=-1)     # (TR+2, WO+2, 9Cin)
    p1 = p1.reshape((TR + 2) * (WO + 2), 9 * Cin).astype(jnp.bfloat16)
    acc1 = jnp.dot(p1, w1_ref[...], preferred_element_type=jnp.float32)
    y1 = jnp.maximum(acc1 * bncl[0:1, :] + bncl[1:2, :], 0.0)
    y1 = y1.reshape(TR + 2, WO + 2, Cout)

    # The halo rows/cols of this tile represent conv2's *zero padding*, not real
    # conv1 outputs -> force them to exactly zero.
    row = lax.broadcasted_iota(jnp.int32, (TR + 2, WO + 2, Cout), 0) + r0
    col = lax.broadcasted_iota(jnp.int32, (TR + 2, WO + 2, Cout), 1)
    keep = (row > 0) & (row < HO + 1) & (col > 0) & (col < WO + 1)
    ye_ref[...] = jnp.where(keep, y1, 0.0)     # conv1 activation stays in VMEM

    # ---- conv2 (+BN): im2col over the VMEM-resident activation --------------
    p2 = jnp.concatenate(
        [ye_ref[ky:ky + TR, kx:kx + WO, :]
         for ky in range(3) for kx in range(3)], axis=-1)     # (TR, WO, 9Cout)
    p2 = p2.reshape(TR * WO, 9 * Cout).astype(jnp.bfloat16)
    acc2 = lax.dot_general(w2t_ref[...], p2, (((1,), (1,)), ((), ())),
                           preferred_element_type=jnp.float32)  # (Cout, TR*WO)
    y2 = acc2 * bncf[:, 0:1] + bncf[:, 1:2]

    # ---- residual branch ------------------------------------------------------
    if has_shortcut:
        # ConvTranspose2d(k=4, s=2, p=1) + BN as one 16-tap im2col matmul over
        # the (pre-dilated, pre-padded) input.
        dsl = d_ref[0, pl.ds(r0, TR + 4)].astype(jnp.float32)   # (TR+4, WO+4, Cin)
        psc = jnp.concatenate(
            [dsl[ky:ky + TR, kx:kx + WO, :]
             for ky in range(4) for kx in range(4)], axis=-1)   # (TR, WO, 16Cin)
        psc = psc.reshape(TR * WO, 16 * Cin).astype(jnp.bfloat16)
        accsc = lax.dot_general(wsct_ref[...], psc, (((1,), (1,)), ((), ())),
                                preferred_element_type=jnp.float32)
        residual = accsc * bncf[:, 2:3] + bncf[:, 3:4]
    else:
        residual = r_ref[0].astype(jnp.float32)                 # (Cout, TR*WO), lane-dense

    o_ref[0] = jnp.maximum(y2 + residual, 0.0).astype(o_ref.dtype)


# ----------------------------------------------------------------------------
# Glue: weight rewrites, BN folding, block / layer wrappers
# ----------------------------------------------------------------------------
def _conv_weight_from_transpose(w_pt):
    # PyTorch ConvTranspose2d weight (Cin, Cout, KH, KW) -> equivalent
    # forward-conv weight (KH, KW, Cin, Cout), spatially flipped.
    return jnp.transpose(w_pt[:, :, ::-1, ::-1], (2, 3, 0, 1))


def _fold_bn(bn, eps=1e-5):
    scale = bn['gamma'] / jnp.sqrt(bn['var'] + eps)
    bias = bn['beta'] - bn['mean'] * scale
    return scale, bias


def _pick_row_tile(HO):
    for tr in (8, 16, 32):
        if HO % tr == 0:
            return tr
    return HO


def transpose_basic_block(x_cf, H, W, p):
    """One TransposeResNetBasicBlock.

    x_cf: (N, Cin, H*W) bf16 activation in channels-first, flattened-spatial
          layout (the kernel's native lane-dense output layout).
    Returns (y_cf, HO, WO) with y_cf: (N, Cout, HO*WO) bf16.
    """
    ups = p['upsampling']
    N, Cin, _ = x_cf.shape
    Cout = p['w1'].shape[1]
    HO, WO = ups * H, ups * W
    has_shortcut = Cin != Cout
    if has_shortcut:
        assert ups == 2
    else:
        assert ups == 1

    # Channels-last view for the conv input (XLA fuses this into the pad below).
    x = jnp.transpose(x_cf.reshape(N, Cin, H, W), (0, 2, 3, 1))   # (N,H,W,Cin) bf16

    # conv1 input: nearest-upsample (if any) + pad by 2 (1 for conv1 itself and
    # 1 more so the kernel can emit conv2's zero-padding halo rows/cols).
    u = x
    if ups == 2:
        u = jnp.repeat(jnp.repeat(x, 2, axis=1), 2, axis=2)
    up2 = jnp.pad(u, ((0, 0), (2, 2), (2, 2), (0, 0)))            # (N,HO+4,WO+4,Cin)

    # im2col-flattened weights, bf16 for the MXU.
    w1 = _conv_weight_from_transpose(p['w1'])                     # (3,3,Cin,Cout)
    w2 = _conv_weight_from_transpose(p['w2'])                     # (3,3,Cout,Cout)
    w1f = w1.reshape(9 * Cin, Cout).astype(jnp.bfloat16)
    w2t = w2.reshape(9 * Cout, Cout).T.astype(jnp.bfloat16)       # (Cout, 9*Cout)

    s1, b1 = _fold_bn(p['bn1'])
    s2, b2 = _fold_bn(p['bn2'])
    bn_cl = jnp.stack([s1, b1]).astype(jnp.float32)               # (2, Cout)

    TR = _pick_row_tile(HO)
    grid = (N, HO // TR)

    up2_spec = pl.BlockSpec((1, HO + 4, WO + 4, Cin), lambda n, t: (n, 0, 0, 0))
    w1_spec = pl.BlockSpec((9 * Cin, Cout), lambda n, t: (0, 0))
    w2_spec = pl.BlockSpec((Cout, 9 * Cout), lambda n, t: (0, 0))
    bncl_spec = pl.BlockSpec((2, Cout), lambda n, t: (0, 0))
    out_spec = pl.BlockSpec((1, Cout, TR * WO), lambda n, t: (n, 0, t))

    if has_shortcut:
        # ConvTranspose2d(k=4, s=2, p=1) rewritten as a stride-1 conv over the
        # zero-dilated input padded by k-1-p = 2 (+1 trailing zero row/col so
        # the kernel can use one uniform slice shape).
        dil = jnp.zeros((N, HO - 1, WO - 1, Cin), x.dtype).at[:, ::2, ::2, :].set(x)
        dil2 = jnp.pad(dil, ((0, 0), (2, 3), (2, 3), (0, 0)))     # (N,HO+4,WO+4,Cin)
        wsc = _conv_weight_from_transpose(p['w_sc'])              # (4,4,Cin,Cout)
        wsct = wsc.reshape(16 * Cin, Cout).T.astype(jnp.bfloat16)  # (Cout, 16*Cin)
        ssc, bsc = _fold_bn(p['bn_sc'])
        bn_cf = jnp.stack([s2, b2, ssc, bsc], axis=1).astype(jnp.float32)  # (Cout,4)

        in_specs = [up2_spec, up2_spec, w1_spec, w2_spec,
                    pl.BlockSpec((Cout, 16 * Cin), lambda n, t: (0, 0)),
                    bncl_spec,
                    pl.BlockSpec((Cout, 4), lambda n, t: (0, 0))]
        args = (up2, dil2, w1f, w2t, wsct, bn_cl, bn_cf)
    else:
        bn_cf = jnp.stack([s2, b2], axis=1).astype(jnp.float32)               # (Cout,2)
        res_spec = pl.BlockSpec((1, Cout, TR * WO), lambda n, t: (n, 0, t))
        in_specs = [up2_spec, res_spec, w1_spec, w2_spec, bncl_spec,
                    pl.BlockSpec((Cout, 2), lambda n, t: (0, 0))]
        args = (up2, x_cf, w1f, w2t, bn_cl, bn_cf)

    kernel = functools.partial(
        _fused_block_kernel, HO=HO, WO=WO, Cin=Cin, Cout=Cout, TR=TR,
        has_shortcut=has_shortcut)

    y_cf = pl.pallas_call(
        kernel,
        out_shape=jax.ShapeDtypeStruct((N, Cout, HO * WO), jnp.bfloat16),
        grid=grid,
        in_specs=in_specs,
        out_specs=out_spec,
        scratch_shapes=[pltpu.VMEM((TR + 2, WO + 2, Cout), jnp.float32)],
        compiler_params=pltpu.CompilerParams(
            dimension_semantics=("parallel", "parallel"),
            vmem_limit_bytes=32 * 1024 * 1024),
    )(*args)
    return y_cf, HO, WO


def transpose_resnet_layer(x_nchw, layer_params):
    """TransposeResNetLayer forward.  Input/output are NCHW (PyTorch layout)."""
    N, C, H, W = x_nchw.shape
    x_cf = x_nchw.astype(jnp.bfloat16).reshape(N, C, H * W)
    for p in layer_params:
        x_cf, H, W = transpose_basic_block(x_cf, H, W, p)
    C = x_cf.shape[1]
    return x_cf.reshape(N, C, H, W).astype(jnp.float32)


# ----------------------------------------------------------------------------
# Deterministic parameter init (shapes from the module's __init__)
# ----------------------------------------------------------------------------
def _init_bn(key, c):
    k1, k2, k3, k4 = jax.random.split(key, 4)
    return {
        'gamma': 1.0 + 0.1 * jax.random.normal(k1, (c,), jnp.float32),
        'beta': 0.1 * jax.random.normal(k2, (c,), jnp.float32),
        'mean': 0.1 * jax.random.normal(k3, (c,), jnp.float32),
        'var': 1.0 + 0.1 * jnp.abs(jax.random.normal(k4, (c,), jnp.float32)),
    }


def init_layer_params(key, in_channels, out_channels, n=1):
    upsampling = 2 if in_channels != out_channels else 1
    params = []
    cin = in_channels
    for i in range(n):
        ups = upsampling if i == 0 else 1
        key, *ks = jax.random.split(key, 8)
        p = {
            'upsampling': ups,
            # ConvTranspose2d weight layout: (Cin, Cout, KH, KW)
            'w1': 0.1 * jax.random.normal(ks[0], (cin, out_channels, 3, 3), jnp.float32),
            'w2': 0.1 * jax.random.normal(ks[1], (out_channels, out_channels, 3, 3), jnp.float32),
            'bn1': _init_bn(ks[2], out_channels),
            'bn2': _init_bn(ks[3], out_channels),
        }
        if cin != out_channels:
            p['w_sc'] = 0.1 * jax.random.normal(ks[4], (cin, out_channels, 4, 4), jnp.float32)
            p['bn_sc'] = _init_bn(ks[5], out_channels)
        params.append(p)
        cin = out_channels
    return params


# ----------------------------------------------------------------------------
# Pure-JAX reference (lax.conv_general_dilated), mirroring the bf16 casts
# ----------------------------------------------------------------------------
def _ref_conv(x_bf, w, *, lhs_dilation=(1, 1), pad):
    return lax.conv_general_dilated(
        x_bf.astype(jnp.bfloat16), w.astype(jnp.bfloat16),
        window_strides=(1, 1), padding=[(pad, pad), (pad, pad)],
        lhs_dilation=lhs_dilation,
        dimension_numbers=('NHWC', 'HWIO', 'NHWC'),
        preferred_element_type=jnp.float32)


def _ref_block(x_bf, p):
    ups = p['upsampling']
    Cin, Cout = x_bf.shape[-1], p['w1'].shape[1]
    if Cin != Cout:
        wsc = _conv_weight_from_transpose(p['w_sc'])
        ssc, bsc = _fold_bn(p['bn_sc'])
        residual = _ref_conv(x_bf, wsc, lhs_dilation=(ups, ups), pad=2) * ssc + bsc
    else:
        residual = x_bf.astype(jnp.float32)
    u = x_bf
    if ups == 2:
        u = jnp.repeat(jnp.repeat(u, 2, axis=1), 2, axis=2)
    w1 = _conv_weight_from_transpose(p['w1'])
    w2 = _conv_weight_from_transpose(p['w2'])
    s1, b1 = _fold_bn(p['bn1'])
    s2, b2 = _fold_bn(p['bn2'])
    y = jnp.maximum(_ref_conv(u, w1, pad=1) * s1 + b1, 0.0)
    y = _ref_conv(y.astype(jnp.bfloat16), w2, pad=1) * s2 + b2
    return jnp.maximum(y + residual, 0.0).astype(jnp.bfloat16)


def _ref_layer(x_nchw, layer_params):
    x = jnp.transpose(x_nchw, (0, 2, 3, 1)).astype(jnp.bfloat16)
    for p in layer_params:
        x = _ref_block(x, p)
    return jnp.transpose(x, (0, 3, 1, 2)).astype(jnp.float32)


if __name__ == "__main__":
    key = jax.random.PRNGKey(0)
    kx, kp = jax.random.split(key)

    N, Cin, Cout, H, W = 2, 4, 8, 16, 16
    x = jax.random.normal(kx, (N, Cin, H, W), jnp.float32)        # NCHW input
    # two blocks: first upsamples 2x with the convT4x4 shortcut, second is the
    # identity-residual variant -> both kernel code paths are exercised.
    params = init_layer_params(kp, Cin, Cout, n=2)

    out = jax.block_until_ready(transpose_resnet_layer(x, params))
    assert out.shape == (N, Cout, 2 * H, 2 * W), out.shape

    ref = _ref_layer(x, params)
    np.testing.assert_allclose(np.asarray(out), np.asarray(ref),
                               rtol=2e-2, atol=2e-2)

    print("KERNEL_OK")
</pallas_src>

<mosaic_0001>
module attributes {stable_mosaic.version = 11 : i64} {
  func.func @_fused_block_kernel(%arg0: i32, %arg1: i32, %arg2: memref<1x36x36x4xbf16, #tpu.memory_space<vmem>>, %arg3: memref<1x36x36x4xbf16, #tpu.memory_space<vmem>>, %arg4: memref<36x8xbf16, #tpu.memory_space<vmem>>, %arg5: memref<8x72xbf16, #tpu.memory_space<vmem>>, %arg6: memref<8x64xbf16, #tpu.memory_space<vmem>>, %arg7: memref<2x8xf32, #tpu.memory_space<vmem>>, %arg8: memref<8x4xf32, #tpu.memory_space<vmem>>, %arg9: memref<1x8x256xbf16, #tpu.memory_space<vmem>>, %arg10: memref<10x34x8xf32, #tpu.memory_space<vmem>>) attributes {dimension_semantics = [#tpu.dimension_semantics<parallel>, #tpu.dimension_semantics<parallel>], iteration_bounds = array<i64: 2, 4>, scalar_prefetch = 0 : i64, scratch_operands = 1 : i64, tpu.core_type = #tpu.core_type<tc>, window_params = [{transform_indices = @transform_0, window_bounds = array<i64: 1, 36, 36, 4>}, {transform_indices = @transform_1, window_bounds = array<i64: 1, 36, 36, 4>}, {pipeline_mode = #tpu.pipeline_mode<synchronous>, transform_indices = @transform_2, window_bounds = array<i64: 36, 8>}, {pipeline_mode = #tpu.pipeline_mode<synchronous>, transform_indices = @transform_3, window_bounds = array<i64: 8, 72>}, {pipeline_mode = #tpu.pipeline_mode<synchronous>, transform_indices = @transform_4, window_bounds = array<i64: 8, 64>}, {pipeline_mode = #tpu.pipeline_mode<synchronous>, transform_indices = @transform_5, window_bounds = array<i64: 2, 8>}, {pipeline_mode = #tpu.pipeline_mode<synchronous>, transform_indices = @transform_6, window_bounds = array<i64: 8, 4>}, {transform_indices = @transform_7, window_bounds = array<i64: 1, 8, 256>}]} {
    %c8_i32 = arith.constant 8 : i32
    %0 = arith.muli %arg1, %c8_i32 : i32
    %1 = tpu.assume_multiple %0, 8 : i32
    %c0 = arith.constant 0 : index
    %c0_0 = arith.constant 0 : index
    %2 = vector.load %arg7[%c0, %c0_0] : memref<2x8xf32, #tpu.memory_space<vmem>>, vector<2x8xf32>
    %c0_1 = arith.constant 0 : index
    %c0_2 = arith.constant 0 : index
    %3 = vector.load %arg8[%c0_1, %c0_2] : memref<8x4xf32, #tpu.memory_space<vmem>>, vector<8x4xf32>
    %c0_3 = arith.constant 0 : index
    %4 = arith.index_cast %1 : i32 to index
    %c0_4 = arith.constant 0 : index
    %c0_5 = arith.constant 0 : index
    %5 = vector.load %arg2[%c0_3, %4, %c0_4, %c0_5] : memref<1x36x36x4xbf16, #tpu.memory_space<vmem>>, vector<1x12x36x4xbf16>
    %6 = vector.shape_cast %5 : vector<1x12x36x4xbf16> to vector<12x36x4xbf16>
    %7 = arith.extf %6 : vector<12x36x4xbf16> to vector<12x36x4xf32>
    %8 = vector.extract_strided_slice %7 {offsets = [0, 0, 0], sizes = [10, 34, 4], strides = [1, 1, 1]} : vector<12x36x4xf32> to vector<10x34x4xf32>
    %9 = vector.extract_strided_slice %7 {offsets = [0, 1, 0], sizes = [10, 34, 4], strides = [1, 1, 1]} : vector<12x36x4xf32> to vector<10x34x4xf32>
    %10 = vector.extract_strided_slice %7 {offsets = [0, 2, 0], sizes = [10, 34, 4], strides = [1, 1, 1]} : vector<12x36x4xf32> to vector<10x34x4xf32>
    %11 = vector.extract_strided_slice %7 {offsets = [1, 0, 0], sizes = [10, 34, 4], strides = [1, 1, 1]} : vector<12x36x4xf32> to vector<10x34x4xf32>
    %12 = vector.extract_strided_slice %7 {offsets = [1, 1, 0], sizes = [10, 34, 4], strides = [1, 1, 1]} : vector<12x36x4xf32> to vector<10x34x4xf32>
    %13 = vector.extract_strided_slice %7 {offsets = [1, 2, 0], sizes = [10, 34, 4], strides = [1, 1, 1]} : vector<12x36x4xf32> to vector<10x34x4xf32>
    %14 = vector.extract_strided_slice %7 {offsets = [2, 0, 0], sizes = [10, 34, 4], strides = [1, 1, 1]} : vector<12x36x4xf32> to vector<10x34x4xf32>
    %15 = vector.extract_strided_slice %7 {offsets = [2, 1, 0], sizes = [10, 34, 4], strides = [1, 1, 1]} : vector<12x36x4xf32> to vector<10x34x4xf32>
    %16 = vector.extract_strided_slice %7 {offsets = [2, 2, 0], sizes = [10, 34, 4], strides = [1, 1, 1]} : vector<12x36x4xf32> to vector<10x34x4xf32>
    %17 = tpu.concatenate %8, %9, %10, %11, %12, %13, %14, %15, %16 in 2 : vector<10x34x4xf32>, vector<10x34x4xf32>, vector<10x34x4xf32>, vector<10x34x4xf32>, vector<10x34x4xf32>, vector<10x34x4xf32>, vector<10x34x4xf32>, vector<10x34x4xf32>, vector<10x34x4xf32> -> vector<10x34x36xf32>
    %18 = vector.shape_cast %17 : vector<10x34x36xf32> to vector<340x36xf32>
    %19 = arith.truncf %18 : vector<340x36xf32> to vector<340x36xbf16>
    %c0_6 = arith.constant 0 : index
    %c0_7 = arith.constant 0 : index
    %20 = vector.load %arg4[%c0_6, %c0_7] : memref<36x8xbf16, #tpu.memory_space<vmem>>, vector<36x8xbf16>
    %cst = arith.constant dense<0.000000e+00> : vector<340x8xf32>
    %21 = tpu.matmul %19, %20, %cst {dimension_numbers = #tpu.dot_dimension_numbers<[1], [0], [0], [1], [0, 0, 1, 1], [], []>} : vector<340x36xbf16>, vector<36x8xbf16>, vector<340x8xf32> -> vector<340x8xf32>
    %22 = vector.extract_strided_slice %2 {offsets = [0, 0], sizes = [1, 8], strides = [1, 1]} : vector<2x8xf32> to vector<1x8xf32>
    %23 = vector.broadcast %22 : vector<1x8xf32> to vector<340x8xf32>
    %24 = arith.mulf %21, %23 : vector<340x8xf32>
    %25 = vector.extract_strided_slice %2 {offsets = [1, 0], sizes = [1, 8], strides = [1, 1]} : vector<2x8xf32> to vector<1x8xf32>
    %26 = vector.broadcast %25 : vector<1x8xf32> to vector<340x8xf32>
    %27 = arith.addf %24, %26 : vector<340x8xf32>
    %cst_8 = arith.constant 0.000000e+00 : f32
    %28 = vector.broadcast %cst_8 : f32 to vector<340x8xf32>
    %29 = arith.maximumf %27, %28 : vector<340x8xf32>
    %30 = vector.shape_cast %29 : vector<340x8xf32> to vector<10x34x8xf32>
    %31 = tpu.iota {dimensions = array<i32: 0>} : vector<10x34x8xi32>
    %32 = vector.broadcast %1 : i32 to vector<10x34x8xi32>
    %33 = arith.addi %31, %32 : vector<10x34x8xi32>
    %34 = tpu.iota {dimensions = array<i32: 1>} : vector<10x34x8xi32>
    %c0_i32 = arith.constant 0 : i32
    %35 = vector.broadcast %c0_i32 : i32 to vector<10x34x8xi32>
    %36 = arith.cmpi sgt, %33, %35 : vector<10x34x8xi32>
    %c33_i32 = arith.constant 33 : i32
    %37 = vector.broadcast %c33_i32 : i32 to vector<10x34x8xi32>
    %38 = arith.cmpi slt, %33, %37 : vector<10x34x8xi32>
    %39 = arith.andi %36, %38 : vector<10x34x8xi1>
    %c0_i32_9 = arith.constant 0 : i32
    %40 = vector.broadcast %c0_i32_9 : i32 to vector<10x34x8xi32>
    %41 = arith.cmpi sgt, %34, %40 : vector<10x34x8xi32>
    %42 = arith.andi %39, %41 : vector<10x34x8xi1>
    %c33_i32_10 = arith.constant 33 : i32
    %43 = vector.broadcast %c33_i32_10 : i32 to vector<10x34x8xi32>
    %44 = arith.cmpi slt, %34, %43 : vector<10x34x8xi32>
    %45 = arith.andi %42, %44 : vector<10x34x8xi1>
    %cst_11 = arith.constant 0.000000e+00 : f32
    %46 = vector.broadcast %cst_11 : f32 to vector<10x34x8xf32>
    %47 = arith.select %45, %30, %46 : vector<10x34x8xi1>, vector<10x34x8xf32>
    %c0_12 = arith.constant 0 : index
    %c0_13 = arith.constant 0 : index
    %c0_14 = arith.constant 0 : index
    %48 = vector.load %arg10[%c0_12, %c0_13, %c0_14] : memref<10x34x8xf32, #tpu.memory_space<vmem>>, vector<10x34x8xf32>
    tpu.vector_store %arg10[%c0_12, %c0_13, %c0_14], %47 {strides = array<i32>} : memref<10x34x8xf32, #tpu.memory_space<vmem>>, vector<10x34x8xf32>,
    %c0_15 = arith.constant 0 : index
    %c0_16 = arith.constant 0 : index
    %c0_17 = arith.constant 0 : index
    %49 = vector.load %arg10[%c0_15, %c0_16, %c0_17] : memref<10x34x8xf32, #tpu.memory_space<vmem>>, vector<8x32x8xf32>
    %c0_18 = arith.constant 0 : index
    %c1 = arith.constant 1 : index
    %c0_19 = arith.constant 0 : index
    %50 = vector.load %arg10[%c0_18, %c1, %c0_19] : memref<10x34x8xf32, #tpu.memory_space<vmem>>, vector<8x32x8xf32>
    %c0_20 = arith.constant 0 : index
    %c2 = arith.constant 2 : index
    %c0_21 = arith.constant 0 : index
    %51 = vector.load %arg10[%c0_20, %c2, %c0_21] : memref<10x34x8xf32, #tpu.memory_space<vmem>>, vector<8x32x8xf32>
    %c1_22 = arith.constant 1 : index
    %c0_23 = arith.constant 0 : index
    %c0_24 = arith.constant 0 : index
    %52 = vector.load %arg10[%c1_22, %c0_23, %c0_24] : memref<10x34x8xf32, #tpu.memory_space<vmem>>, vector<8x32x8xf32>
    %c1_25 = arith.constant 1 : index
    %c1_26 = arith.constant 1 : index
    %c0_27 = arith.constant 0 : index
    %53 = vector.load %arg10[%c1_25, %c1_26, %c0_27] : memref<10x34x8xf32, #tpu.memory_space<vmem>>, vector<8x32x8xf32>
    %c1_28 = arith.constant 1 : index
    %c2_29 = arith.constant 2 : index
    %c0_30 = arith.constant 0 : index
    %54 = vector.load %arg10[%c1_28, %c2_29, %c0_30] : memref<10x34x8xf32, #tpu.memory_space<vmem>>, vector<8x32x8xf32>
    %c2_31 = arith.constant 2 : index
    %c0_32 = arith.constant 0 : index
    %c0_33 = arith.constant 0 : index
    %55 = vector.load %arg10[%c2_31, %c0_32, %c0_33] : memref<10x34x8xf32, #tpu.memory_space<vmem>>, vector<8x32x8xf32>
    %c2_34 = arith.constant 2 : index
    %c1_35 = arith.constant 1 : index
    %c0_36 = arith.constant 0 : index
    %56 = vector.load %arg10[%c2_34, %c1_35, %c0_36] : memref<10x34x8xf32, #tpu.memory_space<vmem>>, vector<8x32x8xf32>
    %c2_37 = arith.constant 2 : index
    %c2_38 = arith.constant 2 : index
    %c0_39 = arith.constant 0 : index
    %57 = vector.load %arg10[%c2_37, %c2_38, %c0_39] : memref<10x34x8xf32, #tpu.memory_space<vmem>>, vector<8x32x8xf32>
    %58 = tpu.concatenate %49, %50, %51, %52, %53, %54, %55, %56, %57 in 2 : vector<8x32x8xf32>, vector<8x32x8xf32>, vector<8x32x8xf32>, vector<8x32x8xf32>, vector<8x32x8xf32>, vector<8x32x8xf32>, vector<8x32x8xf32>, vector<8x32x8xf32>, vector<8x32x8xf32> -> vector<8x32x72xf32>
    %59 = vector.shape_cast %58 : vector<8x32x72xf32> to vector<256x72xf32>
    %60 = arith.truncf %59 : vector<256x72xf32> to vector<256x72xbf16>
    %c0_40 = arith.constant 0 : index
    %c0_41 = arith.constant 0 : index
    %61 = vector.load %arg5[%c0_40, %c0_41] : memref<8x72xbf16, #tpu.memory_space<vmem>>, vector<8x72xbf16>
    %cst_42 = arith.constant dense<0.000000e+00> : vector<8x256xf32>
    %62 = tpu.matmul %61, %60, %cst_42 {dimension_numbers = #tpu.dot_dimension_numbers<[1], [1], [0], [0], [0, 0, 1, 0], [], []>} : vector<8x72xbf16>, vector<256x72xbf16>, vector<8x256xf32> -> vector<8x256xf32>
    %63 = vector.extract_strided_slice %3 {offsets = [0, 0], sizes = [8, 1], strides = [1, 1]} : vector<8x4xf32> to vector<8x1xf32>
    %64 = vector.broadcast %63 : vector<8x1xf32> to vector<8x256xf32>
    %65 = arith.mulf %62, %64 : vector<8x256xf32>
    %66 = vector.extract_strided_slice %3 {offsets = [0, 1], sizes = [8, 1], strides = [1, 1]} : vector<8x4xf32> to vector<8x1xf32>
    %67 = vector.broadcast %66 : vector<8x1xf32> to vector<8x256xf32>
    %68 = arith.addf %65, %67 : vector<8x256xf32>
    %c0_43 = arith.constant 0 : index
    %69 = arith.index_cast %1 : i32 to index
    %c0_44 = arith.constant 0 : index
    %c0_45 = arith.constant 0 : index
    %70 = vector.load %arg3[%c0_43, %69, %c0_44, %c0_45] : memref<1x36x36x4xbf16, #tpu.memory_space<vmem>>, vector<1x12x36x4xbf16>
    %71 = vector.shape_cast %70 : vector<1x12x36x4xbf16> to vector<12x36x4xbf16>
    %72 = arith.extf %71 : vector<12x36x4xbf16> to vector<12x36x4xf32>
    %73 = vector.extract_strided_slice %72 {offsets = [0, 0, 0], sizes = [8, 32, 4], strides = [1, 1, 1]} : vector<12x36x4xf32> to vector<8x32x4xf32>
    %74 = vector.extract_strided_slice %72 {offsets = [0, 1, 0], sizes = [8, 32, 4], strides = [1, 1, 1]} : vector<12x36x4xf32> to vector<8x32x4xf32>
    %75 = vector.extract_strided_slice %72 {offsets = [0, 2, 0], sizes = [8, 32, 4], strides = [1, 1, 1]} : vector<12x36x4xf32> to vector<8x32x4xf32>
    %76 = vector.extract_strided_slice %72 {offsets = [0, 3, 0], sizes = [8, 32, 4], strides = [1, 1, 1]} : vector<12x36x4xf32> to vector<8x32x4xf32>
    %77 = vector.extract_strided_slice %72 {offsets = [1, 0, 0], sizes = [8, 32, 4], strides = [1, 1, 1]} : vector<12x36x4xf32> to vector<8x32x4xf32>
    %78 = vector.extract_strided_slice %72 {offsets = [1, 1, 0], sizes = [8, 32, 4], strides = [1, 1, 1]} : vector<12x36x4xf32> to vector<8x32x4xf32>
    %79 = vector.extract_strided_slice %72 {offsets = [1, 2, 0], sizes = [8, 32, 4], strides = [1, 1, 1]} : vector<12x36x4xf32> to vector<8x32x4xf32>
    %80 = vector.extract_strided_slice %72 {offsets = [1, 3, 0], sizes = [8, 32, 4], strides = [1, 1, 1]} : vector<12x36x4xf32> to vector<8x32x4xf32>
    %81 = vector.extract_strided_slice %72 {offsets = [2, 0, 0], sizes = [8, 32, 4], strides = [1, 1, 1]} : vector<12x36x4xf32> to vector<8x32x4xf32>
    %82 = vector.extract_strided_slice %72 {offsets = [2, 1, 0], sizes = [8, 32, 4], strides = [1, 1, 1]} : vector<12x36x4xf32> to vector<8x32x4xf32>
    %83 = vector.extract_strided_slice %72 {offsets = [2, 2, 0], sizes = [8, 32, 4], strides = [1, 1, 1]} : vector<12x36x4xf32> to vector<8x32x4xf32>
    %84 = vector.extract_strided_slice %72 {offsets = [2, 3, 0], sizes = [8, 32, 4], strides = [1, 1, 1]} : vector<12x36x4xf32> to vector<8x32x4xf32>
    %85 = vector.extract_strided_slice %72 {offsets = [3, 0, 0], sizes = [8, 32, 4], strides = [1, 1, 1]} : vector<12x36x4xf32> to vector<8x32x4xf32>
    %86 = vector.extract_strided_slice %72 {offsets = [3, 1, 0], sizes = [8, 32, 4], strides = [1, 1, 1]} : vector<12x36x4xf32> to vector<8x32x4xf32>
    %87 = vector.extract_strided_slice %72 {offsets = [3, 2, 0], sizes = [8, 32, 4], strides = [1, 1, 1]} : vector<12x36x4xf32> to vector<8x32x4xf32>
    %88 = vector.extract_strided_slice %72 {offsets = [3, 3, 0], sizes = [8, 32, 4], strides = [1, 1, 1]} : vector<12x36x4xf32> to vector<8x32x4xf32>
    %89 = tpu.concatenate %73, %74, %75, %76, %77, %78, %79, %80, %81, %82, %83, %84, %85, %86, %87, %88 in 2 : vector<8x32x4xf32>, vector<8x32x4xf32>, vector<8x32x4xf32>, vector<8x32x4xf32>, vector<8x32x4xf32>, vector<8x32x4xf32>, vector<8x32x4xf32>, vector<8x32x4xf32>, vector<8x32x4xf32>, vector<8x32x4xf32>, vector<8x32x4xf32>, vector<8x32x4xf32>, vector<8x32x4xf32>, vector<8x32x4xf32>, vector<8x32x4xf32>, vector<8x32x4xf32> -> vector<8x32x64xf32>
    %90 = vector.shape_cast %89 : vector<8x32x64xf32> to vector<256x64xf32>
    %91 = arith.truncf %90 : vector<256x64xf32> to vector<256x64xbf16>
    %c0_46 = arith.constant 0 : index
    %c0_47 = arith.constant 0 : index
    %92 = vector.load %arg6[%c0_46, %c0_47] : memref<8x64xbf16, #tpu.memory_space<vmem>>, vector<8x64xbf16>
    %cst_48 = arith.constant dense<0.000000e+00> : vector<8x256xf32>
    %93 = tpu.matmul %92, %91, %cst_48 {dimension_numbers = #tpu.dot_dimension_numbers<[1], [1], [0], [0], [0, 0, 1, 0], [], []>} : vector<8x64xbf16>, vector<256x64xbf16>, vector<8x256xf32> -> vector<8x256xf32>
    %94 = vector.extract_strided_slice %3 {offsets = [0, 2], sizes = [8, 1], strides = [1, 1]} : vector<8x4xf32> to vector<8x1xf32>
    %95 = vector.broadcast %94 : vector<8x1xf32> to vector<8x256xf32>
    %96 = arith.mulf %93, %95 : vector<8x256xf32>
    %97 = vector.extract_strided_slice %3 {offsets = [0, 3], sizes = [8, 1], strides = [1, 1]} : vector<8x4xf32> to vector<8x1xf32>
    %98 = vector.broadcast %97 : vector<8x1xf32> to vector<8x256xf32>
    %99 = arith.addf %96, %98 : vector<8x256xf32>
    %100 = arith.addf %68, %99 : vector<8x256xf32>
    %cst_49 = arith.constant 0.000000e+00 : f32
    %101 = vector.broadcast %cst_49 : f32 to vector<8x256xf32>
    %102 = arith.maximumf %100, %101 : vector<8x256xf32>
    %103 = arith.truncf %102 : vector<8x256xf32> to vector<8x256xbf16>
    %c0_50 = arith.constant 0 : index
    %c0_51 = arith.constant 0 : index
    %c0_52 = arith.constant 0 : index
    %104 = vector.load %arg9[%c0_50, %c0_51, %c0_52] : memref<1x8x256xbf16, #tpu.memory_space<vmem>>, vector<1x8x256xbf16>
    %105 = vector.shape_cast %104 : vector<1x8x256xbf16> to vector<8x256xbf16>
    %106 = vector.shape_cast %103 : vector<8x256xbf16> to vector<1x8x256xbf16>
    tpu.vector_store %arg9[%c0_50, %c0_51, %c0_52], %106 {strides = array<i32>} : memref<1x8x256xbf16, #tpu.memory_space<vmem>>, vector<1x8x256xbf16>,
    return
  }
  func.func @transform_0(%arg0: i32, %arg1: i32) -> (i32, i32, i32, i32) {
    %c0_i32 = arith.constant 0 : i32
    %c0_i32_0 = arith.constant 0 : i32
    %c0_i32_1 = arith.constant 0 : i32
    %c0_i32_2 = arith.constant 0 : i32
    return %arg0, %c0_i32, %c0_i32_0, %c0_i32_1 : i32, i32, i32, i32
  }
  func.func @transform_1(%arg0: i32, %arg1: i32) -> (i32, i32, i32, i32) {
    %c0_i32 = arith.constant 0 : i32
    %c0_i32_0 = arith.constant 0 : i32
    %c0_i32_1 = arith.constant 0 : i32
    %c0_i32_2 = arith.constant 0 : i32
    return %arg0, %c0_i32, %c0_i32_0, %c0_i32_1 : i32, i32, i32, i32
  }
  func.func @transform_2(%arg0: i32, %arg1: i32) -> (i32, i32) {
    %c0_i32 = arith.constant 0 : i32
    %c0_i32_0 = arith.constant 0 : i32
    %c0_i32_1 = arith.constant 0 : i32
    return %c0_i32, %c0_i32_0 : i32, i32
  }
  func.func @transform_3(%arg0: i32, %arg1: i32) -> (i32, i32) {
    %c0_i32 = arith.constant 0 : i32
    %c0_i32_0 = arith.constant 0 : i32
    %c0_i32_1 = arith.constant 0 : i32
    return %c0_i32, %c0_i32_0 : i32, i32
  }
  func.func @transform_4(%arg0: i32, %arg1: i32) -> (i32, i32) {
    %c0_i32 = arith.constant 0 : i32
    %c0_i32_0 = arith.constant 0 : i32
    %c0_i32_1 = arith.constant 0 : i32
    return %c0_i32, %c0_i32_0 : i32, i32
  }
  func.func @transform_5(%arg0: i32, %arg1: i32) -> (i32, i32) {
    %c0_i32 = arith.constant 0 : i32
    %c0_i32_0 = arith.constant 0 : i32
    %c0_i32_1 = arith.constant 0 : i32
    return %c0_i32, %c0_i32_0 : i32, i32
  }
  func.func @transform_6(%arg0: i32, %arg1: i32) -> (i32, i32) {
    %c0_i32 = arith.constant 0 : i32
    %c0_i32_0 = arith.constant 0 : i32
    %c0_i32_1 = arith.constant 0 : i32
    return %c0_i32, %c0_i32_0 : i32, i32
  }
  func.func @transform_7(%arg0: i32, %arg1: i32) -> (i32, i32, i32) {
    %c0_i32 = arith.constant 0 : i32
    %c0_i32_0 = arith.constant 0 : i32
    return %arg0, %c0_i32, %arg1 : i32, i32, i32
  }
}

</mosaic_0001>

<llo_original>
// kernel: tpu_custom_call.1
$region0: #{tpu_custom_call.1}
  #allocation0 [shape = 'u32[]', space=smem, size = 0x4, offset = 0x4, fixed_abs, tag = 'smem constant byte address 0x4 - core index']
  #allocation1 [shape = 'u32[144,128]{1,0:T(1,128)}', space=vmem, size = 0x12000, scoped, tag = 'internal scratch']
  #allocation2 [shape = 'f32[10,34,8]{2,1,0:T(8,128)}', space=vmem, size = 0x32000, scoped, tag = 'scratch operand']
  %s0 = inlined_call_operand.vmem [shape: bf16[2,36,36,4], index: 0, kind: input, shape index: {}]
  %s1 = inlined_call_operand.vmem [shape: bf16[2,36,36,4], index: 1, kind: input, shape index: {}]
  %s2 = inlined_call_operand.vmem [shape: bf16[36,8], index: 2, kind: input, shape index: {}]
  %s3 = inlined_call_operand.vmem [shape: bf16[8,72], index: 3, kind: input, shape index: {}]
  %s4 = inlined_call_operand.vmem [shape: bf16[8,64], index: 4, kind: input, shape index: {}]
  %s5 = inlined_call_operand.vmem [shape: f32[2,8], index: 5, kind: input, shape index: {}]
  %s6 = inlined_call_operand.vmem [shape: f32[8,4], index: 6, kind: input, shape index: {}]
  %s7 = inlined_call_operand.hbm [shape: bf16[2,8,1024], index: 7, kind: output, shape index: {}]
  %s8 = sld [smem:[#allocation0]]
  $region61: #{tpu_custom_call.1} parent=0
    _
  %s10 = ssub.s32 1, %s8
  %s11 = scalar_select 0, %s10, %s8
  $region1: #{tpu_custom_call.1} parent=0
    #allocation3 [shape = 'u8[8192]{0}', space=vmem, size = 0x2000, scoped, tag = 'output window, operand 0']
    #allocation4 [shape = 's32[2]{0}', space=sflag, size = 0x8, scoped, tag = 'scoped memory for tpu_custom_call.1']
    %12 = vsyncpa [#allocation4], 0
    %s13 = scalar_lea.sflag [#allocation4], 1
    %14 = vsyncpa %s13, 0
    loop: start=0, step=1, limit=10
    $region2: #{tpu_custom_call.1} parent=1 // loop_pre_header
      _
    $region3: #{tpu_custom_call.1} parent=1 // loop_header
      %s16 = sphi 0, %s20
      %p17 = scmp.ge.s32.totalorder %s16, 10
      %s23 = sphi 0, %s35
      %s24 = sphi 0, %s31
      %s25 = sphi 0, %s23
      %s26 = sphi 0, %s24
      %s27 = sphi 0, %s25
      %s28 = sphi 0, %s26
      %s38 = sphi 0, %s40
      %s41 = sphi 0, %s38
      %s42 = sphi 0, %s41
      %s58 = sphi 0, %s42
      %s64 = sphi 0, %s66
      %s67 = sphi 0, %s64
      %s68 = sphi 0, %s67
      %s84 = sphi 0, %s68
      %s88 = sphi 0, %s88
      %s90 = sphi 0, %s88
      %s91 = sphi 0, %s90
      %s105 = sphi 0, %s91
      %s109 = sphi 0, %s109
      %s111 = sphi 0, %s109
      %s112 = sphi 0, %s111
      %s126 = sphi 0, %s112
      %s130 = sphi 0, %s130
      %s132 = sphi 0, %s130
      %s133 = sphi 0, %s132
      %s147 = sphi 0, %s133
      %s151 = sphi 0, %s151
      %s153 = sphi 0, %s151
      %s154 = sphi 0, %s153
      %s168 = sphi 0, %s154
      %s172 = sphi 0, %s172
      %s174 = sphi 0, %s172
      %s175 = sphi 0, %s174
      %s189 = sphi 0, %s175
      %s197 = sphi 0, %s199
      %s200 = sphi 0, %s197
      %s201 = sphi 0, %s200
      %s217 = sphi 0, %s201
    $region4: #{tpu_custom_call.1} parent=1 // loop_header_branch
      %19 = sbr.rel (%p17) target = $region8
    $region5: #{tpu_custom_call.1} parent=1 // loop_body
      %s21 = ssub.s32 %s16, 1
      %s22 = ssub.s32 %s16, 2
      %s29 = sadd.s32 1, %s24
      %p30 = scmp.ge.s32.totalorder %s29, 4
      %s31 = scalar_select %p30, 0, %s29
      %s32 = sadd.s32 1, %s23
      %s33 = scalar_select %p30, %s32, %s23
      %p34 = scmp.ge.s32.totalorder %s33, 2
      %s35 = scalar_select %p34, 0, %s33
      %s36 = ssub.s32 %s23, %s35
      %p37 = scmp.eq.s32.totalorder %s36, 0
      %s39 = sadd.s32 %s38, 1
      %s40 = scalar_select %p37, %s38, %s39
      %p43 = pneg %p37
      %p44 = scmp.eq.s32.totalorder %s16, 7
      %p45 = por %p43, %p44
      %p46 = scmp.ne.s32.totalorder %s38, %s41
      %p47 = scmp.eq.s32.totalorder %s16, 0
      %p48 = por %p46, %p47
      %p49 = scmp.ne.s32.totalorder %s38, %s41
      %p50 = scmp.eq.s32.totalorder %s21, 7
      %p51 = por %p49, %p50
      %p52 = scmp.ne.s32.totalorder %s41, %s42
      %p53 = scmp.eq.s32.totalorder %s21, 0
      %p54 = por %p52, %p53
      %p55 = scmp.ne.s32.totalorder %s41, %s42
      %p56 = scmp.eq.s32.totalorder %s22, 7
      %p57 = por %p55, %p56
      %p59 = scmp.ne.s32.totalorder %s42, %s58
      %p60 = scmp.eq.s32.totalorder %s22, 0
      %p61 = por %p59, %p60
      %s62 = ssub.s32 %s23, %s35
      %p63 = scmp.eq.s32.totalorder %s62, 0
      %s65 = sadd.s32 %s64, 1
      %s66 = scalar_select %p63, %s64, %s65
      %p69 = pneg %p63
      %p70 = scmp.eq.s32.totalorder %s16, 7
      %p71 = por %p69, %p70
      %p72 = scmp.ne.s32.totalorder %s64, %s67
      %p73 = scmp.eq.s32.totalorder %s16, 0
      %p74 = por %p72, %p73
      %p75 = scmp.ne.s32.totalorder %s64, %s67
      %p76 = scmp.eq.s32.totalorder %s21, 7
      %p77 = por %p75, %p76
      %p78 = scmp.ne.s32.totalorder %s67, %s68
      %p79 = scmp.eq.s32.totalorder %s21, 0
      %p80 = por %p78, %p79
      %p81 = scmp.ne.s32.totalorder %s67, %s68
      %p82 = scmp.eq.s32.totalorder %s22, 7
      %p83 = por %p81, %p82
      %p85 = scmp.ne.s32.totalorder %s68, %s84
      %p86 = scmp.eq.s32.totalorder %s22, 0
      %p87 = por %p85, %p86
      %s89 = sadd.s32 %s88, 1
      %p92 = scmp.eq.s32.totalorder %s16, 7
      %p93 = scmp.ne.s32.totalorder %s88, %s90
      %p94 = scmp.eq.s32.totalorder %s16, 0
      %p95 = por %p93, %p94
      %p96 = scmp.ne.s32.totalorder %s88, %s90
      %p97 = scmp.eq.s32.totalorder %s21, 7
      %p98 = por %p96, %p97
      %p99 = scmp.ne.s32.totalorder %s90, %s91
      %p100 = scmp.eq.s32.totalorder %s21, 0
      %p101 = por %p99, %p100
      %p102 = scmp.ne.s32.totalorder %s90, %s91
      %p103 = scmp.eq.s32.totalorder %s22, 7
      %p104 = por %p102, %p103
      %p106 = scmp.ne.s32.totalorder %s91, %s105
      %p107 = scmp.eq.s32.totalorder %s22, 0
      %p108 = por %p106, %p107
      %s110 = sadd.s32 %s109, 1
      %p113 = scmp.eq.s32.totalorder %s16, 7
      %p114 = scmp.ne.s32.totalorder %s109, %s111
      %p115 = scmp.eq.s32.totalorder %s16, 0
      %p116 = por %p114, %p115
      %p117 = scmp.ne.s32.totalorder %s109, %s111
      %p118 = scmp.eq.s32.totalorder %s21, 7
      %p119 = por %p117, %p118
      %p120 = scmp.ne.s32.totalorder %s111, %s112
      %p121 = scmp.eq.s32.totalorder %s21, 0
      %p122 = por %p120, %p121
      %p123 = scmp.ne.s32.totalorder %s111, %s112
      %p124 = scmp.eq.s32.totalorder %s22, 7
      %p125 = por %p123, %p124
      %p127 = scmp.ne.s32.totalorder %s112, %s126
      %p128 = scmp.eq.s32.totalorder %s22, 0
      %p129 = por %p127, %p128
      %s131 = sadd.s32 %s130, 1
      %p134 = scmp.eq.s32.totalorder %s16, 7
      %p135 = scmp.ne.s32.totalorder %s130, %s132
      %p136 = scmp.eq.s32.totalorder %s16, 0
      %p137 = por %p135, %p136
      %p138 = scmp.ne.s32.totalorder %s130, %s132
      %p139 = scmp.eq.s32.totalorder %s21, 7
      %p140 = por %p138, %p139
      %p141 = scmp.ne.s32.totalorder %s132, %s133
      %p142 = scmp.eq.s32.totalorder %s21, 0
      %p143 = por %p141, %p142
      %p144 = scmp.ne.s32.totalorder %s132, %s133
      %p145 = scmp.eq.s32.totalorder %s22, 7
      %p146 = por %p144, %p145
      %p148 = scmp.ne.s32.totalorder %s133, %s147
      %p149 = scmp.eq.s32.totalorder %s22, 0
      %p150 = por %p148, %p149
      %s152 = sadd.s32 %s151, 1
      %p155 = scmp.eq.s32.totalorder %s16, 7
      %p156 = scmp.ne.s32.totalorder %s151, %s153
      %p157 = scmp.eq.s32.totalorder %s16, 0
      %p158 = por %p156, %p157
      %p159 = scmp.ne.s32.totalorder %s151, %s153
      %p160 = scmp.eq.s32.totalorder %s21, 7
      %p161 = por %p159, %p160
      %p162 = scmp.ne.s32.totalorder %s153, %s154
      %p163 = scmp.eq.s32.totalorder %s21, 0
      %p164 = por %p162, %p163
      %p165 = scmp.ne.s32.totalorder %s153, %s154
      %p166 = scmp.eq.s32.totalorder %s22, 7
      %p167 = por %p165, %p166
      %p169 = scmp.ne.s32.totalorder %s154, %s168
      %p170 = scmp.eq.s32.totalorder %s22, 0
      %p171 = por %p169, %p170
      %s173 = sadd.s32 %s172, 1
      %p176 = scmp.eq.s32.totalorder %s16, 7
      %p177 = scmp.ne.s32.totalorder %s172, %s174
      %p178 = scmp.eq.s32.totalorder %s16, 0
      %p179 = por %p177, %p178
      %p180 = scmp.ne.s32.totalorder %s172, %s174
      %p181 = scmp.eq.s32.totalorder %s21, 7
      %p182 = por %p180, %p181
      %p183 = scmp.ne.s32.totalorder %s174, %s175
      %p184 = scmp.eq.s32.totalorder %s21, 0
      %p185 = por %p183, %p184
      %p186 = scmp.ne.s32.totalorder %s174, %s175
      %p187 = scmp.eq.s32.totalorder %s22, 7
      %p188 = por %p186, %p187
      %p190 = scmp.ne.s32.totalorder %s175, %s189
      %p191 = scmp.eq.s32.totalorder %s22, 0
      %p192 = por %p190, %p191
      %s193 = ssub.s32 %s23, %s35
      %s194 = ssub.s32 %s24, %s31
      %s195 = sor.u32 %s193, %s194
      %p196 = scmp.eq.s32.totalorder %s195, 0
      %s198 = sadd.s32 %s197, 1
      %s199 = scalar_select %p196, %s197, %s198
      %p202 = pneg %p196
      %p203 = scmp.eq.s32.totalorder %s16, 7
      %p204 = por %p202, %p203
      %p205 = scmp.ne.s32.totalorder %s197, %s200
      %p206 = scmp.eq.s32.totalorder %s16, 0
      %p207 = por %p205, %p206
      %p208 = scmp.ne.s32.totalorder %s197, %s200
      %p209 = scmp.eq.s32.totalorder %s21, 7
      %p210 = por %p208, %p209
      %p211 = scmp.ne.s32.totalorder %s200, %s201
      %p212 = scmp.eq.s32.totalorder %s21, 0
      %p213 = por %p211, %p212
      %p214 = scmp.ne.s32.totalorder %s200, %s201
      %p215 = scmp.eq.s32.totalorder %s22, 7
      %p216 = por %p214, %p215
      %p218 = scmp.ne.s32.totalorder %s201, %s217
      %p219 = scmp.eq.s32.totalorder %s22, 0
      %p220 = por %p218, %p219
      %p221 = scmp.le.s32.totalorder 1, %s16
      %p222 = scmp.lt.s32.totalorder %s16, 9
      %p223 = pnand %p221, %p222
      %p224 = pneg %p223
      // Predicated region
      $region9: #{tpu_custom_call.1} parent=5 // pred_check
        _
      $region10: #{tpu_custom_call.1} parent=5 // pred_check_branch
        %226 = sbr.rel (%p223) target = $region12
      $region11: #{tpu_custom_call.1} parent=5 // pred_region
        %s227 = ssub.s32 %s16, 1
        // Predicated region
        $region13: #{tpu_custom_call.1} parent=11 // pred_check
          %p228 = pneg %p101
        $region14: #{tpu_custom_call.1} parent=11 // pred_check_branch
          %230 = sbr.rel (%p228) target = $region16
        $region15: #{tpu_custom_call.1} parent=11 // pred_region
          _
        $region16: #{tpu_custom_call.1} parent=11 // pred_fallthru
          _
        // Predicated region
        $region17: #{tpu_custom_call.1} parent=11 // pred_check
          %p231 = pneg %p122
        $region18: #{tpu_custom_call.1} parent=11 // pred_check_branch
          %233 = sbr.rel (%p231) target = $region20
        $region19: #{tpu_custom_call.1} parent=11 // pred_region
          _
        $region20: #{tpu_custom_call.1} parent=11 // pred_fallthru
          _
        // Predicated region
        $region21: #{tpu_custom_call.1} parent=11 // pred_check
          %p234 = pneg %p143
        $region22: #{tpu_custom_call.1} parent=11 // pred_check_branch
          %236 = sbr.rel (%p234) target = $region24
        $region23: #{tpu_custom_call.1} parent=11 // pred_region
          _
        $region24: #{tpu_custom_call.1} parent=11 // pred_fallthru
          _
        // Predicated region
        $region25: #{tpu_custom_call.1} parent=11 // pred_check
          %p237 = pneg %p164
        $region26: #{tpu_custom_call.1} parent=11 // pred_check_branch
          %239 = sbr.rel (%p237) target = $region28
        $region27: #{tpu_custom_call.1} parent=11 // pred_region
          _
        $region28: #{tpu_custom_call.1} parent=11 // pred_fallthru
          _
        // Predicated region
        $region29: #{tpu_custom_call.1} parent=11 // pred_check
          %p240 = pneg %p185
        $region30: #{tpu_custom_call.1} parent=11 // pred_check_branch
          %242 = sbr.rel (%p240) target = $region32
        $region31: #{tpu_custom_call.1} parent=11 // pred_region
          _
        $region32: #{tpu_custom_call.1} parent=11 // pred_fallthru
          _
      $region12: #{tpu_custom_call.1} parent=5 // pred_fallthru
        _
      %p243 = scmp.lt.s32.totalorder %s16, 8
      // Predicated region
      $region33: #{tpu_custom_call.1} parent=5 // pred_check
        %p244 = pneg %p243
      $region34: #{tpu_custom_call.1} parent=5 // pred_check_branch
        %246 = sbr.rel (%p244) target = $region36
      $region35: #{tpu_custom_call.1} parent=5 // pred_region
        // Predicated region
        $region37: #{tpu_custom_call.1} parent=35 // pred_check
          %p247 = pneg %p48
        $region38: #{tpu_custom_call.1} parent=35 // pred_check_branch
          %249 = sbr.rel (%p247) target = $region40
        $region39: #{tpu_custom_call.1} parent=35 // pred_region
          %p250 = scmp.lt.s32.totalorder %s23, 1
          %s251 = scalar_select %p250, %s23, 1
          %s252 = smul.addr %s251, 180
          %s253 = smul.addr %s252, 4
          %s254 = scalar_lea.vmem %s0, %s253
        $region40: #{tpu_custom_call.1} parent=35 // pred_fallthru
          _
        // Predicated region
        $region41: #{tpu_custom_call.1} parent=35 // pred_check
          %p255 = pneg %p74
        $region42: #{tpu_custom_call.1} parent=35 // pred_check_branch
          %257 = sbr.rel (%p255) target = $region44
        $region43: #{tpu_custom_call.1} parent=35 // pred_region
          %p258 = scmp.lt.s32.totalorder %s23, 1
          %s259 = scalar_select %p258, %s23, 1
          %s260 = smul.addr %s259, 180
          %s261 = smul.addr %s260, 4
          %s262 = scalar_lea.vmem %s1, %s261
        $region44: #{tpu_custom_call.1} parent=35 // pred_fallthru
          _
      $region36: #{tpu_custom_call.1} parent=5 // pred_fallthru
        _
      %p263 = scmp.le.s32.totalorder 1, %s16
      %p264 = scmp.lt.s32.totalorder %s16, 9
      %p265 = pnand %p263, %p264
      %p266 = pneg %p265
      // Predicated region
      $region45: #{tpu_custom_call.1} parent=5 // pred_check
        _
      $region46: #{tpu_custom_call.1} parent=5 // pred_check_branch
        %268 = sbr.rel (%p265) target = $region48
      $region47: #{tpu_custom_call.1} parent=5 // pred_region
        %s269 = ssub.s32 %s16, 1
        %p270 = scmp.lt.s32.totalorder %s25, 1
        %s271 = scalar_select %p270, %s25, 1
        %s272 = smul.addr %s271, 180
        %s273 = smul.addr %s272, 4
        %s274 = scalar_lea.vmem %s0, %s273
        %p275 = pneg %p54
        %p276 = pneg %p51
        %p277 = scmp.lt.s32.totalorder %s25, 1
        %s278 = scalar_select %p277, %s25, 1
        %s279 = smul.addr %s278, 180
        %s280 = smul.addr %s279, 4
        %s281 = scalar_lea.vmem %s1, %s280
        %p282 = pneg %p80
        %p283 = pneg %p77
        %p284 = pneg %p101
        %p285 = pneg %p98
        %p286 = pneg %p122
        %p287 = pneg %p119
        %p288 = pneg %p143
        %p289 = pneg %p140
        %p290 = pneg %p164
        %p291 = pneg %p161
        %p292 = pneg %p185
        %p293 = pneg %p182
        %p294 = pneg %p213
        %p295 = pneg %p210
        %s296 = sand.u32 %s200, 1
        %s297 = scalar_lea.sflag [#allocation4], %s296
        %s298 = sand.u32 %s200, 1
        %s299 = smul.addr %s298, 8
        %s300 = scalar_lea.vmem [#allocation3], %s299
        %p301 = scmp.lt.s32.totalorder %s25, 1
        %s302 = scalar_select %p301, %s25, 1
        %s303 = smul.addr %s302, 180
        %s304 = smul.addr %s303, 4
        %s305 = scalar_lea.vmem %s0, %s304
        %p306 = scmp.lt.s32.totalorder %s25, 1
        %s307 = scalar_select %p306, %s25, 1
        %s308 = smul.addr %s307, 180
        %s309 = smul.addr %s308, 4
        %s310 = scalar_lea.vmem %s1, %s309
        %s311 = smul.u32 2, %s26
        %s313 = smul.u32 %s26, 8
        %v314 = vld [vmem:[%s5] sm:$0x3]
        %v315 = vld [vmem:[%s6] sm:$0xff]
        %s316 = smul.u32 %s313, 5
        %s317 = smul.addr %s316, 4
        %s318 = scalar_lea.vmem %s305, %s317
        %v319 = vld [vmem:[%s318] sm:$0xf]
        %v320 = vld [vmem:[%s318 + $0x4] sm:$0xf]
        %v321 = vld [vmem:[%s318 + $0x8] sm:$0xf]
        %v322 = vld [vmem:[%s318 + $0xc] sm:$0xf]
        %v323 = vld [vmem:[%s318 + $0x10] sm:$0x3]
        %v324 = vld [vmem:[%s318 + $0x14] sm:$0xf]
        %v325 = vld [vmem:[%s318 + $0x18] sm:$0xf]
        %v326 = vld [vmem:[%s318 + $0x1c] sm:$0xf]
        %v327 = vld [vmem:[%s318 + $0x20] sm:$0xf]
        %v328 = vld [vmem:[%s318 + $0x24] sm:$0x3]
        %v329 = vld [vmem:[%s318 + $0x28] sm:$0xf]
        %v330 = vld [vmem:[%s318 + $0x2c] sm:$0xf]
        %v331 = vld [vmem:[%s318 + $0x30] sm:$0xf]
        %v332 = vld [vmem:[%s318 + $0x34] sm:$0xf]
        %v333 = vld [vmem:[%s318 + $0x38] sm:$0x3]
        %v334 = vld [vmem:[%s318 + $0x3c] sm:$0xf]
        %v335 = vld [vmem:[%s318 + $0x40] sm:$0xf]
        %v336 = vld [vmem:[%s318 + $0x44] sm:$0xf]
        %v337 = vld [vmem:[%s318 + $0x48] sm:$0xf]
        %v338 = vld [vmem:[%s318 + $0x4c] sm:$0x3]
        %v339 = vld [vmem:[%s318 + $0x50] sm:$0xf]
        %v340 = vld [vmem:[%s318 + $0x54] sm:$0xf]
        %v341 = vld [vmem:[%s318 + $0x58] sm:$0xf]
        %v342 = vld [vmem:[%s318 + $0x5c] sm:$0xf]
        %v343 = vld [vmem:[%s318 + $0x60] sm:$0x3]
        %v344 = vld [vmem:[%s318 + $0x64] sm:$0xf]
        %v345 = vld [vmem:[%s318 + $0x68] sm:$0xf]
        %v346 = vld [vmem:[%s318 + $0x6c] sm:$0xf]
        %v347 = vld [vmem:[%s318 + $0x70] sm:$0xf]
        %v348 = vld [vmem:[%s318 + $0x74] sm:$0x3]
        %v349 = vld [vmem:[%s318 + $0x78] sm:$0xf]
        %v350 = vld [vmem:[%s318 + $0x7c] sm:$0xf]
        %v351 = vld [vmem:[%s318 + $0x80] sm:$0xf]
        %v352 = vld [vmem:[%s318 + $0x84] sm:$0xf]
        %v353 = vld [vmem:[%s318 + $0x88] sm:$0x3]
        %v354 = vld [vmem:[%s318 + $0x8c] sm:$0xf]
        %v355 = vld [vmem:[%s318 + $0x90] sm:$0xf]
        %v356 = vld [vmem:[%s318 + $0x94] sm:$0xf]
        %v357 = vld [vmem:[%s318 + $0x98] sm:$0xf]
        %v358 = vld [vmem:[%s318 + $0x9c] sm:$0x3]
        %v359 = vld [vmem:[%s318 + $0xa0] sm:$0xf]
        %v360 = vld [vmem:[%s318 + $0xa4] sm:$0xf]
        %v361 = vld [vmem:[%s318 + $0xa8] sm:$0xf]
        %v362 = vld [vmem:[%s318 + $0xac] sm:$0xf]
        %v363 = vld [vmem:[%s318 + $0xb0] sm:$0x3]
        %v364 = vld [vmem:[%s318 + $0xb4] sm:$0xf]
        %v365 = vld [vmem:[%s318 + $0xb8] sm:$0xf]
        %v366 = vld [vmem:[%s318 + $0xbc] sm:$0xf]
        %v367 = vld [vmem:[%s318 + $0xc0] sm:$0xf]
        %v368 = vld [vmem:[%s318 + $0xc4] sm:$0x3]
        %v369 = vld [vmem:[%s318 + $0xc8] sm:$0xf]
        %v370 = vld [vmem:[%s318 + $0xcc] sm:$0xf]
        %v371 = vld [vmem:[%s318 + $0xd0] sm:$0xf]
        %v372 = vld [vmem:[%s318 + $0xd4] sm:$0xf]
        %v373 = vld [vmem:[%s318 + $0xd8] sm:$0x3]
        %v374 = vld [vmem:[%s318 + $0xdc] sm:$0xf]
        %v375 = vld [vmem:[%s318 + $0xe0] sm:$0xf]
        %v376 = vld [vmem:[%s318 + $0xe4] sm:$0xf]
        %v377 = vld [vmem:[%s318 + $0xe8] sm:$0xf]
        %v378 = vld [vmem:[%s318 + $0xec] sm:$0x3]
        %v379 = vunpack.c.l.bf16 %v319
        %v380 = vunpack.c.l.bf16 %v320
        %v381 = vunpack.c.l.bf16 %v321
        %v382 = vunpack.c.l.bf16 %v322
        %v383 = vunpack.c.l.bf16 %v323
        %v384 = vunpack.c.l.bf16 %v324
        %v385 = vunpack.c.l.bf16 %v325
        %v386 = vunpack.c.l.bf16 %v326
        %v387 = vunpack.c.l.bf16 %v327
        %v388 = vunpack.c.l.bf16 %v328
        %v389 = vunpack.c.l.bf16 %v329
        %v390 = vunpack.c.l.bf16 %v330
        %v391 = vunpack.c.l.bf16 %v331
        %v392 = vunpack.c.l.bf16 %v332
        %v393 = vunpack.c.l.bf16 %v333
        %v394 = vunpack.c.l.bf16 %v334
        %v395 = vunpack.c.l.bf16 %v335
        %v396 = vunpack.c.l.bf16 %v336
        %v397 = vunpack.c.l.bf16 %v337
        %v398 = vunpack.c.l.bf16 %v338
        %v399 = vunpack.c.l.bf16 %v339
        %v400 = vunpack.c.l.bf16 %v340
        %v401 = vunpack.c.l.bf16 %v341
        %v402 = vunpack.c.l.bf16 %v342
        %v403 = vunpack.c.l.bf16 %v343
        %v404 = vunpack.c.l.bf16 %v344
        %v405 = vunpack.c.l.bf16 %v345
        %v406 = vunpack.c.l.bf16 %v346
        %v407 = vunpack.c.l.bf16 %v347
        %v408 = vunpack.c.l.bf16 %v348
        %v409 = vunpack.c.l.bf16 %v349
        %v410 = vunpack.c.l.bf16 %v350
        %v411 = vunpack.c.l.bf16 %v351
        %v412 = vunpack.c.l.bf16 %v352
        %v413 = vunpack.c.l.bf16 %v353
        %v414 = vunpack.c.l.bf16 %v354
        %v415 = vunpack.c.l.bf16 %v355
        %v416 = vunpack.c.l.bf16 %v356
        %v417 = vunpack.c.l.bf16 %v357
        %v418 = vunpack.c.l.bf16 %v358
        %v419 = vunpack.c.l.bf16 %v359
        %v420 = vunpack.c.l.bf16 %v360
        %v421 = vunpack.c.l.bf16 %v361
        %v422 = vunpack.c.l.bf16 %v362
        %v423 = vunpack.c.l.bf16 %v363
        %v424 = vunpack.c.l.bf16 %v364
        %v425 = vunpack.c.l.bf16 %v365
        %v426 = vunpack.c.l.bf16 %v366
        %v427 = vunpack.c.l.bf16 %v367
        %v428 = vunpack.c.l.bf16 %v368
        %v429 = vunpack.c.l.bf16 %v369
        %v430 = vunpack.c.l.bf16 %v370
        %v431 = vunpack.c.l.bf16 %v371
        %v432 = vunpack.c.l.bf16 %v372
        %v433 = vunpack.c.l.bf16 %v373
        %v434 = vunpack.c.l.bf16 %v374
        %v435 = vunpack.c.l.bf16 %v375
        %v436 = vunpack.c.l.bf16 %v376
        %v437 = vunpack.c.l.bf16 %v377
        %v438 = vunpack.c.l.bf16 %v378
        %vm489 = vcmask 1046528
        %v490 = vrot.slane %v379, 1
        %v491 = vrot.slane %v380, 1
        %v492 = vsel %vm489, %v490, %v491
        %v493 = vrot.slane %v381, 1
        %v494 = vsel %vm489, %v491, %v493
        %v495 = vrot.slane %v382, 1
        %v496 = vsel %vm489, %v493, %v495
        %v497 = vrot.slane %v383, 1
        %v498 = vsel %vm489, %v495, %v497
        %v499 = vrot.slane %v384, 1
        %v500 = vrot.slane %v385, 1
        %v501 = vsel %vm489, %v499, %v500
        %v502 = vrot.slane %v386, 1
        %v503 = vsel %vm489, %v500, %v502
        %v504 = vrot.slane %v387, 1
        %v505 = vsel %vm489, %v502, %v504
        %v506 = vrot.slane %v388, 1
        %v507 = vsel %vm489, %v504, %v506
        %v508 = vrot.slane %v389, 1
        %v509 = vrot.slane %v390, 1
        %v510 = vsel %vm489, %v508, %v509
        %v511 = vrot.slane %v391, 1
        %v512 = vsel %vm489, %v509, %v511
        %v513 = vrot.slane %v392, 1
        %v514 = vsel %vm489, %v511, %v513
        %v515 = vrot.slane %v393, 1
        %v516 = vsel %vm489, %v513, %v515
        %v517 = vrot.slane %v394, 1
        %v518 = vrot.slane %v395, 1
        %v519 = vsel %vm489, %v517, %v518
        %v520 = vrot.slane %v396, 1
        %v521 = vsel %vm489, %v518, %v520
        %v522 = vrot.slane %v397, 1
        %v523 = vsel %vm489, %v520, %v522
        %v524 = vrot.slane %v398, 1
        %v525 = vsel %vm489, %v522, %v524
        %v526 = vrot.slane %v399, 1
        %v527 = vrot.slane %v400, 1
        %v528 = vsel %vm489, %v526, %v527
        %v529 = vrot.slane %v401, 1
        %v530 = vsel %vm489, %v527, %v529
        %v531 = vrot.slane %v402, 1
        %v532 = vsel %vm489, %v529, %v531
        %v533 = vrot.slane %v403, 1
        %v534 = vsel %vm489, %v531, %v533
        %v535 = vrot.slane %v404, 1
        %v536 = vrot.slane %v405, 1
        %v537 = vsel %vm489, %v535, %v536
        %v538 = vrot.slane %v406, 1
        %v539 = vsel %vm489, %v536, %v538
        %v540 = vrot.slane %v407, 1
        %v541 = vsel %vm489, %v538, %v540
        %v542 = vrot.slane %v408, 1
        %v543 = vsel %vm489, %v540, %v542
        %v544 = vrot.slane %v409, 1
        %v545 = vrot.slane %v410, 1
        %v546 = vsel %vm489, %v544, %v545
        %v547 = vrot.slane %v411, 1
        %v548 = vsel %vm489, %v545, %v547
        %v549 = vrot.slane %v412, 1
        %v550 = vsel %vm489, %v547, %v549
        %v551 = vrot.slane %v413, 1
        %v552 = vsel %vm489, %v549, %v551
        %v553 = vrot.slane %v414, 1
        %v554 = vrot.slane %v415, 1
        %v555 = vsel %vm489, %v553, %v554
        %v556 = vrot.slane %v416, 1
        %v557 = vsel %vm489, %v554, %v556
        %v558 = vrot.slane %v417, 1
        %v559 = vsel %vm489, %v556, %v558
        %v560 = vrot.slane %v418, 1
        %v561 = vsel %vm489, %v558, %v560
        %v562 = vrot.slane %v419, 1
        %v563 = vrot.slane %v420, 1
        %v564 = vsel %vm489, %v562, %v563
        %v565 = vrot.slane %v421, 1
        %v566 = vsel %vm489, %v563, %v565
        %v567 = vrot.slane %v422, 1
        %v568 = vsel %vm489, %v565, %v567
        %v569 = vrot.slane %v423, 1
        %v570 = vsel %vm489, %v567, %v569
        %v571 = vrot.slane %v424, 1
        %v572 = vrot.slane %v425, 1
        %v573 = vsel %vm489, %v571, %v572
        %v574 = vrot.slane %v426, 1
        %v575 = vsel %vm489, %v572, %v574
        %v576 = vrot.slane %v427, 1
        %v577 = vsel %vm489, %v574, %v576
        %v578 = vrot.slane %v428, 1
        %v579 = vsel %vm489, %v576, %v578
        %580 = vrot.lane.b32.xlu0 %v492, 4
        %v581 = vpop.permute.xlu0 %580
        %582 = vrot.lane.b32.xlu0 %v494, 4
        %v583 = vpop.permute.xlu0 %582
        %584 = vrot.lane.b32.xlu0 %v496, 4
        %v585 = vpop.permute.xlu0 %584
        %586 = vrot.lane.b32.xlu0 %v498, 4
        %v587 = vpop.permute.xlu0 %586
        %588 = vrot.lane.b32.xlu0 %v497, 4
        %v589 = vpop.permute.xlu0 %588
        %590 = vrot.lane.b32.xlu0 %v501, 4
        %v591 = vpop.permute.xlu0 %590
        %592 = vrot.lane.b32.xlu0 %v503, 4
        %v593 = vpop.permute.xlu0 %592
        %594 = vrot.lane.b32.xlu0 %v505, 4
        %v595 = vpop.permute.xlu0 %594
        %596 = vrot.lane.b32.xlu0 %v507, 4
        %v597 = vpop.permute.xlu0 %596
        %598 = vrot.lane.b32.xlu0 %v506, 4
        %v599 = vpop.permute.xlu0 %598
        %600 = vrot.lane.b32.xlu0 %v510, 4
        %v601 = vpop.permute.xlu0 %600
        %602 = vrot.lane.b32.xlu0 %v512, 4
        %v603 = vpop.permute.xlu0 %602
        %604 = vrot.lane.b32.xlu0 %v514, 4
        %v605 = vpop.permute.xlu0 %604
        %606 = vrot.lane.b32.xlu0 %v516, 4
        %v607 = vpop.permute.xlu0 %606
        %608 = vrot.lane.b32.xlu0 %v515, 4
        %v609 = vpop.permute.xlu0 %608
        %610 = vrot.lane.b32.xlu0 %v519, 4
        %v611 = vpop.permute.xlu0 %610
        %612 = vrot.lane.b32.xlu0 %v521, 4
        %v613 = vpop.permute.xlu0 %612
        %614 = vrot.lane.b32.xlu0 %v523, 4
        %v615 = vpop.permute.xlu0 %614
        %616 = vrot.lane.b32.xlu0 %v525, 4
        %v617 = vpop.permute.xlu0 %616
        %618 = vrot.lane.b32.xlu0 %v524, 4
        %v619 = vpop.permute.xlu0 %618
        %620 = vrot.lane.b32.xlu0 %v528, 4
        %v621 = vpop.permute.xlu0 %620
        %622 = vrot.lane.b32.xlu0 %v530, 4
        %v623 = vpop.permute.xlu0 %622
        %624 = vrot.lane.b32.xlu0 %v532, 4
        %v625 = vpop.permute.xlu0 %624
        %626 = vrot.lane.b32.xlu0 %v534, 4
        %v627 = vpop.permute.xlu0 %626
        %628 = vrot.lane.b32.xlu0 %v533, 4
        %v629 = vpop.permute.xlu0 %628
        %630 = vrot.lane.b32.xlu0 %v537, 4
        %v631 = vpop.permute.xlu0 %630
        %632 = vrot.lane.b32.xlu0 %v539, 4
        %v633 = vpop.permute.xlu0 %632
        %634 = vrot.lane.b32.xlu0 %v541, 4
        %v635 = vpop.permute.xlu0 %634
        %636 = vrot.lane.b32.xlu0 %v543, 4
        %v637 = vpop.permute.xlu0 %636
        %638 = vrot.lane.b32.xlu0 %v542, 4
        %v639 = vpop.permute.xlu0 %638
        %640 = vrot.lane.b32.xlu0 %v546, 4
        %v641 = vpop.permute.xlu0 %640
        %642 = vrot.lane.b32.xlu0 %v548, 4
        %v643 = vpop.permute.xlu0 %642
        %644 = vrot.lane.b32.xlu0 %v550, 4
        %v645 = vpop.permute.xlu0 %644
        %646 = vrot.lane.b32.xlu0 %v552, 4
        %v647 = vpop.permute.xlu0 %646
        %648 = vrot.lane.b32.xlu0 %v551, 4
        %v649 = vpop.permute.xlu0 %648
        %650 = vrot.lane.b32.xlu0 %v555, 4
        %v651 = vpop.permute.xlu0 %650
        %652 = vrot.lane.b32.xlu0 %v557, 4
        %v653 = vpop.permute.xlu0 %652
        %654 = vrot.lane.b32.xlu0 %v559, 4
        %v655 = vpop.permute.xlu0 %654
        %656 = vrot.lane.b32.xlu0 %v561, 4
        %v657 = vpop.permute.xlu0 %656
        %658 = vrot.lane.b32.xlu0 %v560, 4
        %v659 = vpop.permute.xlu0 %658
        %660 = vrot.lane.b32.xlu0 %v564, 4
        %v661 = vpop.permute.xlu0 %660
        %662 = vrot.lane.b32.xlu0 %v566, 4
        %v663 = vpop.permute.xlu0 %662
        %664 = vrot.lane.b32.xlu0 %v568, 4
        %v665 = vpop.permute.xlu0 %664
        %666 = vrot.lane.b32.xlu0 %v570, 4
        %v667 = vpop.permute.xlu0 %666
        %668 = vrot.lane.b32.xlu0 %v569, 4
        %v669 = vpop.permute.xlu0 %668
        %670 = vrot.lane.b32.xlu0 %v573, 4
        %v671 = vpop.permute.xlu0 %670
        %672 = vrot.lane.b32.xlu0 %v575, 4
        %v673 = vpop.permute.xlu0 %672
        %674 = vrot.lane.b32.xlu0 %v577, 4
        %v675 = vpop.permute.xlu0 %674
        %676 = vrot.lane.b32.xlu0 %v579, 4
        %v677 = vpop.permute.xlu0 %676
        %678 = vrot.lane.b32.xlu0 %v578, 4
        %v679 = vpop.permute.xlu0 %678
        %vm730 = vcmask 1045504
        %v731 = vrot.slane %v379, 2
        %v732 = vrot.slane %v380, 2
        %v733 = vsel %vm730, %v731, %v732
        %v734 = vrot.slane %v381, 2
        %v735 = vsel %vm730, %v732, %v734
        %v736 = vrot.slane %v382, 2
        %v737 = vsel %vm730, %v734, %v736
        %v738 = vrot.slane %v383, 2
        %v739 = vsel %vm730, %v736, %v738
        %v740 = vrot.slane %v384, 2
        %v741 = vrot.slane %v385, 2
        %v742 = vsel %vm730, %v740, %v741
        %v743 = vrot.slane %v386, 2
        %v744 = vsel %vm730, %v741, %v743
        %v745 = vrot.slane %v387, 2
        %v746 = vsel %vm730, %v743, %v745
        %v747 = vrot.slane %v388, 2
        %v748 = vsel %vm730, %v745, %v747
        %v749 = vrot.slane %v389, 2
        %v750 = vrot.slane %v390, 2
        %v751 = vsel %vm730, %v749, %v750
        %v752 = vrot.slane %v391, 2
        %v753 = vsel %vm730, %v750, %v752
        %v754 = vrot.slane %v392, 2
        %v755 = vsel %vm730, %v752, %v754
        %v756 = vrot.slane %v393, 2
        %v757 = vsel %vm730, %v754, %v756
        %v758 = vrot.slane %v394, 2
        %v759 = vrot.slane %v395, 2
        %v760 = vsel %vm730, %v758, %v759
        %v761 = vrot.slane %v396, 2
        %v762 = vsel %vm730, %v759, %v761
        %v763 = vrot.slane %v397, 2
        %v764 = vsel %vm730, %v761, %v763
        %v765 = vrot.slane %v398, 2
        %v766 = vsel %vm730, %v763, %v765
        %v767 = vrot.slane %v399, 2
        %v768 = vrot.slane %v400, 2
        %v769 = vsel %vm730, %v767, %v768
        %v770 = vrot.slane %v401, 2
        %v771 = vsel %vm730, %v768, %v770
        %v772 = vrot.slane %v402, 2
        %v773 = vsel %vm730, %v770, %v772
        %v774 = vrot.slane %v403, 2
        %v775 = vsel %vm730, %v772, %v774
        %v776 = vrot.slane %v404, 2
        %v777 = vrot.slane %v405, 2
        %v778 = vsel %vm730, %v776, %v777
        %v779 = vrot.slane %v406, 2
        %v780 = vsel %vm730, %v777, %v779
        %v781 = vrot.slane %v407, 2
        %v782 = vsel %vm730, %v779, %v781
        %v783 = vrot.slane %v408, 2
        %v784 = vsel %vm730, %v781, %v783
        %v785 = vrot.slane %v409, 2
        %v786 = vrot.slane %v410, 2
        %v787 = vsel %vm730, %v785, %v786
        %v788 = vrot.slane %v411, 2
        %v789 = vsel %vm730, %v786, %v788
        %v790 = vrot.slane %v412, 2
        %v791 = vsel %vm730, %v788, %v790
        %v792 = vrot.slane %v413, 2
        %v793 = vsel %vm730, %v790, %v792
        %v794 = vrot.slane %v414, 2
        %v795 = vrot.slane %v415, 2
        %v796 = vsel %vm730, %v794, %v795
        %v797 = vrot.slane %v416, 2
        %v798 = vsel %vm730, %v795, %v797
        %v799 = vrot.slane %v417, 2
        %v800 = vsel %vm730, %v797, %v799
        %v801 = vrot.slane %v418, 2
        %v802 = vsel %vm730, %v799, %v801
        %v803 = vrot.slane %v419, 2
        %v804 = vrot.slane %v420, 2
        %v805 = vsel %vm730, %v803, %v804
        %v806 = vrot.slane %v421, 2
        %v807 = vsel %vm730, %v804, %v806
        %v808 = vrot.slane %v422, 2
        %v809 = vsel %vm730, %v806, %v808
        %v810 = vrot.slane %v423, 2
        %v811 = vsel %vm730, %v808, %v810
        %v812 = vrot.slane %v424, 2
        %v813 = vrot.slane %v425, 2
        %v814 = vsel %vm730, %v812, %v813
        %v815 = vrot.slane %v426, 2
        %v816 = vsel %vm730, %v813, %v815
        %v817 = vrot.slane %v427, 2
        %v818 = vsel %vm730, %v815, %v817
        %v819 = vrot.slane %v428, 2
        %v820 = vsel %vm730, %v817, %v819
        %821 = vrot.lane.b32.xlu0 %v733, 8
        %v822 = vpop.permute.xlu0 %821
        %823 = vrot.lane.b32.xlu0 %v735, 8
        %v824 = vpop.permute.xlu0 %823
        %825 = vrot.lane.b32.xlu0 %v737, 8
        %v826 = vpop.permute.xlu0 %825
        %827 = vrot.lane.b32.xlu0 %v739, 8
        %v828 = vpop.permute.xlu0 %827
        %829 = vrot.lane.b32.xlu0 %v738, 8
        %v830 = vpop.permute.xlu0 %829
        %831 = vrot.lane.b32.xlu0 %v742, 8
        %v832 = vpop.permute.xlu0 %831
        %833 = vrot.lane.b32.xlu0 %v744, 8
        %v834 = vpop.permute.xlu0 %833
        %835 = vrot.lane.b32.xlu0 %v746, 8
        %v836 = vpop.permute.xlu0 %835
        %837 = vrot.lane.b32.xlu0 %v748, 8
        %v838 = vpop.permute.xlu0 %837
        %839 = vrot.lane.b32.xlu0 %v747, 8
        %v840 = vpop.permute.xlu0 %839
        %841 = vrot.lane.b32.xlu0 %v751, 8
        %v842 = vpop.permute.xlu0 %841
        %843 = vrot.lane.b32.xlu0 %v753, 8
        %v844 = vpop.permute.xlu0 %843
        %845 = vrot.lane.b32.xlu0 %v755, 8
        %v846 = vpop.permute.xlu0 %845
        %847 = vrot.lane.b32.xlu0 %v757, 8
        %v848 = vpop.permute.xlu0 %847
        %849 = vrot.lane.b32.xlu0 %v756, 8
        %v850 = vpop.permute.xlu0 %849
        %851 = vrot.lane.b32.xlu0 %v760, 8
        %v852 = vpop.permute.xlu0 %851
        %853 = vrot.lane.b32.xlu0 %v762, 8
        %v854 = vpop.permute.xlu0 %853
        %855 = vrot.lane.b32.xlu0 %v764, 8
        %v856 = vpop.permute.xlu0 %855
        %857 = vrot.lane.b32.xlu0 %v766, 8
        %v858 = vpop.permute.xlu0 %857
        %859 = vrot.lane.b32.xlu0 %v765, 8
        %v860 = vpop.permute.xlu0 %859
        %861 = vrot.lane.b32.xlu0 %v769, 8
        %v862 = vpop.permute.xlu0 %861
        %863 = vrot.lane.b32.xlu0 %v771, 8
        %v864 = vpop.permute.xlu0 %863
        %865 = vrot.lane.b32.xlu0 %v773, 8
        %v866 = vpop.permute.xlu0 %865
        %867 = vrot.lane.b32.xlu0 %v775, 8
        %v868 = vpop.permute.xlu0 %867
        %869 = vrot.lane.b32.xlu0 %v774, 8
        %v870 = vpop.permute.xlu0 %869
        %871 = vrot.lane.b32.xlu0 %v778, 8
        %v872 = vpop.permute.xlu0 %871
        %873 = vrot.lane.b32.xlu0 %v780, 8
        %v874 = vpop.permute.xlu0 %873
        %875 = vrot.lane.b32.xlu0 %v782, 8
        %v876 = vpop.permute.xlu0 %875
        %877 = vrot.lane.b32.xlu0 %v784, 8
        %v878 = vpop.permute.xlu0 %877
        %879 = vrot.lane.b32.xlu0 %v783, 8
        %v880 = vpop.permute.xlu0 %879
        %881 = vrot.lane.b32.xlu0 %v787, 8
        %v882 = vpop.permute.xlu0 %881
        %883 = vrot.lane.b32.xlu0 %v789, 8
        %v884 = vpop.permute.xlu0 %883
        %885 = vrot.lane.b32.xlu0 %v791, 8
        %v886 = vpop.permute.xlu0 %885
        %887 = vrot.lane.b32.xlu0 %v793, 8
        %v888 = vpop.permute.xlu0 %887
        %889 = vrot.lane.b32.xlu0 %v792, 8
        %v890 = vpop.permute.xlu0 %889
        %891 = vrot.lane.b32.xlu0 %v796, 8
        %v892 = vpop.permute.xlu0 %891
        %893 = vrot.lane.b32.xlu0 %v798, 8
        %v894 = vpop.permute.xlu0 %893
        %895 = vrot.lane.b32.xlu0 %v800, 8
        %v896 = vpop.permute.xlu0 %895
        %897 = vrot.lane.b32.xlu0 %v802, 8
        %v898 = vpop.permute.xlu0 %897
        %899 = vrot.lane.b32.xlu0 %v801, 8
        %v900 = vpop.permute.xlu0 %899
        %901 = vrot.lane.b32.xlu0 %v805, 8
        %v902 = vpop.permute.xlu0 %901
        %903 = vrot.lane.b32.xlu0 %v807, 8
        %v904 = vpop.permute.xlu0 %903
        %905 = vrot.lane.b32.xlu0 %v809, 8
        %v906 = vpop.permute.xlu0 %905
        %907 = vrot.lane.b32.xlu0 %v811, 8
        %v908 = vpop.permute.xlu0 %907
        %909 = vrot.lane.b32.xlu0 %v810, 8
        %v910 = vpop.permute.xlu0 %909
        %911 = vrot.lane.b32.xlu0 %v814, 8
        %v912 = vpop.permute.xlu0 %911
        %913 = vrot.lane.b32.xlu0 %v816, 8
        %v914 = vpop.permute.xlu0 %913
        %915 = vrot.lane.b32.xlu0 %v818, 8
        %v916 = vpop.permute.xlu0 %915
        %917 = vrot.lane.b32.xlu0 %v820, 8
        %v918 = vpop.permute.xlu0 %917
        %919 = vrot.lane.b32.xlu0 %v819, 8
        %v920 = vpop.permute.xlu0 %919
        %976 = vrot.lane.b32.xlu0 %v384, 12
        %v977 = vpop.permute.xlu0 %976
        %978 = vrot.lane.b32.xlu0 %v385, 12
        %v979 = vpop.permute.xlu0 %978
        %980 = vrot.lane.b32.xlu0 %v386, 12
        %v981 = vpop.permute.xlu0 %980
        %982 = vrot.lane.b32.xlu0 %v387, 12
        %v983 = vpop.permute.xlu0 %982
        %984 = vrot.lane.b32.xlu0 %v388, 12
        %v985 = vpop.permute.xlu0 %984
        %986 = vrot.lane.b32.xlu0 %v389, 12
        %v987 = vpop.permute.xlu0 %986
        %988 = vrot.lane.b32.xlu0 %v390, 12
        %v989 = vpop.permute.xlu0 %988
        %990 = vrot.lane.b32.xlu0 %v391, 12
        %v991 = vpop.permute.xlu0 %990
        %992 = vrot.lane.b32.xlu0 %v392, 12
        %v993 = vpop.permute.xlu0 %992
        %994 = vrot.lane.b32.xlu0 %v393, 12
        %v995 = vpop.permute.xlu0 %994
        %996 = vrot.lane.b32.xlu0 %v394, 12
        %v997 = vpop.permute.xlu0 %996
        %998 = vrot.lane.b32.xlu0 %v395, 12
        %v999 = vpop.permute.xlu0 %998
        %1000 = vrot.lane.b32.xlu0 %v396, 12
        %v1001 = vpop.permute.xlu0 %1000
        %1002 = vrot.lane.b32.xlu0 %v397, 12
        %v1003 = vpop.permute.xlu0 %1002
        %1004 = vrot.lane.b32.xlu0 %v398, 12
        %v1005 = vpop.permute.xlu0 %1004
        %1006 = vrot.lane.b32.xlu0 %v399, 12
        %v1007 = vpop.permute.xlu0 %1006
        %1008 = vrot.lane.b32.xlu0 %v400, 12
        %v1009 = vpop.permute.xlu0 %1008
        %1010 = vrot.lane.b32.xlu0 %v401, 12
        %v1011 = vpop.permute.xlu0 %1010
        %1012 = vrot.lane.b32.xlu0 %v402, 12
        %v1013 = vpop.permute.xlu0 %1012
        %1014 = vrot.lane.b32.xlu0 %v403, 12
        %v1015 = vpop.permute.xlu0 %1014
        %1016 = vrot.lane.b32.xlu0 %v404, 12
        %v1017 = vpop.permute.xlu0 %1016
        %1018 = vrot.lane.b32.xlu0 %v405, 12
        %v1019 = vpop.permute.xlu0 %1018
        %1020 = vrot.lane.b32.xlu0 %v406, 12
        %v1021 = vpop.permute.xlu0 %1020
        %1022 = vrot.lane.b32.xlu0 %v407, 12
        %v1023 = vpop.permute.xlu0 %1022
        %1024 = vrot.lane.b32.xlu0 %v408, 12
        %v1025 = vpop.permute.xlu0 %1024
        %1026 = vrot.lane.b32.xlu0 %v409, 12
        %v1027 = vpop.permute.xlu0 %1026
        %1028 = vrot.lane.b32.xlu0 %v410, 12
        %v1029 = vpop.permute.xlu0 %1028
        %1030 = vrot.lane.b32.xlu0 %v411, 12
        %v1031 = vpop.permute.xlu0 %1030
        %1032 = vrot.lane.b32.xlu0 %v412, 12
        %v1033 = vpop.permute.xlu0 %1032
        %1034 = vrot.lane.b32.xlu0 %v413, 12
        %v1035 = vpop.permute.xlu0 %1034
        %1036 = vrot.lane.b32.xlu0 %v414, 12
        %v1037 = vpop.permute.xlu0 %1036
        %1038 = vrot.lane.b32.xlu0 %v415, 12
        %v1039 = vpop.permute.xlu0 %1038
        %1040 = vrot.lane.b32.xlu0 %v416, 12
        %v1041 = vpop.permute.xlu0 %1040
        %1042 = vrot.lane.b32.xlu0 %v417, 12
        %v1043 = vpop.permute.xlu0 %1042
        %1044 = vrot.lane.b32.xlu0 %v418, 12
        %v1045 = vpop.permute.xlu0 %1044
        %1046 = vrot.lane.b32.xlu0 %v419, 12
        %v1047 = vpop.permute.xlu0 %1046
        %1048 = vrot.lane.b32.xlu0 %v420, 12
        %v1049 = vpop.permute.xlu0 %1048
        %1050 = vrot.lane.b32.xlu0 %v421, 12
        %v1051 = vpop.permute.xlu0 %1050
        %1052 = vrot.lane.b32.xlu0 %v422, 12
        %v1053 = vpop.permute.xlu0 %1052
        %1054 = vrot.lane.b32.xlu0 %v423, 12
        %v1055 = vpop.permute.xlu0 %1054
        %1056 = vrot.lane.b32.xlu0 %v424, 12
        %v1057 = vpop.permute.xlu0 %1056
        %1058 = vrot.lane.b32.xlu0 %v425, 12
        %v1059 = vpop.permute.xlu0 %1058
        %1060 = vrot.lane.b32.xlu0 %v426, 12
        %v1061 = vpop.permute.xlu0 %1060
        %1062 = vrot.lane.b32.xlu0 %v427, 12
        %v1063 = vpop.permute.xlu0 %1062
        %1064 = vrot.lane.b32.xlu0 %v428, 12
        %v1065 = vpop.permute.xlu0 %1064
        %1066 = vrot.lane.b32.xlu0 %v429, 12
        %v1067 = vpop.permute.xlu0 %1066
        %1068 = vrot.lane.b32.xlu0 %v430, 12
        %v1069 = vpop.permute.xlu0 %1068
        %1070 = vrot.lane.b32.xlu0 %v431, 12
        %v1071 = vpop.permute.xlu0 %1070
        %1072 = vrot.lane.b32.xlu0 %v432, 12
        %v1073 = vpop.permute.xlu0 %1072
        %1074 = vrot.lane.b32.xlu0 %v433, 12
        %v1075 = vpop.permute.xlu0 %1074
        %v1126 = vrot.slane %v429, 1
        %v1127 = vrot.slane %v430, 1
        %v1128 = vsel %vm489, %v1126, %v1127
        %v1129 = vrot.slane %v431, 1
        %v1130 = vsel %vm489, %v1127, %v1129
        %v1131 = vrot.slane %v432, 1
        %v1132 = vsel %vm489, %v1129, %v1131
        %v1133 = vrot.slane %v433, 1
        %v1134 = vsel %vm489, %v1131, %v1133
        %1135 = vrot.lane.b32.xlu0 %v501, 16
        %v1136 = vpop.permute.xlu0 %1135
        %1137 = vrot.lane.b32.xlu0 %v503, 16
        %v1138 = vpop.permute.xlu0 %1137
        %1139 = vrot.lane.b32.xlu0 %v505, 16
        %v1140 = vpop.permute.xlu0 %1139
        %1141 = vrot.lane.b32.xlu0 %v507, 16
        %v1142 = vpop.permute.xlu0 %1141
        %1143 = vrot.lane.b32.xlu0 %v506, 16
        %v1144 = vpop.permute.xlu0 %1143
        %1145 = vrot.lane.b32.xlu0 %v510, 16
        %v1146 = vpop.permute.xlu0 %1145
        %1147 = vrot.lane.b32.xlu0 %v512, 16
        %v1148 = vpop.permute.xlu0 %1147
        %1149 = vrot.lane.b32.xlu0 %v514, 16
        %v1150 = vpop.permute.xlu0 %1149
        %1151 = vrot.lane.b32.xlu0 %v516, 16
        %v1152 = vpop.permute.xlu0 %1151
        %1153 = vrot.lane.b32.xlu0 %v515, 16
        %v1154 = vpop.permute.xlu0 %1153
        %1155 = vrot.lane.b32.xlu0 %v519, 16
        %v1156 = vpop.permute.xlu0 %1155
        %1157 = vrot.lane.b32.xlu0 %v521, 16
        %v1158 = vpop.permute.xlu0 %1157
        %1159 = vrot.lane.b32.xlu0 %v523, 16
        %v1160 = vpop.permute.xlu0 %1159
        %1161 = vrot.lane.b32.xlu0 %v525, 16
        %v1162 = vpop.permute.xlu0 %1161
        %1163 = vrot.lane.b32.xlu0 %v524, 16
        %v1164 = vpop.permute.xlu0 %1163
        %1165 = vrot.lane.b32.xlu0 %v528, 16
        %v1166 = vpop.permute.xlu0 %1165
        %1167 = vrot.lane.b32.xlu0 %v530, 16
        %v1168 = vpop.permute.xlu0 %1167
        %1169 = vrot.lane.b32.xlu0 %v532, 16
        %v1170 = vpop.permute.xlu0 %1169
        %1171 = vrot.lane.b32.xlu0 %v534, 16
        %v1172 = vpop.permute.xlu0 %1171
        %1173 = vrot.lane.b32.xlu0 %v533, 16
        %v1174 = vpop.permute.xlu0 %1173
        %1175 = vrot.lane.b32.xlu0 %v537, 16
        %v1176 = vpop.permute.xlu0 %1175
        %1177 = vrot.lane.b32.xlu0 %v539, 16
        %v1178 = vpop.permute.xlu0 %1177
        %1179 = vrot.lane.b32.xlu0 %v541, 16
        %v1180 = vpop.permute.xlu0 %1179
        %1181 = vrot.lane.b32.xlu0 %v543, 16
        %v1182 = vpop.permute.xlu0 %1181
        %1183 = vrot.lane.b32.xlu0 %v542, 16
        %v1184 = vpop.permute.xlu0 %1183
        %1185 = vrot.lane.b32.xlu0 %v546, 16
        %v1186 = vpop.permute.xlu0 %1185
        %1187 = vrot.lane.b32.xlu0 %v548, 16
        %v1188 = vpop.permute.xlu0 %1187
        %1189 = vrot.lane.b32.xlu0 %v550, 16
        %v1190 = vpop.permute.xlu0 %1189
        %1191 = vrot.lane.b32.xlu0 %v552, 16
        %v1192 = vpop.permute.xlu0 %1191
        %1193 = vrot.lane.b32.xlu0 %v551, 16
        %v1194 = vpop.permute.xlu0 %1193
        %1195 = vrot.lane.b32.xlu0 %v555, 16
        %v1196 = vpop.permute.xlu0 %1195
        %1197 = vrot.lane.b32.xlu0 %v557, 16
        %v1198 = vpop.permute.xlu0 %1197
        %1199 = vrot.lane.b32.xlu0 %v559, 16
        %v1200 = vpop.permute.xlu0 %1199
        %1201 = vrot.lane.b32.xlu0 %v561, 16
        %v1202 = vpop.permute.xlu0 %1201
        %1203 = vrot.lane.b32.xlu0 %v560, 16
        %v1204 = vpop.permute.xlu0 %1203
        %1205 = vrot.lane.b32.xlu0 %v564, 16
        %v1206 = vpop.permute.xlu0 %1205
        %1207 = vrot.lane.b32.xlu0 %v566, 16
        %v1208 = vpop.permute.xlu0 %1207
        %1209 = vrot.lane.b32.xlu0 %v568, 16
        %v1210 = vpop.permute.xlu0 %1209
        %1211 = vrot.lane.b32.xlu0 %v570, 16
        %v1212 = vpop.permute.xlu0 %1211
        %1213 = vrot.lane.b32.xlu0 %v569, 16
        %v1214 = vpop.permute.xlu0 %1213
        %1215 = vrot.lane.b32.xlu0 %v573, 16
        %v1216 = vpop.permute.xlu0 %1215
        %1217 = vrot.lane.b32.xlu0 %v575, 16
        %v1218 = vpop.permute.xlu0 %1217
        %1219 = vrot.lane.b32.xlu0 %v577, 16
        %v1220 = vpop.permute.xlu0 %1219
        %1221 = vrot.lane.b32.xlu0 %v579, 16
        %v1222 = vpop.permute.xlu0 %1221
        %1223 = vrot.lane.b32.xlu0 %v578, 16
        %v1224 = vpop.permute.xlu0 %1223
        %1225 = vrot.lane.b32.xlu0 %v1128, 16
        %v1226 = vpop.permute.xlu0 %1225
        %1227 = vrot.lane.b32.xlu0 %v1130, 16
        %v1228 = vpop.permute.xlu0 %1227
        %1229 = vrot.lane.b32.xlu0 %v1132, 16
        %v1230 = vpop.permute.xlu0 %1229
        %1231 = vrot.lane.b32.xlu0 %v1134, 16
        %v1232 = vpop.permute.xlu0 %1231
        %1233 = vrot.lane.b32.xlu0 %v1133, 16
        %v1234 = vpop.permute.xlu0 %1233
        %v1285 = vrot.slane %v429, 2
        %v1286 = vrot.slane %v430, 2
        %v1287 = vsel %vm730, %v1285, %v1286
        %v1288 = vrot.slane %v431, 2
        %v1289 = vsel %vm730, %v1286, %v1288
        %v1290 = vrot.slane %v432, 2
        %v1291 = vsel %vm730, %v1288, %v1290
        %v1292 = vrot.slane %v433, 2
        %v1293 = vsel %vm730, %v1290, %v1292
        %1294 = vrot.lane.b32.xlu0 %v742, 20
        %v1295 = vpop.permute.xlu0 %1294
        %1296 = vrot.lane.b32.xlu0 %v744, 20
        %v1297 = vpop.permute.xlu0 %1296
        %1298 = vrot.lane.b32.xlu0 %v746, 20
        %v1299 = vpop.permute.xlu0 %1298
        %1300 = vrot.lane.b32.xlu0 %v748, 20
        %v1301 = vpop.permute.xlu0 %1300
        %1302 = vrot.lane.b32.xlu0 %v747, 20
        %v1303 = vpop.permute.xlu0 %1302
        %1304 = vrot.lane.b32.xlu0 %v751, 20
        %v1305 = vpop.permute.xlu0 %1304
        %1306 = vrot.lane.b32.xlu0 %v753, 20
        %v1307 = vpop.permute.xlu0 %1306
        %1308 = vrot.lane.b32.xlu0 %v755, 20
        %v1309 = vpop.permute.xlu0 %1308
        %1310 = vrot.lane.b32.xlu0 %v757, 20
        %v1311 = vpop.permute.xlu0 %1310
        %1312 = vrot.lane.b32.xlu0 %v756, 20
        %v1313 = vpop.permute.xlu0 %1312
        %1314 = vrot.lane.b32.xlu0 %v760, 20
        %v1315 = vpop.permute.xlu0 %1314
        %1316 = vrot.lane.b32.xlu0 %v762, 20
        %v1317 = vpop.permute.xlu0 %1316
        %1318 = vrot.lane.b32.xlu0 %v764, 20
        %v1319 = vpop.permute.xlu0 %1318
        %1320 = vrot.lane.b32.xlu0 %v766, 20
        %v1321 = vpop.permute.xlu0 %1320
        %1322 = vrot.lane.b32.xlu0 %v765, 20
        %v1323 = vpop.permute.xlu0 %1322
        %1324 = vrot.lane.b32.xlu0 %v769, 20
        %v1325 = vpop.permute.xlu0 %1324
        %1326 = vrot.lane.b32.xlu0 %v771, 20
        %v1327 = vpop.permute.xlu0 %1326
        %1328 = vrot.lane.b32.xlu0 %v773, 20
        %v1329 = vpop.permute.xlu0 %1328
        %1330 = vrot.lane.b32.xlu0 %v775, 20
        %v1331 = vpop.permute.xlu0 %1330
        %1332 = vrot.lane.b32.xlu0 %v774, 20
        %v1333 = vpop.permute.xlu0 %1332
        %1334 = vrot.lane.b32.xlu0 %v778, 20
        %v1335 = vpop.permute.xlu0 %1334
        %1336 = vrot.lane.b32.xlu0 %v780, 20
        %v1337 = vpop.permute.xlu0 %1336
        %1338 = vrot.lane.b32.xlu0 %v782, 20
        %v1339 = vpop.permute.xlu0 %1338
        %1340 = vrot.lane.b32.xlu0 %v784, 20
        %v1341 = vpop.permute.xlu0 %1340
        %1342 = vrot.lane.b32.xlu0 %v783, 20
        %v1343 = vpop.permute.xlu0 %1342
        %1344 = vrot.lane.b32.xlu0 %v787, 20
        %v1345 = vpop.permute.xlu0 %1344
        %1346 = vrot.lane.b32.xlu0 %v789, 20
        %v1347 = vpop.permute.xlu0 %1346
        %1348 = vrot.lane.b32.xlu0 %v791, 20
        %v1349 = vpop.permute.xlu0 %1348
        %1350 = vrot.lane.b32.xlu0 %v793, 20
        %v1351 = vpop.permute.xlu0 %1350
        %1352 = vrot.lane.b32.xlu0 %v792, 20
        %v1353 = vpop.permute.xlu0 %1352
        %1354 = vrot.lane.b32.xlu0 %v796, 20
        %v1355 = vpop.permute.xlu0 %1354
        %1356 = vrot.lane.b32.xlu0 %v798, 20
        %v1357 = vpop.permute.xlu0 %1356
        %1358 = vrot.lane.b32.xlu0 %v800, 20
        %v1359 = vpop.permute.xlu0 %1358
        %1360 = vrot.lane.b32.xlu0 %v802, 20
        %v1361 = vpop.permute.xlu0 %1360
        %1362 = vrot.lane.b32.xlu0 %v801, 20
        %v1363 = vpop.permute.xlu0 %1362
        %1364 = vrot.lane.b32.xlu0 %v805, 20
        %v1365 = vpop.permute.xlu0 %1364
        %1366 = vrot.lane.b32.xlu0 %v807, 20
        %v1367 = vpop.permute.xlu0 %1366
        %1368 = vrot.lane.b32.xlu0 %v809, 20
        %v1369 = vpop.permute.xlu0 %1368
        %1370 = vrot.lane.b32.xlu0 %v811, 20
        %v1371 = vpop.permute.xlu0 %1370
        %1372 = vrot.lane.b32.xlu0 %v810, 20
        %v1373 = vpop.permute.xlu0 %1372
        %1374 = vrot.lane.b32.xlu0 %v814, 20
        %v1375 = vpop.permute.xlu0 %1374
        %1376 = vrot.lane.b32.xlu0 %v816, 20
        %v1377 = vpop.permute.xlu0 %1376
        %1378 = vrot.lane.b32.xlu0 %v818, 20
        %v1379 = vpop.permute.xlu0 %1378
        %1380 = vrot.lane.b32.xlu0 %v820, 20
        %v1381 = vpop.permute.xlu0 %1380
        %1382 = vrot.lane.b32.xlu0 %v819, 20
        %v1383 = vpop.permute.xlu0 %1382
        %1384 = vrot.lane.b32.xlu0 %v1287, 20
        %v1385 = vpop.permute.xlu0 %1384
        %1386 = vrot.lane.b32.xlu0 %v1289, 20
        %v1387 = vpop.permute.xlu0 %1386
        %1388 = vrot.lane.b32.xlu0 %v1291, 20
        %v1389 = vpop.permute.xlu0 %1388
        %1390 = vrot.lane.b32.xlu0 %v1293, 20
        %v1391 = vpop.permute.xlu0 %1390
        %1392 = vrot.lane.b32.xlu0 %v1292, 20
        %v1393 = vpop.permute.xlu0 %1392
        %1449 = vrot.lane.b32.xlu0 %v389, 24
        %v1450 = vpop.permute.xlu0 %1449
        %1451 = vrot.lane.b32.xlu0 %v390, 24
        %v1452 = vpop.permute.xlu0 %1451
        %1453 = vrot.lane.b32.xlu0 %v391, 24
        %v1454 = vpop.permute.xlu0 %1453
        %1455 = vrot.lane.b32.xlu0 %v392, 24
        %v1456 = vpop.permute.xlu0 %1455
        %1457 = vrot.lane.b32.xlu0 %v393, 24
        %v1458 = vpop.permute.xlu0 %1457
        %1459 = vrot.lane.b32.xlu0 %v394, 24
        %v1460 = vpop.permute.xlu0 %1459
        %1461 = vrot.lane.b32.xlu0 %v395, 24
        %v1462 = vpop.permute.xlu0 %1461
        %1463 = vrot.lane.b32.xlu0 %v396, 24
        %v1464 = vpop.permute.xlu0 %1463
        %1465 = vrot.lane.b32.xlu0 %v397, 24
        %v1466 = vpop.permute.xlu0 %1465
        %1467 = vrot.lane.b32.xlu0 %v398, 24
        %v1468 = vpop.permute.xlu0 %1467
        %1469 = vrot.lane.b32.xlu0 %v399, 24
        %v1470 = vpop.permute.xlu0 %1469
        %1471 = vrot.lane.b32.xlu0 %v400, 24
        %v1472 = vpop.permute.xlu0 %1471
        %1473 = vrot.lane.b32.xlu0 %v401, 24
        %v1474 = vpop.permute.xlu0 %1473
        %1475 = vrot.lane.b32.xlu0 %v402, 24
        %v1476 = vpop.permute.xlu0 %1475
        %1477 = vrot.lane.b32.xlu0 %v403, 24
        %v1478 = vpop.permute.xlu0 %1477
        %1479 = vrot.lane.b32.xlu0 %v404, 24
        %v1480 = vpop.permute.xlu0 %1479
        %1481 = vrot.lane.b32.xlu0 %v405, 24
        %v1482 = vpop.permute.xlu0 %1481
        %1483 = vrot.lane.b32.xlu0 %v406, 24
        %v1484 = vpop.permute.xlu0 %1483
        %1485 = vrot.lane.b32.xlu0 %v407, 24
        %v1486 = vpop.permute.xlu0 %1485
        %1487 = vrot.lane.b32.xlu0 %v408, 24
        %v1488 = vpop.permute.xlu0 %1487
        %1489 = vrot.lane.b32.xlu0 %v409, 24
        %v1490 = vpop.permute.xlu0 %1489
        %1491 = vrot.lane.b32.xlu0 %v410, 24
        %v1492 = vpop.permute.xlu0 %1491
        %1493 = vrot.lane.b32.xlu0 %v411, 24
        %v1494 = vpop.permute.xlu0 %1493
        %1495 = vrot.lane.b32.xlu0 %v412, 24
        %v1496 = vpop.permute.xlu0 %1495
        %1497 = vrot.lane.b32.xlu0 %v413, 24
        %v1498 = vpop.permute.xlu0 %1497
        %1499 = vrot.lane.b32.xlu0 %v414, 24
        %v1500 = vpop.permute.xlu0 %1499
        %1501 = vrot.lane.b32.xlu0 %v415, 24
        %v1502 = vpop.permute.xlu0 %1501
        %1503 = vrot.lane.b32.xlu0 %v416, 24
        %v1504 = vpop.permute.xlu0 %1503
        %1505 = vrot.lane.b32.xlu0 %v417, 24
        %v1506 = vpop.permute.xlu0 %1505
        %1507 = vrot.lane.b32.xlu0 %v418, 24
        %v1508 = vpop.permute.xlu0 %1507
        %1509 = vrot.lane.b32.xlu0 %v419, 24
        %v1510 = vpop.permute.xlu0 %1509
        %1511 = vrot.lane.b32.xlu0 %v420, 24
        %v1512 = vpop.permute.xlu0 %1511
        %1513 = vrot.lane.b32.xlu0 %v421, 24
        %v1514 = vpop.permute.xlu0 %1513
        %1515 = vrot.lane.b32.xlu0 %v422, 24
        %v1516 = vpop.permute.xlu0 %1515
        %1517 = vrot.lane.b32.xlu0 %v423, 24
        %v1518 = vpop.permute.xlu0 %1517
        %1519 = vrot.lane.b32.xlu0 %v424, 24
        %v1520 = vpop.permute.xlu0 %1519
        %1521 = vrot.lane.b32.xlu0 %v425, 24
        %v1522 = vpop.permute.xlu0 %1521
        %1523 = vrot.lane.b32.xlu0 %v426, 24
        %v1524 = vpop.permute.xlu0 %1523
        %1525 = vrot.lane.b32.xlu0 %v427, 24
        %v1526 = vpop.permute.xlu0 %1525
        %1527 = vrot.lane.b32.xlu0 %v428, 24
        %v1528 = vpop.permute.xlu0 %1527
        %1529 = vrot.lane.b32.xlu0 %v429, 24
        %v1530 = vpop.permute.xlu0 %1529
        %1531 = vrot.lane.b32.xlu0 %v430, 24
        %v1532 = vpop.permute.xlu0 %1531
        %1533 = vrot.lane.b32.xlu0 %v431, 24
        %v1534 = vpop.permute.xlu0 %1533
        %1535 = vrot.lane.b32.xlu0 %v432, 24
        %v1536 = vpop.permute.xlu0 %1535
        %1537 = vrot.lane.b32.xlu0 %v433, 24
        %v1538 = vpop.permute.xlu0 %1537
        %1539 = vrot.lane.b32.xlu0 %v434, 24
        %v1540 = vpop.permute.xlu0 %1539
        %1541 = vrot.lane.b32.xlu0 %v435, 24
        %v1542 = vpop.permute.xlu0 %1541
        %1543 = vrot.lane.b32.xlu0 %v436, 24
        %v1544 = vpop.permute.xlu0 %1543
        %1545 = vrot.lane.b32.xlu0 %v437, 24
        %v1546 = vpop.permute.xlu0 %1545
        %1547 = vrot.lane.b32.xlu0 %v438, 24
        %v1548 = vpop.permute.xlu0 %1547
        %v1599 = vrot.slane %v434, 1
        %v1600 = vrot.slane %v435, 1
        %v1601 = vsel %vm489, %v1599, %v1600
        %v1602 = vrot.slane %v436, 1
        %v1603 = vsel %vm489, %v1600, %v1602
        %v1604 = vrot.slane %v437, 1
        %v1605 = vsel %vm489, %v1602, %v1604
        %v1606 = vrot.slane %v438, 1
        %v1607 = vsel %vm489, %v1604, %v1606
        %1608 = vrot.lane.b32.xlu0 %v510, 28
        %v1609 = vpop.permute.xlu0 %1608
        %1610 = vrot.lane.b32.xlu0 %v512, 28
        %v1611 = vpop.permute.xlu0 %1610
        %1612 = vrot.lane.b32.xlu0 %v514, 28
        %v1613 = vpop.permute.xlu0 %1612
        %1614 = vrot.lane.b32.xlu0 %v516, 28
        %v1615 = vpop.permute.xlu0 %1614
        %1616 = vrot.lane.b32.xlu0 %v515, 28
        %v1617 = vpop.permute.xlu0 %1616
        %1618 = vrot.lane.b32.xlu0 %v519, 28
        %v1619 = vpop.permute.xlu0 %1618
        %1620 = vrot.lane.b32.xlu0 %v521, 28
        %v1621 = vpop.permute.xlu0 %1620
        %1622 = vrot.lane.b32.xlu0 %v523, 28
        %v1623 = vpop.permute.xlu0 %1622
        %1624 = vrot.lane.b32.xlu0 %v525, 28
        %v1625 = vpop.permute.xlu0 %1624
        %1626 = vrot.lane.b32.xlu0 %v524, 28
        %v1627 = vpop.permute.xlu0 %1626
        %1628 = vrot.lane.b32.xlu0 %v528, 28
        %v1629 = vpop.permute.xlu0 %1628
        %1630 = vrot.lane.b32.xlu0 %v530, 28
        %v1631 = vpop.permute.xlu0 %1630
        %1632 = vrot.lane.b32.xlu0 %v532, 28
        %v1633 = vpop.permute.xlu0 %1632
        %1634 = vrot.lane.b32.xlu0 %v534, 28
        %v1635 = vpop.permute.xlu0 %1634
        %1636 = vrot.lane.b32.xlu0 %v533, 28
        %v1637 = vpop.permute.xlu0 %1636
        %1638 = vrot.lane.b32.xlu0 %v537, 28
        %v1639 = vpop.permute.xlu0 %1638
        %1640 = vrot.lane.b32.xlu0 %v539, 28
        %v1641 = vpop.permute.xlu0 %1640
        %1642 = vrot.lane.b32.xlu0 %v541, 28
        %v1643 = vpop.permute.xlu0 %1642
        %1644 = vrot.lane.b32.xlu0 %v543, 28
        %v1645 = vpop.permute.xlu0 %1644
        %1646 = vrot.lane.b32.xlu0 %v542, 28
        %v1647 = vpop.permute.xlu0 %1646
        %1648 = vrot.lane.b32.xlu0 %v546, 28
        %v1649 = vpop.permute.xlu0 %1648
        %1650 = vrot.lane.b32.xlu0 %v548, 28
        %v1651 = vpop.permute.xlu0 %1650
        %1652 = vrot.lane.b32.xlu0 %v550, 28
        %v1653 = vpop.permute.xlu0 %1652
        %1654 = vrot.lane.b32.xlu0 %v552, 28
        %v1655 = vpop.permute.xlu0 %1654
        %1656 = vrot.lane.b32.xlu0 %v551, 28
        %v1657 = vpop.permute.xlu0 %1656
        %1658 = vrot.lane.b32.xlu0 %v555, 28
        %v1659 = vpop.permute.xlu0 %1658
        %1660 = vrot.lane.b32.xlu0 %v557, 28
        %v1661 = vpop.permute.xlu0 %1660
        %1662 = vrot.lane.b32.xlu0 %v559, 28
        %v1663 = vpop.permute.xlu0 %1662
        %1664 = vrot.lane.b32.xlu0 %v561, 28
        %v1665 = vpop.permute.xlu0 %1664
        %1666 = vrot.lane.b32.xlu0 %v560, 28
        %v1667 = vpop.permute.xlu0 %1666
        %1668 = vrot.lane.b32.xlu0 %v564, 28
        %v1669 = vpop.permute.xlu0 %1668
        %1670 = vrot.lane.b32.xlu0 %v566, 28
        %v1671 = vpop.permute.xlu0 %1670
        %1672 = vrot.lane.b32.xlu0 %v568, 28
        %v1673 = vpop.permute.xlu0 %1672
        %1674 = vrot.lane.b32.xlu0 %v570, 28
        %v1675 = vpop.permute.xlu0 %1674
        %1676 = vrot.lane.b32.xlu0 %v569, 28
        %v1677 = vpop.permute.xlu0 %1676
        %1678 = vrot.lane.b32.xlu0 %v573, 28
        %v1679 = vpop.permute.xlu0 %1678
        %1680 = vrot.lane.b32.xlu0 %v575, 28
        %v1681 = vpop.permute.xlu0 %1680
        %1682 = vrot.lane.b32.xlu0 %v577, 28
        %v1683 = vpop.permute.xlu0 %1682
        %1684 = vrot.lane.b32.xlu0 %v579, 28
        %v1685 = vpop.permute.xlu0 %1684
        %1686 = vrot.lane.b32.xlu0 %v578, 28
        %v1687 = vpop.permute.xlu0 %1686
        %1688 = vrot.lane.b32.xlu0 %v1128, 28
        %v1689 = vpop.permute.xlu0 %1688
        %1690 = vrot.lane.b32.xlu0 %v1130, 28
        %v1691 = vpop.permute.xlu0 %1690
        %1692 = vrot.lane.b32.xlu0 %v1132, 28
        %v1693 = vpop.permute.xlu0 %1692
        %1694 = vrot.lane.b32.xlu0 %v1134, 28
        %v1695 = vpop.permute.xlu0 %1694
        %1696 = vrot.lane.b32.xlu0 %v1133, 28
        %v1697 = vpop.permute.xlu0 %1696
        %1698 = vrot.lane.b32.xlu0 %v1601, 28
        %v1699 = vpop.permute.xlu0 %1698
        %1700 = vrot.lane.b32.xlu0 %v1603, 28
        %v1701 = vpop.permute.xlu0 %1700
        %1702 = vrot.lane.b32.xlu0 %v1605, 28
        %v1703 = vpop.permute.xlu0 %1702
        %1704 = vrot.lane.b32.xlu0 %v1607, 28
        %v1705 = vpop.permute.xlu0 %1704
        %1706 = vrot.lane.b32.xlu0 %v1606, 28
        %v1707 = vpop.permute.xlu0 %1706
        %v1758 = vrot.slane %v434, 2
        %v1759 = vrot.slane %v435, 2
        %v1760 = vsel %vm730, %v1758, %v1759
        %v1761 = vrot.slane %v436, 2
        %v1762 = vsel %vm730, %v1759, %v1761
        %v1763 = vrot.slane %v437, 2
        %v1764 = vsel %vm730, %v1761, %v1763
        %v1765 = vrot.slane %v438, 2
        %v1766 = vsel %vm730, %v1763, %v1765
        %1767 = vrot.lane.b32.xlu0 %v751, 32
        %v1768 = vpop.permute.xlu0 %1767
        %1769 = vrot.lane.b32.xlu0 %v753, 32
        %v1770 = vpop.permute.xlu0 %1769
        %1771 = vrot.lane.b32.xlu0 %v755, 32
        %v1772 = vpop.permute.xlu0 %1771
        %1773 = vrot.lane.b32.xlu0 %v757, 32
        %v1774 = vpop.permute.xlu0 %1773
        %1775 = vrot.lane.b32.xlu0 %v756, 32
        %v1776 = vpop.permute.xlu0 %1775
        %1777 = vrot.lane.b32.xlu0 %v760, 32
        %v1778 = vpop.permute.xlu0 %1777
        %1779 = vrot.lane.b32.xlu0 %v762, 32
        %v1780 = vpop.permute.xlu0 %1779
        %1781 = vrot.lane.b32.xlu0 %v764, 32
        %v1782 = vpop.permute.xlu0 %1781
        %1783 = vrot.lane.b32.xlu0 %v766, 32
        %v1784 = vpop.permute.xlu0 %1783
        %1785 = vrot.lane.b32.xlu0 %v765, 32
        %v1786 = vpop.permute.xlu0 %1785
        %1787 = vrot.lane.b32.xlu0 %v769, 32
        %v1788 = vpop.permute.xlu0 %1787
        %1789 = vrot.lane.b32.xlu0 %v771, 32
        %v1790 = vpop.permute.xlu0 %1789
        %1791 = vrot.lane.b32.xlu0 %v773, 32
        %v1792 = vpop.permute.xlu0 %1791
        %1793 = vrot.lane.b32.xlu0 %v775, 32
        %v1794 = vpop.permute.xlu0 %1793
        %1795 = vrot.lane.b32.xlu0 %v774, 32
        %v1796 = vpop.permute.xlu0 %1795
        %1797 = vrot.lane.b32.xlu0 %v778, 32
        %v1798 = vpop.permute.xlu0 %1797
        %1799 = vrot.lane.b32.xlu0 %v780, 32
        %v1800 = vpop.permute.xlu0 %1799
        %1801 = vrot.lane.b32.xlu0 %v782, 32
        %v1802 = vpop.permute.xlu0 %1801
        %1803 = vrot.lane.b32.xlu0 %v784, 32
        %v1804 = vpop.permute.xlu0 %1803
        %1805 = vrot.lane.b32.xlu0 %v783, 32
        %v1806 = vpop.permute.xlu0 %1805
        %1807 = vrot.lane.b32.xlu0 %v787, 32
        %v1808 = vpop.permute.xlu0 %1807
        %1809 = vrot.lane.b32.xlu0 %v789, 32
        %v1810 = vpop.permute.xlu0 %1809
        %1811 = vrot.lane.b32.xlu0 %v791, 32
        %v1812 = vpop.permute.xlu0 %1811
        %1813 = vrot.lane.b32.xlu0 %v793, 32
        %v1814 = vpop.permute.xlu0 %1813
        %1815 = vrot.lane.b32.xlu0 %v792, 32
        %v1816 = vpop.permute.xlu0 %1815
        %1817 = vrot.lane.b32.xlu0 %v796, 32
        %v1818 = vpop.permute.xlu0 %1817
        %1819 = vrot.lane.b32.xlu0 %v798, 32
        %v1820 = vpop.permute.xlu0 %1819
        %1821 = vrot.lane.b32.xlu0 %v800, 32
        %v1822 = vpop.permute.xlu0 %1821
        %1823 = vrot.lane.b32.xlu0 %v802, 32
        %v1824 = vpop.permute.xlu0 %1823
        %1825 = vrot.lane.b32.xlu0 %v801, 32
        %v1826 = vpop.permute.xlu0 %1825
        %1827 = vrot.lane.b32.xlu0 %v805, 32
        %v1828 = vpop.permute.xlu0 %1827
        %1829 = vrot.lane.b32.xlu0 %v807, 32
        %v1830 = vpop.permute.xlu0 %1829
        %1831 = vrot.lane.b32.xlu0 %v809, 32
        %v1832 = vpop.permute.xlu0 %1831
        %1833 = vrot.lane.b32.xlu0 %v811, 32
        %v1834 = vpop.permute.xlu0 %1833
        %1835 = vrot.lane.b32.xlu0 %v810, 32
        %v1836 = vpop.permute.xlu0 %1835
        %1837 = vrot.lane.b32.xlu0 %v814, 32
        %v1838 = vpop.permute.xlu0 %1837
        %1839 = vrot.lane.b32.xlu0 %v816, 32
        %v1840 = vpop.permute.xlu0 %1839
        %1841 = vrot.lane.b32.xlu0 %v818, 32
        %v1842 = vpop.permute.xlu0 %1841
        %1843 = vrot.lane.b32.xlu0 %v820, 32
        %v1844 = vpop.permute.xlu0 %1843
        %1845 = vrot.lane.b32.xlu0 %v819, 32
        %v1846 = vpop.permute.xlu0 %1845
        %1847 = vrot.lane.b32.xlu0 %v1287, 32
        %v1848 = vpop.permute.xlu0 %1847
        %1849 = vrot.lane.b32.xlu0 %v1289, 32
        %v1850 = vpop.permute.xlu0 %1849
        %1851 = vrot.lane.b32.xlu0 %v1291, 32
        %v1852 = vpop.permute.xlu0 %1851
        %1853 = vrot.lane.b32.xlu0 %v1293, 32
        %v1854 = vpop.permute.xlu0 %1853
        %1855 = vrot.lane.b32.xlu0 %v1292, 32
        %v1856 = vpop.permute.xlu0 %1855
        %1857 = vrot.lane.b32.xlu0 %v1760, 32
        %v1858 = vpop.permute.xlu0 %1857
        %1859 = vrot.lane.b32.xlu0 %v1762, 32
        %v1860 = vpop.permute.xlu0 %1859
        %1861 = vrot.lane.b32.xlu0 %v1764, 32
        %v1862 = vpop.permute.xlu0 %1861
        %1863 = vrot.lane.b32.xlu0 %v1766, 32
        %v1864 = vpop.permute.xlu0 %1863
        %1865 = vrot.lane.b32.xlu0 %v1765, 32
        %v1866 = vpop.permute.xlu0 %1865
        %vm1917 = vcmask 31744
        %v1918 = vsel %vm1917, %v379, %v581
        %v1919 = vsel %vm1917, %v380, %v583
        %v1920 = vsel %vm1917, %v381, %v585
        %v1921 = vsel %vm1917, %v382, %v587
        %v1922 = vsel %vm1917, %v383, %v589
        %v1923 = vsel %vm1917, %v384, %v591
        %v1924 = vsel %vm1917, %v385, %v593
        %v1925 = vsel %vm1917, %v386, %v595
        %v1926 = vsel %vm1917, %v387, %v597
        %v1927 = vsel %vm1917, %v388, %v599
        %v1928 = vsel %vm1917, %v389, %v601
        %v1929 = vsel %vm1917, %v390, %v603
        %v1930 = vsel %vm1917, %v391, %v605
        %v1931 = vsel %vm1917, %v392, %v607
        %v1932 = vsel %vm1917, %v393, %v609
        %v1933 = vsel %vm1917, %v394, %v611
        %v1934 = vsel %vm1917, %v395, %v613
        %v1935 = vsel %vm1917, %v396, %v615
        %v1936 = vsel %vm1917, %v397, %v617
        %v1937 = vsel %vm1917, %v398, %v619
        %v1938 = vsel %vm1917, %v399, %v621
        %v1939 = vsel %vm1917, %v400, %v623
        %v1940 = vsel %vm1917, %v401, %v625
        %v1941 = vsel %vm1917, %v402, %v627
        %v1942 = vsel %vm1917, %v403, %v629
        %v1943 = vsel %vm1917, %v404, %v631
        %v1944 = vsel %vm1917, %v405, %v633
        %v1945 = vsel %vm1917, %v406, %v635
        %v1946 = vsel %vm1917, %v407, %v637
        %v1947 = vsel %vm1917, %v408, %v639
        %v1948 = vsel %vm1917, %v409, %v641
        %v1949 = vsel %vm1917, %v410, %v643
        %v1950 = vsel %vm1917, %v411, %v645
        %v1951 = vsel %vm1917, %v412, %v647
        %v1952 = vsel %vm1917, %v413, %v649
        %v1953 = vsel %vm1917, %v414, %v651
        %v1954 = vsel %vm1917, %v415, %v653
        %v1955 = vsel %vm1917, %v416, %v655
        %v1956 = vsel %vm1917, %v417, %v657
        %v1957 = vsel %vm1917, %v418, %v659
        %v1958 = vsel %vm1917, %v419, %v661
        %v1959 = vsel %vm1917, %v420, %v663
        %v1960 = vsel %vm1917, %v421, %v665
        %v1961 = vsel %vm1917, %v422, %v667
        %v1962 = vsel %vm1917, %v423, %v669
        %v1963 = vsel %vm1917, %v424, %v671
        %v1964 = vsel %vm1917, %v425, %v673
        %v1965 = vsel %vm1917, %v426, %v675
        %v1966 = vsel %vm1917, %v427, %v677
        %v1967 = vsel %vm1917, %v428, %v679
        %vm1968 = vcmask 64512
        %v1969 = vsel %vm1968, %v1918, %v822
        %v1970 = vsel %vm1968, %v1919, %v824
        %v1971 = vsel %vm1968, %v1920, %v826
        %v1972 = vsel %vm1968, %v1921, %v828
        %v1973 = vsel %vm1968, %v1922, %v830
        %v1974 = vsel %vm1968, %v1923, %v832
        %v1975 = vsel %vm1968, %v1924, %v834
        %v1976 = vsel %vm1968, %v1925, %v836
        %v1977 = vsel %vm1968, %v1926, %v838
        %v1978 = vsel %vm1968, %v1927, %v840
        %v1979 = vsel %vm1968, %v1928, %v842
        %v1980 = vsel %vm1968, %v1929, %v844
        %v1981 = vsel %vm1968, %v1930, %v846
        %v1982 = vsel %vm1968, %v1931, %v848
        %v1983 = vsel %vm1968, %v1932, %v850
        %v1984 = vsel %vm1968, %v1933, %v852
        %v1985 = vsel %vm1968, %v1934, %v854
        %v1986 = vsel %vm1968, %v1935, %v856
        %v1987 = vsel %vm1968, %v1936, %v858
        %v1988 = vsel %vm1968, %v1937, %v860
        %v1989 = vsel %vm1968, %v1938, %v862
        %v1990 = vsel %vm1968, %v1939, %v864
        %v1991 = vsel %vm1968, %v1940, %v866
        %v1992 = vsel %vm1968, %v1941, %v868
        %v1993 = vsel %vm1968, %v1942, %v870
        %v1994 = vsel %vm1968, %v1943, %v872
        %v1995 = vsel %vm1968, %v1944, %v874
        %v1996 = vsel %vm1968, %v1945, %v876
        %v1997 = vsel %vm1968, %v1946, %v878
        %v1998 = vsel %vm1968, %v1947, %v880
        %v1999 = vsel %vm1968, %v1948, %v882
        %v2000 = vsel %vm1968, %v1949, %v884
        %v2001 = vsel %vm1968, %v1950, %v886
        %v2002 = vsel %vm1968, %v1951, %v888
        %v2003 = vsel %vm1968, %v1952, %v890
        %v2004 = vsel %vm1968, %v1953, %v892
        %v2005 = vsel %vm1968, %v1954, %v894
        %v2006 = vsel %vm1968, %v1955, %v896
        %v2007 = vsel %vm1968, %v1956, %v898
        %v2008 = vsel %vm1968, %v1957, %v900
        %v2009 = vsel %vm1968, %v1958, %v902
        %v2010 = vsel %vm1968, %v1959, %v904
        %v2011 = vsel %vm1968, %v1960, %v906
        %v2012 = vsel %vm1968, %v1961, %v908
        %v2013 = vsel %vm1968, %v1962, %v910
        %v2014 = vsel %vm1968, %v1963, %v912
        %v2015 = vsel %vm1968, %v1964, %v914
        %v2016 = vsel %vm1968, %v1965, %v916
        %v2017 = vsel %vm1968, %v1966, %v918
        %v2018 = vsel %vm1968, %v1967, %v920
        %vm2019 = vcmask 97280
        %v2020 = vsel %vm2019, %v1969, %v977
        %v2021 = vsel %vm2019, %v1970, %v979
        %v2022 = vsel %vm2019, %v1971, %v981
        %v2023 = vsel %vm2019, %v1972, %v983
        %v2024 = vsel %vm2019, %v1973, %v985
        %v2025 = vsel %vm2019, %v1974, %v987
        %v2026 = vsel %vm2019, %v1975, %v989
        %v2027 = vsel %vm2019, %v1976, %v991
        %v2028 = vsel %vm2019, %v1977, %v993
        %v2029 = vsel %vm2019, %v1978, %v995
        %v2030 = vsel %vm2019, %v1979, %v997
        %v2031 = vsel %vm2019, %v1980, %v999
        %v2032 = vsel %vm2019, %v1981, %v1001
        %v2033 = vsel %vm2019, %v1982, %v1003
        %v2034 = vsel %vm2019, %v1983, %v1005
        %v2035 = vsel %vm2019, %v1984, %v1007
        %v2036 = vsel %vm2019, %v1985, %v1009
        %v2037 = vsel %vm2019, %v1986, %v1011
        %v2038 = vsel %vm2019, %v1987, %v1013
        %v2039 = vsel %vm2019, %v1988, %v1015
        %v2040 = vsel %vm2019, %v1989, %v1017
        %v2041 = vsel %vm2019, %v1990, %v1019
        %v2042 = vsel %vm2019, %v1991, %v1021
        %v2043 = vsel %vm2019, %v1992, %v1023
        %v2044 = vsel %vm2019, %v1993, %v1025
        %v2045 = vsel %vm2019, %v1994, %v1027
        %v2046 = vsel %vm2019, %v1995, %v1029
        %v2047 = vsel %vm2019, %v1996, %v1031
        %v2048 = vsel %vm2019, %v1997, %v1033
        %v2049 = vsel %vm2019, %v1998, %v1035
        %v2050 = vsel %vm2019, %v1999, %v1037
        %v2051 = vsel %vm2019, %v2000, %v1039
        %v2052 = vsel %vm2019, %v2001, %v1041
        %v2053 = vsel %vm2019, %v2002, %v1043
        %v2054 = vsel %vm2019, %v2003, %v1045
        %v2055 = vsel %vm2019, %v2004, %v1047
        %v2056 = vsel %vm2019, %v2005, %v1049
        %v2057 = vsel %vm2019, %v2006, %v1051
        %v2058 = vsel %vm2019, %v2007, %v1053
        %v2059 = vsel %vm2019, %v2008, %v1055
        %v2060 = vsel %vm2019, %v2009, %v1057
        %v2061 = vsel %vm2019, %v2010, %v1059
        %v2062 = vsel %vm2019, %v2011, %v1061
        %v2063 = vsel %vm2019, %v2012, %v1063
        %v2064 = vsel %vm2019, %v2013, %v1065
        %v2065 = vsel %vm2019, %v2014, %v1067
        %v2066 = vsel %vm2019, %v2015, %v1069
        %v2067 = vsel %vm2019, %v2016, %v1071
        %v2068 = vsel %vm2019, %v2017, %v1073
        %v2069 = vsel %vm2019, %v2018, %v1075
        %vm2070 = vcmask 130048
        %v2071 = vsel %vm2070, %v2020, %v1136
        %v2072 = vsel %vm2070, %v2021, %v1138
        %v2073 = vsel %vm2070, %v2022, %v1140
        %v2074 = vsel %vm2070, %v2023, %v1142
        %v2075 = vsel %vm2070, %v2024, %v1144
        %v2076 = vsel %vm2070, %v2025, %v1146
        %v2077 = vsel %vm2070, %v2026, %v1148
        %v2078 = vsel %vm2070, %v2027, %v1150
        %v2079 = vsel %vm2070, %v2028, %v1152
        %v2080 = vsel %vm2070, %v2029, %v1154
        %v2081 = vsel %vm2070, %v2030, %v1156
        %v2082 = vsel %vm2070, %v2031, %v1158
        %v2083 = vsel %vm2070, %v2032, %v1160
        %v2084 = vsel %vm2070, %v2033, %v1162
        %v2085 = vsel %vm2070, %v2034, %v1164
        %v2086 = vsel %vm2070, %v2035, %v1166
        %v2087 = vsel %vm2070, %v2036, %v1168
        %v2088 = vsel %vm2070, %v2037, %v1170
        %v2089 = vsel %vm2070, %v2038, %v1172
        %v2090 = vsel %vm2070, %v2039, %v1174
        %v2091 = vsel %vm2070, %v2040, %v1176
        %v2092 = vsel %vm2070, %v2041, %v1178
        %v2093 = vsel %vm2070, %v2042, %v1180
        %v2094 = vsel %vm2070, %v2043, %v1182
        %v2095 = vsel %vm2070, %v2044, %v1184
        %v2096 = vsel %vm2070, %v2045, %v1186
        %v2097 = vsel %vm2070, %v2046, %v1188
        %v2098 = vsel %vm2070, %v2047, %v1190
        %v2099 = vsel %vm2070, %v2048, %v1192
        %v2100 = vsel %vm2070, %v2049, %v1194
        %v2101 = vsel %vm2070, %v2050, %v1196
        %v2102 = vsel %vm2070, %v2051, %v1198
        %v2103 = vsel %vm2070, %v2052, %v1200
        %v2104 = vsel %vm2070, %v2053, %v1202
        %v2105 = vsel %vm2070, %v2054, %v1204
        %v2106 = vsel %vm2070, %v2055, %v1206
        %v2107 = vsel %vm2070, %v2056, %v1208
        %v2108 = vsel %vm2070, %v2057, %v1210
        %v2109 = vsel %vm2070, %v2058, %v1212
        %v2110 = vsel %vm2070, %v2059, %v1214
        %v2111 = vsel %vm2070, %v2060, %v1216
        %v2112 = vsel %vm2070, %v2061, %v1218
        %v2113 = vsel %vm2070, %v2062, %v1220
        %v2114 = vsel %vm2070, %v2063, %v1222
        %v2115 = vsel %vm2070, %v2064, %v1224
        %v2116 = vsel %vm2070, %v2065, %v1226
        %v2117 = vsel %vm2070, %v2066, %v1228
        %v2118 = vsel %vm2070, %v2067, %v1230
        %v2119 = vsel %vm2070, %v2068, %v1232
        %v2120 = vsel %vm2070, %v2069, %v1234
        %vm2121 = vcmask 162816
        %v2122 = vsel %vm2121, %v2071, %v1295
        %v2123 = vsel %vm2121, %v2072, %v1297
        %v2124 = vsel %vm2121, %v2073, %v1299
        %v2125 = vsel %vm2121, %v2074, %v1301
        %v2126 = vsel %vm2121, %v2075, %v1303
        %v2127 = vsel %vm2121, %v2076, %v1305
        %v2128 = vsel %vm2121, %v2077, %v1307
        %v2129 = vsel %vm2121, %v2078, %v1309
        %v2130 = vsel %vm2121, %v2079, %v1311
        %v2131 = vsel %vm2121, %v2080, %v1313
        %v2132 = vsel %vm2121, %v2081, %v1315
        %v2133 = vsel %vm2121, %v2082, %v1317
        %v2134 = vsel %vm2121, %v2083, %v1319
        %v2135 = vsel %vm2121, %v2084, %v1321
        %v2136 = vsel %vm2121, %v2085, %v1323
        %v2137 = vsel %vm2121, %v2086, %v1325
        %v2138 = vsel %vm2121, %v2087, %v1327
        %v2139 = vsel %vm2121, %v2088, %v1329
        %v2140 = vsel %vm2121, %v2089, %v1331
        %v2141 = vsel %vm2121, %v2090, %v1333
        %v2142 = vsel %vm2121, %v2091, %v1335
        %v2143 = vsel %vm2121, %v2092, %v1337
        %v2144 = vsel %vm2121, %v2093, %v1339
        %v2145 = vsel %vm2121, %v2094, %v1341
        %v2146 = vsel %vm2121, %v2095, %v1343
        %v2147 = vsel %vm2121, %v2096, %v1345
        %v2148 = vsel %vm2121, %v2097, %v1347
        %v2149 = vsel %vm2121, %v2098, %v1349
        %v2150 = vsel %vm2121, %v2099, %v1351
        %v2151 = vsel %vm2121, %v2100, %v1353
        %v2152 = vsel %vm2121, %v2101, %v1355
        %v2153 = vsel %vm2121, %v2102, %v1357
        %v2154 = vsel %vm2121, %v2103, %v1359
        %v2155 = vsel %vm2121, %v2104, %v1361
        %v2156 = vsel %vm2121, %v2105, %v1363
        %v2157 = vsel %vm2121, %v2106, %v1365
        %v2158 = vsel %vm2121, %v2107, %v1367
        %v2159 = vsel %vm2121, %v2108, %v1369
        %v2160 = vsel %vm2121, %v2109, %v1371
        %v2161 = vsel %vm2121, %v2110, %v1373
        %v2162 = vsel %vm2121, %v2111, %v1375
        %v2163 = vsel %vm2121, %v2112, %v1377
        %v2164 = vsel %vm2121, %v2113, %v1379
        %v2165 = vsel %vm2121, %v2114, %v1381
        %v2166 = vsel %vm2121, %v2115, %v1383
        %v2167 = vsel %vm2121, %v2116, %v1385
        %v2168 = vsel %vm2121, %v2117, %v1387
        %v2169 = vsel %vm2121, %v2118, %v1389
        %v2170 = vsel %vm2121, %v2119, %v1391
        %v2171 = vsel %vm2121, %v2120, %v1393
        %vm2172 = vcmask 195584
        %v2173 = vsel %vm2172, %v2122, %v1450
        %v2174 = vsel %vm2172, %v2123, %v1452
        %v2175 = vsel %vm2172, %v2124, %v1454
        %v2176 = vsel %vm2172, %v2125, %v1456
        %v2177 = vsel %vm2172, %v2126, %v1458
        %v2178 = vsel %vm2172, %v2127, %v1460
        %v2179 = vsel %vm2172, %v2128, %v1462
        %v2180 = vsel %vm2172, %v2129, %v1464
        %v2181 = vsel %vm2172, %v2130, %v1466
        %v2182 = vsel %vm2172, %v2131, %v1468
        %v2183 = vsel %vm2172, %v2132, %v1470
        %v2184 = vsel %vm2172, %v2133, %v1472
        %v2185 = vsel %vm2172, %v2134, %v1474
        %v2186 = vsel %vm2172, %v2135, %v1476
        %v2187 = vsel %vm2172, %v2136, %v1478
        %v2188 = vsel %vm2172, %v2137, %v1480
        %v2189 = vsel %vm2172, %v2138, %v1482
        %v2190 = vsel %vm2172, %v2139, %v1484
        %v2191 = vsel %vm2172, %v2140, %v1486
        %v2192 = vsel %vm2172, %v2141, %v1488
        %v2193 = vsel %vm2172, %v2142, %v1490
        %v2194 = vsel %vm2172, %v2143, %v1492
        %v2195 = vsel %vm2172, %v2144, %v1494
        %v2196 = vsel %vm2172, %v2145, %v1496
        %v2197 = vsel %vm2172, %v2146, %v1498
        %v2198 = vsel %vm2172, %v2147, %v1500
        %v2199 = vsel %vm2172, %v2148, %v1502
        %v2200 = vsel %vm2172, %v2149, %v1504
        %v2201 = vsel %vm2172, %v2150, %v1506
        %v2202 = vsel %vm2172, %v2151, %v1508
        %v2203 = vsel %vm2172, %v2152, %v1510
        %v2204 = vsel %vm2172, %v2153, %v1512
        %v2205 = vsel %vm2172, %v2154, %v1514
        %v2206 = vsel %vm2172, %v2155, %v1516
        %v2207 = vsel %vm2172, %v2156, %v1518
        %v2208 = vsel %vm2172, %v2157, %v1520
        %v2209 = vsel %vm2172, %v2158, %v1522
        %v2210 = vsel %vm2172, %v2159, %v1524
        %v2211 = vsel %vm2172, %v2160, %v1526
        %v2212 = vsel %vm2172, %v2161, %v1528
        %v2213 = vsel %vm2172, %v2162, %v1530
        %v2214 = vsel %vm2172, %v2163, %v1532
        %v2215 = vsel %vm2172, %v2164, %v1534
        %v2216 = vsel %vm2172, %v2165, %v1536
        %v2217 = vsel %vm2172, %v2166, %v1538
        %v2218 = vsel %vm2172, %v2167, %v1540
        %v2219 = vsel %vm2172, %v2168, %v1542
        %v2220 = vsel %vm2172, %v2169, %v1544
        %v2221 = vsel %vm2172, %v2170, %v1546
        %v2222 = vsel %vm2172, %v2171, %v1548
        %vm2223 = vcmask 228352
        %v2224 = vsel %vm2223, %v2173, %v1609
        %v2225 = vsel %vm2223, %v2174, %v1611
        %v2226 = vsel %vm2223, %v2175, %v1613
        %v2227 = vsel %vm2223, %v2176, %v1615
        %v2228 = vsel %vm2223, %v2177, %v1617
        %v2229 = vsel %vm2223, %v2178, %v1619
        %v2230 = vsel %vm2223, %v2179, %v1621
        %v2231 = vsel %vm2223, %v2180, %v1623
        %v2232 = vsel %vm2223, %v2181, %v1625
        %v2233 = vsel %vm2223, %v2182, %v1627
        %v2234 = vsel %vm2223, %v2183, %v1629
        %v2235 = vsel %vm2223, %v2184, %v1631
        %v2236 = vsel %vm2223, %v2185, %v1633
        %v2237 = vsel %vm2223, %v2186, %v1635
        %v2238 = vsel %vm2223, %v2187, %v1637
        %v2239 = vsel %vm2223, %v2188, %v1639
        %v2240 = vsel %vm2223, %v2189, %v1641
        %v2241 = vsel %vm2223, %v2190, %v1643
        %v2242 = vsel %vm2223, %v2191, %v1645
        %v2243 = vsel %vm2223, %v2192, %v1647
        %v2244 = vsel %vm2223, %v2193, %v1649
        %v2245 = vsel %vm2223, %v2194, %v1651
        %v2246 = vsel %vm2223, %v2195, %v1653
        %v2247 = vsel %vm2223, %v2196, %v1655
        %v2248 = vsel %vm2223, %v2197, %v1657
        %v2249 = vsel %vm2223, %v2198, %v1659
        %v2250 = vsel %vm2223, %v2199, %v1661
        %v2251 = vsel %vm2223, %v2200, %v1663
        %v2252 = vsel %vm2223, %v2201, %v1665
        %v2253 = vsel %vm2223, %v2202, %v1667
        %v2254 = vsel %vm2223, %v2203, %v1669
        %v2255 = vsel %vm2223, %v2204, %v1671
        %v2256 = vsel %vm2223, %v2205, %v1673
        %v2257 = vsel %vm2223, %v2206, %v1675
        %v2258 = vsel %vm2223, %v2207, %v1677
        %v2259 = vsel %vm2223, %v2208, %v1679
        %v2260 = vsel %vm2223, %v2209, %v1681
        %v2261 = vsel %vm2223, %v2210, %v1683
        %v2262 = vsel %vm2223, %v2211, %v1685
        %v2263 = vsel %vm2223, %v2212, %v1687
        %v2264 = vsel %vm2223, %v2213, %v1689
        %v2265 = vsel %vm2223, %v2214, %v1691
        %v2266 = vsel %vm2223, %v2215, %v1693
        %v2267 = vsel %vm2223, %v2216, %v1695
        %v2268 = vsel %vm2223, %v2217, %v1697
        %v2269 = vsel %vm2223, %v2218, %v1699
        %v2270 = vsel %vm2223, %v2219, %v1701
        %v2271 = vsel %vm2223, %v2220, %v1703
        %v2272 = vsel %vm2223, %v2221, %v1705
        %v2273 = vsel %vm2223, %v2222, %v1707
        %vm2274 = vcmask 261120
        %v2275 = vsel %vm2274, %v2224, %v1768
        %v2276 = vsel %vm2274, %v2225, %v1770
        %v2277 = vsel %vm2274, %v2226, %v1772
        %v2278 = vsel %vm2274, %v2227, %v1774
        %v2279 = vsel %vm2274, %v2228, %v1776
        %v2280 = vsel %vm2274, %v2229, %v1778
        %v2281 = vsel %vm2274, %v2230, %v1780
        %v2282 = vsel %vm2274, %v2231, %v1782
        %v2283 = vsel %vm2274, %v2232, %v1784
        %v2284 = vsel %vm2274, %v2233, %v1786
        %v2285 = vsel %vm2274, %v2234, %v1788
        %v2286 = vsel %vm2274, %v2235, %v1790
        %v2287 = vsel %vm2274, %v2236, %v1792
        %v2288 = vsel %vm2274, %v2237, %v1794
        %v2289 = vsel %vm2274, %v2238, %v1796
        %v2290 = vsel %vm2274, %v2239, %v1798
        %v2291 = vsel %vm2274, %v2240, %v1800
        %v2292 = vsel %vm2274, %v2241, %v1802
        %v2293 = vsel %vm2274, %v2242, %v1804
        %v2294 = vsel %vm2274, %v2243, %v1806
        %v2295 = vsel %vm2274, %v2244, %v1808
        %v2296 = vsel %vm2274, %v2245, %v1810
        %v2297 = vsel %vm2274, %v2246, %v1812
        %v2298 = vsel %vm2274, %v2247, %v1814
        %v2299 = vsel %vm2274, %v2248, %v1816
        %v2300 = vsel %vm2274, %v2249, %v1818
        %v2301 = vsel %vm2274, %v2250, %v1820
        %v2302 = vsel %vm2274, %v2251, %v1822
        %v2303 = vsel %vm2274, %v2252, %v1824
        %v2304 = vsel %vm2274, %v2253, %v1826
        %v2305 = vsel %vm2274, %v2254, %v1828
        %v2306 = vsel %vm2274, %v2255, %v1830
        %v2307 = vsel %vm2274, %v2256, %v1832
        %v2308 = vsel %vm2274, %v2257, %v1834
        %v2309 = vsel %vm2274, %v2258, %v1836
        %v2310 = vsel %vm2274, %v2259, %v1838
        %v2311 = vsel %vm2274, %v2260, %v1840
        %v2312 = vsel %vm2274, %v2261, %v1842
        %v2313 = vsel %vm2274, %v2262, %v1844
        %v2314 = vsel %vm2274, %v2263, %v1846
        %v2315 = vsel %vm2274, %v2264, %v1848
        %v2316 = vsel %vm2274, %v2265, %v1850
        %v2317 = vsel %vm2274, %v2266, %v1852
        %v2318 = vsel %vm2274, %v2267, %v1854
        %v2319 = vsel %vm2274, %v2268, %v1856
        %v2320 = vsel %vm2274, %v2269, %v1858
        %v2321 = vsel %vm2274, %v2270, %v1860
        %v2322 = vsel %vm2274, %v2271, %v1862
        %v2323 = vsel %vm2274, %v2272, %v1864
        %v2324 = vsel %vm2274, %v2273, %v1866
        %v2375 = vcombine.high %v2275, %v2275
        %v2377 = vunpack.c.l.s4 1983009808
        %v2378 = vunpack.c.0.s8 %v2377
        %v2379 = vlaneseq
        %v2380 = vshrl.u32 %v2379, 7
        %v2381 = vsub.s32 %v2378, %v2380
        %v2382 = vrot.slane %v2275, %v2381
        %v2384 = vunpack.c.l.s4 1983009808
        %v2385 = vunpack.c.0.s8 %v2384
        %v2386 = vlaneseq
        %v2387 = vshrl.u32 %v2386, 7
        %v2388 = vsub.s32 %v2385, %v2387
        %v2389 = vrot.slane %v2375, %v2388
        %v2390 = vcombine.high %v2382, %v2382
        %v2391 = vcombine.high %v2389, %v2389
        %v2392 = vcombine.high %v2276, %v2276
        %v2394 = vunpack.c.l.s4 1983009808
        %v2395 = vunpack.c.0.s8 %v2394
        %v2396 = vlaneseq
        %v2397 = vshrl.u32 %v2396, 7
        %v2398 = vsub.s32 %v2395, %v2397
        %v2399 = vrot.slane %v2276, %v2398
        %v2401 = vunpack.c.l.s4 1983009808
        %v2402 = vunpack.c.0.s8 %v2401
        %v2403 = vlaneseq
        %v2404 = vshrl.u32 %v2403, 7
        %v2405 = vsub.s32 %v2402, %v2404
        %v2406 = vrot.slane %v2392, %v2405
        %v2407 = vcombine.high %v2399, %v2399
        %v2408 = vcombine.high %v2406, %v2406
        %v2409 = vcombine.high %v2277, %v2277
        %v2411 = vunpack.c.l.s4 1983009808
        %v2412 = vunpack.c.0.s8 %v2411
        %v2413 = vlaneseq
        %v2414 = vshrl.u32 %v2413, 7
        %v2415 = vsub.s32 %v2412, %v2414
        %v2416 = vrot.slane %v2277, %v2415
        %v2418 = vunpack.c.l.s4 1983009808
        %v2419 = vunpack.c.0.s8 %v2418
        %v2420 = vlaneseq
        %v2421 = vshrl.u32 %v2420, 7
        %v2422 = vsub.s32 %v2419, %v2421
        %v2423 = vrot.slane %v2409, %v2422
        %v2424 = vcombine.high %v2416, %v2416
        %v2425 = vcombine.high %v2423, %v2423
        %v2426 = vcombine.high %v2278, %v2278
        %v2428 = vunpack.c.l.s4 1983009808
        %v2429 = vunpack.c.0.s8 %v2428
        %v2430 = vlaneseq
        %v2431 = vshrl.u32 %v2430, 7
        %v2432 = vsub.s32 %v2429, %v2431
        %v2433 = vrot.slane %v2278, %v2432
        %v2435 = vunpack.c.l.s4 1983009808
        %v2436 = vunpack.c.0.s8 %v2435
        %v2437 = vlaneseq
        %v2438 = vshrl.u32 %v2437, 7
        %v2439 = vsub.s32 %v2436, %v2438
        %v2440 = vrot.slane %v2426, %v2439
        %v2441 = vcombine.high %v2433, %v2433
        %v2442 = vcombine.high %v2440, %v2440
        %v2444 = vunpack.c.l.s4 1983009808
        %v2445 = vunpack.c.0.s8 %v2444
        %v2446 = vlaneseq
        %v2447 = vshrl.u32 %v2446, 7
        %v2448 = vsub.s32 %v2445, %v2447
        %v2449 = vrot.slane %v2279, %v2448
        %v2450 = vcombine.high %v2280, %v2280
        %v2452 = vunpack.c.l.s4 1983009808
        %v2453 = vunpack.c.0.s8 %v2452
        %v2454 = vlaneseq
        %v2455 = vshrl.u32 %v2454, 7
        %v2456 = vsub.s32 %v2453, %v2455
        %v2457 = vrot.slane %v2280, %v2456
        %v2459 = vunpack.c.l.s4 1983009808
        %v2460 = vunpack.c.0.s8 %v2459
        %v2461 = vlaneseq
        %v2462 = vshrl.u32 %v2461, 7
        %v2463 = vsub.s32 %v2460, %v2462
        %v2464 = vrot.slane %v2450, %v2463
        %v2465 = vcombine.high %v2457, %v2457
        %v2466 = vcombine.high %v2464, %v2464
        %v2467 = vcombine.high %v2281, %v2281
        %v2469 = vunpack.c.l.s4 1983009808
        %v2470 = vunpack.c.0.s8 %v2469
        %v2471 = vlaneseq
        %v2472 = vshrl.u32 %v2471, 7
        %v2473 = vsub.s32 %v2470, %v2472
        %v2474 = vrot.slane %v2281, %v2473
        %v2476 = vunpack.c.l.s4 1983009808
        %v2477 = vunpack.c.0.s8 %v2476
        %v2478 = vlaneseq
        %v2479 = vshrl.u32 %v2478, 7
        %v2480 = vsub.s32 %v2477, %v2479
        %v2481 = vrot.slane %v2467, %v2480
        %v2482 = vcombine.high %v2474, %v2474
        %v2483 = vcombine.high %v2481, %v2481
        %v2484 = vcombine.high %v2282, %v2282
        %v2486 = vunpack.c.l.s4 1983009808
        %v2487 = vunpack.c.0.s8 %v2486
        %v2488 = vlaneseq
        %v2489 = vshrl.u32 %v2488, 7
        %v2490 = vsub.s32 %v2487, %v2489
        %v2491 = vrot.slane %v2282, %v2490
        %v2493 = vunpack.c.l.s4 1983009808
        %v2494 = vunpack.c.0.s8 %v2493
        %v2495 = vlaneseq
        %v2496 = vshrl.u32 %v2495, 7
        %v2497 = vsub.s32 %v2494, %v2496
        %v2498 = vrot.slane %v2484, %v2497
        %v2499 = vcombine.high %v2491, %v2491
        %v2500 = vcombine.high %v2498, %v2498
        %v2501 = vcombine.high %v2283, %v2283
        %v2503 = vunpack.c.l.s4 1983009808
        %v2504 = vunpack.c.0.s8 %v2503
        %v2505 = vlaneseq
        %v2506 = vshrl.u32 %v2505, 7
        %v2507 = vsub.s32 %v2504, %v2506
        %v2508 = vrot.slane %v2283, %v2507
        %v2510 = vunpack.c.l.s4 1983009808
        %v2511 = vunpack.c.0.s8 %v2510
        %v2512 = vlaneseq
        %v2513 = vshrl.u32 %v2512, 7
        %v2514 = vsub.s32 %v2511, %v2513
        %v2515 = vrot.slane %v2501, %v2514
        %v2516 = vcombine.high %v2508, %v2508
        %v2517 = vcombine.high %v2515, %v2515
        %v2519 = vunpack.c.l.s4 1983009808
        %v2520 = vunpack.c.0.s8 %v2519
        %v2521 = vlaneseq
        %v2522 = vshrl.u32 %v2521, 7
        %v2523 = vsub.s32 %v2520, %v2522
        %v2524 = vrot.slane %v2284, %v2523
        %v2525 = vcombine.high %v2285, %v2285
        %v2527 = vunpack.c.l.s4 1983009808
        %v2528 = vunpack.c.0.s8 %v2527
        %v2529 = vlaneseq
        %v2530 = vshrl.u32 %v2529, 7
        %v2531 = vsub.s32 %v2528, %v2530
        %v2532 = vrot.slane %v2285, %v2531
        %v2534 = vunpack.c.l.s4 1983009808
        %v2535 = vunpack.c.0.s8 %v2534
        %v2536 = vlaneseq
        %v2537 = vshrl.u32 %v2536, 7
        %v2538 = vsub.s32 %v2535, %v2537
        %v2539 = vrot.slane %v2525, %v2538
        %v2540 = vcombine.high %v2532, %v2532
        %v2541 = vcombine.high %v2539, %v2539
        %v2542 = vcombine.high %v2286, %v2286
        %v2544 = vunpack.c.l.s4 1983009808
        %v2545 = vunpack.c.0.s8 %v2544
        %v2546 = vlaneseq
        %v2547 = vshrl.u32 %v2546, 7
        %v2548 = vsub.s32 %v2545, %v2547
        %v2549 = vrot.slane %v2286, %v2548
        %v2551 = vunpack.c.l.s4 1983009808
        %v2552 = vunpack.c.0.s8 %v2551
        %v2553 = vlaneseq
        %v2554 = vshrl.u32 %v2553, 7
        %v2555 = vsub.s32 %v2552, %v2554
        %v2556 = vrot.slane %v2542, %v2555
        %v2557 = vcombine.high %v2549, %v2549
        %v2558 = vcombine.high %v2556, %v2556
        %v2559 = vcombine.high %v2287, %v2287
        %v2561 = vunpack.c.l.s4 1983009808
        %v2562 = vunpack.c.0.s8 %v2561
        %v2563 = vlaneseq
        %v2564 = vshrl.u32 %v2563, 7
        %v2565 = vsub.s32 %v2562, %v2564
        %v2566 = vrot.slane %v2287, %v2565
        %v2568 = vunpack.c.l.s4 1983009808
        %v2569 = vunpack.c.0.s8 %v2568
        %v2570 = vlaneseq
        %v2571 = vshrl.u32 %v2570, 7
        %v2572 = vsub.s32 %v2569, %v2571
        %v2573 = vrot.slane %v2559, %v2572
        %v2574 = vcombine.high %v2566, %v2566
        %v2575 = vcombine.high %v2573, %v2573
        %v2576 = vcombine.high %v2288, %v2288
        %v2578 = vunpack.c.l.s4 1983009808
        %v2579 = vunpack.c.0.s8 %v2578
        %v2580 = vlaneseq
        %v2581 = vshrl.u32 %v2580, 7
        %v2582 = vsub.s32 %v2579, %v2581
        %v2583 = vrot.slane %v2288, %v2582
        %v2585 = vunpack.c.l.s4 1983009808
        %v2586 = vunpack.c.0.s8 %v2585
        %v2587 = vlaneseq
        %v2588 = vshrl.u32 %v2587, 7
        %v2589 = vsub.s32 %v2586, %v2588
        %v2590 = vrot.slane %v2576, %v2589
        %v2591 = vcombine.high %v2583, %v2583
        %v2592 = vcombine.high %v2590, %v2590
        %v2594 = vunpack.c.l.s4 1983009808
        %v2595 = vunpack.c.0.s8 %v2594
        %v2596 = vlaneseq
        %v2597 = vshrl.u32 %v2596, 7
        %v2598 = vsub.s32 %v2595, %v2597
        %v2599 = vrot.slane %v2289, %v2598
        %v2600 = vcombine.high %v2290, %v2290
        %v2602 = vunpack.c.l.s4 1983009808
        %v2603 = vunpack.c.0.s8 %v2602
        %v2604 = vlaneseq
        %v2605 = vshrl.u32 %v2604, 7
        %v2606 = vsub.s32 %v2603, %v2605
        %v2607 = vrot.slane %v2290, %v2606
        %v2609 = vunpack.c.l.s4 1983009808
        %v2610 = vunpack.c.0.s8 %v2609
        %v2611 = vlaneseq
        %v2612 = vshrl.u32 %v2611, 7
        %v2613 = vsub.s32 %v2610, %v2612
        %v2614 = vrot.slane %v2600, %v2613
        %v2615 = vcombine.high %v2607, %v2607
        %v2616 = vcombine.high %v2614, %v2614
        %v2617 = vcombine.high %v2291, %v2291
        %v2619 = vunpack.c.l.s4 1983009808
        %v2620 = vunpack.c.0.s8 %v2619
        %v2621 = vlaneseq
        %v2622 = vshrl.u32 %v2621, 7
        %v2623 = vsub.s32 %v2620, %v2622
        %v2624 = vrot.slane %v2291, %v2623
        %v2626 = vunpack.c.l.s4 1983009808
        %v2627 = vunpack.c.0.s8 %v2626
        %v2628 = vlaneseq
        %v2629 = vshrl.u32 %v2628, 7
        %v2630 = vsub.s32 %v2627, %v2629
        %v2631 = vrot.slane %v2617, %v2630
        %v2632 = vcombine.high %v2624, %v2624
        %v2633 = vcombine.high %v2631, %v2631
        %v2634 = vcombine.high %v2292, %v2292
        %v2636 = vunpack.c.l.s4 1983009808
        %v2637 = vunpack.c.0.s8 %v2636
        %v2638 = vlaneseq
        %v2639 = vshrl.u32 %v2638, 7
        %v2640 = vsub.s32 %v2637, %v2639
        %v2641 = vrot.slane %v2292, %v2640
        %v2643 = vunpack.c.l.s4 1983009808
        %v2644 = vunpack.c.0.s8 %v2643
        %v2645 = vlaneseq
        %v2646 = vshrl.u32 %v2645, 7
        %v2647 = vsub.s32 %v2644, %v2646
        %v2648 = vrot.slane %v2634, %v2647
        %v2649 = vcombine.high %v2641, %v2641
        %v2650 = vcombine.high %v2648, %v2648
        %v2651 = vcombine.high %v2293, %v2293
        %v2653 = vunpack.c.l.s4 1983009808
        %v2654 = vunpack.c.0.s8 %v2653
        %v2655 = vlaneseq
        %v2656 = vshrl.u32 %v2655, 7
        %v2657 = vsub.s32 %v2654, %v2656
        %v2658 = vrot.slane %v2293, %v2657
        %v2660 = vunpack.c.l.s4 1983009808
        %v2661 = vunpack.c.0.s8 %v2660
        %v2662 = vlaneseq
        %v2663 = vshrl.u32 %v2662, 7
        %v2664 = vsub.s32 %v2661, %v2663
        %v2665 = vrot.slane %v2651, %v2664
        %v2666 = vcombine.high %v2658, %v2658
        %v2667 = vcombine.high %v2665, %v2665
        %v2669 = vunpack.c.l.s4 1983009808
        %v2670 = vunpack.c.0.s8 %v2669
        %v2671 = vlaneseq
        %v2672 = vshrl.u32 %v2671, 7
        %v2673 = vsub.s32 %v2670, %v2672
        %v2674 = vrot.slane %v2294, %v2673
        %v2675 = vcombine.high %v2295, %v2295
        %v2677 = vunpack.c.l.s4 1983009808
        %v2678 = vunpack.c.0.s8 %v2677
        %v2679 = vlaneseq
        %v2680 = vshrl.u32 %v2679, 7
        %v2681 = vsub.s32 %v2678, %v2680
        %v2682 = vrot.slane %v2295, %v2681
        %v2684 = vunpack.c.l.s4 1983009808
        %v2685 = vunpack.c.0.s8 %v2684
        %v2686 = vlaneseq
        %v2687 = vshrl.u32 %v2686, 7
        %v2688 = vsub.s32 %v2685, %v2687
        %v2689 = vrot.slane %v2675, %v2688
        %v2690 = vcombine.high %v2682, %v2682
        %v2691 = vcombine.high %v2689, %v2689
        %v2692 = vcombine.high %v2296, %v2296
        %v2694 = vunpack.c.l.s4 1983009808
        %v2695 = vunpack.c.0.s8 %v2694
        %v2696 = vlaneseq
        %v2697 = vshrl.u32 %v2696, 7
        %v2698 = vsub.s32 %v2695, %v2697
        %v2699 = vrot.slane %v2296, %v2698
        %v2701 = vunpack.c.l.s4 1983009808
        %v2702 = vunpack.c.0.s8 %v2701
        %v2703 = vlaneseq
        %v2704 = vshrl.u32 %v2703, 7
        %v2705 = vsub.s32 %v2702, %v2704
        %v2706 = vrot.slane %v2692, %v2705
        %v2707 = vcombine.high %v2699, %v2699
        %v2708 = vcombine.high %v2706, %v2706
        %v2709 = vcombine.high %v2297, %v2297
        %v2711 = vunpack.c.l.s4 1983009808
        %v2712 = vunpack.c.0.s8 %v2711
        %v2713 = vlaneseq
        %v2714 = vshrl.u32 %v2713, 7
        %v2715 = vsub.s32 %v2712, %v2714
        %v2716 = vrot.slane %v2297, %v2715
        %v2718 = vunpack.c.l.s4 1983009808
        %v2719 = vunpack.c.0.s8 %v2718
        %v2720 = vlaneseq
        %v2721 = vshrl.u32 %v2720, 7
        %v2722 = vsub.s32 %v2719, %v2721
        %v2723 = vrot.slane %v2709, %v2722
        %v2724 = vcombine.high %v2716, %v2716
        %v2725 = vcombine.high %v2723, %v2723
        %v2726 = vcombine.high %v2298, %v2298
        %v2728 = vunpack.c.l.s4 1983009808
        %v2729 = vunpack.c.0.s8 %v2728
        %v2730 = vlaneseq
        %v2731 = vshrl.u32 %v2730, 7
        %v2732 = vsub.s32 %v2729, %v2731
        %v2733 = vrot.slane %v2298, %v2732
        %v2735 = vunpack.c.l.s4 1983009808
        %v2736 = vunpack.c.0.s8 %v2735
        %v2737 = vlaneseq
        %v2738 = vshrl.u32 %v2737, 7
        %v2739 = vsub.s32 %v2736, %v2738
        %v2740 = vrot.slane %v2726, %v2739
        %v2741 = vcombine.high %v2733, %v2733
        %v2742 = vcombine.high %v2740, %v2740
        %v2744 = vunpack.c.l.s4 1983009808
        %v2745 = vunpack.c.0.s8 %v2744
        %v2746 = vlaneseq
        %v2747 = vshrl.u32 %v2746, 7
        %v2748 = vsub.s32 %v2745, %v2747
        %v2749 = vrot.slane %v2299, %v2748
        %v2750 = vcombine.high %v2300, %v2300
        %v2752 = vunpack.c.l.s4 1983009808
        %v2753 = vunpack.c.0.s8 %v2752
        %v2754 = vlaneseq
        %v2755 = vshrl.u32 %v2754, 7
        %v2756 = vsub.s32 %v2753, %v2755
        %v2757 = vrot.slane %v2300, %v2756
        %v2759 = vunpack.c.l.s4 1983009808
        %v2760 = vunpack.c.0.s8 %v2759
        %v2761 = vlaneseq
        %v2762 = vshrl.u32 %v2761, 7
        %v2763 = vsub.s32 %v2760, %v2762
        %v2764 = vrot.slane %v2750, %v2763
        %v2765 = vcombine.high %v2757, %v2757
        %v2766 = vcombine.high %v2764, %v2764
        %v2767 = vcombine.high %v2301, %v2301
        %v2769 = vunpack.c.l.s4 1983009808
        %v2770 = vunpack.c.0.s8 %v2769
        %v2771 = vlaneseq
        %v2772 = vshrl.u32 %v2771, 7
        %v2773 = vsub.s32 %v2770, %v2772
        %v2774 = vrot.slane %v2301, %v2773
        %v2776 = vunpack.c.l.s4 1983009808
        %v2777 = vunpack.c.0.s8 %v2776
        %v2778 = vlaneseq
        %v2779 = vshrl.u32 %v2778, 7
        %v2780 = vsub.s32 %v2777, %v2779
        %v2781 = vrot.slane %v2767, %v2780
        %v2782 = vcombine.high %v2774, %v2774
        %v2783 = vcombine.high %v2781, %v2781
        %v2784 = vcombine.high %v2302, %v2302
        %v2786 = vunpack.c.l.s4 1983009808
        %v2787 = vunpack.c.0.s8 %v2786
        %v2788 = vlaneseq
        %v2789 = vshrl.u32 %v2788, 7
        %v2790 = vsub.s32 %v2787, %v2789
        %v2791 = vrot.slane %v2302, %v2790
        %v2793 = vunpack.c.l.s4 1983009808
        %v2794 = vunpack.c.0.s8 %v2793
        %v2795 = vlaneseq
        %v2796 = vshrl.u32 %v2795, 7
        %v2797 = vsub.s32 %v2794, %v2796
        %v2798 = vrot.slane %v2784, %v2797
        %v2799 = vcombine.high %v2791, %v2791
        %v2800 = vcombine.high %v2798, %v2798
        %v2801 = vcombine.high %v2303, %v2303
        %v2803 = vunpack.c.l.s4 1983009808
        %v2804 = vunpack.c.0.s8 %v2803
        %v2805 = vlaneseq
        %v2806 = vshrl.u32 %v2805, 7
        %v2807 = vsub.s32 %v2804, %v2806
        %v2808 = vrot.slane %v2303, %v2807
        %v2810 = vunpack.c.l.s4 1983009808
        %v2811 = vunpack.c.0.s8 %v2810
        %v2812 = vlaneseq
        %v2813 = vshrl.u32 %v2812, 7
        %v2814 = vsub.s32 %v2811, %v2813
        %v2815 = vrot.slane %v2801, %v2814
        %v2816 = vcombine.high %v2808, %v2808
        %v2817 = vcombine.high %v2815, %v2815
        %v2819 = vunpack.c.l.s4 1983009808
        %v2820 = vunpack.c.0.s8 %v2819
        %v2821 = vlaneseq
        %v2822 = vshrl.u32 %v2821, 7
        %v2823 = vsub.s32 %v2820, %v2822
        %v2824 = vrot.slane %v2304, %v2823
        %v2825 = vcombine.high %v2305, %v2305
        %v2827 = vunpack.c.l.s4 1983009808
        %v2828 = vunpack.c.0.s8 %v2827
        %v2829 = vlaneseq
        %v2830 = vshrl.u32 %v2829, 7
        %v2831 = vsub.s32 %v2828, %v2830
        %v2832 = vrot.slane %v2305, %v2831
        %v2834 = vunpack.c.l.s4 1983009808
        %v2835 = vunpack.c.0.s8 %v2834
        %v2836 = vlaneseq
        %v2837 = vshrl.u32 %v2836, 7
        %v2838 = vsub.s32 %v2835, %v2837
        %v2839 = vrot.slane %v2825, %v2838
        %v2840 = vcombine.high %v2832, %v2832
        %v2841 = vcombine.high %v2839, %v2839
        %v2842 = vcombine.high %v2306, %v2306
        %v2844 = vunpack.c.l.s4 1983009808
        %v2845 = vunpack.c.0.s8 %v2844
        %v2846 = vlaneseq
        %v2847 = vshrl.u32 %v2846, 7
        %v2848 = vsub.s32 %v2845, %v2847
        %v2849 = vrot.slane %v2306, %v2848
        %v2851 = vunpack.c.l.s4 1983009808
        %v2852 = vunpack.c.0.s8 %v2851
        %v2853 = vlaneseq
        %v2854 = vshrl.u32 %v2853, 7
        %v2855 = vsub.s32 %v2852, %v2854
        %v2856 = vrot.slane %v2842, %v2855
        %v2857 = vcombine.high %v2849, %v2849
        %v2858 = vcombine.high %v2856, %v2856
        %v2859 = vcombine.high %v2307, %v2307
        %v2861 = vunpack.c.l.s4 1983009808
        %v2862 = vunpack.c.0.s8 %v2861
        %v2863 = vlaneseq
        %v2864 = vshrl.u32 %v2863, 7
        %v2865 = vsub.s32 %v2862, %v2864
        %v2866 = vrot.slane %v2307, %v2865
        %v2868 = vunpack.c.l.s4 1983009808
        %v2869 = vunpack.c.0.s8 %v2868
        %v2870 = vlaneseq
        %v2871 = vshrl.u32 %v2870, 7
        %v2872 = vsub.s32 %v2869, %v2871
        %v2873 = vrot.slane %v2859, %v2872
        %v2874 = vcombine.high %v2866, %v2866
        %v2875 = vcombine.high %v2873, %v2873
        %v2876 = vcombine.high %v2308, %v2308
        %v2878 = vunpack.c.l.s4 1983009808
        %v2879 = vunpack.c.0.s8 %v2878
        %v2880 = vlaneseq
        %v2881 = vshrl.u32 %v2880, 7
        %v2882 = vsub.s32 %v2879, %v2881
        %v2883 = vrot.slane %v2308, %v2882
        %v2885 = vunpack.c.l.s4 1983009808
        %v2886 = vunpack.c.0.s8 %v2885
        %v2887 = vlaneseq
        %v2888 = vshrl.u32 %v2887, 7
        %v2889 = vsub.s32 %v2886, %v2888
        %v2890 = vrot.slane %v2876, %v2889
        %v2891 = vcombine.high %v2883, %v2883
        %v2892 = vcombine.high %v2890, %v2890
        %v2894 = vunpack.c.l.s4 1983009808
        %v2895 = vunpack.c.0.s8 %v2894
        %v2896 = vlaneseq
        %v2897 = vshrl.u32 %v2896, 7
        %v2898 = vsub.s32 %v2895, %v2897
        %v2899 = vrot.slane %v2309, %v2898
        %v2900 = vcombine.high %v2310, %v2310
        %v2902 = vunpack.c.l.s4 1983009808
        %v2903 = vunpack.c.0.s8 %v2902
        %v2904 = vlaneseq
        %v2905 = vshrl.u32 %v2904, 7
        %v2906 = vsub.s32 %v2903, %v2905
        %v2907 = vrot.slane %v2310, %v2906
        %v2909 = vunpack.c.l.s4 1983009808
        %v2910 = vunpack.c.0.s8 %v2909
        %v2911 = vlaneseq
        %v2912 = vshrl.u32 %v2911, 7
        %v2913 = vsub.s32 %v2910, %v2912
        %v2914 = vrot.slane %v2900, %v2913
        %v2915 = vcombine.high %v2907, %v2907
        %v2916 = vcombine.high %v2914, %v2914
        %v2917 = vcombine.high %v2311, %v2311
        %v2919 = vunpack.c.l.s4 1983009808
        %v2920 = vunpack.c.0.s8 %v2919
        %v2921 = vlaneseq
        %v2922 = vshrl.u32 %v2921, 7
        %v2923 = vsub.s32 %v2920, %v2922
        %v2924 = vrot.slane %v2311, %v2923
        %v2926 = vunpack.c.l.s4 1983009808
        %v2927 = vunpack.c.0.s8 %v2926
        %v2928 = vlaneseq
        %v2929 = vshrl.u32 %v2928, 7
        %v2930 = vsub.s32 %v2927, %v2929
        %v2931 = vrot.slane %v2917, %v2930
        %v2932 = vcombine.high %v2924, %v2924
        %v2933 = vcombine.high %v2931, %v2931
        %v2934 = vcombine.high %v2312, %v2312
        %v2936 = vunpack.c.l.s4 1983009808
        %v2937 = vunpack.c.0.s8 %v2936
        %v2938 = vlaneseq
        %v2939 = vshrl.u32 %v2938, 7
        %v2940 = vsub.s32 %v2937, %v2939
        %v2941 = vrot.slane %v2312, %v2940
        %v2943 = vunpack.c.l.s4 1983009808
        %v2944 = vunpack.c.0.s8 %v2943
        %v2945 = vlaneseq
        %v2946 = vshrl.u32 %v2945, 7
        %v2947 = vsub.s32 %v2944, %v2946
        %v2948 = vrot.slane %v2934, %v2947
        %v2949 = vcombine.high %v2941, %v2941
        %v2950 = vcombine.high %v2948, %v2948
        %v2951 = vcombine.high %v2313, %v2313
        %v2953 = vunpack.c.l.s4 1983009808
        %v2954 = vunpack.c.0.s8 %v2953
        %v2955 = vlaneseq
        %v2956 = vshrl.u32 %v2955, 7
        %v2957 = vsub.s32 %v2954, %v2956
        %v2958 = vrot.slane %v2313, %v2957
        %v2960 = vunpack.c.l.s4 1983009808
        %v2961 = vunpack.c.0.s8 %v2960
        %v2962 = vlaneseq
        %v2963 = vshrl.u32 %v2962, 7
        %v2964 = vsub.s32 %v2961, %v2963
        %v2965 = vrot.slane %v2951, %v2964
        %v2966 = vcombine.high %v2958, %v2958
        %v2967 = vcombine.high %v2965, %v2965
        %v2969 = vunpack.c.l.s4 1983009808
        %v2970 = vunpack.c.0.s8 %v2969
        %v2971 = vlaneseq
        %v2972 = vshrl.u32 %v2971, 7
        %v2973 = vsub.s32 %v2970, %v2972
        %v2974 = vrot.slane %v2314, %v2973
        %v2975 = vcombine.high %v2315, %v2315
        %v2977 = vunpack.c.l.s4 1983009808
        %v2978 = vunpack.c.0.s8 %v2977
        %v2979 = vlaneseq
        %v2980 = vshrl.u32 %v2979, 7
        %v2981 = vsub.s32 %v2978, %v2980
        %v2982 = vrot.slane %v2315, %v2981
        %v2984 = vunpack.c.l.s4 1983009808
        %v2985 = vunpack.c.0.s8 %v2984
        %v2986 = vlaneseq
        %v2987 = vshrl.u32 %v2986, 7
        %v2988 = vsub.s32 %v2985, %v2987
        %v2989 = vrot.slane %v2975, %v2988
        %v2990 = vcombine.high %v2982, %v2982
        %v2991 = vcombine.high %v2989, %v2989
        %v2992 = vcombine.high %v2316, %v2316
        %v2994 = vunpack.c.l.s4 1983009808
        %v2995 = vunpack.c.0.s8 %v2994
        %v2996 = vlaneseq
        %v2997 = vshrl.u32 %v2996, 7
        %v2998 = vsub.s32 %v2995, %v2997
        %v2999 = vrot.slane %v2316, %v2998
        %v3001 = vunpack.c.l.s4 1983009808
        %v3002 = vunpack.c.0.s8 %v3001
        %v3003 = vlaneseq
        %v3004 = vshrl.u32 %v3003, 7
        %v3005 = vsub.s32 %v3002, %v3004
        %v3006 = vrot.slane %v2992, %v3005
        %v3007 = vcombine.high %v2999, %v2999
        %v3008 = vcombine.high %v3006, %v3006
        %v3009 = vcombine.high %v2317, %v2317
        %v3011 = vunpack.c.l.s4 1983009808
        %v3012 = vunpack.c.0.s8 %v3011
        %v3013 = vlaneseq
        %v3014 = vshrl.u32 %v3013, 7
        %v3015 = vsub.s32 %v3012, %v3014
        %v3016 = vrot.slane %v2317, %v3015
        %v3018 = vunpack.c.l.s4 1983009808
        %v3019 = vunpack.c.0.s8 %v3018
        %v3020 = vlaneseq
        %v3021 = vshrl.u32 %v3020, 7
        %v3022 = vsub.s32 %v3019, %v3021
        %v3023 = vrot.slane %v3009, %v3022
        %v3024 = vcombine.high %v3016, %v3016
        %v3025 = vcombine.high %v3023, %v3023
        %v3026 = vcombine.high %v2318, %v2318
        %v3028 = vunpack.c.l.s4 1983009808
        %v3029 = vunpack.c.0.s8 %v3028
        %v3030 = vlaneseq
        %v3031 = vshrl.u32 %v3030, 7
        %v3032 = vsub.s32 %v3029, %v3031
        %v3033 = vrot.slane %v2318, %v3032
        %v3035 = vunpack.c.l.s4 1983009808
        %v3036 = vunpack.c.0.s8 %v3035
        %v3037 = vlaneseq
        %v3038 = vshrl.u32 %v3037, 7
        %v3039 = vsub.s32 %v3036, %v3038
        %v3040 = vrot.slane %v3026, %v3039
        %v3041 = vcombine.high %v3033, %v3033
        %v3042 = vcombine.high %v3040, %v3040
        %v3044 = vunpack.c.l.s4 1983009808
        %v3045 = vunpack.c.0.s8 %v3044
        %v3046 = vlaneseq
        %v3047 = vshrl.u32 %v3046, 7
        %v3048 = vsub.s32 %v3045, %v3047
        %v3049 = vrot.slane %v2319, %v3048
        %v3050 = vcombine.high %v2320, %v2320
        %v3052 = vunpack.c.l.s4 1983009808
        %v3053 = vunpack.c.0.s8 %v3052
        %v3054 = vlaneseq
        %v3055 = vshrl.u32 %v3054, 7
        %v3056 = vsub.s32 %v3053, %v3055
        %v3057 = vrot.slane %v2320, %v3056
        %v3059 = vunpack.c.l.s4 1983009808
        %v3060 = vunpack.c.0.s8 %v3059
        %v3061 = vlaneseq
        %v3062 = vshrl.u32 %v3061, 7
        %v3063 = vsub.s32 %v3060, %v3062
        %v3064 = vrot.slane %v3050, %v3063
        %v3065 = vcombine.high %v3057, %v3057
        %v3066 = vcombine.high %v3064, %v3064
        %v3067 = vcombine.high %v2321, %v2321
        %v3069 = vunpack.c.l.s4 1983009808
        %v3070 = vunpack.c.0.s8 %v3069
        %v3071 = vlaneseq
        %v3072 = vshrl.u32 %v3071, 7
        %v3073 = vsub.s32 %v3070, %v3072
        %v3074 = vrot.slane %v2321, %v3073
        %v3076 = vunpack.c.l.s4 1983009808
        %v3077 = vunpack.c.0.s8 %v3076
        %v3078 = vlaneseq
        %v3079 = vshrl.u32 %v3078, 7
        %v3080 = vsub.s32 %v3077, %v3079
        %v3081 = vrot.slane %v3067, %v3080
        %v3082 = vcombine.high %v3074, %v3074
        %v3083 = vcombine.high %v3081, %v3081
        %v3084 = vcombine.high %v2322, %v2322
        %v3086 = vunpack.c.l.s4 1983009808
        %v3087 = vunpack.c.0.s8 %v3086
        %v3088 = vlaneseq
        %v3089 = vshrl.u32 %v3088, 7
        %v3090 = vsub.s32 %v3087, %v3089
        %v3091 = vrot.slane %v2322, %v3090
        %v3093 = vunpack.c.l.s4 1983009808
        %v3094 = vunpack.c.0.s8 %v3093
        %v3095 = vlaneseq
        %v3096 = vshrl.u32 %v3095, 7
        %v3097 = vsub.s32 %v3094, %v3096
        %v3098 = vrot.slane %v3084, %v3097
        %v3099 = vcombine.high %v3091, %v3091
        %v3100 = vcombine.high %v3098, %v3098
        %v3101 = vcombine.high %v2323, %v2323
        %v3103 = vunpack.c.l.s4 1983009808
        %v3104 = vunpack.c.0.s8 %v3103
        %v3105 = vlaneseq
        %v3106 = vshrl.u32 %v3105, 7
        %v3107 = vsub.s32 %v3104, %v3106
        %v3108 = vrot.slane %v2323, %v3107
        %v3110 = vunpack.c.l.s4 1983009808
        %v3111 = vunpack.c.0.s8 %v3110
        %v3112 = vlaneseq
        %v3113 = vshrl.u32 %v3112, 7
        %v3114 = vsub.s32 %v3111, %v3113
        %v3115 = vrot.slane %v3101, %v3114
        %v3116 = vcombine.high %v3108, %v3108
        %v3117 = vcombine.high %v3115, %v3115
        %v3119 = vunpack.c.l.s4 1983009808
        %v3120 = vunpack.c.0.s8 %v3119
        %v3121 = vlaneseq
        %v3122 = vshrl.u32 %v3121, 7
        %v3123 = vsub.s32 %v3120, %v3122
        %v3124 = vrot.slane %v2324, %v3123
        %v3125 = vcombine.low %v2382, %v2390
        %v3126 = vcombine.low %v2389, %v2391
        %v3128 = vunpack.c.l.s4 1983009808
        %v3129 = vunpack.c.0.s8 %v3128
        %v3130 = vlaneseq
        %v3131 = vshrl.u32 %v3130, 7
        %v3132 = vsub.s32 %v3129, %v3131
        %v3133 = vrot.slane %v3125, %v3132
        %v3135 = vunpack.c.l.s4 1983009808
        %v3136 = vunpack.c.0.s8 %v3135
        %v3137 = vlaneseq
        %v3138 = vshrl.u32 %v3137, 7
        %v3139 = vsub.s32 %v3136, %v3138
        %v3140 = vrot.slane %v3126, %v3139
        %v3141 = vcombine.low %v3133, %v3140
        %v3142 = vcombine.low %v2399, %v2407
        %v3143 = vcombine.low %v2406, %v2408
        %v3145 = vunpack.c.l.s4 1983009808
        %v3146 = vunpack.c.0.s8 %v3145
        %v3147 = vlaneseq
        %v3148 = vshrl.u32 %v3147, 7
        %v3149 = vsub.s32 %v3146, %v3148
        %v3150 = vrot.slane %v3142, %v3149
        %v3152 = vunpack.c.l.s4 1983009808
        %v3153 = vunpack.c.0.s8 %v3152
        %v3154 = vlaneseq
        %v3155 = vshrl.u32 %v3154, 7
        %v3156 = vsub.s32 %v3153, %v3155
        %v3157 = vrot.slane %v3143, %v3156
        %v3158 = vcombine.low %v3150, %v3157
        %v3159 = vcombine.low %v2416, %v2424
        %v3160 = vcombine.low %v2423, %v2425
        %v3162 = vunpack.c.l.s4 1983009808
        %v3163 = vunpack.c.0.s8 %v3162
        %v3164 = vlaneseq
        %v3165 = vshrl.u32 %v3164, 7
        %v3166 = vsub.s32 %v3163, %v3165
        %v3167 = vrot.slane %v3159, %v3166
        %v3169 = vunpack.c.l.s4 1983009808
        %v3170 = vunpack.c.0.s8 %v3169
        %v3171 = vlaneseq
        %v3172 = vshrl.u32 %v3171, 7
        %v3173 = vsub.s32 %v3170, %v3172
        %v3174 = vrot.slane %v3160, %v3173
        %v3175 = vcombine.low %v3167, %v3174
        %v3176 = vcombine.low %v2433, %v2441
        %v3177 = vcombine.low %v2440, %v2442
        %v3179 = vunpack.c.l.s4 1983009808
        %v3180 = vunpack.c.0.s8 %v3179
        %v3181 = vlaneseq
        %v3182 = vshrl.u32 %v3181, 7
        %v3183 = vsub.s32 %v3180, %v3182
        %v3184 = vrot.slane %v3176, %v3183
        %v3186 = vunpack.c.l.s4 1983009808
        %v3187 = vunpack.c.0.s8 %v3186
        %v3188 = vlaneseq
        %v3189 = vshrl.u32 %v3188, 7
        %v3190 = vsub.s32 %v3187, %v3189
        %v3191 = vrot.slane %v3177, %v3190
        %v3192 = vcombine.low %v3184, %v3191
        %v3193 = vcombine.low %v2449, %v2457
        %v3194 = vcombine.low %v2465, %v2464
        %v3196 = vunpack.c.l.s4 1983009808
        %v3197 = vunpack.c.0.s8 %v3196
        %v3198 = vlaneseq
        %v3199 = vshrl.u32 %v3198, 7
        %v3200 = vsub.s32 %v3197, %v3199
        %v3201 = vrot.slane %v3193, %v3200
        %v3203 = vunpack.c.l.s4 1983009808
        %v3204 = vunpack.c.0.s8 %v3203
        %v3205 = vlaneseq
        %v3206 = vshrl.u32 %v3205, 7
        %v3207 = vsub.s32 %v3204, %v3206
        %v3208 = vrot.slane %v3194, %v3207
        %v3209 = vcombine.low %v3201, %v3208
        %v3210 = vcombine.low %v2466, %v2474
        %v3211 = vcombine.low %v2482, %v2481
        %v3213 = vunpack.c.l.s4 1983009808
        %v3214 = vunpack.c.0.s8 %v3213
        %v3215 = vlaneseq
        %v3216 = vshrl.u32 %v3215, 7
        %v3217 = vsub.s32 %v3214, %v3216
        %v3218 = vrot.slane %v3210, %v3217
        %v3220 = vunpack.c.l.s4 1983009808
        %v3221 = vunpack.c.0.s8 %v3220
        %v3222 = vlaneseq
        %v3223 = vshrl.u32 %v3222, 7
        %v3224 = vsub.s32 %v3221, %v3223
        %v3225 = vrot.slane %v3211, %v3224
        %v3226 = vcombine.low %v3218, %v3225
        %v3227 = vcombine.low %v2483, %v2491
        %v3228 = vcombine.low %v2499, %v2498
        %v3230 = vunpack.c.l.s4 1983009808
        %v3231 = vunpack.c.0.s8 %v3230
        %v3232 = vlaneseq
        %v3233 = vshrl.u32 %v3232, 7
        %v3234 = vsub.s32 %v3231, %v3233
        %v3235 = vrot.slane %v3227, %v3234
        %v3237 = vunpack.c.l.s4 1983009808
        %v3238 = vunpack.c.0.s8 %v3237
        %v3239 = vlaneseq
        %v3240 = vshrl.u32 %v3239, 7
        %v3241 = vsub.s32 %v3238, %v3240
        %v3242 = vrot.slane %v3228, %v3241
        %v3243 = vcombine.low %v3235, %v3242
        %v3244 = vcombine.low %v2500, %v2508
        %v3245 = vcombine.low %v2516, %v2515
        %v3247 = vunpack.c.l.s4 1983009808
        %v3248 = vunpack.c.0.s8 %v3247
        %v3249 = vlaneseq
        %v3250 = vshrl.u32 %v3249, 7
        %v3251 = vsub.s32 %v3248, %v3250
        %v3252 = vrot.slane %v3244, %v3251
        %v3254 = vunpack.c.l.s4 1983009808
        %v3255 = vunpack.c.0.s8 %v3254
        %v3256 = vlaneseq
        %v3257 = vshrl.u32 %v3256, 7
        %v3258 = vsub.s32 %v3255, %v3257
        %v3259 = vrot.slane %v3245, %v3258
        %v3260 = vcombine.low %v3252, %v3259
        %v3261 = vcombine.low %v2517, %v2524
        %v3262 = vcombine.low %v2532, %v2540
        %v3264 = vunpack.c.l.s4 1983009808
        %v3265 = vunpack.c.0.s8 %v3264
        %v3266 = vlaneseq
        %v3267 = vshrl.u32 %v3266, 7
        %v3268 = vsub.s32 %v3265, %v3267
        %v3269 = vrot.slane %v3261, %v3268
        %v3271 = vunpack.c.l.s4 1983009808
        %v3272 = vunpack.c.0.s8 %v3271
        %v3273 = vlaneseq
        %v3274 = vshrl.u32 %v3273, 7
        %v3275 = vsub.s32 %v3272, %v3274
        %v3276 = vrot.slane %v3262, %v3275
        %v3277 = vcombine.low %v3269, %v3276
        %v3278 = vcombine.low %v2539, %v2541
        %v3279 = vcombine.low %v2549, %v2557
        %v3281 = vunpack.c.l.s4 1983009808
        %v3282 = vunpack.c.0.s8 %v3281
        %v3283 = vlaneseq
        %v3284 = vshrl.u32 %v3283, 7
        %v3285 = vsub.s32 %v3282, %v3284
        %v3286 = vrot.slane %v3278, %v3285
        %v3288 = vunpack.c.l.s4 1983009808
        %v3289 = vunpack.c.0.s8 %v3288
        %v3290 = vlaneseq
        %v3291 = vshrl.u32 %v3290, 7
        %v3292 = vsub.s32 %v3289, %v3291
        %v3293 = vrot.slane %v3279, %v3292
        %v3294 = vcombine.low %v3286, %v3293
        %v3295 = vcombine.low %v2556, %v2558
        %v3296 = vcombine.low %v2566, %v2574
        %v3298 = vunpack.c.l.s4 1983009808
        %v3299 = vunpack.c.0.s8 %v3298
        %v3300 = vlaneseq
        %v3301 = vshrl.u32 %v3300, 7
        %v3302 = vsub.s32 %v3299, %v3301
        %v3303 = vrot.slane %v3295, %v3302
        %v3305 = vunpack.c.l.s4 1983009808
        %v3306 = vunpack.c.0.s8 %v3305
        %v3307 = vlaneseq
        %v3308 = vshrl.u32 %v3307, 7
        %v3309 = vsub.s32 %v3306, %v3308
        %v3310 = vrot.slane %v3296, %v3309
        %v3311 = vcombine.low %v3303, %v3310
        %v3312 = vcombine.low %v2573, %v2575
        %v3313 = vcombine.low %v2583, %v2591
        %v3315 = vunpack.c.l.s4 1983009808
        %v3316 = vunpack.c.0.s8 %v3315
        %v3317 = vlaneseq
        %v3318 = vshrl.u32 %v3317, 7
        %v3319 = vsub.s32 %v3316, %v3318
        %v3320 = vrot.slane %v3312, %v3319
        %v3322 = vunpack.c.l.s4 1983009808
        %v3323 = vunpack.c.0.s8 %v3322
        %v3324 = vlaneseq
        %v3325 = vshrl.u32 %v3324, 7
        %v3326 = vsub.s32 %v3323, %v3325
        %v3327 = vrot.slane %v3313, %v3326
        %v3328 = vcombine.low %v3320, %v3327
        %v3329 = vcombine.low %v2590, %v2592
        %v3330 = vcombine.low %v2599, %v2607
        %v3332 = vunpack.c.l.s4 1983009808
        %v3333 = vunpack.c.0.s8 %v3332
        %v3334 = vlaneseq
        %v3335 = vshrl.u32 %v3334, 7
        %v3336 = vsub.s32 %v3333, %v3335
        %v3337 = vrot.slane %v3329, %v3336
        %v3339 = vunpack.c.l.s4 1983009808
        %v3340 = vunpack.c.0.s8 %v3339
        %v3341 = vlaneseq
        %v3342 = vshrl.u32 %v3341, 7
        %v3343 = vsub.s32 %v3340, %v3342
        %v3344 = vrot.slane %v3330, %v3343
        %v3345 = vcombine.low %v3337, %v3344
        %v3346 = vcombine.low %v2615, %v2614
        %v3347 = vcombine.low %v2616, %v2624
        %v3349 = vunpack.c.l.s4 1983009808
        %v3350 = vunpack.c.0.s8 %v3349
        %v3351 = vlaneseq
        %v3352 = vshrl.u32 %v3351, 7
        %v3353 = vsub.s32 %v3350, %v3352
        %v3354 = vrot.slane %v3346, %v3353
        %v3356 = vunpack.c.l.s4 1983009808
        %v3357 = vunpack.c.0.s8 %v3356
        %v3358 = vlaneseq
        %v3359 = vshrl.u32 %v3358, 7
        %v3360 = vsub.s32 %v3357, %v3359
        %v3361 = vrot.slane %v3347, %v3360
        %v3362 = vcombine.low %v3354, %v3361
        %v3363 = vcombine.low %v2632, %v2631
        %v3364 = vcombine.low %v2633, %v2641
        %v3366 = vunpack.c.l.s4 1983009808
        %v3367 = vunpack.c.0.s8 %v3366
        %v3368 = vlaneseq
        %v3369 = vshrl.u32 %v3368, 7
        %v3370 = vsub.s32 %v3367, %v3369
        %v3371 = vrot.slane %v3363, %v3370
        %v3373 = vunpack.c.l.s4 1983009808
        %v3374 = vunpack.c.0.s8 %v3373
        %v3375 = vlaneseq
        %v3376 = vshrl.u32 %v3375, 7
        %v3377 = vsub.s32 %v3374, %v3376
        %v3378 = vrot.slane %v3364, %v3377
        %v3379 = vcombine.low %v3371, %v3378
        %v3380 = vcombine.low %v2649, %v2648
        %v3381 = vcombine.low %v2650, %v2658
        %v3383 = vunpack.c.l.s4 1983009808
        %v3384 = vunpack.c.0.s8 %v3383
        %v3385 = vlaneseq
        %v3386 = vshrl.u32 %v3385, 7
        %v3387 = vsub.s32 %v3384, %v3386
        %v3388 = vrot.slane %v3380, %v3387
        %v3390 = vunpack.c.l.s4 1983009808
        %v3391 = vunpack.c.0.s8 %v3390
        %v3392 = vlaneseq
        %v3393 = vshrl.u32 %v3392, 7
        %v3394 = vsub.s32 %v3391, %v3393
        %v3395 = vrot.slane %v3381, %v3394
        %v3396 = vcombine.low %v3388, %v3395
        %v3397 = vcombine.low %v2666, %v2665
        %v3398 = vcombine.low %v2667, %v2674
        %v3400 = vunpack.c.l.s4 1983009808
        %v3401 = vunpack.c.0.s8 %v3400
        %v3402 = vlaneseq
        %v3403 = vshrl.u32 %v3402, 7
        %v3404 = vsub.s32 %v3401, %v3403
        %v3405 = vrot.slane %v3397, %v3404
        %v3407 = vunpack.c.l.s4 1983009808
        %v3408 = vunpack.c.0.s8 %v3407
        %v3409 = vlaneseq
        %v3410 = vshrl.u32 %v3409, 7
        %v3411 = vsub.s32 %v3408, %v3410
        %v3412 = vrot.slane %v3398, %v3411
        %v3413 = vcombine.low %v3405, %v3412
        %v3414 = vcombine.low %v2682, %v2690
        %v3415 = vcombine.low %v2689, %v2691
        %v3417 = vunpack.c.l.s4 1983009808
        %v3418 = vunpack.c.0.s8 %v3417
        %v3419 = vlaneseq
        %v3420 = vshrl.u32 %v3419, 7
        %v3421 = vsub.s32 %v3418, %v3420
        %v3422 = vrot.slane %v3414, %v3421
        %v3424 = vunpack.c.l.s4 1983009808
        %v3425 = vunpack.c.0.s8 %v3424
        %v3426 = vlaneseq
        %v3427 = vshrl.u32 %v3426, 7
        %v3428 = vsub.s32 %v3425, %v3427
        %v3429 = vrot.slane %v3415, %v3428
        %v3430 = vcombine.low %v3422, %v3429
        %v3431 = vcombine.low %v2699, %v2707
        %v3432 = vcombine.low %v2706, %v2708
        %v3434 = vunpack.c.l.s4 1983009808
        %v3435 = vunpack.c.0.s8 %v3434
        %v3436 = vlaneseq
        %v3437 = vshrl.u32 %v3436, 7
        %v3438 = vsub.s32 %v3435, %v3437
        %v3439 = vrot.slane %v3431, %v3438
        %v3441 = vunpack.c.l.s4 1983009808
        %v3442 = vunpack.c.0.s8 %v3441
        %v3443 = vlaneseq
        %v3444 = vshrl.u32 %v3443, 7
        %v3445 = vsub.s32 %v3442, %v3444
        %v3446 = vrot.slane %v3432, %v3445
        %v3447 = vcombine.low %v3439, %v3446
        %v3448 = vcombine.low %v2716, %v2724
        %v3449 = vcombine.low %v2723, %v2725
        %v3451 = vunpack.c.l.s4 1983009808
        %v3452 = vunpack.c.0.s8 %v3451
        %v3453 = vlaneseq
        %v3454 = vshrl.u32 %v3453, 7
        %v3455 = vsub.s32 %v3452, %v3454
        %v3456 = vrot.slane %v3448, %v3455
        %v3458 = vunpack.c.l.s4 1983009808
        %v3459 = vunpack.c.0.s8 %v3458
        %v3460 = vlaneseq
        %v3461 = vshrl.u32 %v3460, 7
        %v3462 = vsub.s32 %v3459, %v3461
        %v3463 = vrot.slane %v3449, %v3462
        %v3464 = vcombine.low %v3456, %v3463
        %v3465 = vcombine.low %v2733, %v2741
        %v3466 = vcombine.low %v2740, %v2742
        %v3468 = vunpack.c.l.s4 1983009808
        %v3469 = vunpack.c.0.s8 %v3468
        %v3470 = vlaneseq
        %v3471 = vshrl.u32 %v3470, 7
        %v3472 = vsub.s32 %v3469, %v3471
        %v3473 = vrot.slane %v3465, %v3472
        %v3475 = vunpack.c.l.s4 1983009808
        %v3476 = vunpack.c.0.s8 %v3475
        %v3477 = vlaneseq
        %v3478 = vshrl.u32 %v3477, 7
        %v3479 = vsub.s32 %v3476, %v3478
        %v3480 = vrot.slane %v3466, %v3479
        %v3481 = vcombine.low %v3473, %v3480
        %v3482 = vcombine.low %v2749, %v2757
        %v3483 = vcombine.low %v2765, %v2764
        %v3485 = vunpack.c.l.s4 1983009808
        %v3486 = vunpack.c.0.s8 %v3485
        %v3487 = vlaneseq
        %v3488 = vshrl.u32 %v3487, 7
        %v3489 = vsub.s32 %v3486, %v3488
        %v3490 = vrot.slane %v3482, %v3489
        %v3492 = vunpack.c.l.s4 1983009808
        %v3493 = vunpack.c.0.s8 %v3492
        %v3494 = vlaneseq
        %v3495 = vshrl.u32 %v3494, 7
        %v3496 = vsub.s32 %v3493, %v3495
        %v3497 = vrot.slane %v3483, %v3496
        %v3498 = vcombine.low %v3490, %v3497
        %v3499 = vcombine.low %v2766, %v2774
        %v3500 = vcombine.low %v2782, %v2781
        %v3502 = vunpack.c.l.s4 1983009808
        %v3503 = vunpack.c.0.s8 %v3502
        %v3504 = vlaneseq
        %v3505 = vshrl.u32 %v3504, 7
        %v3506 = vsub.s32 %v3503, %v3505
        %v3507 = vrot.slane %v3499, %v3506
        %v3509 = vunpack.c.l.s4 1983009808
        %v3510 = vunpack.c.0.s8 %v3509
        %v3511 = vlaneseq
        %v3512 = vshrl.u32 %v3511, 7
        %v3513 = vsub.s32 %v3510, %v3512
        %v3514 = vrot.slane %v3500, %v3513
        %v3515 = vcombine.low %v3507, %v3514
        %v3516 = vcombine.low %v2783, %v2791
        %v3517 = vcombine.low %v2799, %v2798
        %v3519 = vunpack.c.l.s4 1983009808
        %v3520 = vunpack.c.0.s8 %v3519
        %v3521 = vlaneseq
        %v3522 = vshrl.u32 %v3521, 7
        %v3523 = vsub.s32 %v3520, %v3522
        %v3524 = vrot.slane %v3516, %v3523
        %v3526 = vunpack.c.l.s4 1983009808
        %v3527 = vunpack.c.0.s8 %v3526
        %v3528 = vlaneseq
        %v3529 = vshrl.u32 %v3528, 7
        %v3530 = vsub.s32 %v3527, %v3529
        %v3531 = vrot.slane %v3517, %v3530
        %v3532 = vcombine.low %v3524, %v3531
        %v3533 = vcombine.low %v2800, %v2808
        %v3534 = vcombine.low %v2816, %v2815
        %v3536 = vunpack.c.l.s4 1983009808
        %v3537 = vunpack.c.0.s8 %v3536
        %v3538 = vlaneseq
        %v3539 = vshrl.u32 %v3538, 7
        %v3540 = vsub.s32 %v3537, %v3539
        %v3541 = vrot.slane %v3533, %v3540
        %v3543 = vunpack.c.l.s4 1983009808
        %v3544 = vunpack.c.0.s8 %v3543
        %v3545 = vlaneseq
        %v3546 = vshrl.u32 %v3545, 7
        %v3547 = vsub.s32 %v3544, %v3546
        %v3548 = vrot.slane %v3534, %v3547
        %v3549 = vcombine.low %v3541, %v3548
        %v3550 = vcombine.low %v2817, %v2824
        %v3551 = vcombine.low %v2832, %v2840
        %v3553 = vunpack.c.l.s4 1983009808
        %v3554 = vunpack.c.0.s8 %v3553
        %v3555 = vlaneseq
        %v3556 = vshrl.u32 %v3555, 7
        %v3557 = vsub.s32 %v3554, %v3556
        %v3558 = vrot.slane %v3550, %v3557
        %v3560 = vunpack.c.l.s4 1983009808
        %v3561 = vunpack.c.0.s8 %v3560
        %v3562 = vlaneseq
        %v3563 = vshrl.u32 %v3562, 7
        %v3564 = vsub.s32 %v3561, %v3563
        %v3565 = vrot.slane %v3551, %v3564
        %v3566 = vcombine.low %v3558, %v3565
        %v3567 = vcombine.low %v2839, %v2841
        %v3568 = vcombine.low %v2849, %v2857
        %v3570 = vunpack.c.l.s4 1983009808
        %v3571 = vunpack.c.0.s8 %v3570
        %v3572 = vlaneseq
        %v3573 = vshrl.u32 %v3572, 7
        %v3574 = vsub.s32 %v3571, %v3573
        %v3575 = vrot.slane %v3567, %v3574
        %v3577 = vunpack.c.l.s4 1983009808
        %v3578 = vunpack.c.0.s8 %v3577
        %v3579 = vlaneseq
        %v3580 = vshrl.u32 %v3579, 7
        %v3581 = vsub.s32 %v3578, %v3580
        %v3582 = vrot.slane %v3568, %v3581
        %v3583 = vcombine.low %v3575, %v3582
        %v3584 = vcombine.low %v2856, %v2858
        %v3585 = vcombine.low %v2866, %v2874
        %v3587 = vunpack.c.l.s4 1983009808
        %v3588 = vunpack.c.0.s8 %v3587
        %v3589 = vlaneseq
        %v3590 = vshrl.u32 %v3589, 7
        %v3591 = vsub.s32 %v3588, %v3590
        %v3592 = vrot.slane %v3584, %v3591
        %v3594 = vunpack.c.l.s4 1983009808
        %v3595 = vunpack.c.0.s8 %v3594
        %v3596 = vlaneseq
        %v3597 = vshrl.u32 %v3596, 7
        %v3598 = vsub.s32 %v3595, %v3597
        %v3599 = vrot.slane %v3585, %v3598
        %v3600 = vcombine.low %v3592, %v3599
        %v3601 = vcombine.low %v2873, %v2875
        %v3602 = vcombine.low %v2883, %v2891
        %v3604 = vunpack.c.l.s4 1983009808
        %v3605 = vunpack.c.0.s8 %v3604
        %v3606 = vlaneseq
        %v3607 = vshrl.u32 %v3606, 7
        %v3608 = vsub.s32 %v3605, %v3607
        %v3609 = vrot.slane %v3601, %v3608
        %v3611 = vunpack.c.l.s4 1983009808
        %v3612 = vunpack.c.0.s8 %v3611
        %v3613 = vlaneseq
        %v3614 = vshrl.u32 %v3613, 7
        %v3615 = vsub.s32 %v3612, %v3614
        %v3616 = vrot.slane %v3602, %v3615
        %v3617 = vcombine.low %v3609, %v3616
        %v3618 = vcombine.low %v2890, %v2892
        %v3619 = vcombine.low %v2899, %v2907
        %v3621 = vunpack.c.l.s4 1983009808
        %v3622 = vunpack.c.0.s8 %v3621
        %v3623 = vlaneseq
        %v3624 = vshrl.u32 %v3623, 7
        %v3625 = vsub.s32 %v3622, %v3624
        %v3626 = vrot.slane %v3618, %v3625
        %v3628 = vunpack.c.l.s4 1983009808
        %v3629 = vunpack.c.0.s8 %v3628
        %v3630 = vlaneseq
        %v3631 = vshrl.u32 %v3630, 7
        %v3632 = vsub.s32 %v3629, %v3631
        %v3633 = vrot.slane %v3619, %v3632
        %v3634 = vcombine.low %v3626, %v3633
        %v3635 = vcombine.low %v2915, %v2914
        %v3636 = vcombine.low %v2916, %v2924
        %v3638 = vunpack.c.l.s4 1983009808
        %v3639 = vunpack.c.0.s8 %v3638
        %v3640 = vlaneseq
        %v3641 = vshrl.u32 %v3640, 7
        %v3642 = vsub.s32 %v3639, %v3641
        %v3643 = vrot.slane %v3635, %v3642
        %v3645 = vunpack.c.l.s4 1983009808
        %v3646 = vunpack.c.0.s8 %v3645
        %v3647 = vlaneseq
        %v3648 = vshrl.u32 %v3647, 7
        %v3649 = vsub.s32 %v3646, %v3648
        %v3650 = vrot.slane %v3636, %v3649
        %v3651 = vcombine.low %v3643, %v3650
        %v3652 = vcombine.low %v2932, %v2931
        %v3653 = vcombine.low %v2933, %v2941
        %v3655 = vunpack.c.l.s4 1983009808
        %v3656 = vunpack.c.0.s8 %v3655
        %v3657 = vlaneseq
        %v3658 = vshrl.u32 %v3657, 7
        %v3659 = vsub.s32 %v3656, %v3658
        %v3660 = vrot.slane %v3652, %v3659
        %v3662 = vunpack.c.l.s4 1983009808
        %v3663 = vunpack.c.0.s8 %v3662
        %v3664 = vlaneseq
        %v3665 = vshrl.u32 %v3664, 7
        %v3666 = vsub.s32 %v3663, %v3665
        %v3667 = vrot.slane %v3653, %v3666
        %v3668 = vcombine.low %v3660, %v3667
        %v3669 = vcombine.low %v2949, %v2948
        %v3670 = vcombine.low %v2950, %v2958
        %v3672 = vunpack.c.l.s4 1983009808
        %v3673 = vunpack.c.0.s8 %v3672
        %v3674 = vlaneseq
        %v3675 = vshrl.u32 %v3674, 7
        %v3676 = vsub.s32 %v3673, %v3675
        %v3677 = vrot.slane %v3669, %v3676
        %v3679 = vunpack.c.l.s4 1983009808
        %v3680 = vunpack.c.0.s8 %v3679
        %v3681 = vlaneseq
        %v3682 = vshrl.u32 %v3681, 7
        %v3683 = vsub.s32 %v3680, %v3682
        %v3684 = vrot.slane %v3670, %v3683
        %v3685 = vcombine.low %v3677, %v3684
        %v3686 = vcombine.low %v2966, %v2965
        %v3687 = vcombine.low %v2967, %v2974
        %v3689 = vunpack.c.l.s4 1983009808
        %v3690 = vunpack.c.0.s8 %v3689
        %v3691 = vlaneseq
        %v3692 = vshrl.u32 %v3691, 7
        %v3693 = vsub.s32 %v3690, %v3692
        %v3694 = vrot.slane %v3686, %v3693
        %v3696 = vunpack.c.l.s4 1983009808
        %v3697 = vunpack.c.0.s8 %v3696
        %v3698 = vlaneseq
        %v3699 = vshrl.u32 %v3698, 7
        %v3700 = vsub.s32 %v3697, %v3699
        %v3701 = vrot.slane %v3687, %v3700
        %v3702 = vcombine.low %v3694, %v3701
        %v3703 = vcombine.low %v2982, %v2990
        %v3704 = vcombine.low %v2989, %v2991
        %v3706 = vunpack.c.l.s4 1983009808
        %v3707 = vunpack.c.0.s8 %v3706
        %v3708 = vlaneseq
        %v3709 = vshrl.u32 %v3708, 7
        %v3710 = vsub.s32 %v3707, %v3709
        %v3711 = vrot.slane %v3703, %v3710
        %v3713 = vunpack.c.l.s4 1983009808
        %v3714 = vunpack.c.0.s8 %v3713
        %v3715 = vlaneseq
        %v3716 = vshrl.u32 %v3715, 7
        %v3717 = vsub.s32 %v3714, %v3716
        %v3718 = vrot.slane %v3704, %v3717
        %v3719 = vcombine.low %v3711, %v3718
        %v3720 = vcombine.low %v2999, %v3007
        %v3721 = vcombine.low %v3006, %v3008
        %v3723 = vunpack.c.l.s4 1983009808
        %v3724 = vunpack.c.0.s8 %v3723
        %v3725 = vlaneseq
        %v3726 = vshrl.u32 %v3725, 7
        %v3727 = vsub.s32 %v3724, %v3726
        %v3728 = vrot.slane %v3720, %v3727
        %v3730 = vunpack.c.l.s4 1983009808
        %v3731 = vunpack.c.0.s8 %v3730
        %v3732 = vlaneseq
        %v3733 = vshrl.u32 %v3732, 7
        %v3734 = vsub.s32 %v3731, %v3733
        %v3735 = vrot.slane %v3721, %v3734
        %v3736 = vcombine.low %v3728, %v3735
        %v3737 = vcombine.low %v3016, %v3024
        %v3738 = vcombine.low %v3023, %v3025
        %v3740 = vunpack.c.l.s4 1983009808
        %v3741 = vunpack.c.0.s8 %v3740
        %v3742 = vlaneseq
        %v3743 = vshrl.u32 %v3742, 7
        %v3744 = vsub.s32 %v3741, %v3743
        %v3745 = vrot.slane %v3737, %v3744
        %v3747 = vunpack.c.l.s4 1983009808
        %v3748 = vunpack.c.0.s8 %v3747
        %v3749 = vlaneseq
        %v3750 = vshrl.u32 %v3749, 7
        %v3751 = vsub.s32 %v3748, %v3750
        %v3752 = vrot.slane %v3738, %v3751
        %v3753 = vcombine.low %v3745, %v3752
        %v3754 = vcombine.low %v3033, %v3041
        %v3755 = vcombine.low %v3040, %v3042
        %v3757 = vunpack.c.l.s4 1983009808
        %v3758 = vunpack.c.0.s8 %v3757
        %v3759 = vlaneseq
        %v3760 = vshrl.u32 %v3759, 7
        %v3761 = vsub.s32 %v3758, %v3760
        %v3762 = vrot.slane %v3754, %v3761
        %v3764 = vunpack.c.l.s4 1983009808
        %v3765 = vunpack.c.0.s8 %v3764
        %v3766 = vlaneseq
        %v3767 = vshrl.u32 %v3766, 7
        %v3768 = vsub.s32 %v3765, %v3767
        %v3769 = vrot.slane %v3755, %v3768
        %v3770 = vcombine.low %v3762, %v3769
        %v3771 = vcombine.low %v3049, %v3057
        %v3772 = vcombine.low %v3065, %v3064
        %v3774 = vunpack.c.l.s4 1983009808
        %v3775 = vunpack.c.0.s8 %v3774
        %v3776 = vlaneseq
        %v3777 = vshrl.u32 %v3776, 7
        %v3778 = vsub.s32 %v3775, %v3777
        %v3779 = vrot.slane %v3771, %v3778
        %v3781 = vunpack.c.l.s4 1983009808
        %v3782 = vunpack.c.0.s8 %v3781
        %v3783 = vlaneseq
        %v3784 = vshrl.u32 %v3783, 7
        %v3785 = vsub.s32 %v3782, %v3784
        %v3786 = vrot.slane %v3772, %v3785
        %v3787 = vcombine.low %v3779, %v3786
        %v3788 = vcombine.low %v3066, %v3074
        %v3789 = vcombine.low %v3082, %v3081
        %v3791 = vunpack.c.l.s4 1983009808
        %v3792 = vunpack.c.0.s8 %v3791
        %v3793 = vlaneseq
        %v3794 = vshrl.u32 %v3793, 7
        %v3795 = vsub.s32 %v3792, %v3794
        %v3796 = vrot.slane %v3788, %v3795
        %v3798 = vunpack.c.l.s4 1983009808
        %v3799 = vunpack.c.0.s8 %v3798
        %v3800 = vlaneseq
        %v3801 = vshrl.u32 %v3800, 7
        %v3802 = vsub.s32 %v3799, %v3801
        %v3803 = vrot.slane %v3789, %v3802
        %v3804 = vcombine.low %v3796, %v3803
        %v3805 = vcombine.low %v3083, %v3091
        %v3806 = vcombine.low %v3099, %v3098
        %v3808 = vunpack.c.l.s4 1983009808
        %v3809 = vunpack.c.0.s8 %v3808
        %v3810 = vlaneseq
        %v3811 = vshrl.u32 %v3810, 7
        %v3812 = vsub.s32 %v3809, %v3811
        %v3813 = vrot.slane %v3805, %v3812
        %v3815 = vunpack.c.l.s4 1983009808
        %v3816 = vunpack.c.0.s8 %v3815
        %v3817 = vlaneseq
        %v3818 = vshrl.u32 %v3817, 7
        %v3819 = vsub.s32 %v3816, %v3818
        %v3820 = vrot.slane %v3806, %v3819
        %v3821 = vcombine.low %v3813, %v3820
        %v3822 = vcombine.low %v3100, %v3108
        %v3823 = vcombine.low %v3116, %v3115
        %v3825 = vunpack.c.l.s4 1983009808
        %v3826 = vunpack.c.0.s8 %v3825
        %v3827 = vlaneseq
        %v3828 = vshrl.u32 %v3827, 7
        %v3829 = vsub.s32 %v3826, %v3828
        %v3830 = vrot.slane %v3822, %v3829
        %v3832 = vunpack.c.l.s4 1983009808
        %v3833 = vunpack.c.0.s8 %v3832
        %v3834 = vlaneseq
        %v3835 = vshrl.u32 %v3834, 7
        %v3836 = vsub.s32 %v3833, %v3835
        %v3837 = vrot.slane %v3823, %v3836
        %v3838 = vcombine.low %v3830, %v3837
        %v3839 = vcombine.low %v3117, %v3124
        %v3841 = vunpack.c.l.s4 1983009808
        %v3842 = vunpack.c.0.s8 %v3841
        %v3843 = vlaneseq
        %v3844 = vshrl.u32 %v3843, 7
        %v3845 = vsub.s32 %v3842, %v3844
        %v3846 = vrot.slane %v3839, %v3845
        %v3890 = vpack.c.bf16 %v3158, %v3141
        %v3891 = vpack.c.bf16 %v3192, %v3175
        %v3892 = vpack.c.bf16 %v3226, %v3209
        %v3893 = vpack.c.bf16 %v3260, %v3243
        %v3894 = vpack.c.bf16 %v3294, %v3277
        %v3895 = vpack.c.bf16 %v3328, %v3311
        %v3896 = vpack.c.bf16 %v3362, %v3345
        %v3897 = vpack.c.bf16 %v3396, %v3379
        %v3898 = vpack.c.bf16 %v3430, %v3413
        %v3899 = vpack.c.bf16 %v3464, %v3447
        %v3900 = vpack.c.bf16 %v3498, %v3481
        %v3901 = vpack.c.bf16 %v3532, %v3515
        %v3902 = vpack.c.bf16 %v3566, %v3549
        %v3903 = vpack.c.bf16 %v3600, %v3583
        %v3904 = vpack.c.bf16 %v3634, %v3617
        %v3905 = vpack.c.bf16 %v3668, %v3651
        %v3906 = vpack.c.bf16 %v3702, %v3685
        %v3907 = vpack.c.bf16 %v3736, %v3719
        %v3908 = vpack.c.bf16 %v3770, %v3753
        %v3909 = vpack.c.bf16 %v3804, %v3787
        %v3910 = vpack.c.bf16 %v3838, %v3821
        %v3911 = vpack.c.bf16 %v3846, %v3846
        %v3912 = vld [vmem:[%s2] sm:$0xf]
        %v3913 = vld [vmem:[%s2 + $0x4] sm:$0xf]
        %v3914 = vld [vmem:[%s2 + $0x8] sm:$0xf]
        %v3915 = vld [vmem:[%s2 + $0xc] sm:$0xf]
        %v3916 = vld [vmem:[%s2 + $0x10] sm:$0x3]
        %v3922 = vunpack.c.l.b16 %v3912
        %v3923 = vunpack.c.l.b16 %v3913
        %v3924 = vunpack.c.l.b16 %v3914
        %v3925 = vunpack.c.l.b16 %v3915
        %v3926 = vunpack.c.l.b16 %v3916
        %v3927 = vpack.c.b16 %v3923, %v3922
        %v3928 = vpack.c.b16 %v3925, %v3924
        %v3929 = vpack.c.b16 %v3926, %v3926
        %vm3932 = vcmask 293888
        %v3934 = vsel %vm3932, %v3890, 0
        %v3937 = vsel %vm3932, %v3891, 0
        %v3940 = vsel %vm3932, %v3892, 0
        %v3943 = vsel %vm3932, %v3893, 0
        %v3946 = vsel %vm3932, %v3894, 0
        %v3949 = vsel %vm3932, %v3895, 0
        %v3952 = vsel %vm3932, %v3896, 0
        %v3955 = vsel %vm3932, %v3897, 0
        %v3958 = vsel %vm3932, %v3898, 0
        %v3961 = vsel %vm3932, %v3899, 0
        %v3964 = vsel %vm3932, %v3900, 0
        %v3967 = vsel %vm3932, %v3901, 0
        %v3970 = vsel %vm3932, %v3902, 0
        %v3973 = vsel %vm3932, %v3903, 0
        %v3976 = vsel %vm3932, %v3904, 0
        %v3979 = vsel %vm3932, %v3905, 0
        %v3982 = vsel %vm3932, %v3906, 0
        %v3985 = vsel %vm3932, %v3907, 0
        %v3988 = vsel %vm3932, %v3908, 0
        %v3991 = vsel %vm3932, %v3909, 0
        %v3994 = vsel %vm3932, %v3910, 0
        %v3997 = vsel %vm3932, %v3911, 0
        %vm3999 = vcmask 1041408
        %v4001 = vsel %vm3999, %v3929, 0
        %4003 = vmatprep.subr.bf16.mxu0 0
        %4004 = vmatpush1.bf16.msra.mxu0 0
        %4005 = vmatprep.subr.bf16.mxu0 0
        %4006 = vmatpush1.bf16.msra.mxu0 0
        %4007 = vmatprep.subr.bf16.mxu0 0
        %4008 = vmatpush1.bf16.msra.mxu0 0
        %4009 = vmatprep.subr.bf16.mxu0 0
        %4010 = vmatpush1.bf16.msra.mxu0 0
        %4011 = vmatprep.subr.bf16.mxu0 0
        %4012 = vmatpush1.bf16.msra.mxu0 0
        %4013 = vmatprep.subr.bf16.mxu0 0
        %4014 = vmatpush1.bf16.msra.mxu0 %v4001
        %4015 = vmatprep.subr.bf16.mxu0 0
        %4016 = vmatpush1.bf16.msra.mxu0 %v3928
        %4017 = vmatprep.subr.bf16.mxu0 0
        %4018 = vmatpush1.bf16.msra.mxu0 %v3927
        %4019 = vmatprep.subr.bf16.mxu0 0
        %4020 = vmatpush2.bf16.msra.mxu0 0
        %4021 = vmatprep.subr.bf16.mxu0 0
        %4022 = vmatpush2.bf16.msra.mxu0 0
        %4023 = vmatprep.subr.bf16.mxu0 0
        %4024 = vmatpush2.bf16.msra.mxu0 0
        %4025 = vmatprep.subr.bf16.mxu0 0
        %4026 = vmatpush2.bf16.msra.mxu0 0
        %4027 = vmatprep.subr.bf16.mxu0 0
        %4028 = vmatpush2.bf16.msra.mxu0 0
        %4029 = vmatprep.subr.bf16.mxu0 0
        %4030 = vmatpush2.bf16.msra.mxu0 0
        %4031 = vmatprep.subr.bf16.mxu0 0
        %4032 = vmatpush2.bf16.msra.mxu0 0
        %4033 = vmatprep.subr.bf16.mxu0 0
        %4034 = vmatpush2.bf16.msra.mxu0 0
        %4035 = vmatprep.mubr.bf16.mxu0 0
        %4036 = vmatmul.mubr.bf16.gmra.mxu0 %v3934
        %v4037 = vpop.f32.mrf.mxu0
        %v4038 = vadd.f32 0.0, %v4037
        %v4039 = vpop.f32.mrf.mxu0
        %v4040 = vpop.f32.mrf.mxu0
        %v4041 = vadd.f32 0.0, %v4040
        %v4042 = vpop.f32.mrf.mxu0
        %4043 = vmatprep.mubr.bf16.mxu0 0
        %4044 = vmatmul.mubr.bf16.gmra.mxu0 %v3937
        %v4045 = vpop.f32.mrf.mxu0
        %v4046 = vadd.f32 0.0, %v4045
        %v4047 = vpop.f32.mrf.mxu0
        %v4048 = vpop.f32.mrf.mxu0
        %v4049 = vadd.f32 0.0, %v4048
        %v4050 = vpop.f32.mrf.mxu0
        %4051 = vmatprep.mubr.bf16.mxu0 0
        %4052 = vmatmul.mubr.bf16.gmra.mxu0 %v3940
        %v4053 = vpop.f32.mrf.mxu0
        %v4054 = vadd.f32 0.0, %v4053
        %v4055 = vpop.f32.mrf.mxu0
        %v4056 = vpop.f32.mrf.mxu0
        %v4057 = vadd.f32 0.0, %v4056
        %v4058 = vpop.f32.mrf.mxu0
        %4059 = vmatprep.mubr.bf16.mxu0 0
        %4060 = vmatmul.mubr.bf16.gmra.mxu0 %v3943
        %v4061 = vpop.f32.mrf.mxu0
        %v4062 = vadd.f32 0.0, %v4061
        %v4063 = vpop.f32.mrf.mxu0
        %v4064 = vpop.f32.mrf.mxu0
        %v4065 = vadd.f32 0.0, %v4064
        %v4066 = vpop.f32.mrf.mxu0
        %4067 = vmatprep.mubr.bf16.mxu0 0
        %4068 = vmatmul.mubr.bf16.gmra.mxu0 %v3946
        %v4069 = vpop.f32.mrf.mxu0
        %v4070 = vadd.f32 0.0, %v4069
        %v4071 = vpop.f32.mrf.mxu0
        %v4072 = vpop.f32.mrf.mxu0
        %v4073 = vadd.f32 0.0, %v4072
        %v4074 = vpop.f32.mrf.mxu0
        %4075 = vmatprep.mubr.bf16.mxu0 0
        %4076 = vmatmul.mubr.bf16.gmra.mxu0 %v3949
        %v4077 = vpop.f32.mrf.mxu0
        %v4078 = vadd.f32 0.0, %v4077
        %v4079 = vpop.f32.mrf.mxu0
        %v4080 = vpop.f32.mrf.mxu0
        %v4081 = vadd.f32 0.0, %v4080
        %v4082 = vpop.f32.mrf.mxu0
        %4083 = vmatprep.mubr.bf16.mxu0 0
        %4084 = vmatmul.mubr.bf16.gmra.mxu0 %v3952
        %v4085 = vpop.f32.mrf.mxu0
        %v4086 = vadd.f32 0.0, %v4085
        %v4087 = vpop.f32.mrf.mxu0
        %v4088 = vpop.f32.mrf.mxu0
        %v4089 = vadd.f32 0.0, %v4088
        %v4090 = vpop.f32.mrf.mxu0
        %4091 = vmatprep.mubr.bf16.mxu0 0
        %4092 = vmatmul.mubr.bf16.gmra.mxu0 %v3955
        %v4093 = vpop.f32.mrf.mxu0
        %v4094 = vadd.f32 0.0, %v4093
        %v4095 = vpop.f32.mrf.mxu0
        %v4096 = vpop.f32.mrf.mxu0
        %v4097 = vadd.f32 0.0, %v4096
        %v4098 = vpop.f32.mrf.mxu0
        %4099 = vmatprep.mubr.bf16.mxu0 0
        %4100 = vmatmul.mubr.bf16.gmra.mxu0 %v3958
        %v4101 = vpop.f32.mrf.mxu0
        %v4102 = vadd.f32 0.0, %v4101
        %v4103 = vpop.f32.mrf.mxu0
        %v4104 = vpop.f32.mrf.mxu0
        %v4105 = vadd.f32 0.0, %v4104
        %v4106 = vpop.f32.mrf.mxu0
        %4107 = vmatprep.mubr.bf16.mxu0 0
        %4108 = vmatmul.mubr.bf16.gmra.mxu0 %v3961
        %v4109 = vpop.f32.mrf.mxu0
        %v4110 = vadd.f32 0.0, %v4109
        %v4111 = vpop.f32.mrf.mxu0
        %v4112 = vpop.f32.mrf.mxu0
        %v4113 = vadd.f32 0.0, %v4112
        %v4114 = vpop.f32.mrf.mxu0
        %4115 = vmatprep.mubr.bf16.mxu0 0
        %4116 = vmatmul.mubr.bf16.gmra.mxu0 %v3964
        %v4117 = vpop.f32.mrf.mxu0
        %v4118 = vadd.f32 0.0, %v4117
        %v4119 = vpop.f32.mrf.mxu0
        %v4120 = vpop.f32.mrf.mxu0
        %v4121 = vadd.f32 0.0, %v4120
        %v4122 = vpop.f32.mrf.mxu0
        %4123 = vmatprep.mubr.bf16.mxu0 0
        %4124 = vmatmul.mubr.bf16.gmra.mxu0 %v3967
        %v4125 = vpop.f32.mrf.mxu0
        %v4126 = vadd.f32 0.0, %v4125
        %v4127 = vpop.f32.mrf.mxu0
        %v4128 = vpop.f32.mrf.mxu0
        %v4129 = vadd.f32 0.0, %v4128
        %v4130 = vpop.f32.mrf.mxu0
        %4131 = vmatprep.mubr.bf16.mxu0 0
        %4132 = vmatmul.mubr.bf16.gmra.mxu0 %v3970
        %v4133 = vpop.f32.mrf.mxu0
        %v4134 = vadd.f32 0.0, %v4133
        %v4135 = vpop.f32.mrf.mxu0
        %v4136 = vpop.f32.mrf.mxu0
        %v4137 = vadd.f32 0.0, %v4136
        %v4138 = vpop.f32.mrf.mxu0
        %4139 = vmatprep.mubr.bf16.mxu0 0
        %4140 = vmatmul.mubr.bf16.gmra.mxu0 %v3973
        %v4141 = vpop.f32.mrf.mxu0
        %v4142 = vadd.f32 0.0, %v4141
        %v4143 = vpop.f32.mrf.mxu0
        %v4144 = vpop.f32.mrf.mxu0
        %v4145 = vadd.f32 0.0, %v4144
        %v4146 = vpop.f32.mrf.mxu0
        %4147 = vmatprep.mubr.bf16.mxu0 0
        %4148 = vmatmul.mubr.bf16.gmra.mxu0 %v3976
        %v4149 = vpop.f32.mrf.mxu0
        %v4150 = vadd.f32 0.0, %v4149
        %v4151 = vpop.f32.mrf.mxu0
        %v4152 = vpop.f32.mrf.mxu0
        %v4153 = vadd.f32 0.0, %v4152
        %v4154 = vpop.f32.mrf.mxu0
        %4155 = vmatprep.mubr.bf16.mxu0 0
        %4156 = vmatmul.mubr.bf16.gmra.mxu0 %v3979
        %v4157 = vpop.f32.mrf.mxu0
        %v4158 = vadd.f32 0.0, %v4157
        %v4159 = vpop.f32.mrf.mxu0
        %v4160 = vpop.f32.mrf.mxu0
        %v4161 = vadd.f32 0.0, %v4160
        %v4162 = vpop.f32.mrf.mxu0
        %4163 = vmatprep.mubr.bf16.mxu0 0
        %4164 = vmatmul.mubr.bf16.gmra.mxu0 %v3982
        %v4165 = vpop.f32.mrf.mxu0
        %v4166 = vadd.f32 0.0, %v4165
        %v4167 = vpop.f32.mrf.mxu0
        %v4168 = vpop.f32.mrf.mxu0
        %v4169 = vadd.f32 0.0, %v4168
        %v4170 = vpop.f32.mrf.mxu0
        %4171 = vmatprep.mubr.bf16.mxu0 0
        %4172 = vmatmul.mubr.bf16.gmra.mxu0 %v3985
        %v4173 = vpop.f32.mrf.mxu0
        %v4174 = vadd.f32 0.0, %v4173
        %v4175 = vpop.f32.mrf.mxu0
        %v4176 = vpop.f32.mrf.mxu0
        %v4177 = vadd.f32 0.0, %v4176
        %v4178 = vpop.f32.mrf.mxu0
        %4179 = vmatprep.mubr.bf16.mxu0 0
        %4180 = vmatmul.mubr.bf16.gmra.mxu0 %v3988
        %v4181 = vpop.f32.mrf.mxu0
        %v4182 = vadd.f32 0.0, %v4181
        %v4183 = vpop.f32.mrf.mxu0
        %v4184 = vpop.f32.mrf.mxu0
        %v4185 = vadd.f32 0.0, %v4184
        %v4186 = vpop.f32.mrf.mxu0
        %4187 = vmatprep.mubr.bf16.mxu0 0
        %4188 = vmatmul.mubr.bf16.gmra.mxu0 %v3991
        %v4189 = vpop.f32.mrf.mxu0
        %v4190 = vadd.f32 0.0, %v4189
        %v4191 = vpop.f32.mrf.mxu0
        %v4192 = vpop.f32.mrf.mxu0
        %v4193 = vadd.f32 0.0, %v4192
        %v4194 = vpop.f32.mrf.mxu0
        %4195 = vmatprep.mubr.bf16.mxu0 0
        %4196 = vmatmul.mubr.bf16.gmra.mxu0 %v3994
        %v4197 = vpop.f32.mrf.mxu0
        %v4198 = vadd.f32 0.0, %v4197
        %v4199 = vpop.f32.mrf.mxu0
        %v4200 = vpop.f32.mrf.mxu0
        %v4201 = vadd.f32 0.0, %v4200
        %v4202 = vpop.f32.mrf.mxu0
        %4203 = vmatprep.mubr.bf16.mxu0 0
        %4204 = vmatmul.mubr.bf16.gmra.mxu0 %v3997
        %v4205 = vpop.f32.mrf.mxu0
        %v4206 = vadd.f32 0.0, %v4205
        %v4207 = vpop.f32.mrf.mxu0
        %v4208 = vpop.f32.mrf.mxu0
        %v4209 = vpop.f32.mrf.mxu0
        %4210 = vdwg.mxu0
        %v4211 = vlaneseq
        %v4212 = vshrl.u32 %v4211, 7
        %v4213 = vsub.s32 0, %v4212
        %v4214 = vrot.slane %v314, %v4213
        %v4215 = vmul.f32 %v4038, %v4214
        %v4216 = vmul.f32 %v4041, %v4214
        %v4217 = vmul.f32 %v4046, %v4214
        %v4218 = vmul.f32 %v4049, %v4214
        %v4219 = vmul.f32 %v4054, %v4214
        %v4220 = vmul.f32 %v4057, %v4214
        %v4221 = vmul.f32 %v4062, %v4214
        %v4222 = vmul.f32 %v4065, %v4214
        %v4223 = vmul.f32 %v4070, %v4214
        %v4224 = vmul.f32 %v4073, %v4214
        %v4225 = vmul.f32 %v4078, %v4214
        %v4226 = vmul.f32 %v4081, %v4214
        %v4227 = vmul.f32 %v4086, %v4214
        %v4228 = vmul.f32 %v4089, %v4214
        %v4229 = vmul.f32 %v4094, %v4214
        %v4230 = vmul.f32 %v4097, %v4214
        %v4231 = vmul.f32 %v4102, %v4214
        %v4232 = vmul.f32 %v4105, %v4214
        %v4233 = vmul.f32 %v4110, %v4214
        %v4234 = vmul.f32 %v4113, %v4214
        %v4235 = vmul.f32 %v4118, %v4214
        %v4236 = vmul.f32 %v4121, %v4214
        %v4237 = vmul.f32 %v4126, %v4214
        %v4238 = vmul.f32 %v4129, %v4214
        %v4239 = vmul.f32 %v4134, %v4214
        %v4240 = vmul.f32 %v4137, %v4214
        %v4241 = vmul.f32 %v4142, %v4214
        %v4242 = vmul.f32 %v4145, %v4214
        %v4243 = vmul.f32 %v4150, %v4214
        %v4244 = vmul.f32 %v4153, %v4214
        %v4245 = vmul.f32 %v4158, %v4214
        %v4246 = vmul.f32 %v4161, %v4214
        %v4247 = vmul.f32 %v4166, %v4214
        %v4248 = vmul.f32 %v4169, %v4214
        %v4249 = vmul.f32 %v4174, %v4214
        %v4250 = vmul.f32 %v4177, %v4214
        %v4251 = vmul.f32 %v4182, %v4214
        %v4252 = vmul.f32 %v4185, %v4214
        %v4253 = vmul.f32 %v4190, %v4214
        %v4254 = vmul.f32 %v4193, %v4214
        %v4255 = vmul.f32 %v4198, %v4214
        %v4256 = vmul.f32 %v4201, %v4214
        %v4257 = vmul.f32 %v4206, %v4214
        %v4258 = vlaneseq
        %v4259 = vshrl.u32 %v4258, 7
        %v4260 = vsub.s32 1, %v4259
        %v4261 = vrot.slane %v314, %v4260
        %v4262 = vadd.f32 %v4215, %v4261
        %v4263 = vadd.f32 %v4216, %v4261
        %v4264 = vadd.f32 %v4217, %v4261
        %v4265 = vadd.f32 %v4218, %v4261
        %v4266 = vadd.f32 %v4219, %v4261
        %v4267 = vadd.f32 %v4220, %v4261
        %v4268 = vadd.f32 %v4221, %v4261
        %v4269 = vadd.f32 %v4222, %v4261
        %v4270 = vadd.f32 %v4223, %v4261
        %v4271 = vadd.f32 %v4224, %v4261
        %v4272 = vadd.f32 %v4225, %v4261
        %v4273 = vadd.f32 %v4226, %v4261
        %v4274 = vadd.f32 %v4227, %v4261
        %v4275 = vadd.f32 %v4228, %v4261
        %v4276 = vadd.f32 %v4229, %v4261
        %v4277 = vadd.f32 %v4230, %v4261
        %v4278 = vadd.f32 %v4231, %v4261
        %v4279 = vadd.f32 %v4232, %v4261
        %v4280 = vadd.f32 %v4233, %v4261
        %v4281 = vadd.f32 %v4234, %v4261
        %v4282 = vadd.f32 %v4235, %v4261
        %v4283 = vadd.f32 %v4236, %v4261
        %v4284 = vadd.f32 %v4237, %v4261
        %v4285 = vadd.f32 %v4238, %v4261
        %v4286 = vadd.f32 %v4239, %v4261
        %v4287 = vadd.f32 %v4240, %v4261
        %v4288 = vadd.f32 %v4241, %v4261
        %v4289 = vadd.f32 %v4242, %v4261
        %v4290 = vadd.f32 %v4243, %v4261
        %v4291 = vadd.f32 %v4244, %v4261
        %v4292 = vadd.f32 %v4245, %v4261
        %v4293 = vadd.f32 %v4246, %v4261
        %v4294 = vadd.f32 %v4247, %v4261
        %v4295 = vadd.f32 %v4248, %v4261
        %v4296 = vadd.f32 %v4249, %v4261
        %v4297 = vadd.f32 %v4250, %v4261
        %v4298 = vadd.f32 %v4251, %v4261
        %v4299 = vadd.f32 %v4252, %v4261
        %v4300 = vadd.f32 %v4253, %v4261
        %v4301 = vadd.f32 %v4254, %v4261
        %v4302 = vadd.f32 %v4255, %v4261
        %v4303 = vadd.f32 %v4256, %v4261
        %v4304 = vadd.f32 %v4257, %v4261
        %v4305 = vmax.f32 %v4262, 0.0
        %v4306 = vmax.f32 %v4263, 0.0
        %v4307 = vmax.f32 %v4264, 0.0
        %v4308 = vmax.f32 %v4265, 0.0
        %v4309 = vmax.f32 %v4266, 0.0
        %v4310 = vmax.f32 %v4267, 0.0
        %v4311 = vmax.f32 %v4268, 0.0
        %v4312 = vmax.f32 %v4269, 0.0
        %v4313 = vmax.f32 %v4270, 0.0
        %v4314 = vmax.f32 %v4271, 0.0
        %v4315 = vmax.f32 %v4272, 0.0
        %v4316 = vmax.f32 %v4273, 0.0
        %v4317 = vmax.f32 %v4274, 0.0
        %v4318 = vmax.f32 %v4275, 0.0
        %v4319 = vmax.f32 %v4276, 0.0
        %v4320 = vmax.f32 %v4277, 0.0
        %v4321 = vmax.f32 %v4278, 0.0
        %v4322 = vmax.f32 %v4279, 0.0
        %v4323 = vmax.f32 %v4280, 0.0
        %v4324 = vmax.f32 %v4281, 0.0
        %v4325 = vmax.f32 %v4282, 0.0
        %v4326 = vmax.f32 %v4283, 0.0
        %v4327 = vmax.f32 %v4284, 0.0
        %v4328 = vmax.f32 %v4285, 0.0
        %v4329 = vmax.f32 %v4286, 0.0
        %v4330 = vmax.f32 %v4287, 0.0
        %v4331 = vmax.f32 %v4288, 0.0
        %v4332 = vmax.f32 %v4289, 0.0
        %v4333 = vmax.f32 %v4290, 0.0
        %v4334 = vmax.f32 %v4291, 0.0
        %v4335 = vmax.f32 %v4292, 0.0
        %v4336 = vmax.f32 %v4293, 0.0
        %v4337 = vmax.f32 %v4294, 0.0
        %v4338 = vmax.f32 %v4295, 0.0
        %v4339 = vmax.f32 %v4296, 0.0
        %v4340 = vmax.f32 %v4297, 0.0
        %v4341 = vmax.f32 %v4298, 0.0
        %v4342 = vmax.f32 %v4299, 0.0
        %v4343 = vmax.f32 %v4300, 0.0
        %v4344 = vmax.f32 %v4301, 0.0
        %v4345 = vmax.f32 %v4302, 0.0
        %v4346 = vmax.f32 %v4303, 0.0
        %v4347 = vmax.f32 %v4304, 0.0
        %v4391 = vcombine.high %v4305, %v4305
        %v4393 = vunpack.c.l.s4 1983009808
        %v4394 = vunpack.c.0.s8 %v4393
        %v4395 = vlaneseq
        %v4396 = vshrl.u32 %v4395, 7
        %v4397 = vsub.s32 %v4394, %v4396
        %v4398 = vrot.slane %v4305, %v4397
        %v4400 = vunpack.c.l.s4 1983009808
        %v4401 = vunpack.c.0.s8 %v4400
        %v4402 = vlaneseq
        %v4403 = vshrl.u32 %v4402, 7
        %v4404 = vsub.s32 %v4401, %v4403
        %v4405 = vrot.slane %v4391, %v4404
        %v4406 = vcombine.high %v4398, %v4398
        %v4407 = vcombine.high %v4405, %v4405
        %v4408 = vcombine.high %v4306, %v4306
        %v4410 = vunpack.c.l.s4 1983009808
        %v4411 = vunpack.c.0.s8 %v4410
        %v4412 = vlaneseq
        %v4413 = vshrl.u32 %v4412, 7
        %v4414 = vsub.s32 %v4411, %v4413
        %v4415 = vrot.slane %v4306, %v4414
        %v4417 = vunpack.c.l.s4 1983009808
        %v4418 = vunpack.c.0.s8 %v4417
        %v4419 = vlaneseq
        %v4420 = vshrl.u32 %v4419, 7
        %v4421 = vsub.s32 %v4418, %v4420
        %v4422 = vrot.slane %v4408, %v4421
        %v4423 = vcombine.high %v4415, %v4415
        %v4424 = vcombine.high %v4422, %v4422
        %v4425 = vcombine.high %v4307, %v4307
        %v4427 = vunpack.c.l.s4 1983009808
        %v4428 = vunpack.c.0.s8 %v4427
        %v4429 = vlaneseq
        %v4430 = vshrl.u32 %v4429, 7
        %v4431 = vsub.s32 %v4428, %v4430
        %v4432 = vrot.slane %v4307, %v4431
        %v4434 = vunpack.c.l.s4 1983009808
        %v4435 = vunpack.c.0.s8 %v4434
        %v4436 = vlaneseq
        %v4437 = vshrl.u32 %v4436, 7
        %v4438 = vsub.s32 %v4435, %v4437
        %v4439 = vrot.slane %v4425, %v4438
        %v4440 = vcombine.high %v4432, %v4432
        %v4441 = vcombine.high %v4439, %v4439
        %v4442 = vcombine.high %v4308, %v4308
        %v4444 = vunpack.c.l.s4 1983009808
        %v4445 = vunpack.c.0.s8 %v4444
        %v4446 = vlaneseq
        %v4447 = vshrl.u32 %v4446, 7
        %v4448 = vsub.s32 %v4445, %v4447
        %v4449 = vrot.slane %v4308, %v4448
        %v4451 = vunpack.c.l.s4 1983009808
        %v4452 = vunpack.c.0.s8 %v4451
        %v4453 = vlaneseq
        %v4454 = vshrl.u32 %v4453, 7
        %v4455 = vsub.s32 %v4452, %v4454
        %v4456 = vrot.slane %v4442, %v4455
        %v4457 = vcombine.high %v4449, %v4449
        %v4458 = vcombine.high %v4456, %v4456
        %v4459 = vcombine.high %v4309, %v4309
        %v4461 = vunpack.c.l.s4 1983009808
        %v4462 = vunpack.c.0.s8 %v4461
        %v4463 = vlaneseq
        %v4464 = vshrl.u32 %v4463, 7
        %v4465 = vsub.s32 %v4462, %v4464
        %v4466 = vrot.slane %v4309, %v4465
        %v4468 = vunpack.c.l.s4 1983009808
        %v4469 = vunpack.c.0.s8 %v4468
        %v4470 = vlaneseq
        %v4471 = vshrl.u32 %v4470, 7
        %v4472 = vsub.s32 %v4469, %v4471
        %v4473 = vrot.slane %v4459, %v4472
        %v4474 = vcombine.high %v4466, %v4466
        %v4475 = vcombine.high %v4473, %v4473
        %v4476 = vcombine.high %v4310, %v4310
        %v4478 = vunpack.c.l.s4 1983009808
        %v4479 = vunpack.c.0.s8 %v4478
        %v4480 = vlaneseq
        %v4481 = vshrl.u32 %v4480, 7
        %v4482 = vsub.s32 %v4479, %v4481
        %v4483 = vrot.slane %v4310, %v4482
        %v4485 = vunpack.c.l.s4 1983009808
        %v4486 = vunpack.c.0.s8 %v4485
        %v4487 = vlaneseq
        %v4488 = vshrl.u32 %v4487, 7
        %v4489 = vsub.s32 %v4486, %v4488
        %v4490 = vrot.slane %v4476, %v4489
        %v4491 = vcombine.high %v4483, %v4483
        %v4492 = vcombine.high %v4490, %v4490
        %v4493 = vcombine.high %v4311, %v4311
        %v4495 = vunpack.c.l.s4 1983009808
        %v4496 = vunpack.c.0.s8 %v4495
        %v4497 = vlaneseq
        %v4498 = vshrl.u32 %v4497, 7
        %v4499 = vsub.s32 %v4496, %v4498
        %v4500 = vrot.slane %v4311, %v4499
        %v4502 = vunpack.c.l.s4 1983009808
        %v4503 = vunpack.c.0.s8 %v4502
        %v4504 = vlaneseq
        %v4505 = vshrl.u32 %v4504, 7
        %v4506 = vsub.s32 %v4503, %v4505
        %v4507 = vrot.slane %v4493, %v4506
        %v4508 = vcombine.high %v4500, %v4500
        %v4509 = vcombine.high %v4507, %v4507
        %v4510 = vcombine.high %v4312, %v4312
        %v4512 = vunpack.c.l.s4 1983009808
        %v4513 = vunpack.c.0.s8 %v4512
        %v4514 = vlaneseq
        %v4515 = vshrl.u32 %v4514, 7
        %v4516 = vsub.s32 %v4513, %v4515
        %v4517 = vrot.slane %v4312, %v4516
        %v4519 = vunpack.c.l.s4 1983009808
        %v4520 = vunpack.c.0.s8 %v4519
        %v4521 = vlaneseq
        %v4522 = vshrl.u32 %v4521, 7
        %v4523 = vsub.s32 %v4520, %v4522
        %v4524 = vrot.slane %v4510, %v4523
        %v4525 = vcombine.high %v4517, %v4517
        %v4526 = vcombine.high %v4524, %v4524
        %v4527 = vcombine.high %v4313, %v4313
        %v4529 = vunpack.c.l.s4 1983009808
        %v4530 = vunpack.c.0.s8 %v4529
        %v4531 = vlaneseq
        %v4532 = vshrl.u32 %v4531, 7
        %v4533 = vsub.s32 %v4530, %v4532
        %v4534 = vrot.slane %v4313, %v4533
        %v4536 = vunpack.c.l.s4 1983009808
        %v4537 = vunpack.c.0.s8 %v4536
        %v4538 = vlaneseq
        %v4539 = vshrl.u32 %v4538, 7
        %v4540 = vsub.s32 %v4537, %v4539
        %v4541 = vrot.slane %v4527, %v4540
        %v4542 = vcombine.high %v4534, %v4534
        %v4543 = vcombine.high %v4541, %v4541
        %v4544 = vcombine.high %v4314, %v4314
        %v4546 = vunpack.c.l.s4 1983009808
        %v4547 = vunpack.c.0.s8 %v4546
        %v4548 = vlaneseq
        %v4549 = vshrl.u32 %v4548, 7
        %v4550 = vsub.s32 %v4547, %v4549
        %v4551 = vrot.slane %v4314, %v4550
        %v4553 = vunpack.c.l.s4 1983009808
        %v4554 = vunpack.c.0.s8 %v4553
        %v4555 = vlaneseq
        %v4556 = vshrl.u32 %v4555, 7
        %v4557 = vsub.s32 %v4554, %v4556
        %v4558 = vrot.slane %v4544, %v4557
        %v4559 = vcombine.high %v4551, %v4551
        %v4560 = vcombine.high %v4558, %v4558
        %v4561 = vcombine.high %v4315, %v4315
        %v4563 = vunpack.c.l.s4 1983009808
        %v4564 = vunpack.c.0.s8 %v4563
        %v4565 = vlaneseq
        %v4566 = vshrl.u32 %v4565, 7
        %v4567 = vsub.s32 %v4564, %v4566
        %v4568 = vrot.slane %v4315, %v4567
        %v4570 = vunpack.c.l.s4 1983009808
        %v4571 = vunpack.c.0.s8 %v4570
        %v4572 = vlaneseq
        %v4573 = vshrl.u32 %v4572, 7
        %v4574 = vsub.s32 %v4571, %v4573
        %v4575 = vrot.slane %v4561, %v4574
        %v4576 = vcombine.high %v4568, %v4568
        %v4577 = vcombine.high %v4575, %v4575
        %v4578 = vcombine.high %v4316, %v4316
        %v4580 = vunpack.c.l.s4 1983009808
        %v4581 = vunpack.c.0.s8 %v4580
        %v4582 = vlaneseq
        %v4583 = vshrl.u32 %v4582, 7
        %v4584 = vsub.s32 %v4581, %v4583
        %v4585 = vrot.slane %v4316, %v4584
        %v4587 = vunpack.c.l.s4 1983009808
        %v4588 = vunpack.c.0.s8 %v4587
        %v4589 = vlaneseq
        %v4590 = vshrl.u32 %v4589, 7
        %v4591 = vsub.s32 %v4588, %v4590
        %v4592 = vrot.slane %v4578, %v4591
        %v4593 = vcombine.high %v4585, %v4585
        %v4594 = vcombine.high %v4592, %v4592
        %v4595 = vcombine.high %v4317, %v4317
        %v4597 = vunpack.c.l.s4 1983009808
        %v4598 = vunpack.c.0.s8 %v4597
        %v4599 = vlaneseq
        %v4600 = vshrl.u32 %v4599, 7
        %v4601 = vsub.s32 %v4598, %v4600
        %v4602 = vrot.slane %v4317, %v4601
        %v4604 = vunpack.c.l.s4 1983009808
        %v4605 = vunpack.c.0.s8 %v4604
        %v4606 = vlaneseq
        %v4607 = vshrl.u32 %v4606, 7
        %v4608 = vsub.s32 %v4605, %v4607
        %v4609 = vrot.slane %v4595, %v4608
        %v4610 = vcombine.high %v4602, %v4602
        %v4611 = vcombine.high %v4609, %v4609
        %v4612 = vcombine.high %v4318, %v4318
        %v4614 = vunpack.c.l.s4 1983009808
        %v4615 = vunpack.c.0.s8 %v4614
        %v4616 = vlaneseq
        %v4617 = vshrl.u32 %v4616, 7
        %v4618 = vsub.s32 %v4615, %v4617
        %v4619 = vrot.slane %v4318, %v4618
        %v4621 = vunpack.c.l.s4 1983009808
        %v4622 = vunpack.c.0.s8 %v4621
        %v4623 = vlaneseq
        %v4624 = vshrl.u32 %v4623, 7
        %v4625 = vsub.s32 %v4622, %v4624
        %v4626 = vrot.slane %v4612, %v4625
        %v4627 = vcombine.high %v4619, %v4619
        %v4628 = vcombine.high %v4626, %v4626
        %v4629 = vcombine.high %v4319, %v4319
        %v4631 = vunpack.c.l.s4 1983009808
        %v4632 = vunpack.c.0.s8 %v4631
        %v4633 = vlaneseq
        %v4634 = vshrl.u32 %v4633, 7
        %v4635 = vsub.s32 %v4632, %v4634
        %v4636 = vrot.slane %v4319, %v4635
        %v4638 = vunpack.c.l.s4 1983009808
        %v4639 = vunpack.c.0.s8 %v4638
        %v4640 = vlaneseq
        %v4641 = vshrl.u32 %v4640, 7
        %v4642 = vsub.s32 %v4639, %v4641
        %v4643 = vrot.slane %v4629, %v4642
        %v4644 = vcombine.high %v4636, %v4636
        %v4645 = vcombine.high %v4643, %v4643
        %v4646 = vcombine.high %v4320, %v4320
        %v4648 = vunpack.c.l.s4 1983009808
        %v4649 = vunpack.c.0.s8 %v4648
        %v4650 = vlaneseq
        %v4651 = vshrl.u32 %v4650, 7
        %v4652 = vsub.s32 %v4649, %v4651
        %v4653 = vrot.slane %v4320, %v4652
        %v4655 = vunpack.c.l.s4 1983009808
        %v4656 = vunpack.c.0.s8 %v4655
        %v4657 = vlaneseq
        %v4658 = vshrl.u32 %v4657, 7
        %v4659 = vsub.s32 %v4656, %v4658
        %v4660 = vrot.slane %v4646, %v4659
        %v4661 = vcombine.high %v4653, %v4653
        %v4662 = vcombine.high %v4660, %v4660
        %v4663 = vcombine.high %v4321, %v4321
        %v4665 = vunpack.c.l.s4 1983009808
        %v4666 = vunpack.c.0.s8 %v4665
        %v4667 = vlaneseq
        %v4668 = vshrl.u32 %v4667, 7
        %v4669 = vsub.s32 %v4666, %v4668
        %v4670 = vrot.slane %v4321, %v4669
        %v4672 = vunpack.c.l.s4 1983009808
        %v4673 = vunpack.c.0.s8 %v4672
        %v4674 = vlaneseq
        %v4675 = vshrl.u32 %v4674, 7
        %v4676 = vsub.s32 %v4673, %v4675
        %v4677 = vrot.slane %v4663, %v4676
        %v4678 = vcombine.high %v4670, %v4670
        %v4679 = vcombine.high %v4677, %v4677
        %v4680 = vcombine.high %v4322, %v4322
        %v4682 = vunpack.c.l.s4 1983009808
        %v4683 = vunpack.c.0.s8 %v4682
        %v4684 = vlaneseq
        %v4685 = vshrl.u32 %v4684, 7
        %v4686 = vsub.s32 %v4683, %v4685
        %v4687 = vrot.slane %v4322, %v4686
        %v4689 = vunpack.c.l.s4 1983009808
        %v4690 = vunpack.c.0.s8 %v4689
        %v4691 = vlaneseq
        %v4692 = vshrl.u32 %v4691, 7
        %v4693 = vsub.s32 %v4690, %v4692
        %v4694 = vrot.slane %v4680, %v4693
        %v4695 = vcombine.high %v4687, %v4687
        %v4696 = vcombine.high %v4694, %v4694
        %v4697 = vcombine.high %v4323, %v4323
        %v4699 = vunpack.c.l.s4 1983009808
        %v4700 = vunpack.c.0.s8 %v4699
        %v4701 = vlaneseq
        %v4702 = vshrl.u32 %v4701, 7
        %v4703 = vsub.s32 %v4700, %v4702
        %v4704 = vrot.slane %v4323, %v4703
        %v4706 = vunpack.c.l.s4 1983009808
        %v4707 = vunpack.c.0.s8 %v4706
        %v4708 = vlaneseq
        %v4709 = vshrl.u32 %v4708, 7
        %v4710 = vsub.s32 %v4707, %v4709
        %v4711 = vrot.slane %v4697, %v4710
        %v4712 = vcombine.high %v4704, %v4704
        %v4713 = vcombine.high %v4711, %v4711
        %v4714 = vcombine.high %v4324, %v4324
        %v4716 = vunpack.c.l.s4 1983009808
        %v4717 = vunpack.c.0.s8 %v4716
        %v4718 = vlaneseq
        %v4719 = vshrl.u32 %v4718, 7
        %v4720 = vsub.s32 %v4717, %v4719
        %v4721 = vrot.slane %v4324, %v4720
        %v4723 = vunpack.c.l.s4 1983009808
        %v4724 = vunpack.c.0.s8 %v4723
        %v4725 = vlaneseq
        %v4726 = vshrl.u32 %v4725, 7
        %v4727 = vsub.s32 %v4724, %v4726
        %v4728 = vrot.slane %v4714, %v4727
        %v4729 = vcombine.high %v4721, %v4721
        %v4730 = vcombine.high %v4728, %v4728
        %v4731 = vcombine.high %v4325, %v4325
        %v4733 = vunpack.c.l.s4 1983009808
        %v4734 = vunpack.c.0.s8 %v4733
        %v4735 = vlaneseq
        %v4736 = vshrl.u32 %v4735, 7
        %v4737 = vsub.s32 %v4734, %v4736
        %v4738 = vrot.slane %v4325, %v4737
        %v4740 = vunpack.c.l.s4 1983009808
        %v4741 = vunpack.c.0.s8 %v4740
        %v4742 = vlaneseq
        %v4743 = vshrl.u32 %v4742, 7
        %v4744 = vsub.s32 %v4741, %v4743
        %v4745 = vrot.slane %v4731, %v4744
        %v4746 = vcombine.high %v4738, %v4738
        %v4747 = vcombine.high %v4745, %v4745
        %v4748 = vcombine.high %v4326, %v4326
        %v4750 = vunpack.c.l.s4 1983009808
        %v4751 = vunpack.c.0.s8 %v4750
        %v4752 = vlaneseq
        %v4753 = vshrl.u32 %v4752, 7
        %v4754 = vsub.s32 %v4751, %v4753
        %v4755 = vrot.slane %v4326, %v4754
        %v4757 = vunpack.c.l.s4 1983009808
        %v4758 = vunpack.c.0.s8 %v4757
        %v4759 = vlaneseq
        %v4760 = vshrl.u32 %v4759, 7
        %v4761 = vsub.s32 %v4758, %v4760
        %v4762 = vrot.slane %v4748, %v4761
        %v4763 = vcombine.high %v4755, %v4755
        %v4764 = vcombine.high %v4762, %v4762
        %v4765 = vcombine.high %v4327, %v4327
        %v4767 = vunpack.c.l.s4 1983009808
        %v4768 = vunpack.c.0.s8 %v4767
        %v4769 = vlaneseq
        %v4770 = vshrl.u32 %v4769, 7
        %v4771 = vsub.s32 %v4768, %v4770
        %v4772 = vrot.slane %v4327, %v4771
        %v4774 = vunpack.c.l.s4 1983009808
        %v4775 = vunpack.c.0.s8 %v4774
        %v4776 = vlaneseq
        %v4777 = vshrl.u32 %v4776, 7
        %v4778 = vsub.s32 %v4775, %v4777
        %v4779 = vrot.slane %v4765, %v4778
        %v4780 = vcombine.high %v4772, %v4772
        %v4781 = vcombine.high %v4779, %v4779
        %v4782 = vcombine.high %v4328, %v4328
        %v4784 = vunpack.c.l.s4 1983009808
        %v4785 = vunpack.c.0.s8 %v4784
        %v4786 = vlaneseq
        %v4787 = vshrl.u32 %v4786, 7
        %v4788 = vsub.s32 %v4785, %v4787
        %v4789 = vrot.slane %v4328, %v4788
        %v4791 = vunpack.c.l.s4 1983009808
        %v4792 = vunpack.c.0.s8 %v4791
        %v4793 = vlaneseq
        %v4794 = vshrl.u32 %v4793, 7
        %v4795 = vsub.s32 %v4792, %v4794
        %v4796 = vrot.slane %v4782, %v4795
        %v4797 = vcombine.high %v4789, %v4789
        %v4798 = vcombine.high %v4796, %v4796
        %v4799 = vcombine.high %v4329, %v4329
        %v4801 = vunpack.c.l.s4 1983009808
        %v4802 = vunpack.c.0.s8 %v4801
        %v4803 = vlaneseq
        %v4804 = vshrl.u32 %v4803, 7
        %v4805 = vsub.s32 %v4802, %v4804
        %v4806 = vrot.slane %v4329, %v4805
        %v4808 = vunpack.c.l.s4 1983009808
        %v4809 = vunpack.c.0.s8 %v4808
        %v4810 = vlaneseq
        %v4811 = vshrl.u32 %v4810, 7
        %v4812 = vsub.s32 %v4809, %v4811
        %v4813 = vrot.slane %v4799, %v4812
        %v4814 = vcombine.high %v4806, %v4806
        %v4815 = vcombine.high %v4813, %v4813
        %v4816 = vcombine.high %v4330, %v4330
        %v4818 = vunpack.c.l.s4 1983009808
        %v4819 = vunpack.c.0.s8 %v4818
        %v4820 = vlaneseq
        %v4821 = vshrl.u32 %v4820, 7
        %v4822 = vsub.s32 %v4819, %v4821
        %v4823 = vrot.slane %v4330, %v4822
        %v4825 = vunpack.c.l.s4 1983009808
        %v4826 = vunpack.c.0.s8 %v4825
        %v4827 = vlaneseq
        %v4828 = vshrl.u32 %v4827, 7
        %v4829 = vsub.s32 %v4826, %v4828
        %v4830 = vrot.slane %v4816, %v4829
        %v4831 = vcombine.high %v4823, %v4823
        %v4832 = vcombine.high %v4830, %v4830
        %v4833 = vcombine.high %v4331, %v4331
        %v4835 = vunpack.c.l.s4 1983009808
        %v4836 = vunpack.c.0.s8 %v4835
        %v4837 = vlaneseq
        %v4838 = vshrl.u32 %v4837, 7
        %v4839 = vsub.s32 %v4836, %v4838
        %v4840 = vrot.slane %v4331, %v4839
        %v4842 = vunpack.c.l.s4 1983009808
        %v4843 = vunpack.c.0.s8 %v4842
        %v4844 = vlaneseq
        %v4845 = vshrl.u32 %v4844, 7
        %v4846 = vsub.s32 %v4843, %v4845
        %v4847 = vrot.slane %v4833, %v4846
        %v4848 = vcombine.high %v4840, %v4840
        %v4849 = vcombine.high %v4847, %v4847
        %v4850 = vcombine.high %v4332, %v4332
        %v4852 = vunpack.c.l.s4 1983009808
        %v4853 = vunpack.c.0.s8 %v4852
        %v4854 = vlaneseq
        %v4855 = vshrl.u32 %v4854, 7
        %v4856 = vsub.s32 %v4853, %v4855
        %v4857 = vrot.slane %v4332, %v4856
        %v4859 = vunpack.c.l.s4 1983009808
        %v4860 = vunpack.c.0.s8 %v4859
        %v4861 = vlaneseq
        %v4862 = vshrl.u32 %v4861, 7
        %v4863 = vsub.s32 %v4860, %v4862
        %v4864 = vrot.slane %v4850, %v4863
        %v4865 = vcombine.high %v4857, %v4857
        %v4866 = vcombine.high %v4864, %v4864
        %v4867 = vcombine.high %v4333, %v4333
        %v4869 = vunpack.c.l.s4 1983009808
        %v4870 = vunpack.c.0.s8 %v4869
        %v4871 = vlaneseq
        %v4872 = vshrl.u32 %v4871, 7
        %v4873 = vsub.s32 %v4870, %v4872
        %v4874 = vrot.slane %v4333, %v4873
        %v4876 = vunpack.c.l.s4 1983009808
        %v4877 = vunpack.c.0.s8 %v4876
        %v4878 = vlaneseq
        %v4879 = vshrl.u32 %v4878, 7
        %v4880 = vsub.s32 %v4877, %v4879
        %v4881 = vrot.slane %v4867, %v4880
        %v4882 = vcombine.high %v4874, %v4874
        %v4883 = vcombine.high %v4881, %v4881
        %v4884 = vcombine.high %v4334, %v4334
        %v4886 = vunpack.c.l.s4 1983009808
        %v4887 = vunpack.c.0.s8 %v4886
        %v4888 = vlaneseq
        %v4889 = vshrl.u32 %v4888, 7
        %v4890 = vsub.s32 %v4887, %v4889
        %v4891 = vrot.slane %v4334, %v4890
        %v4893 = vunpack.c.l.s4 1983009808
        %v4894 = vunpack.c.0.s8 %v4893
        %v4895 = vlaneseq
        %v4896 = vshrl.u32 %v4895, 7
        %v4897 = vsub.s32 %v4894, %v4896
        %v4898 = vrot.slane %v4884, %v4897
        %v4899 = vcombine.high %v4891, %v4891
        %v4900 = vcombine.high %v4898, %v4898
        %v4901 = vcombine.high %v4335, %v4335
        %v4903 = vunpack.c.l.s4 1983009808
        %v4904 = vunpack.c.0.s8 %v4903
        %v4905 = vlaneseq
        %v4906 = vshrl.u32 %v4905, 7
        %v4907 = vsub.s32 %v4904, %v4906
        %v4908 = vrot.slane %v4335, %v4907
        %v4910 = vunpack.c.l.s4 1983009808
        %v4911 = vunpack.c.0.s8 %v4910
        %v4912 = vlaneseq
        %v4913 = vshrl.u32 %v4912, 7
        %v4914 = vsub.s32 %v4911, %v4913
        %v4915 = vrot.slane %v4901, %v4914
        %v4916 = vcombine.high %v4908, %v4908
        %v4917 = vcombine.high %v4915, %v4915
        %v4918 = vcombine.high %v4336, %v4336
        %v4920 = vunpack.c.l.s4 1983009808
        %v4921 = vunpack.c.0.s8 %v4920
        %v4922 = vlaneseq
        %v4923 = vshrl.u32 %v4922, 7
        %v4924 = vsub.s32 %v4921, %v4923
        %v4925 = vrot.slane %v4336, %v4924
        %v4927 = vunpack.c.l.s4 1983009808
        %v4928 = vunpack.c.0.s8 %v4927
        %v4929 = vlaneseq
        %v4930 = vshrl.u32 %v4929, 7
        %v4931 = vsub.s32 %v4928, %v4930
        %v4932 = vrot.slane %v4918, %v4931
        %v4933 = vcombine.high %v4925, %v4925
        %v4934 = vcombine.high %v4932, %v4932
        %v4935 = vcombine.high %v4337, %v4337
        %v4937 = vunpack.c.l.s4 1983009808
        %v4938 = vunpack.c.0.s8 %v4937
        %v4939 = vlaneseq
        %v4940 = vshrl.u32 %v4939, 7
        %v4941 = vsub.s32 %v4938, %v4940
        %v4942 = vrot.slane %v4337, %v4941
        %v4944 = vunpack.c.l.s4 1983009808
        %v4945 = vunpack.c.0.s8 %v4944
        %v4946 = vlaneseq
        %v4947 = vshrl.u32 %v4946, 7
        %v4948 = vsub.s32 %v4945, %v4947
        %v4949 = vrot.slane %v4935, %v4948
        %v4950 = vcombine.high %v4942, %v4942
        %v4951 = vcombine.high %v4949, %v4949
        %v4952 = vcombine.high %v4338, %v4338
        %v4954 = vunpack.c.l.s4 1983009808
        %v4955 = vunpack.c.0.s8 %v4954
        %v4956 = vlaneseq
        %v4957 = vshrl.u32 %v4956, 7
        %v4958 = vsub.s32 %v4955, %v4957
        %v4959 = vrot.slane %v4338, %v4958
        %v4961 = vunpack.c.l.s4 1983009808
        %v4962 = vunpack.c.0.s8 %v4961
        %v4963 = vlaneseq
        %v4964 = vshrl.u32 %v4963, 7
        %v4965 = vsub.s32 %v4962, %v4964
        %v4966 = vrot.slane %v4952, %v4965
        %v4967 = vcombine.high %v4959, %v4959
        %v4968 = vcombine.high %v4966, %v4966
        %v4969 = vcombine.high %v4339, %v4339
        %v4971 = vunpack.c.l.s4 1983009808
        %v4972 = vunpack.c.0.s8 %v4971
        %v4973 = vlaneseq
        %v4974 = vshrl.u32 %v4973, 7
        %v4975 = vsub.s32 %v4972, %v4974
        %v4976 = vrot.slane %v4339, %v4975
        %v4978 = vunpack.c.l.s4 1983009808
        %v4979 = vunpack.c.0.s8 %v4978
        %v4980 = vlaneseq
        %v4981 = vshrl.u32 %v4980, 7
        %v4982 = vsub.s32 %v4979, %v4981
        %v4983 = vrot.slane %v4969, %v4982
        %v4984 = vcombine.high %v4976, %v4976
        %v4985 = vcombine.high %v4983, %v4983
        %v4986 = vcombine.high %v4340, %v4340
        %v4988 = vunpack.c.l.s4 1983009808
        %v4989 = vunpack.c.0.s8 %v4988
        %v4990 = vlaneseq
        %v4991 = vshrl.u32 %v4990, 7
        %v4992 = vsub.s32 %v4989, %v4991
        %v4993 = vrot.slane %v4340, %v4992
        %v4995 = vunpack.c.l.s4 1983009808
        %v4996 = vunpack.c.0.s8 %v4995
        %v4997 = vlaneseq
        %v4998 = vshrl.u32 %v4997, 7
        %v4999 = vsub.s32 %v4996, %v4998
        %v5000 = vrot.slane %v4986, %v4999
        %v5001 = vcombine.high %v4993, %v4993
        %v5002 = vcombine.high %v5000, %v5000
        %v5003 = vcombine.high %v4341, %v4341
        %v5005 = vunpack.c.l.s4 1983009808
        %v5006 = vunpack.c.0.s8 %v5005
        %v5007 = vlaneseq
        %v5008 = vshrl.u32 %v5007, 7
        %v5009 = vsub.s32 %v5006, %v5008
        %v5010 = vrot.slane %v4341, %v5009
        %v5012 = vunpack.c.l.s4 1983009808
        %v5013 = vunpack.c.0.s8 %v5012
        %v5014 = vlaneseq
        %v5015 = vshrl.u32 %v5014, 7
        %v5016 = vsub.s32 %v5013, %v5015
        %v5017 = vrot.slane %v5003, %v5016
        %v5018 = vcombine.high %v5010, %v5010
        %v5019 = vcombine.high %v5017, %v5017
        %v5020 = vcombine.high %v4342, %v4342
        %v5022 = vunpack.c.l.s4 1983009808
        %v5023 = vunpack.c.0.s8 %v5022
        %v5024 = vlaneseq
        %v5025 = vshrl.u32 %v5024, 7
        %v5026 = vsub.s32 %v5023, %v5025
        %v5027 = vrot.slane %v4342, %v5026
        %v5029 = vunpack.c.l.s4 1983009808
        %v5030 = vunpack.c.0.s8 %v5029
        %v5031 = vlaneseq
        %v5032 = vshrl.u32 %v5031, 7
        %v5033 = vsub.s32 %v5030, %v5032
        %v5034 = vrot.slane %v5020, %v5033
        %v5035 = vcombine.high %v5027, %v5027
        %v5036 = vcombine.high %v5034, %v5034
        %v5037 = vcombine.high %v4343, %v4343
        %v5039 = vunpack.c.l.s4 1983009808
        %v5040 = vunpack.c.0.s8 %v5039
        %v5041 = vlaneseq
        %v5042 = vshrl.u32 %v5041, 7
        %v5043 = vsub.s32 %v5040, %v5042
        %v5044 = vrot.slane %v4343, %v5043
        %v5046 = vunpack.c.l.s4 1983009808
        %v5047 = vunpack.c.0.s8 %v5046
        %v5048 = vlaneseq
        %v5049 = vshrl.u32 %v5048, 7
        %v5050 = vsub.s32 %v5047, %v5049
        %v5051 = vrot.slane %v5037, %v5050
        %v5052 = vcombine.high %v5044, %v5044
        %v5053 = vcombine.high %v5051, %v5051
        %v5054 = vcombine.high %v4344, %v4344
        %v5056 = vunpack.c.l.s4 1983009808
        %v5057 = vunpack.c.0.s8 %v5056
        %v5058 = vlaneseq
        %v5059 = vshrl.u32 %v5058, 7
        %v5060 = vsub.s32 %v5057, %v5059
        %v5061 = vrot.slane %v4344, %v5060
        %v5063 = vunpack.c.l.s4 1983009808
        %v5064 = vunpack.c.0.s8 %v5063
        %v5065 = vlaneseq
        %v5066 = vshrl.u32 %v5065, 7
        %v5067 = vsub.s32 %v5064, %v5066
        %v5068 = vrot.slane %v5054, %v5067
        %v5069 = vcombine.high %v5061, %v5061
        %v5070 = vcombine.high %v5068, %v5068
        %v5071 = vcombine.high %v4345, %v4345
        %v5073 = vunpack.c.l.s4 1983009808
        %v5074 = vunpack.c.0.s8 %v5073
        %v5075 = vlaneseq
        %v5076 = vshrl.u32 %v5075, 7
        %v5077 = vsub.s32 %v5074, %v5076
        %v5078 = vrot.slane %v4345, %v5077
        %v5080 = vunpack.c.l.s4 1983009808
        %v5081 = vunpack.c.0.s8 %v5080
        %v5082 = vlaneseq
        %v5083 = vshrl.u32 %v5082, 7
        %v5084 = vsub.s32 %v5081, %v5083
        %v5085 = vrot.slane %v5071, %v5084
        %v5086 = vcombine.high %v5078, %v5078
        %v5087 = vcombine.high %v5085, %v5085
        %v5088 = vcombine.high %v4346, %v4346
        %v5090 = vunpack.c.l.s4 1983009808
        %v5091 = vunpack.c.0.s8 %v5090
        %v5092 = vlaneseq
        %v5093 = vshrl.u32 %v5092, 7
        %v5094 = vsub.s32 %v5091, %v5093
        %v5095 = vrot.slane %v4346, %v5094
        %v5097 = vunpack.c.l.s4 1983009808
        %v5098 = vunpack.c.0.s8 %v5097
        %v5099 = vlaneseq
        %v5100 = vshrl.u32 %v5099, 7
        %v5101 = vsub.s32 %v5098, %v5100
        %v5102 = vrot.slane %v5088, %v5101
        %v5103 = vcombine.high %v5095, %v5095
        %v5104 = vcombine.high %v5102, %v5102
        %v5106 = vunpack.c.l.s4 1983009808
        %v5107 = vunpack.c.0.s8 %v5106
        %v5108 = vlaneseq
        %v5109 = vshrl.u32 %v5108, 7
        %v5110 = vsub.s32 %v5107, %v5109
        %v5111 = vrot.slane %v4347, %v5110
        %v5112 = vcombine.high %v5111, %v5111
        %v5113 = vstv %s313
        %v5114 = vadd.s32 %v5113, 1
        %v5115 = vadd.s32 %v5113, 2
        %v5116 = vadd.s32 %v5113, 3
        %v5117 = vadd.s32 %v5113, 4
        %v5118 = vadd.s32 %v5113, 5
        %v5119 = vadd.s32 %v5113, 6
        %v5120 = vadd.s32 %v5113, 7
        %v5121 = vadd.s32 %v5113, 8
        %v5122 = vadd.s32 %v5113, 9
        %v5123 = vlaneseq
        %v5124 = vshrl.u32 %v5123, 7
        %v5125 = vadd.s32 %v5124, 8
        %v5126 = vadd.s32 %v5124, 16
        %v5127 = vadd.s32 %v5124, 24
        %v5128 = vadd.s32 %v5124, 32
        %vm5129 = vcmp.gt.s32.totalorder %v5113, 0
        %vm5130 = vcmp.gt.s32.totalorder %v5114, 0
        %vm5131 = vcmp.gt.s32.totalorder %v5115, 0
        %vm5132 = vcmp.gt.s32.totalorder %v5116, 0
        %vm5133 = vcmp.gt.s32.totalorder %v5117, 0
        %vm5134 = vcmp.gt.s32.totalorder %v5118, 0
        %vm5135 = vcmp.gt.s32.totalorder %v5119, 0
        %vm5136 = vcmp.gt.s32.totalorder %v5120, 0
        %vm5137 = vcmp.gt.s32.totalorder %v5121, 0
        %vm5138 = vcmp.gt.s32.totalorder %v5122, 0
        %vm5139 = vcmp.lt.s32.totalorder %v5113, 33
        %vm5140 = vcmp.lt.s32.totalorder %v5114, 33
        %vm5141 = vcmp.lt.s32.totalorder %v5115, 33
        %vm5142 = vcmp.lt.s32.totalorder %v5116, 33
        %vm5143 = vcmp.lt.s32.totalorder %v5117, 33
        %vm5144 = vcmp.lt.s32.totalorder %v5118, 33
        %vm5145 = vcmp.lt.s32.totalorder %v5119, 33
        %vm5146 = vcmp.lt.s32.totalorder %v5120, 33
        %vm5147 = vcmp.lt.s32.totalorder %v5121, 33
        %vm5148 = vcmp.lt.s32.totalorder %v5122, 33
        %vm5149 = vmand %vm5129, %vm5139
        %vm5150 = vmand %vm5130, %vm5140
        %vm5151 = vmand %vm5131, %vm5141
        %vm5152 = vmand %vm5132, %vm5142
        %vm5153 = vmand %vm5133, %vm5143
        %vm5154 = vmand %vm5134, %vm5144
        %vm5155 = vmand %vm5135, %vm5145
        %vm5156 = vmand %vm5136, %vm5146
        %vm5157 = vmand %vm5137, %vm5147
        %vm5158 = vmand %vm5138, %vm5148
        %vm5159 = vcmp.gt.s32.totalorder %v5124, 0
        %vm5160 = vcmp.gt.s32.totalorder %v5125, 0
        %vm5161 = vcmp.gt.s32.totalorder %v5126, 0
        %vm5162 = vcmp.gt.s32.totalorder %v5127, 0
        %vm5163 = vcmp.gt.s32.totalorder %v5128, 0
        %vm5164 = vmand %vm5149, %vm5159
        %vm5165 = vmand %vm5149, %vm5160
        %vm5166 = vmand %vm5149, %vm5161
        %vm5167 = vmand %vm5149, %vm5162
        %vm5168 = vmand %vm5149, %vm5163
        %vm5169 = vmand %vm5150, %vm5159
        %vm5170 = vmand %vm5150, %vm5160
        %vm5171 = vmand %vm5150, %vm5161
        %vm5172 = vmand %vm5150, %vm5162
        %vm5173 = vmand %vm5150, %vm5163
        %vm5174 = vmand %vm5151, %vm5159
        %vm5175 = vmand %vm5151, %vm5160
        %vm5176 = vmand %vm5151, %vm5161
        %vm5177 = vmand %vm5151, %vm5162
        %vm5178 = vmand %vm5151, %vm5163
        %vm5179 = vmand %vm5152, %vm5159
        %vm5180 = vmand %vm5152, %vm5160
        %vm5181 = vmand %vm5152, %vm5161
        %vm5182 = vmand %vm5152, %vm5162
        %vm5183 = vmand %vm5152, %vm5163
        %vm5184 = vmand %vm5153, %vm5159
        %vm5185 = vmand %vm5153, %vm5160
        %vm5186 = vmand %vm5153, %vm5161
        %vm5187 = vmand %vm5153, %vm5162
        %vm5188 = vmand %vm5153, %vm5163
        %vm5189 = vmand %vm5154, %vm5159
        %vm5190 = vmand %vm5154, %vm5160
        %vm5191 = vmand %vm5154, %vm5161
        %vm5192 = vmand %vm5154, %vm5162
        %vm5193 = vmand %vm5154, %vm5163
        %vm5194 = vmand %vm5155, %vm5159
        %vm5195 = vmand %vm5155, %vm5160
        %vm5196 = vmand %vm5155, %vm5161
        %vm5197 = vmand %vm5155, %vm5162
        %vm5198 = vmand %vm5155, %vm5163
        %vm5199 = vmand %vm5156, %vm5159
        %vm5200 = vmand %vm5156, %vm5160
        %vm5201 = vmand %vm5156, %vm5161
        %vm5202 = vmand %vm5156, %vm5162
        %vm5203 = vmand %vm5156, %vm5163
        %vm5204 = vmand %vm5157, %vm5159
        %vm5205 = vmand %vm5157, %vm5160
        %vm5206 = vmand %vm5157, %vm5161
        %vm5207 = vmand %vm5157, %vm5162
        %vm5208 = vmand %vm5157, %vm5163
        %vm5209 = vmand %vm5158, %vm5159
        %vm5210 = vmand %vm5158, %vm5160
        %vm5211 = vmand %vm5158, %vm5161
        %vm5212 = vmand %vm5158, %vm5162
        %vm5213 = vmand %vm5158, %vm5163
        %vm5214 = vcmp.lt.s32.totalorder %v5124, 33
        %vm5215 = vcmp.lt.s32.totalorder %v5125, 33
        %vm5216 = vcmp.lt.s32.totalorder %v5126, 33
        %vm5217 = vcmp.lt.s32.totalorder %v5127, 33
        %vm5218 = vcmp.lt.s32.totalorder %v5128, 33
        %vm5219 = vmand %vm5164, %vm5214
        %vm5220 = vmand %vm5165, %vm5215
        %vm5221 = vmand %vm5166, %vm5216
        %vm5222 = vmand %vm5167, %vm5217
        %vm5223 = vmand %vm5168, %vm5218
        %vm5224 = vmand %vm5169, %vm5214
        %vm5225 = vmand %vm5170, %vm5215
        %vm5226 = vmand %vm5171, %vm5216
        %vm5227 = vmand %vm5172, %vm5217
        %vm5228 = vmand %vm5173, %vm5218
        %vm5229 = vmand %vm5174, %vm5214
        %vm5230 = vmand %vm5175, %vm5215
        %vm5231 = vmand %vm5176, %vm5216
        %vm5232 = vmand %vm5177, %vm5217
        %vm5233 = vmand %vm5178, %vm5218
        %vm5234 = vmand %vm5179, %vm5214
        %vm5235 = vmand %vm5180, %vm5215
        %vm5236 = vmand %vm5181, %vm5216
        %vm5237 = vmand %vm5182, %vm5217
        %vm5238 = vmand %vm5183, %vm5218
        %vm5239 = vmand %vm5184, %vm5214
        %vm5240 = vmand %vm5185, %vm5215
        %vm5241 = vmand %vm5186, %vm5216
        %vm5242 = vmand %vm5187, %vm5217
        %vm5243 = vmand %vm5188, %vm5218
        %vm5244 = vmand %vm5189, %vm5214
        %vm5245 = vmand %vm5190, %vm5215
        %vm5246 = vmand %vm5191, %vm5216
        %vm5247 = vmand %vm5192, %vm5217
        %vm5248 = vmand %vm5193, %vm5218
        %vm5249 = vmand %vm5194, %vm5214
        %vm5250 = vmand %vm5195, %vm5215
        %vm5251 = vmand %vm5196, %vm5216
        %vm5252 = vmand %vm5197, %vm5217
        %vm5253 = vmand %vm5198, %vm5218
        %vm5254 = vmand %vm5199, %vm5214
        %vm5255 = vmand %vm5200, %vm5215
        %vm5256 = vmand %vm5201, %vm5216
        %vm5257 = vmand %vm5202, %vm5217
        %vm5258 = vmand %vm5203, %vm5218
        %vm5259 = vmand %vm5204, %vm5214
        %vm5260 = vmand %vm5205, %vm5215
        %vm5261 = vmand %vm5206, %vm5216
        %vm5262 = vmand %vm5207, %vm5217
        %vm5263 = vmand %vm5208, %vm5218
        %vm5264 = vmand %vm5209, %vm5214
        %vm5265 = vmand %vm5210, %vm5215
        %vm5266 = vmand %vm5211, %vm5216
        %vm5267 = vmand %vm5212, %vm5217
        %vm5268 = vmand %vm5213, %vm5218
        %v5269 = vcombine.low %v4398, %v4406
        %v5270 = vcombine.low %v4405, %v4407
        %v5272 = vunpack.c.l.s4 1983009808
        %v5273 = vunpack.c.0.s8 %v5272
        %v5274 = vlaneseq
        %v5275 = vshrl.u32 %v5274, 7
        %v5276 = vsub.s32 %v5273, %v5275
        %v5277 = vrot.slane %v5269, %v5276
        %v5279 = vunpack.c.l.s4 1983009808
        %v5280 = vunpack.c.0.s8 %v5279
        %v5281 = vlaneseq
        %v5282 = vshrl.u32 %v5281, 7
        %v5283 = vsub.s32 %v5280, %v5282
        %v5284 = vrot.slane %v5270, %v5283
        %v5285 = vcombine.low %v5277, %v5284
        %v5286 = vcombine.low %v4415, %v4423
        %v5287 = vcombine.low %v4422, %v4424
        %v5289 = vunpack.c.l.s4 1983009808
        %v5290 = vunpack.c.0.s8 %v5289
        %v5291 = vlaneseq
        %v5292 = vshrl.u32 %v5291, 7
        %v5293 = vsub.s32 %v5290, %v5292
        %v5294 = vrot.slane %v5286, %v5293
        %v5296 = vunpack.c.l.s4 1983009808
        %v5297 = vunpack.c.0.s8 %v5296
        %v5298 = vlaneseq
        %v5299 = vshrl.u32 %v5298, 7
        %v5300 = vsub.s32 %v5297, %v5299
        %v5301 = vrot.slane %v5287, %v5300
        %v5302 = vcombine.low %v5294, %v5301
        %v5303 = vcombine.low %v4432, %v4440
        %v5304 = vcombine.low %v4439, %v4441
        %v5306 = vunpack.c.l.s4 1983009808
        %v5307 = vunpack.c.0.s8 %v5306
        %v5308 = vlaneseq
        %v5309 = vshrl.u32 %v5308, 7
        %v5310 = vsub.s32 %v5307, %v5309
        %v5311 = vrot.slane %v5303, %v5310
        %v5313 = vunpack.c.l.s4 1983009808
        %v5314 = vunpack.c.0.s8 %v5313
        %v5315 = vlaneseq
        %v5316 = vshrl.u32 %v5315, 7
        %v5317 = vsub.s32 %v5314, %v5316
        %v5318 = vrot.slane %v5304, %v5317
        %v5319 = vcombine.low %v5311, %v5318
        %v5320 = vcombine.low %v4449, %v4457
        %v5321 = vcombine.low %v4456, %v4458
        %v5323 = vunpack.c.l.s4 1983009808
        %v5324 = vunpack.c.0.s8 %v5323
        %v5325 = vlaneseq
        %v5326 = vshrl.u32 %v5325, 7
        %v5327 = vsub.s32 %v5324, %v5326
        %v5328 = vrot.slane %v5320, %v5327
        %v5330 = vunpack.c.l.s4 1983009808
        %v5331 = vunpack.c.0.s8 %v5330
        %v5332 = vlaneseq
        %v5333 = vshrl.u32 %v5332, 7
        %v5334 = vsub.s32 %v5331, %v5333
        %v5335 = vrot.slane %v5321, %v5334
        %v5336 = vcombine.low %v5328, %v5335
        %v5338 = vunpack.c.l.s4 1983009808
        %v5339 = vunpack.c.0.s8 %v5338
        %v5340 = vlaneseq
        %v5341 = vshrl.u32 %v5340, 7
        %v5342 = vsub.s32 %v5339, %v5341
        %v5343 = vrot.slane %v4466, %v5342
        %v5344 = vcombine.low %v4474, %v4473
        %v5345 = vcombine.low %v4475, %v4483
        %v5347 = vunpack.c.l.s4 1983009808
        %v5348 = vunpack.c.0.s8 %v5347
        %v5349 = vlaneseq
        %v5350 = vshrl.u32 %v5349, 7
        %v5351 = vsub.s32 %v5348, %v5350
        %v5352 = vrot.slane %v5344, %v5351
        %v5354 = vunpack.c.l.s4 1983009808
        %v5355 = vunpack.c.0.s8 %v5354
        %v5356 = vlaneseq
        %v5357 = vshrl.u32 %v5356, 7
        %v5358 = vsub.s32 %v5355, %v5357
        %v5359 = vrot.slane %v5345, %v5358
        %v5360 = vcombine.low %v5352, %v5359
        %v5361 = vcombine.low %v4491, %v4490
        %v5362 = vcombine.low %v4492, %v4500
        %v5364 = vunpack.c.l.s4 1983009808
        %v5365 = vunpack.c.0.s8 %v5364
        %v5366 = vlaneseq
        %v5367 = vshrl.u32 %v5366, 7
        %v5368 = vsub.s32 %v5365, %v5367
        %v5369 = vrot.slane %v5361, %v5368
        %v5371 = vunpack.c.l.s4 1983009808
        %v5372 = vunpack.c.0.s8 %v5371
        %v5373 = vlaneseq
        %v5374 = vshrl.u32 %v5373, 7
        %v5375 = vsub.s32 %v5372, %v5374
        %v5376 = vrot.slane %v5362, %v5375
        %v5377 = vcombine.low %v5369, %v5376
        %v5378 = vcombine.low %v4508, %v4507
        %v5379 = vcombine.low %v4509, %v4517
        %v5381 = vunpack.c.l.s4 1983009808
        %v5382 = vunpack.c.0.s8 %v5381
        %v5383 = vlaneseq
        %v5384 = vshrl.u32 %v5383, 7
        %v5385 = vsub.s32 %v5382, %v5384
        %v5386 = vrot.slane %v5378, %v5385
        %v5388 = vunpack.c.l.s4 1983009808
        %v5389 = vunpack.c.0.s8 %v5388
        %v5390 = vlaneseq
        %v5391 = vshrl.u32 %v5390, 7
        %v5392 = vsub.s32 %v5389, %v5391
        %v5393 = vrot.slane %v5379, %v5392
        %v5394 = vcombine.low %v5386, %v5393
        %v5395 = vcombine.low %v4525, %v4524
        %v5396 = vcombine.low %v4526, %v4534
        %v5398 = vunpack.c.l.s4 1983009808
        %v5399 = vunpack.c.0.s8 %v5398
        %v5400 = vlaneseq
        %v5401 = vshrl.u32 %v5400, 7
        %v5402 = vsub.s32 %v5399, %v5401
        %v5403 = vrot.slane %v5395, %v5402
        %v5405 = vunpack.c.l.s4 1983009808
        %v5406 = vunpack.c.0.s8 %v5405
        %v5407 = vlaneseq
        %v5408 = vshrl.u32 %v5407, 7
        %v5409 = vsub.s32 %v5406, %v5408
        %v5410 = vrot.slane %v5396, %v5409
        %v5411 = vcombine.low %v5403, %v5410
        %v5413 = vunpack.c.l.s4 1983009808
        %v5414 = vunpack.c.0.s8 %v5413
        %v5415 = vlaneseq
        %v5416 = vshrl.u32 %v5415, 7
        %v5417 = vsub.s32 %v5414, %v5416
        %v5418 = vrot.slane %v4542, %v5417
        %v5419 = vcombine.low %v4541, %v4543
        %v5420 = vcombine.low %v4551, %v4559
        %v5422 = vunpack.c.l.s4 1983009808
        %v5423 = vunpack.c.0.s8 %v5422
        %v5424 = vlaneseq
        %v5425 = vshrl.u32 %v5424, 7
        %v5426 = vsub.s32 %v5423, %v5425
        %v5427 = vrot.slane %v5419, %v5426
        %v5429 = vunpack.c.l.s4 1983009808
        %v5430 = vunpack.c.0.s8 %v5429
        %v5431 = vlaneseq
        %v5432 = vshrl.u32 %v5431, 7
        %v5433 = vsub.s32 %v5430, %v5432
        %v5434 = vrot.slane %v5420, %v5433
        %v5435 = vcombine.low %v5427, %v5434
        %v5436 = vcombine.low %v4558, %v4560
        %v5437 = vcombine.low %v4568, %v4576
        %v5439 = vunpack.c.l.s4 1983009808
        %v5440 = vunpack.c.0.s8 %v5439
        %v5441 = vlaneseq
        %v5442 = vshrl.u32 %v5441, 7
        %v5443 = vsub.s32 %v5440, %v5442
        %v5444 = vrot.slane %v5436, %v5443
        %v5446 = vunpack.c.l.s4 1983009808
        %v5447 = vunpack.c.0.s8 %v5446
        %v5448 = vlaneseq
        %v5449 = vshrl.u32 %v5448, 7
        %v5450 = vsub.s32 %v5447, %v5449
        %v5451 = vrot.slane %v5437, %v5450
        %v5452 = vcombine.low %v5444, %v5451
        %v5453 = vcombine.low %v4575, %v4577
        %v5454 = vcombine.low %v4585, %v4593
        %v5456 = vunpack.c.l.s4 1983009808
        %v5457 = vunpack.c.0.s8 %v5456
        %v5458 = vlaneseq
        %v5459 = vshrl.u32 %v5458, 7
        %v5460 = vsub.s32 %v5457, %v5459
        %v5461 = vrot.slane %v5453, %v5460
        %v5463 = vunpack.c.l.s4 1983009808
        %v5464 = vunpack.c.0.s8 %v5463
        %v5465 = vlaneseq
        %v5466 = vshrl.u32 %v5465, 7
        %v5467 = vsub.s32 %v5464, %v5466
        %v5468 = vrot.slane %v5454, %v5467
        %v5469 = vcombine.low %v5461, %v5468
        %v5470 = vcombine.low %v4592, %v4594
        %v5471 = vcombine.low %v4602, %v4610
        %v5473 = vunpack.c.l.s4 1983009808
        %v5474 = vunpack.c.0.s8 %v5473
        %v5475 = vlaneseq
        %v5476 = vshrl.u32 %v5475, 7
        %v5477 = vsub.s32 %v5474, %v5476
        %v5478 = vrot.slane %v5470, %v5477
        %v5480 = vunpack.c.l.s4 1983009808
        %v5481 = vunpack.c.0.s8 %v5480
        %v5482 = vlaneseq
        %v5483 = vshrl.u32 %v5482, 7
        %v5484 = vsub.s32 %v5481, %v5483
        %v5485 = vrot.slane %v5471, %v5484
        %v5486 = vcombine.low %v5478, %v5485
        %v5488 = vunpack.c.l.s4 1983009808
        %v5489 = vunpack.c.0.s8 %v5488
        %v5490 = vlaneseq
        %v5491 = vshrl.u32 %v5490, 7
        %v5492 = vsub.s32 %v5489, %v5491
        %v5493 = vrot.slane %v4609, %v5492
        %v5494 = vcombine.low %v4611, %v4619
        %v5495 = vcombine.low %v4627, %v4626
        %v5497 = vunpack.c.l.s4 1983009808
        %v5498 = vunpack.c.0.s8 %v5497
        %v5499 = vlaneseq
        %v5500 = vshrl.u32 %v5499, 7
        %v5501 = vsub.s32 %v5498, %v5500
        %v5502 = vrot.slane %v5494, %v5501
        %v5504 = vunpack.c.l.s4 1983009808
        %v5505 = vunpack.c.0.s8 %v5504
        %v5506 = vlaneseq
        %v5507 = vshrl.u32 %v5506, 7
        %v5508 = vsub.s32 %v5505, %v5507
        %v5509 = vrot.slane %v5495, %v5508
        %v5510 = vcombine.low %v5502, %v5509
        %v5511 = vcombine.low %v4628, %v4636
        %v5512 = vcombine.low %v4644, %v4643
        %v5514 = vunpack.c.l.s4 1983009808
        %v5515 = vunpack.c.0.s8 %v5514
        %v5516 = vlaneseq
        %v5517 = vshrl.u32 %v5516, 7
        %v5518 = vsub.s32 %v5515, %v5517
        %v5519 = vrot.slane %v5511, %v5518
        %v5521 = vunpack.c.l.s4 1983009808
        %v5522 = vunpack.c.0.s8 %v5521
        %v5523 = vlaneseq
        %v5524 = vshrl.u32 %v5523, 7
        %v5525 = vsub.s32 %v5522, %v5524
        %v5526 = vrot.slane %v5512, %v5525
        %v5527 = vcombine.low %v5519, %v5526
        %v5528 = vcombine.low %v4645, %v4653
        %v5529 = vcombine.low %v4661, %v4660
        %v5531 = vunpack.c.l.s4 1983009808
        %v5532 = vunpack.c.0.s8 %v5531
        %v5533 = vlaneseq
        %v5534 = vshrl.u32 %v5533, 7
        %v5535 = vsub.s32 %v5532, %v5534
        %v5536 = vrot.slane %v5528, %v5535
        %v5538 = vunpack.c.l.s4 1983009808
        %v5539 = vunpack.c.0.s8 %v5538
        %v5540 = vlaneseq
        %v5541 = vshrl.u32 %v5540, 7
        %v5542 = vsub.s32 %v5539, %v5541
        %v5543 = vrot.slane %v5529, %v5542
        %v5544 = vcombine.low %v5536, %v5543
        %v5545 = vcombine.low %v4662, %v4670
        %v5546 = vcombine.low %v4678, %v4677
        %v5548 = vunpack.c.l.s4 1983009808
        %v5549 = vunpack.c.0.s8 %v5548
        %v5550 = vlaneseq
        %v5551 = vshrl.u32 %v5550, 7
        %v5552 = vsub.s32 %v5549, %v5551
        %v5553 = vrot.slane %v5545, %v5552
        %v5555 = vunpack.c.l.s4 1983009808
        %v5556 = vunpack.c.0.s8 %v5555
        %v5557 = vlaneseq
        %v5558 = vshrl.u32 %v5557, 7
        %v5559 = vsub.s32 %v5556, %v5558
        %v5560 = vrot.slane %v5546, %v5559
        %v5561 = vcombine.low %v5553, %v5560
        %v5563 = vunpack.c.l.s4 1983009808
        %v5564 = vunpack.c.0.s8 %v5563
        %v5565 = vlaneseq
        %v5566 = vshrl.u32 %v5565, 7
        %v5567 = vsub.s32 %v5564, %v5566
        %v5568 = vrot.slane %v4679, %v5567
        %v5569 = vcombine.low %v4687, %v4695
        %v5570 = vcombine.low %v4694, %v4696
        %v5572 = vunpack.c.l.s4 1983009808
        %v5573 = vunpack.c.0.s8 %v5572
        %v5574 = vlaneseq
        %v5575 = vshrl.u32 %v5574, 7
        %v5576 = vsub.s32 %v5573, %v5575
        %v5577 = vrot.slane %v5569, %v5576
        %v5579 = vunpack.c.l.s4 1983009808
        %v5580 = vunpack.c.0.s8 %v5579
        %v5581 = vlaneseq
        %v5582 = vshrl.u32 %v5581, 7
        %v5583 = vsub.s32 %v5580, %v5582
        %v5584 = vrot.slane %v5570, %v5583
        %v5585 = vcombine.low %v5577, %v5584
        %v5586 = vcombine.low %v4704, %v4712
        %v5587 = vcombine.low %v4711, %v4713
        %v5589 = vunpack.c.l.s4 1983009808
        %v5590 = vunpack.c.0.s8 %v5589
        %v5591 = vlaneseq
        %v5592 = vshrl.u32 %v5591, 7
        %v5593 = vsub.s32 %v5590, %v5592
        %v5594 = vrot.slane %v5586, %v5593
        %v5596 = vunpack.c.l.s4 1983009808
        %v5597 = vunpack.c.0.s8 %v5596
        %v5598 = vlaneseq
        %v5599 = vshrl.u32 %v5598, 7
        %v5600 = vsub.s32 %v5597, %v5599
        %v5601 = vrot.slane %v5587, %v5600
        %v5602 = vcombine.low %v5594, %v5601
        %v5603 = vcombine.low %v4721, %v4729
        %v5604 = vcombine.low %v4728, %v4730
        %v5606 = vunpack.c.l.s4 1983009808
        %v5607 = vunpack.c.0.s8 %v5606
        %v5608 = vlaneseq
        %v5609 = vshrl.u32 %v5608, 7
        %v5610 = vsub.s32 %v5607, %v5609
        %v5611 = vrot.slane %v5603, %v5610
        %v5613 = vunpack.c.l.s4 1983009808
        %v5614 = vunpack.c.0.s8 %v5613
        %v5615 = vlaneseq
        %v5616 = vshrl.u32 %v5615, 7
        %v5617 = vsub.s32 %v5614, %v5616
        %v5618 = vrot.slane %v5604, %v5617
        %v5619 = vcombine.low %v5611, %v5618
        %v5620 = vcombine.low %v4738, %v4746
        %v5621 = vcombine.low %v4745, %v4747
        %v5623 = vunpack.c.l.s4 1983009808
        %v5624 = vunpack.c.0.s8 %v5623
        %v5625 = vlaneseq
        %v5626 = vshrl.u32 %v5625, 7
        %v5627 = vsub.s32 %v5624, %v5626
        %v5628 = vrot.slane %v5620, %v5627
        %v5630 = vunpack.c.l.s4 1983009808
        %v5631 = vunpack.c.0.s8 %v5630
        %v5632 = vlaneseq
        %v5633 = vshrl.u32 %v5632, 7
        %v5634 = vsub.s32 %v5631, %v5633
        %v5635 = vrot.slane %v5621, %v5634
        %v5636 = vcombine.low %v5628, %v5635
        %v5638 = vunpack.c.l.s4 1983009808
        %v5639 = vunpack.c.0.s8 %v5638
        %v5640 = vlaneseq
        %v5641 = vshrl.u32 %v5640, 7
        %v5642 = vsub.s32 %v5639, %v5641
        %v5643 = vrot.slane %v4755, %v5642
        %v5644 = vcombine.low %v4763, %v4762
        %v5645 = vcombine.low %v4764, %v4772
        %v5647 = vunpack.c.l.s4 1983009808
        %v5648 = vunpack.c.0.s8 %v5647
        %v5649 = vlaneseq
        %v5650 = vshrl.u32 %v5649, 7
        %v5651 = vsub.s32 %v5648, %v5650
        %v5652 = vrot.slane %v5644, %v5651
        %v5654 = vunpack.c.l.s4 1983009808
        %v5655 = vunpack.c.0.s8 %v5654
        %v5656 = vlaneseq
        %v5657 = vshrl.u32 %v5656, 7
        %v5658 = vsub.s32 %v5655, %v5657
        %v5659 = vrot.slane %v5645, %v5658
        %v5660 = vcombine.low %v5652, %v5659
        %v5661 = vcombine.low %v4780, %v4779
        %v5662 = vcombine.low %v4781, %v4789
        %v5664 = vunpack.c.l.s4 1983009808
        %v5665 = vunpack.c.0.s8 %v5664
        %v5666 = vlaneseq
        %v5667 = vshrl.u32 %v5666, 7
        %v5668 = vsub.s32 %v5665, %v5667
        %v5669 = vrot.slane %v5661, %v5668
        %v5671 = vunpack.c.l.s4 1983009808
        %v5672 = vunpack.c.0.s8 %v5671
        %v5673 = vlaneseq
        %v5674 = vshrl.u32 %v5673, 7
        %v5675 = vsub.s32 %v5672, %v5674
        %v5676 = vrot.slane %v5662, %v5675
        %v5677 = vcombine.low %v5669, %v5676
        %v5678 = vcombine.low %v4797, %v4796
        %v5679 = vcombine.low %v4798, %v4806
        %v5681 = vunpack.c.l.s4 1983009808
        %v5682 = vunpack.c.0.s8 %v5681
        %v5683 = vlaneseq
        %v5684 = vshrl.u32 %v5683, 7
        %v5685 = vsub.s32 %v5682, %v5684
        %v5686 = vrot.slane %v5678, %v5685
        %v5688 = vunpack.c.l.s4 1983009808
        %v5689 = vunpack.c.0.s8 %v5688
        %v5690 = vlaneseq
        %v5691 = vshrl.u32 %v5690, 7
        %v5692 = vsub.s32 %v5689, %v5691
        %v5693 = vrot.slane %v5679, %v5692
        %v5694 = vcombine.low %v5686, %v5693
        %v5695 = vcombine.low %v4814, %v4813
        %v5696 = vcombine.low %v4815, %v4823
        %v5698 = vunpack.c.l.s4 1983009808
        %v5699 = vunpack.c.0.s8 %v5698
        %v5700 = vlaneseq
        %v5701 = vshrl.u32 %v5700, 7
        %v5702 = vsub.s32 %v5699, %v5701
        %v5703 = vrot.slane %v5695, %v5702
        %v5705 = vunpack.c.l.s4 1983009808
        %v5706 = vunpack.c.0.s8 %v5705
        %v5707 = vlaneseq
        %v5708 = vshrl.u32 %v5707, 7
        %v5709 = vsub.s32 %v5706, %v5708
        %v5710 = vrot.slane %v5696, %v5709
        %v5711 = vcombine.low %v5703, %v5710
        %v5713 = vunpack.c.l.s4 1983009808
        %v5714 = vunpack.c.0.s8 %v5713
        %v5715 = vlaneseq
        %v5716 = vshrl.u32 %v5715, 7
        %v5717 = vsub.s32 %v5714, %v5716
        %v5718 = vrot.slane %v4831, %v5717
        %v5719 = vcombine.low %v4830, %v4832
        %v5720 = vcombine.low %v4840, %v4848
        %v5722 = vunpack.c.l.s4 1983009808
        %v5723 = vunpack.c.0.s8 %v5722
        %v5724 = vlaneseq
        %v5725 = vshrl.u32 %v5724, 7
        %v5726 = vsub.s32 %v5723, %v5725
        %v5727 = vrot.slane %v5719, %v5726
        %v5729 = vunpack.c.l.s4 1983009808
        %v5730 = vunpack.c.0.s8 %v5729
        %v5731 = vlaneseq
        %v5732 = vshrl.u32 %v5731, 7
        %v5733 = vsub.s32 %v5730, %v5732
        %v5734 = vrot.slane %v5720, %v5733
        %v5735 = vcombine.low %v5727, %v5734
        %v5736 = vcombine.low %v4847, %v4849
        %v5737 = vcombine.low %v4857, %v4865
        %v5739 = vunpack.c.l.s4 1983009808
        %v5740 = vunpack.c.0.s8 %v5739
        %v5741 = vlaneseq
        %v5742 = vshrl.u32 %v5741, 7
        %v5743 = vsub.s32 %v5740, %v5742
        %v5744 = vrot.slane %v5736, %v5743
        %v5746 = vunpack.c.l.s4 1983009808
        %v5747 = vunpack.c.0.s8 %v5746
        %v5748 = vlaneseq
        %v5749 = vshrl.u32 %v5748, 7
        %v5750 = vsub.s32 %v5747, %v5749
        %v5751 = vrot.slane %v5737, %v5750
        %v5752 = vcombine.low %v5744, %v5751
        %v5753 = vcombine.low %v4864, %v4866
        %v5754 = vcombine.low %v4874, %v4882
        %v5756 = vunpack.c.l.s4 1983009808
        %v5757 = vunpack.c.0.s8 %v5756
        %v5758 = vlaneseq
        %v5759 = vshrl.u32 %v5758, 7
        %v5760 = vsub.s32 %v5757, %v5759
        %v5761 = vrot.slane %v5753, %v5760
        %v5763 = vunpack.c.l.s4 1983009808
        %v5764 = vunpack.c.0.s8 %v5763
        %v5765 = vlaneseq
        %v5766 = vshrl.u32 %v5765, 7
        %v5767 = vsub.s32 %v5764, %v5766
        %v5768 = vrot.slane %v5754, %v5767
        %v5769 = vcombine.low %v5761, %v5768
        %v5770 = vcombine.low %v4881, %v4883
        %v5771 = vcombine.low %v4891, %v4899
        %v5773 = vunpack.c.l.s4 1983009808
        %v5774 = vunpack.c.0.s8 %v5773
        %v5775 = vlaneseq
        %v5776 = vshrl.u32 %v5775, 7
        %v5777 = vsub.s32 %v5774, %v5776
        %v5778 = vrot.slane %v5770, %v5777
        %v5780 = vunpack.c.l.s4 1983009808
        %v5781 = vunpack.c.0.s8 %v5780
        %v5782 = vlaneseq
        %v5783 = vshrl.u32 %v5782, 7
        %v5784 = vsub.s32 %v5781, %v5783
        %v5785 = vrot.slane %v5771, %v5784
        %v5786 = vcombine.low %v5778, %v5785
        %v5788 = vunpack.c.l.s4 1983009808
        %v5789 = vunpack.c.0.s8 %v5788
        %v5790 = vlaneseq
        %v5791 = vshrl.u32 %v5790, 7
        %v5792 = vsub.s32 %v5789, %v5791
        %v5793 = vrot.slane %v4898, %v5792
        %v5794 = vcombine.low %v4900, %v4908
        %v5795 = vcombine.low %v4916, %v4915
        %v5797 = vunpack.c.l.s4 1983009808
        %v5798 = vunpack.c.0.s8 %v5797
        %v5799 = vlaneseq
        %v5800 = vshrl.u32 %v5799, 7
        %v5801 = vsub.s32 %v5798, %v5800
        %v5802 = vrot.slane %v5794, %v5801
        %v5804 = vunpack.c.l.s4 1983009808
        %v5805 = vunpack.c.0.s8 %v5804
        %v5806 = vlaneseq
        %v5807 = vshrl.u32 %v5806, 7
        %v5808 = vsub.s32 %v5805, %v5807
        %v5809 = vrot.slane %v5795, %v5808
        %v5810 = vcombine.low %v5802, %v5809
        %v5811 = vcombine.low %v4917, %v4925
        %v5812 = vcombine.low %v4933, %v4932
        %v5814 = vunpack.c.l.s4 1983009808
        %v5815 = vunpack.c.0.s8 %v5814
        %v5816 = vlaneseq
        %v5817 = vshrl.u32 %v5816, 7
        %v5818 = vsub.s32 %v5815, %v5817
        %v5819 = vrot.slane %v5811, %v5818
        %v5821 = vunpack.c.l.s4 1983009808
        %v5822 = vunpack.c.0.s8 %v5821
        %v5823 = vlaneseq
        %v5824 = vshrl.u32 %v5823, 7
        %v5825 = vsub.s32 %v5822, %v5824
        %v5826 = vrot.slane %v5812, %v5825
        %v5827 = vcombine.low %v5819, %v5826
        %v5828 = vcombine.low %v4934, %v4942
        %v5829 = vcombine.low %v4950, %v4949
        %v5831 = vunpack.c.l.s4 1983009808
        %v5832 = vunpack.c.0.s8 %v5831
        %v5833 = vlaneseq
        %v5834 = vshrl.u32 %v5833, 7
        %v5835 = vsub.s32 %v5832, %v5834
        %v5836 = vrot.slane %v5828, %v5835
        %v5838 = vunpack.c.l.s4 1983009808
        %v5839 = vunpack.c.0.s8 %v5838
        %v5840 = vlaneseq
        %v5841 = vshrl.u32 %v5840, 7
        %v5842 = vsub.s32 %v5839, %v5841
        %v5843 = vrot.slane %v5829, %v5842
        %v5844 = vcombine.low %v5836, %v5843
        %v5845 = vcombine.low %v4951, %v4959
        %v5846 = vcombine.low %v4967, %v4966
        %v5848 = vunpack.c.l.s4 1983009808
        %v5849 = vunpack.c.0.s8 %v5848
        %v5850 = vlaneseq
        %v5851 = vshrl.u32 %v5850, 7
        %v5852 = vsub.s32 %v5849, %v5851
        %v5853 = vrot.slane %v5845, %v5852
        %v5855 = vunpack.c.l.s4 1983009808
        %v5856 = vunpack.c.0.s8 %v5855
        %v5857 = vlaneseq
        %v5858 = vshrl.u32 %v5857, 7
        %v5859 = vsub.s32 %v5856, %v5858
        %v5860 = vrot.slane %v5846, %v5859
        %v5861 = vcombine.low %v5853, %v5860
        %v5863 = vunpack.c.l.s4 1983009808
        %v5864 = vunpack.c.0.s8 %v5863
        %v5865 = vlaneseq
        %v5866 = vshrl.u32 %v5865, 7
        %v5867 = vsub.s32 %v5864, %v5866
        %v5868 = vrot.slane %v4968, %v5867
        %v5869 = vcombine.low %v4976, %v4984
        %v5870 = vcombine.low %v4983, %v4985
        %v5872 = vunpack.c.l.s4 1983009808
        %v5873 = vunpack.c.0.s8 %v5872
        %v5874 = vlaneseq
        %v5875 = vshrl.u32 %v5874, 7
        %v5876 = vsub.s32 %v5873, %v5875
        %v5877 = vrot.slane %v5869, %v5876
        %v5879 = vunpack.c.l.s4 1983009808
        %v5880 = vunpack.c.0.s8 %v5879
        %v5881 = vlaneseq
        %v5882 = vshrl.u32 %v5881, 7
        %v5883 = vsub.s32 %v5880, %v5882
        %v5884 = vrot.slane %v5870, %v5883
        %v5885 = vcombine.low %v5877, %v5884
        %v5886 = vcombine.low %v4993, %v5001
        %v5887 = vcombine.low %v5000, %v5002
        %v5889 = vunpack.c.l.s4 1983009808
        %v5890 = vunpack.c.0.s8 %v5889
        %v5891 = vlaneseq
        %v5892 = vshrl.u32 %v5891, 7
        %v5893 = vsub.s32 %v5890, %v5892
        %v5894 = vrot.slane %v5886, %v5893
        %v5896 = vunpack.c.l.s4 1983009808
        %v5897 = vunpack.c.0.s8 %v5896
        %v5898 = vlaneseq
        %v5899 = vshrl.u32 %v5898, 7
        %v5900 = vsub.s32 %v5897, %v5899
        %v5901 = vrot.slane %v5887, %v5900
        %v5902 = vcombine.low %v5894, %v5901
        %v5903 = vcombine.low %v5010, %v5018
        %v5904 = vcombine.low %v5017, %v5019
        %v5906 = vunpack.c.l.s4 1983009808
        %v5907 = vunpack.c.0.s8 %v5906
        %v5908 = vlaneseq
        %v5909 = vshrl.u32 %v5908, 7
        %v5910 = vsub.s32 %v5907, %v5909
        %v5911 = vrot.slane %v5903, %v5910
        %v5913 = vunpack.c.l.s4 1983009808
        %v5914 = vunpack.c.0.s8 %v5913
        %v5915 = vlaneseq
        %v5916 = vshrl.u32 %v5915, 7
        %v5917 = vsub.s32 %v5914, %v5916
        %v5918 = vrot.slane %v5904, %v5917
        %v5919 = vcombine.low %v5911, %v5918
        %v5920 = vcombine.low %v5027, %v5035
        %v5921 = vcombine.low %v5034, %v5036
        %v5923 = vunpack.c.l.s4 1983009808
        %v5924 = vunpack.c.0.s8 %v5923
        %v5925 = vlaneseq
        %v5926 = vshrl.u32 %v5925, 7
        %v5927 = vsub.s32 %v5924, %v5926
        %v5928 = vrot.slane %v5920, %v5927
        %v5930 = vunpack.c.l.s4 1983009808
        %v5931 = vunpack.c.0.s8 %v5930
        %v5932 = vlaneseq
        %v5933 = vshrl.u32 %v5932, 7
        %v5934 = vsub.s32 %v5931, %v5933
        %v5935 = vrot.slane %v5921, %v5934
        %v5936 = vcombine.low %v5928, %v5935
        %v5938 = vunpack.c.l.s4 1983009808
        %v5939 = vunpack.c.0.s8 %v5938
        %v5940 = vlaneseq
        %v5941 = vshrl.u32 %v5940, 7
        %v5942 = vsub.s32 %v5939, %v5941
        %v5943 = vrot.slane %v5044, %v5942
        %v5944 = vcombine.low %v5052, %v5051
        %v5945 = vcombine.low %v5053, %v5061
        %v5947 = vunpack.c.l.s4 1983009808
        %v5948 = vunpack.c.0.s8 %v5947
        %v5949 = vlaneseq
        %v5950 = vshrl.u32 %v5949, 7
        %v5951 = vsub.s32 %v5948, %v5950
        %v5952 = vrot.slane %v5944, %v5951
        %v5954 = vunpack.c.l.s4 1983009808
        %v5955 = vunpack.c.0.s8 %v5954
        %v5956 = vlaneseq
        %v5957 = vshrl.u32 %v5956, 7
        %v5958 = vsub.s32 %v5955, %v5957
        %v5959 = vrot.slane %v5945, %v5958
        %v5960 = vcombine.low %v5952, %v5959
        %v5961 = vcombine.low %v5069, %v5068
        %v5962 = vcombine.low %v5070, %v5078
        %v5964 = vunpack.c.l.s4 1983009808
        %v5965 = vunpack.c.0.s8 %v5964
        %v5966 = vlaneseq
        %v5967 = vshrl.u32 %v5966, 7
        %v5968 = vsub.s32 %v5965, %v5967
        %v5969 = vrot.slane %v5961, %v5968
        %v5971 = vunpack.c.l.s4 1983009808
        %v5972 = vunpack.c.0.s8 %v5971
        %v5973 = vlaneseq
        %v5974 = vshrl.u32 %v5973, 7
        %v5975 = vsub.s32 %v5972, %v5974
        %v5976 = vrot.slane %v5962, %v5975
        %v5977 = vcombine.low %v5969, %v5976
        %v5978 = vcombine.low %v5086, %v5085
        %v5979 = vcombine.low %v5087, %v5095
        %v5981 = vunpack.c.l.s4 1983009808
        %v5982 = vunpack.c.0.s8 %v5981
        %v5983 = vlaneseq
        %v5984 = vshrl.u32 %v5983, 7
        %v5985 = vsub.s32 %v5982, %v5984
        %v5986 = vrot.slane %v5978, %v5985
        %v5988 = vunpack.c.l.s4 1983009808
        %v5989 = vunpack.c.0.s8 %v5988
        %v5990 = vlaneseq
        %v5991 = vshrl.u32 %v5990, 7
        %v5992 = vsub.s32 %v5989, %v5991
        %v5993 = vrot.slane %v5979, %v5992
        %v5994 = vcombine.low %v5986, %v5993
        %v5995 = vcombine.low %v5103, %v5102
        %v5996 = vcombine.low %v5104, %v5111
        %v5998 = vunpack.c.l.s4 1983009808
        %v5999 = vunpack.c.0.s8 %v5998
        %v6000 = vlaneseq
        %v6001 = vshrl.u32 %v6000, 7
        %v6002 = vsub.s32 %v5999, %v6001
        %v6003 = vrot.slane %v5995, %v6002
        %v6005 = vunpack.c.l.s4 1983009808
        %v6006 = vunpack.c.0.s8 %v6005
        %v6007 = vlaneseq
        %v6008 = vshrl.u32 %v6007, 7
        %v6009 = vsub.s32 %v6006, %v6008
        %v6010 = vrot.slane %v5996, %v6009
        %v6011 = vcombine.low %v6003, %v6010
        %v6013 = vunpack.c.l.s4 1983009808
        %v6014 = vunpack.c.0.s8 %v6013
        %v6015 = vlaneseq
        %v6016 = vshrl.u32 %v6015, 7
        %v6017 = vsub.s32 %v6014, %v6016
        %v6018 = vrot.slane %v5112, %v6017
        %v6069 = vsel %vm5219, %v5285, 0.0
        %v6070 = vsel %vm5220, %v5302, 0.0
        %v6071 = vsel %vm5221, %v5319, 0.0
        %v6072 = vsel %vm5222, %v5336, 0.0
        %v6073 = vsel %vm5223, %v5343, 0.0
        %v6074 = vsel %vm5224, %v5360, 0.0
        %v6075 = vsel %vm5225, %v5377, 0.0
        %v6076 = vsel %vm5226, %v5394, 0.0
        %v6077 = vsel %vm5227, %v5411, 0.0
        %v6078 = vsel %vm5228, %v5418, 0.0
        %v6079 = vsel %vm5229, %v5435, 0.0
        %v6080 = vsel %vm5230, %v5452, 0.0
        %v6081 = vsel %vm5231, %v5469, 0.0
        %v6082 = vsel %vm5232, %v5486, 0.0
        %v6083 = vsel %vm5233, %v5493, 0.0
        %v6084 = vsel %vm5234, %v5510, 0.0
        %v6085 = vsel %vm5235, %v5527, 0.0
        %v6086 = vsel %vm5236, %v5544, 0.0
        %v6087 = vsel %vm5237, %v5561, 0.0
        %v6088 = vsel %vm5238, %v5568, 0.0
        %v6089 = vsel %vm5239, %v5585, 0.0
        %v6090 = vsel %vm5240, %v5602, 0.0
        %v6091 = vsel %vm5241, %v5619, 0.0
        %v6092 = vsel %vm5242, %v5636, 0.0
        %v6093 = vsel %vm5243, %v5643, 0.0
        %v6094 = vsel %vm5244, %v5660, 0.0
        %v6095 = vsel %vm5245, %v5677, 0.0
        %v6096 = vsel %vm5246, %v5694, 0.0
        %v6097 = vsel %vm5247, %v5711, 0.0
        %v6098 = vsel %vm5248, %v5718, 0.0
        %v6099 = vsel %vm5249, %v5735, 0.0
        %v6100 = vsel %vm5250, %v5752, 0.0
        %v6101 = vsel %vm5251, %v5769, 0.0
        %v6102 = vsel %vm5252, %v5786, 0.0
        %v6103 = vsel %vm5253, %v5793, 0.0
        %v6104 = vsel %vm5254, %v5810, 0.0
        %v6105 = vsel %vm5255, %v5827, 0.0
        %v6106 = vsel %vm5256, %v5844, 0.0
        %v6107 = vsel %vm5257, %v5861, 0.0
        %v6108 = vsel %vm5258, %v5868, 0.0
        %v6109 = vsel %vm5259, %v5885, 0.0
        %v6110 = vsel %vm5260, %v5902, 0.0
        %v6111 = vsel %vm5261, %v5919, 0.0
        %v6112 = vsel %vm5262, %v5936, 0.0
        %v6113 = vsel %vm5263, %v5943, 0.0
        %v6114 = vsel %vm5264, %v5960, 0.0
        %v6115 = vsel %vm5265, %v5977, 0.0
        %v6116 = vsel %vm5266, %v5994, 0.0
        %v6117 = vsel %vm5267, %v6011, 0.0
        %v6118 = vsel %vm5268, %v6018, 0.0
        %6119 = vst.msk [vmem:[#allocation2] sm:$0xff] %vm1968, %v6069
        %6120 = vst.msk [vmem:[#allocation2 + $0x8] sm:$0xff] %vm1968, %v6070
        %6121 = vst.msk [vmem:[#allocation2 + $0x10] sm:$0xff] %vm1968, %v6071
        %6122 = vst.msk [vmem:[#allocation2 + $0x18] sm:$0xff] %vm1968, %v6072
        %vm6123 = vcmask 58368
        %6124 = vst.msk [vmem:[#allocation2 + $0x20] sm:$0x3] %vm6123, %v6073
        %6125 = vst.msk [vmem:[#allocation2 + $0x28] sm:$0xff] %vm1968, %v6074
        %6126 = vst.msk [vmem:[#allocation2 + $0x30] sm:$0xff] %vm1968, %v6075
        %6127 = vst.msk [vmem:[#allocation2 + $0x38] sm:$0xff] %vm1968, %v6076
        %6128 = vst.msk [vmem:[#allocation2 + $0x40] sm:$0xff] %vm1968, %v6077
        %6129 = vst.msk [vmem:[#allocation2 + $0x48] sm:$0x3] %vm6123, %v6078
        %6130 = vst.msk [vmem:[#allocation2 + $0x50] sm:$0xff] %vm1968, %v6079
        %6131 = vst.msk [vmem:[#allocation2 + $0x58] sm:$0xff] %vm1968, %v6080
        %6132 = vst.msk [vmem:[#allocation2 + $0x60] sm:$0xff] %vm1968, %v6081
        %6133 = vst.msk [vmem:[#allocation2 + $0x68] sm:$0xff] %vm1968, %v6082
        %6134 = vst.msk [vmem:[#allocation2 + $0x70] sm:$0x3] %vm6123, %v6083
        %6135 = vst.msk [vmem:[#allocation2 + $0x78] sm:$0xff] %vm1968, %v6084
        %6136 = vst.msk [vmem:[#allocation2 + $0x80] sm:$0xff] %vm1968, %v6085
        %6137 = vst.msk [vmem:[#allocation2 + $0x88] sm:$0xff] %vm1968, %v6086
        %6138 = vst.msk [vmem:[#allocation2 + $0x90] sm:$0xff] %vm1968, %v6087
        %6139 = vst.msk [vmem:[#allocation2 + $0x98] sm:$0x3] %vm6123, %v6088
        %6140 = vst.msk [vmem:[#allocation2 + $0xa0] sm:$0xff] %vm1968, %v6089
        %6141 = vst.msk [vmem:[#allocation2 + $0xa8] sm:$0xff] %vm1968, %v6090
        %6142 = vst.msk [vmem:[#allocation2 + $0xb0] sm:$0xff] %vm1968, %v6091
        %6143 = vst.msk [vmem:[#allocation2 + $0xb8] sm:$0xff] %vm1968, %v6092
        %6144 = vst.msk [vmem:[#allocation2 + $0xc0] sm:$0x3] %vm6123, %v6093
        %6145 = vst.msk [vmem:[#allocation2 + $0xc8] sm:$0xff] %vm1968, %v6094
        %6146 = vst.msk [vmem:[#allocation2 + $0xd0] sm:$0xff] %vm1968, %v6095
        %6147 = vst.msk [vmem:[#allocation2 + $0xd8] sm:$0xff] %vm1968, %v6096
        %6148 = vst.msk [vmem:[#allocation2 + $0xe0] sm:$0xff] %vm1968, %v6097
        %6149 = vst.msk [vmem:[#allocation2 + $0xe8] sm:$0x3] %vm6123, %v6098
        %6150 = vst.msk [vmem:[#allocation2 + $0xf0] sm:$0xff] %vm1968, %v6099
        %6151 = vst.msk [vmem:[#allocation2 + $0xf8] sm:$0xff] %vm1968, %v6100
        %6152 = vst.msk [vmem:[#allocation2 + $0x100] sm:$0xff] %vm1968, %v6101
        %6153 = vst.msk [vmem:[#allocation2 + $0x108] sm:$0xff] %vm1968, %v6102
        %6154 = vst.msk [vmem:[#allocation2 + $0x110] sm:$0x3] %vm6123, %v6103
        %6155 = vst.msk [vmem:[#allocation2 + $0x118] sm:$0xff] %vm1968, %v6104
        %6156 = vst.msk [vmem:[#allocation2 + $0x120] sm:$0xff] %vm1968, %v6105
        %6157 = vst.msk [vmem:[#allocation2 + $0x128] sm:$0xff] %vm1968, %v6106
        %6158 = vst.msk [vmem:[#allocation2 + $0x130] sm:$0xff] %vm1968, %v6107
        %6159 = vst.msk [vmem:[#allocation2 + $0x138] sm:$0x3] %vm6123, %v6108
        %6160 = vst.msk [vmem:[#allocation2 + $0x140] sm:$0xff] %vm1968, %v6109
        %6161 = vst.msk [vmem:[#allocation2 + $0x148] sm:$0xff] %vm1968, %v6110
        %6162 = vst.msk [vmem:[#allocation2 + $0x150] sm:$0xff] %vm1968, %v6111
        %6163 = vst.msk [vmem:[#allocation2 + $0x158] sm:$0xff] %vm1968, %v6112
        %6164 = vst.msk [vmem:[#allocation2 + $0x160] sm:$0x3] %vm6123, %v6113
        %6165 = vst.msk [vmem:[#allocation2 + $0x168] sm:$0xff] %vm1968, %v6114
        %6166 = vst.msk [vmem:[#allocation2 + $0x170] sm:$0xff] %vm1968, %v6115
        %6167 = vst.msk [vmem:[#allocation2 + $0x178] sm:$0xff] %vm1968, %v6116
        %6168 = vst.msk [vmem:[#allocation2 + $0x180] sm:$0xff] %vm1968, %v6117
        %6169 = vst.msk [vmem:[#allocation2 + $0x188] sm:$0x3] %vm6123, %v6118
        %v6170 = vld [vmem:[#allocation2] sm:$0xff]
        %v6171 = vld [vmem:[#allocation2 + $0x8] sm:$0xff]
        %v6172 = vld [vmem:[#allocation2 + $0x10] sm:$0xff]
        %v6173 = vld [vmem:[#allocation2 + $0x18] sm:$0xff]
        %v6174 = vld [vmem:[#allocation2 + $0x28] sm:$0xff]
        %v6175 = vld [vmem:[#allocation2 + $0x30] sm:$0xff]
        %v6176 = vld [vmem:[#allocation2 + $0x38] sm:$0xff]
        %v6177 = vld [vmem:[#allocation2 + $0x40] sm:$0xff]
        %v6178 = vld [vmem:[#allocation2 + $0x50] sm:$0xff]
        %v6179 = vld [vmem:[#allocation2 + $0x58] sm:$0xff]
        %v6180 = vld [vmem:[#allocation2 + $0x60] sm:$0xff]
        %v6181 = vld [vmem:[#allocation2 + $0x68] sm:$0xff]
        %v6182 = vld [vmem:[#allocation2 + $0x78] sm:$0xff]
        %v6183 = vld [vmem:[#allocation2 + $0x80] sm:$0xff]
        %v6184 = vld [vmem:[#allocation2 + $0x88] sm:$0xff]
        %v6185 = vld [vmem:[#allocation2 + $0x90] sm:$0xff]
        %v6186 = vld [vmem:[#allocation2 + $0xa0] sm:$0xff]
        %v6187 = vld [vmem:[#allocation2 + $0xa8] sm:$0xff]
        %v6188 = vld [vmem:[#allocation2 + $0xb0] sm:$0xff]
        %v6189 = vld [vmem:[#allocation2 + $0xb8] sm:$0xff]
        %v6190 = vld [vmem:[#allocation2 + $0xc8] sm:$0xff]
        %v6191 = vld [vmem:[#allocation2 + $0xd0] sm:$0xff]
        %v6192 = vld [vmem:[#allocation2 + $0xd8] sm:$0xff]
        %v6193 = vld [vmem:[#allocation2 + $0xe0] sm:$0xff]
        %v6194 = vld [vmem:[#allocation2 + $0xf0] sm:$0xff]
        %v6195 = vld [vmem:[#allocation2 + $0xf8] sm:$0xff]
        %v6196 = vld [vmem:[#allocation2 + $0x100] sm:$0xff]
        %v6197 = vld [vmem:[#allocation2 + $0x108] sm:$0xff]
        %v6198 = vld [vmem:[#allocation2 + $0x118] sm:$0xff]
        %v6199 = vld [vmem:[#allocation2 + $0x120] sm:$0xff]
        %v6200 = vld [vmem:[#allocation2 + $0x128] sm:$0xff]
        %v6201 = vld [vmem:[#allocation2 + $0x130] sm:$0xff]
        %v6202 = vld [vmem:[#allocation2 + $0x1] sm:$0xff]
        %v6203 = vld [vmem:[#allocation2 + $0x9] sm:$0xff]
        %v6204 = vld [vmem:[#allocation2 + $0x11] sm:$0xff]
        %v6205 = vld [vmem:[#allocation2 + $0x19] sm:$0xff]
        %v6206 = vld [vmem:[#allocation2 + $0x29] sm:$0xff]
        %v6207 = vld [vmem:[#allocation2 + $0x31] sm:$0xff]
        %v6208 = vld [vmem:[#allocation2 + $0x39] sm:$0xff]
        %v6209 = vld [vmem:[#allocation2 + $0x41] sm:$0xff]
        %v6210 = vld [vmem:[#allocation2 + $0x51] sm:$0xff]
        %v6211 = vld [vmem:[#allocation2 + $0x59] sm:$0xff]
        %v6212 = vld [vmem:[#allocation2 + $0x61] sm:$0xff]
        %v6213 = vld [vmem:[#allocation2 + $0x69] sm:$0xff]
        %v6214 = vld [vmem:[#allocation2 + $0x79] sm:$0xff]
        %v6215 = vld [vmem:[#allocation2 + $0x81] sm:$0xff]
        %v6216 = vld [vmem:[#allocation2 + $0x89] sm:$0xff]
        %v6217 = vld [vmem:[#allocation2 + $0x91] sm:$0xff]
        %v6218 = vld [vmem:[#allocation2 + $0xa1] sm:$0xff]
        %v6219 = vld [vmem:[#allocation2 + $0xa9] sm:$0xff]
        %v6220 = vld [vmem:[#allocation2 + $0xb1] sm:$0xff]
        %v6221 = vld [vmem:[#allocation2 + $0xb9] sm:$0xff]
        %v6222 = vld [vmem:[#allocation2 + $0xc9] sm:$0xff]
        %v6223 = vld [vmem:[#allocation2 + $0xd1] sm:$0xff]
        %v6224 = vld [vmem:[#allocation2 + $0xd9] sm:$0xff]
        %v6225 = vld [vmem:[#allocation2 + $0xe1] sm:$0xff]
        %v6226 = vld [vmem:[#allocation2 + $0xf1] sm:$0xff]
        %v6227 = vld [vmem:[#allocation2 + $0xf9] sm:$0xff]
        %v6228 = vld [vmem:[#allocation2 + $0x101] sm:$0xff]
        %v6229 = vld [vmem:[#allocation2 + $0x109] sm:$0xff]
        %v6230 = vld [vmem:[#allocation2 + $0x119] sm:$0xff]
        %v6231 = vld [vmem:[#allocation2 + $0x121] sm:$0xff]
        %v6232 = vld [vmem:[#allocation2 + $0x129] sm:$0xff]
        %v6233 = vld [vmem:[#allocation2 + $0x131] sm:$0xff]
        %v6234 = vld [vmem:[#allocation2 + $0x2] sm:$0xff]
        %v6235 = vld [vmem:[#allocation2 + $0xa] sm:$0xff]
        %v6236 = vld [vmem:[#allocation2 + $0x12] sm:$0xff]
        %v6237 = vld [vmem:[#allocation2 + $0x1a] sm:$0xff]
        %v6238 = vld [vmem:[#allocation2 + $0x2a] sm:$0xff]
        %v6239 = vld [vmem:[#allocation2 + $0x32] sm:$0xff]
        %v6240 = vld [vmem:[#allocation2 + $0x3a] sm:$0xff]
        %v6241 = vld [vmem:[#allocation2 + $0x42] sm:$0xff]
        %v6242 = vld [vmem:[#allocation2 + $0x52] sm:$0xff]
        %v6243 = vld [vmem:[#allocation2 + $0x5a] sm:$0xff]
        %v6244 = vld [vmem:[#allocation2 + $0x62] sm:$0xff]
        %v6245 = vld [vmem:[#allocation2 + $0x6a] sm:$0xff]
        %v6246 = vld [vmem:[#allocation2 + $0x7a] sm:$0xff]
        %v6247 = vld [vmem:[#allocation2 + $0x82] sm:$0xff]
        %v6248 = vld [vmem:[#allocation2 + $0x8a] sm:$0xff]
        %v6249 = vld [vmem:[#allocation2 + $0x92] sm:$0xff]
        %v6250 = vld [vmem:[#allocation2 + $0xa2] sm:$0xff]
        %v6251 = vld [vmem:[#allocation2 + $0xaa] sm:$0xff]
        %v6252 = vld [vmem:[#allocation2 + $0xb2] sm:$0xff]
        %v6253 = vld [vmem:[#allocation2 + $0xba] sm:$0xff]
        %v6254 = vld [vmem:[#allocation2 + $0xca] sm:$0xff]
        %v6255 = vld [vmem:[#allocation2 + $0xd2] sm:$0xff]
        %v6256 = vld [vmem:[#allocation2 + $0xda] sm:$0xff]
        %v6257 = vld [vmem:[#allocation2 + $0xe2] sm:$0xff]
        %v6258 = vld [vmem:[#allocation2 + $0xf2] sm:$0xff]
        %v6259 = vld [vmem:[#allocation2 + $0xfa] sm:$0xff]
        %v6260 = vld [vmem:[#allocation2 + $0x102] sm:$0xff]
        %v6261 = vld [vmem:[#allocation2 + $0x10a] sm:$0xff]
        %v6262 = vld [vmem:[#allocation2 + $0x11a] sm:$0xff]
        %v6263 = vld [vmem:[#allocation2 + $0x122] sm:$0xff]
        %v6264 = vld [vmem:[#allocation2 + $0x12a] sm:$0xff]
        %v6265 = vld [vmem:[#allocation2 + $0x132] sm:$0xff]
        %s6266 = scalar_lea.vmem [#allocation2], 40
        %v6267 = vld [vmem:[%s6266] sm:$0xff]
        %v6268 = vld [vmem:[%s6266 + $0x8] sm:$0xff]
        %v6269 = vld [vmem:[%s6266 + $0x10] sm:$0xff]
        %v6270 = vld [vmem:[%s6266 + $0x18] sm:$0xff]
        %v6271 = vld [vmem:[%s6266 + $0x28] sm:$0xff]
        %v6272 = vld [vmem:[%s6266 + $0x30] sm:$0xff]
        %v6273 = vld [vmem:[%s6266 + $0x38] sm:$0xff]
        %v6274 = vld [vmem:[%s6266 + $0x40] sm:$0xff]
        %v6275 = vld [vmem:[%s6266 + $0x50] sm:$0xff]
        %v6276 = vld [vmem:[%s6266 + $0x58] sm:$0xff]
        %v6277 = vld [vmem:[%s6266 + $0x60] sm:$0xff]
        %v6278 = vld [vmem:[%s6266 + $0x68] sm:$0xff]
        %v6279 = vld [vmem:[%s6266 + $0x78] sm:$0xff]
        %v6280 = vld [vmem:[%s6266 + $0x80] sm:$0xff]
        %v6281 = vld [vmem:[%s6266 + $0x88] sm:$0xff]
        %v6282 = vld [vmem:[%s6266 + $0x90] sm:$0xff]
        %v6283 = vld [vmem:[%s6266 + $0xa0] sm:$0xff]
        %v6284 = vld [vmem:[%s6266 + $0xa8] sm:$0xff]
        %v6285 = vld [vmem:[%s6266 + $0xb0] sm:$0xff]
        %v6286 = vld [vmem:[%s6266 + $0xb8] sm:$0xff]
        %v6287 = vld [vmem:[%s6266 + $0xc8] sm:$0xff]
        %v6288 = vld [vmem:[%s6266 + $0xd0] sm:$0xff]
        %v6289 = vld [vmem:[%s6266 + $0xd8] sm:$0xff]
        %v6290 = vld [vmem:[%s6266 + $0xe0] sm:$0xff]
        %v6291 = vld [vmem:[%s6266 + $0xf0] sm:$0xff]
        %v6292 = vld [vmem:[%s6266 + $0xf8] sm:$0xff]
        %v6293 = vld [vmem:[%s6266 + $0x100] sm:$0xff]
        %v6294 = vld [vmem:[%s6266 + $0x108] sm:$0xff]
        %v6295 = vld [vmem:[%s6266 + $0x118] sm:$0xff]
        %v6296 = vld [vmem:[%s6266 + $0x120] sm:$0xff]
        %v6297 = vld [vmem:[%s6266 + $0x128] sm:$0xff]
        %v6298 = vld [vmem:[%s6266 + $0x130] sm:$0xff]
        %v6299 = vld [vmem:[%s6266 + $0x1] sm:$0xff]
        %v6300 = vld [vmem:[%s6266 + $0x9] sm:$0xff]
        %v6301 = vld [vmem:[%s6266 + $0x11] sm:$0xff]
        %v6302 = vld [vmem:[%s6266 + $0x19] sm:$0xff]
        %v6303 = vld [vmem:[%s6266 + $0x29] sm:$0xff]
        %v6304 = vld [vmem:[%s6266 + $0x31] sm:$0xff]
        %v6305 = vld [vmem:[%s6266 + $0x39] sm:$0xff]
        %v6306 = vld [vmem:[%s6266 + $0x41] sm:$0xff]
        %v6307 = vld [vmem:[%s6266 + $0x51] sm:$0xff]
        %v6308 = vld [vmem:[%s6266 + $0x59] sm:$0xff]
        %v6309 = vld [vmem:[%s6266 + $0x61] sm:$0xff]
        %v6310 = vld [vmem:[%s6266 + $0x69] sm:$0xff]
        %v6311 = vld [vmem:[%s6266 + $0x79] sm:$0xff]
        %v6312 = vld [vmem:[%s6266 + $0x81] sm:$0xff]
        %v6313 = vld [vmem:[%s6266 + $0x89] sm:$0xff]
        %v6314 = vld [vmem:[%s6266 + $0x91] sm:$0xff]
        %v6315 = vld [vmem:[%s6266 + $0xa1] sm:$0xff]
        %v6316 = vld [vmem:[%s6266 + $0xa9] sm:$0xff]
        %v6317 = vld [vmem:[%s6266 + $0xb1] sm:$0xff]
        %v6318 = vld [vmem:[%s6266 + $0xb9] sm:$0xff]
        %v6319 = vld [vmem:[%s6266 + $0xc9] sm:$0xff]
        %v6320 = vld [vmem:[%s6266 + $0xd1] sm:$0xff]
        %v6321 = vld [vmem:[%s6266 + $0xd9] sm:$0xff]
        %v6322 = vld [vmem:[%s6266 + $0xe1] sm:$0xff]
        %v6323 = vld [vmem:[%s6266 + $0xf1] sm:$0xff]
        %v6324 = vld [vmem:[%s6266 + $0xf9] sm:$0xff]
        %v6325 = vld [vmem:[%s6266 + $0x101] sm:$0xff]
        %v6326 = vld [vmem:[%s6266 + $0x109] sm:$0xff]
        %v6327 = vld [vmem:[%s6266 + $0x119] sm:$0xff]
        %v6328 = vld [vmem:[%s6266 + $0x121] sm:$0xff]
        %v6329 = vld [vmem:[%s6266 + $0x129] sm:$0xff]
        %v6330 = vld [vmem:[%s6266 + $0x131] sm:$0xff]
        %v6331 = vld [vmem:[%s6266 + $0x2] sm:$0xff]
        %v6332 = vld [vmem:[%s6266 + $0xa] sm:$0xff]
        %v6333 = vld [vmem:[%s6266 + $0x12] sm:$0xff]
        %v6334 = vld [vmem:[%s6266 + $0x1a] sm:$0xff]
        %v6335 = vld [vmem:[%s6266 + $0x2a] sm:$0xff]
        %v6336 = vld [vmem:[%s6266 + $0x32] sm:$0xff]
        %v6337 = vld [vmem:[%s6266 + $0x3a] sm:$0xff]
        %v6338 = vld [vmem:[%s6266 + $0x42] sm:$0xff]
        %v6339 = vld [vmem:[%s6266 + $0x52] sm:$0xff]
        %v6340 = vld [vmem:[%s6266 + $0x5a] sm:$0xff]
        %v6341 = vld [vmem:[%s6266 + $0x62] sm:$0xff]
        %v6342 = vld [vmem:[%s6266 + $0x6a] sm:$0xff]
        %v6343 = vld [vmem:[%s6266 + $0x7a] sm:$0xff]
        %v6344 = vld [vmem:[%s6266 + $0x82] sm:$0xff]
        %v6345 = vld [vmem:[%s6266 + $0x8a] sm:$0xff]
        %v6346 = vld [vmem:[%s6266 + $0x92] sm:$0xff]
        %v6347 = vld [vmem:[%s6266 + $0xa2] sm:$0xff]
        %v6348 = vld [vmem:[%s6266 + $0xaa] sm:$0xff]
        %v6349 = vld [vmem:[%s6266 + $0xb2] sm:$0xff]
        %v6350 = vld [vmem:[%s6266 + $0xba] sm:$0xff]
        %v6351 = vld [vmem:[%s6266 + $0xca] sm:$0xff]
        %v6352 = vld [vmem:[%s6266 + $0xd2] sm:$0xff]
        %v6353 = vld [vmem:[%s6266 + $0xda] sm:$0xff]
        %v6354 = vld [vmem:[%s6266 + $0xe2] sm:$0xff]
        %v6355 = vld [vmem:[%s6266 + $0xf2] sm:$0xff]
        %v6356 = vld [vmem:[%s6266 + $0xfa] sm:$0xff]
        %v6357 = vld [vmem:[%s6266 + $0x102] sm:$0xff]
        %v6358 = vld [vmem:[%s6266 + $0x10a] sm:$0xff]
        %v6359 = vld [vmem:[%s6266 + $0x11a] sm:$0xff]
        %v6360 = vld [vmem:[%s6266 + $0x122] sm:$0xff]
        %v6361 = vld [vmem:[%s6266 + $0x12a] sm:$0xff]
        %v6362 = vld [vmem:[%s6266 + $0x132] sm:$0xff]
        %s6363 = scalar_lea.vmem [#allocation2], 80
        %v6364 = vld [vmem:[%s6363] sm:$0xff]
        %v6365 = vld [vmem:[%s6363 + $0x8] sm:$0xff]
        %v6366 = vld [vmem:[%s6363 + $0x10] sm:$0xff]
        %v6367 = vld [vmem:[%s6363 + $0x18] sm:$0xff]
        %v6368 = vld [vmem:[%s6363 + $0x28] sm:$0xff]
        %v6369 = vld [vmem:[%s6363 + $0x30] sm:$0xff]
        %v6370 = vld [vmem:[%s6363 + $0x38] sm:$0xff]
        %v6371 = vld [vmem:[%s6363 + $0x40] sm:$0xff]
        %v6372 = vld [vmem:[%s6363 + $0x50] sm:$0xff]
        %v6373 = vld [vmem:[%s6363 + $0x58] sm:$0xff]
        %v6374 = vld [vmem:[%s6363 + $0x60] sm:$0xff]
        %v6375 = vld [vmem:[%s6363 + $0x68] sm:$0xff]
        %v6376 = vld [vmem:[%s6363 + $0x78] sm:$0xff]
        %v6377 = vld [vmem:[%s6363 + $0x80] sm:$0xff]
        %v6378 = vld [vmem:[%s6363 + $0x88] sm:$0xff]
        %v6379 = vld [vmem:[%s6363 + $0x90] sm:$0xff]
        %v6380 = vld [vmem:[%s6363 + $0xa0] sm:$0xff]
        %v6381 = vld [vmem:[%s6363 + $0xa8] sm:$0xff]
        %v6382 = vld [vmem:[%s6363 + $0xb0] sm:$0xff]
        %v6383 = vld [vmem:[%s6363 + $0xb8] sm:$0xff]
        %v6384 = vld [vmem:[%s6363 + $0xc8] sm:$0xff]
        %v6385 = vld [vmem:[%s6363 + $0xd0] sm:$0xff]
        %v6386 = vld [vmem:[%s6363 + $0xd8] sm:$0xff]
        %v6387 = vld [vmem:[%s6363 + $0xe0] sm:$0xff]
        %v6388 = vld [vmem:[%s6363 + $0xf0] sm:$0xff]
        %v6389 = vld [vmem:[%s6363 + $0xf8] sm:$0xff]
        %v6390 = vld [vmem:[%s6363 + $0x100] sm:$0xff]
        %v6391 = vld [vmem:[%s6363 + $0x108] sm:$0xff]
        %v6392 = vld [vmem:[%s6363 + $0x118] sm:$0xff]
        %v6393 = vld [vmem:[%s6363 + $0x120] sm:$0xff]
        %v6394 = vld [vmem:[%s6363 + $0x128] sm:$0xff]
        %v6395 = vld [vmem:[%s6363 + $0x130] sm:$0xff]
        %v6396 = vld [vmem:[%s6363 + $0x1] sm:$0xff]
        %v6397 = vld [vmem:[%s6363 + $0x9] sm:$0xff]
        %v6398 = vld [vmem:[%s6363 + $0x11] sm:$0xff]
        %v6399 = vld [vmem:[%s6363 + $0x19] sm:$0xff]
        %v6400 = vld [vmem:[%s6363 + $0x29] sm:$0xff]
        %v6401 = vld [vmem:[%s6363 + $0x31] sm:$0xff]
        %v6402 = vld [vmem:[%s6363 + $0x39] sm:$0xff]
        %v6403 = vld [vmem:[%s6363 + $0x41] sm:$0xff]
        %v6404 = vld [vmem:[%s6363 + $0x51] sm:$0xff]
        %v6405 = vld [vmem:[%s6363 + $0x59] sm:$0xff]
        %v6406 = vld [vmem:[%s6363 + $0x61] sm:$0xff]
        %v6407 = vld [vmem:[%s6363 + $0x69] sm:$0xff]
        %v6408 = vld [vmem:[%s6363 + $0x79] sm:$0xff]
        %v6409 = vld [vmem:[%s6363 + $0x81] sm:$0xff]
        %v6410 = vld [vmem:[%s6363 + $0x89] sm:$0xff]
        %v6411 = vld [vmem:[%s6363 + $0x91] sm:$0xff]
        %v6412 = vld [vmem:[%s6363 + $0xa1] sm:$0xff]
        %v6413 = vld [vmem:[%s6363 + $0xa9] sm:$0xff]
        %v6414 = vld [vmem:[%s6363 + $0xb1] sm:$0xff]
        %v6415 = vld [vmem:[%s6363 + $0xb9] sm:$0xff]
        %v6416 = vld [vmem:[%s6363 + $0xc9] sm:$0xff]
        %v6417 = vld [vmem:[%s6363 + $0xd1] sm:$0xff]
        %v6418 = vld [vmem:[%s6363 + $0xd9] sm:$0xff]
        %v6419 = vld [vmem:[%s6363 + $0xe1] sm:$0xff]
        %v6420 = vld [vmem:[%s6363 + $0xf1] sm:$0xff]
        %v6421 = vld [vmem:[%s6363 + $0xf9] sm:$0xff]
        %v6422 = vld [vmem:[%s6363 + $0x101] sm:$0xff]
        %v6423 = vld [vmem:[%s6363 + $0x109] sm:$0xff]
        %v6424 = vld [vmem:[%s6363 + $0x119] sm:$0xff]
        %v6425 = vld [vmem:[%s6363 + $0x121] sm:$0xff]
        %v6426 = vld [vmem:[%s6363 + $0x129] sm:$0xff]
        %v6427 = vld [vmem:[%s6363 + $0x131] sm:$0xff]
        %v6428 = vld [vmem:[%s6363 + $0x2] sm:$0xff]
        %v6429 = vld [vmem:[%s6363 + $0xa] sm:$0xff]
        %v6430 = vld [vmem:[%s6363 + $0x12] sm:$0xff]
        %v6431 = vld [vmem:[%s6363 + $0x1a] sm:$0xff]
        %v6432 = vld [vmem:[%s6363 + $0x2a] sm:$0xff]
        %v6433 = vld [vmem:[%s6363 + $0x32] sm:$0xff]
        %v6434 = vld [vmem:[%s6363 + $0x3a] sm:$0xff]
        %v6435 = vld [vmem:[%s6363 + $0x42] sm:$0xff]
        %v6436 = vld [vmem:[%s6363 + $0x52] sm:$0xff]
        %v6437 = vld [vmem:[%s6363 + $0x5a] sm:$0xff]
        %v6438 = vld [vmem:[%s6363 + $0x62] sm:$0xff]
        %v6439 = vld [vmem:[%s6363 + $0x6a] sm:$0xff]
        %v6440 = vld [vmem:[%s6363 + $0x7a] sm:$0xff]
        %v6441 = vld [vmem:[%s6363 + $0x82] sm:$0xff]
        %v6442 = vld [vmem:[%s6363 + $0x8a] sm:$0xff]
        %v6443 = vld [vmem:[%s6363 + $0x92] sm:$0xff]
        %v6444 = vld [vmem:[%s6363 + $0xa2] sm:$0xff]
        %v6445 = vld [vmem:[%s6363 + $0xaa] sm:$0xff]
        %v6446 = vld [vmem:[%s6363 + $0xb2] sm:$0xff]
        %v6447 = vld [vmem:[%s6363 + $0xba] sm:$0xff]
        %v6448 = vld [vmem:[%s6363 + $0xca] sm:$0xff]
        %v6449 = vld [vmem:[%s6363 + $0xd2] sm:$0xff]
        %v6450 = vld [vmem:[%s6363 + $0xda] sm:$0xff]
        %v6451 = vld [vmem:[%s6363 + $0xe2] sm:$0xff]
        %v6452 = vld [vmem:[%s6363 + $0xf2] sm:$0xff]
        %v6453 = vld [vmem:[%s6363 + $0xfa] sm:$0xff]
        %v6454 = vld [vmem:[%s6363 + $0x102] sm:$0xff]
        %v6455 = vld [vmem:[%s6363 + $0x10a] sm:$0xff]
        %v6456 = vld [vmem:[%s6363 + $0x11a] sm:$0xff]
        %v6457 = vld [vmem:[%s6363 + $0x122] sm:$0xff]
        %v6458 = vld [vmem:[%s6363 + $0x12a] sm:$0xff]
        %v6459 = vld [vmem:[%s6363 + $0x132] sm:$0xff]
        %6492 = vrot.lane.b32.xlu0 %v6202, 8
        %v6493 = vpop.permute.xlu0 %6492
        %6494 = vrot.lane.b32.xlu0 %v6203, 8
        %v6495 = vpop.permute.xlu0 %6494
        %6496 = vrot.lane.b32.xlu0 %v6204, 8
        %v6497 = vpop.permute.xlu0 %6496
        %6498 = vrot.lane.b32.xlu0 %v6205, 8
        %v6499 = vpop.permute.xlu0 %6498
        %6500 = vrot.lane.b32.xlu0 %v6206, 8
        %v6501 = vpop.permute.xlu0 %6500
        %6502 = vrot.lane.b32.xlu0 %v6207, 8
        %v6503 = vpop.permute.xlu0 %6502
        %6504 = vrot.lane.b32.xlu0 %v6208, 8
        %v6505 = vpop.permute.xlu0 %6504
        %6506 = vrot.lane.b32.xlu0 %v6209, 8
        %v6507 = vpop.permute.xlu0 %6506
        %6508 = vrot.lane.b32.xlu0 %v6210, 8
        %v6509 = vpop.permute.xlu0 %6508
        %6510 = vrot.lane.b32.xlu0 %v6211, 8
        %v6511 = vpop.permute.xlu0 %6510
        %6512 = vrot.lane.b32.xlu0 %v6212, 8
        %v6513 = vpop.permute.xlu0 %6512
        %6514 = vrot.lane.b32.xlu0 %v6213, 8
        %v6515 = vpop.permute.xlu0 %6514
        %6516 = vrot.lane.b32.xlu0 %v6214, 8
        %v6517 = vpop.permute.xlu0 %6516
        %6518 = vrot.lane.b32.xlu0 %v6215, 8
        %v6519 = vpop.permute.xlu0 %6518
        %6520 = vrot.lane.b32.xlu0 %v6216, 8
        %v6521 = vpop.permute.xlu0 %6520
        %6522 = vrot.lane.b32.xlu0 %v6217, 8
        %v6523 = vpop.permute.xlu0 %6522
        %6524 = vrot.lane.b32.xlu0 %v6218, 8
        %v6525 = vpop.permute.xlu0 %6524
        %6526 = vrot.lane.b32.xlu0 %v6219, 8
        %v6527 = vpop.permute.xlu0 %6526
        %6528 = vrot.lane.b32.xlu0 %v6220, 8
        %v6529 = vpop.permute.xlu0 %6528
        %6530 = vrot.lane.b32.xlu0 %v6221, 8
        %v6531 = vpop.permute.xlu0 %6530
        %6532 = vrot.lane.b32.xlu0 %v6222, 8
        %v6533 = vpop.permute.xlu0 %6532
        %6534 = vrot.lane.b32.xlu0 %v6223, 8
        %v6535 = vpop.permute.xlu0 %6534
        %6536 = vrot.lane.b32.xlu0 %v6224, 8
        %v6537 = vpop.permute.xlu0 %6536
        %6538 = vrot.lane.b32.xlu0 %v6225, 8
        %v6539 = vpop.permute.xlu0 %6538
        %6540 = vrot.lane.b32.xlu0 %v6226, 8
        %v6541 = vpop.permute.xlu0 %6540
        %6542 = vrot.lane.b32.xlu0 %v6227, 8
        %v6543 = vpop.permute.xlu0 %6542
        %6544 = vrot.lane.b32.xlu0 %v6228, 8
        %v6545 = vpop.permute.xlu0 %6544
        %6546 = vrot.lane.b32.xlu0 %v6229, 8
        %v6547 = vpop.permute.xlu0 %6546
        %6548 = vrot.lane.b32.xlu0 %v6230, 8
        %v6549 = vpop.permute.xlu0 %6548
        %6550 = vrot.lane.b32.xlu0 %v6231, 8
        %v6551 = vpop.permute.xlu0 %6550
        %6552 = vrot.lane.b32.xlu0 %v6232, 8
        %v6553 = vpop.permute.xlu0 %6552
        %6554 = vrot.lane.b32.xlu0 %v6233, 8
        %v6555 = vpop.permute.xlu0 %6554
        %6620 = vrot.lane.b32.xlu0 %v6234, 16
        %v6621 = vpop.permute.xlu0 %6620
        %6622 = vrot.lane.b32.xlu0 %v6235, 16
        %v6623 = vpop.permute.xlu0 %6622
        %6624 = vrot.lane.b32.xlu0 %v6236, 16
        %v6625 = vpop.permute.xlu0 %6624
        %6626 = vrot.lane.b32.xlu0 %v6237, 16
        %v6627 = vpop.permute.xlu0 %6626
        %6628 = vrot.lane.b32.xlu0 %v6238, 16
        %v6629 = vpop.permute.xlu0 %6628
        %6630 = vrot.lane.b32.xlu0 %v6239, 16
        %v6631 = vpop.permute.xlu0 %6630
        %6632 = vrot.lane.b32.xlu0 %v6240, 16
        %v6633 = vpop.permute.xlu0 %6632
        %6634 = vrot.lane.b32.xlu0 %v6241, 16
        %v6635 = vpop.permute.xlu0 %6634
        %6636 = vrot.lane.b32.xlu0 %v6242, 16
        %v6637 = vpop.permute.xlu0 %6636
        %6638 = vrot.lane.b32.xlu0 %v6243, 16
        %v6639 = vpop.permute.xlu0 %6638
        %6640 = vrot.lane.b32.xlu0 %v6244, 16
        %v6641 = vpop.permute.xlu0 %6640
        %6642 = vrot.lane.b32.xlu0 %v6245, 16
        %v6643 = vpop.permute.xlu0 %6642
        %6644 = vrot.lane.b32.xlu0 %v6246, 16
        %v6645 = vpop.permute.xlu0 %6644
        %6646 = vrot.lane.b32.xlu0 %v6247, 16
        %v6647 = vpop.permute.xlu0 %6646
        %6648 = vrot.lane.b32.xlu0 %v6248, 16
        %v6649 = vpop.permute.xlu0 %6648
        %6650 = vrot.lane.b32.xlu0 %v6249, 16
        %v6651 = vpop.permute.xlu0 %6650
        %6652 = vrot.lane.b32.xlu0 %v6250, 16
        %v6653 = vpop.permute.xlu0 %6652
        %6654 = vrot.lane.b32.xlu0 %v6251, 16
        %v6655 = vpop.permute.xlu0 %6654
        %6656 = vrot.lane.b32.xlu0 %v6252, 16
        %v6657 = vpop.permute.xlu0 %6656
        %6658 = vrot.lane.b32.xlu0 %v6253, 16
        %v6659 = vpop.permute.xlu0 %6658
        %6660 = vrot.lane.b32.xlu0 %v6254, 16
        %v6661 = vpop.permute.xlu0 %6660
        %6662 = vrot.lane.b32.xlu0 %v6255, 16
        %v6663 = vpop.permute.xlu0 %6662
        %6664 = vrot.lane.b32.xlu0 %v6256, 16
        %v6665 = vpop.permute.xlu0 %6664
        %6666 = vrot.lane.b32.xlu0 %v6257, 16
        %v6667 = vpop.permute.xlu0 %6666
        %6668 = vrot.lane.b32.xlu0 %v6258, 16
        %v6669 = vpop.permute.xlu0 %6668
        %6670 = vrot.lane.b32.xlu0 %v6259, 16
        %v6671 = vpop.permute.xlu0 %6670
        %6672 = vrot.lane.b32.xlu0 %v6260, 16
        %v6673 = vpop.permute.xlu0 %6672
        %6674 = vrot.lane.b32.xlu0 %v6261, 16
        %v6675 = vpop.permute.xlu0 %6674
        %6676 = vrot.lane.b32.xlu0 %v6262, 16
        %v6677 = vpop.permute.xlu0 %6676
        %6678 = vrot.lane.b32.xlu0 %v6263, 16
        %v6679 = vpop.permute.xlu0 %6678
        %6680 = vrot.lane.b32.xlu0 %v6264, 16
        %v6681 = vpop.permute.xlu0 %6680
        %6682 = vrot.lane.b32.xlu0 %v6265, 16
        %v6683 = vpop.permute.xlu0 %6682
        %6748 = vrot.lane.b32.xlu0 %v6267, 24
        %v6749 = vpop.permute.xlu0 %6748
        %6750 = vrot.lane.b32.xlu0 %v6268, 24
        %v6751 = vpop.permute.xlu0 %6750
        %6752 = vrot.lane.b32.xlu0 %v6269, 24
        %v6753 = vpop.permute.xlu0 %6752
        %6754 = vrot.lane.b32.xlu0 %v6270, 24
        %v6755 = vpop.permute.xlu0 %6754
        %6756 = vrot.lane.b32.xlu0 %v6271, 24
        %v6757 = vpop.permute.xlu0 %6756
        %6758 = vrot.lane.b32.xlu0 %v6272, 24
        %v6759 = vpop.permute.xlu0 %6758
        %6760 = vrot.lane.b32.xlu0 %v6273, 24
        %v6761 = vpop.permute.xlu0 %6760
        %6762 = vrot.lane.b32.xlu0 %v6274, 24
        %v6763 = vpop.permute.xlu0 %6762
        %6764 = vrot.lane.b32.xlu0 %v6275, 24
        %v6765 = vpop.permute.xlu0 %6764
        %6766 = vrot.lane.b32.xlu0 %v6276, 24
        %v6767 = vpop.permute.xlu0 %6766
        %6768 = vrot.lane.b32.xlu0 %v6277, 24
        %v6769 = vpop.permute.xlu0 %6768
        %6770 = vrot.lane.b32.xlu0 %v6278, 24
        %v6771 = vpop.permute.xlu0 %6770
        %6772 = vrot.lane.b32.xlu0 %v6279, 24
        %v6773 = vpop.permute.xlu0 %6772
        %6774 = vrot.lane.b32.xlu0 %v6280, 24
        %v6775 = vpop.permute.xlu0 %6774
        %6776 = vrot.lane.b32.xlu0 %v6281, 24
        %v6777 = vpop.permute.xlu0 %6776
        %6778 = vrot.lane.b32.xlu0 %v6282, 24
        %v6779 = vpop.permute.xlu0 %6778
        %6780 = vrot.lane.b32.xlu0 %v6283, 24
        %v6781 = vpop.permute.xlu0 %6780
        %6782 = vrot.lane.b32.xlu0 %v6284, 24
        %v6783 = vpop.permute.xlu0 %6782
        %6784 = vrot.lane.b32.xlu0 %v6285, 24
        %v6785 = vpop.permute.xlu0 %6784
        %6786 = vrot.lane.b32.xlu0 %v6286, 24
        %v6787 = vpop.permute.xlu0 %6786
        %6788 = vrot.lane.b32.xlu0 %v6287, 24
        %v6789 = vpop.permute.xlu0 %6788
        %6790 = vrot.lane.b32.xlu0 %v6288, 24
        %v6791 = vpop.permute.xlu0 %6790
        %6792 = vrot.lane.b32.xlu0 %v6289, 24
        %v6793 = vpop.permute.xlu0 %6792
        %6794 = vrot.lane.b32.xlu0 %v6290, 24
        %v6795 = vpop.permute.xlu0 %6794
        %6796 = vrot.lane.b32.xlu0 %v6291, 24
        %v6797 = vpop.permute.xlu0 %6796
        %6798 = vrot.lane.b32.xlu0 %v6292, 24
        %v6799 = vpop.permute.xlu0 %6798
        %6800 = vrot.lane.b32.xlu0 %v6293, 24
        %v6801 = vpop.permute.xlu0 %6800
        %6802 = vrot.lane.b32.xlu0 %v6294, 24
        %v6803 = vpop.permute.xlu0 %6802
        %6804 = vrot.lane.b32.xlu0 %v6295, 24
        %v6805 = vpop.permute.xlu0 %6804
        %6806 = vrot.lane.b32.xlu0 %v6296, 24
        %v6807 = vpop.permute.xlu0 %6806
        %6808 = vrot.lane.b32.xlu0 %v6297, 24
        %v6809 = vpop.permute.xlu0 %6808
        %6810 = vrot.lane.b32.xlu0 %v6298, 24
        %v6811 = vpop.permute.xlu0 %6810
        %6876 = vrot.lane.b32.xlu0 %v6299, 32
        %v6877 = vpop.permute.xlu0 %6876
        %6878 = vrot.lane.b32.xlu0 %v6300, 32
        %v6879 = vpop.permute.xlu0 %6878
        %6880 = vrot.lane.b32.xlu0 %v6301, 32
        %v6881 = vpop.permute.xlu0 %6880
        %6882 = vrot.lane.b32.xlu0 %v6302, 32
        %v6883 = vpop.permute.xlu0 %6882
        %6884 = vrot.lane.b32.xlu0 %v6303, 32
        %v6885 = vpop.permute.xlu0 %6884
        %6886 = vrot.lane.b32.xlu0 %v6304, 32
        %v6887 = vpop.permute.xlu0 %6886
        %6888 = vrot.lane.b32.xlu0 %v6305, 32
        %v6889 = vpop.permute.xlu0 %6888
        %6890 = vrot.lane.b32.xlu0 %v6306, 32
        %v6891 = vpop.permute.xlu0 %6890
        %6892 = vrot.lane.b32.xlu0 %v6307, 32
        %v6893 = vpop.permute.xlu0 %6892
        %6894 = vrot.lane.b32.xlu0 %v6308, 32
        %v6895 = vpop.permute.xlu0 %6894
        %6896 = vrot.lane.b32.xlu0 %v6309, 32
        %v6897 = vpop.permute.xlu0 %6896
        %6898 = vrot.lane.b32.xlu0 %v6310, 32
        %v6899 = vpop.permute.xlu0 %6898
        %6900 = vrot.lane.b32.xlu0 %v6311, 32
        %v6901 = vpop.permute.xlu0 %6900
        %6902 = vrot.lane.b32.xlu0 %v6312, 32
        %v6903 = vpop.permute.xlu0 %6902
        %6904 = vrot.lane.b32.xlu0 %v6313, 32
        %v6905 = vpop.permute.xlu0 %6904
        %6906 = vrot.lane.b32.xlu0 %v6314, 32
        %v6907 = vpop.permute.xlu0 %6906
        %6908 = vrot.lane.b32.xlu0 %v6315, 32
        %v6909 = vpop.permute.xlu0 %6908
        %6910 = vrot.lane.b32.xlu0 %v6316, 32
        %v6911 = vpop.permute.xlu0 %6910
        %6912 = vrot.lane.b32.xlu0 %v6317, 32
        %v6913 = vpop.permute.xlu0 %6912
        %6914 = vrot.lane.b32.xlu0 %v6318, 32
        %v6915 = vpop.permute.xlu0 %6914
        %6916 = vrot.lane.b32.xlu0 %v6319, 32
        %v6917 = vpop.permute.xlu0 %6916
        %6918 = vrot.lane.b32.xlu0 %v6320, 32
        %v6919 = vpop.permute.xlu0 %6918
        %6920 = vrot.lane.b32.xlu0 %v6321, 32
        %v6921 = vpop.permute.xlu0 %6920
        %6922 = vrot.lane.b32.xlu0 %v6322, 32
        %v6923 = vpop.permute.xlu0 %6922
        %6924 = vrot.lane.b32.xlu0 %v6323, 32
        %v6925 = vpop.permute.xlu0 %6924
        %6926 = vrot.lane.b32.xlu0 %v6324, 32
        %v6927 = vpop.permute.xlu0 %6926
        %6928 = vrot.lane.b32.xlu0 %v6325, 32
        %v6929 = vpop.permute.xlu0 %6928
        %6930 = vrot.lane.b32.xlu0 %v6326, 32
        %v6931 = vpop.permute.xlu0 %6930
        %6932 = vrot.lane.b32.xlu0 %v6327, 32
        %v6933 = vpop.permute.xlu0 %6932
        %6934 = vrot.lane.b32.xlu0 %v6328, 32
        %v6935 = vpop.permute.xlu0 %6934
        %6936 = vrot.lane.b32.xlu0 %v6329, 32
        %v6937 = vpop.permute.xlu0 %6936
        %6938 = vrot.lane.b32.xlu0 %v6330, 32
        %v6939 = vpop.permute.xlu0 %6938
        %7004 = vrot.lane.b32.xlu0 %v6331, 40
        %v7005 = vpop.permute.xlu0 %7004
        %7006 = vrot.lane.b32.xlu0 %v6332, 40
        %v7007 = vpop.permute.xlu0 %7006
        %7008 = vrot.lane.b32.xlu0 %v6333, 40
        %v7009 = vpop.permute.xlu0 %7008
        %7010 = vrot.lane.b32.xlu0 %v6334, 40
        %v7011 = vpop.permute.xlu0 %7010
        %7012 = vrot.lane.b32.xlu0 %v6335, 40
        %v7013 = vpop.permute.xlu0 %7012
        %7014 = vrot.lane.b32.xlu0 %v6336, 40
        %v7015 = vpop.permute.xlu0 %7014
        %7016 = vrot.lane.b32.xlu0 %v6337, 40
        %v7017 = vpop.permute.xlu0 %7016
        %7018 = vrot.lane.b32.xlu0 %v6338, 40
        %v7019 = vpop.permute.xlu0 %7018
        %7020 = vrot.lane.b32.xlu0 %v6339, 40
        %v7021 = vpop.permute.xlu0 %7020
        %7022 = vrot.lane.b32.xlu0 %v6340, 40
        %v7023 = vpop.permute.xlu0 %7022
        %7024 = vrot.lane.b32.xlu0 %v6341, 40
        %v7025 = vpop.permute.xlu0 %7024
        %7026 = vrot.lane.b32.xlu0 %v6342, 40
        %v7027 = vpop.permute.xlu0 %7026
        %7028 = vrot.lane.b32.xlu0 %v6343, 40
        %v7029 = vpop.permute.xlu0 %7028
        %7030 = vrot.lane.b32.xlu0 %v6344, 40
        %v7031 = vpop.permute.xlu0 %7030
        %7032 = vrot.lane.b32.xlu0 %v6345, 40
        %v7033 = vpop.permute.xlu0 %7032
        %7034 = vrot.lane.b32.xlu0 %v6346, 40
        %v7035 = vpop.permute.xlu0 %7034
        %7036 = vrot.lane.b32.xlu0 %v6347, 40
        %v7037 = vpop.permute.xlu0 %7036
        %7038 = vrot.lane.b32.xlu0 %v6348, 40
        %v7039 = vpop.permute.xlu0 %7038
        %7040 = vrot.lane.b32.xlu0 %v6349, 40
        %v7041 = vpop.permute.xlu0 %7040
        %7042 = vrot.lane.b32.xlu0 %v6350, 40
        %v7043 = vpop.permute.xlu0 %7042
        %7044 = vrot.lane.b32.xlu0 %v6351, 40
        %v7045 = vpop.permute.xlu0 %7044
        %7046 = vrot.lane.b32.xlu0 %v6352, 40
        %v7047 = vpop.permute.xlu0 %7046
        %7048 = vrot.lane.b32.xlu0 %v6353, 40
        %v7049 = vpop.permute.xlu0 %7048
        %7050 = vrot.lane.b32.xlu0 %v6354, 40
        %v7051 = vpop.permute.xlu0 %7050
        %7052 = vrot.lane.b32.xlu0 %v6355, 40
        %v7053 = vpop.permute.xlu0 %7052
        %7054 = vrot.lane.b32.xlu0 %v6356, 40
        %v7055 = vpop.permute.xlu0 %7054
        %7056 = vrot.lane.b32.xlu0 %v6357, 40
        %v7057 = vpop.permute.xlu0 %7056
        %7058 = vrot.lane.b32.xlu0 %v6358, 40
        %v7059 = vpop.permute.xlu0 %7058
        %7060 = vrot.lane.b32.xlu0 %v6359, 40
        %v7061 = vpop.permute.xlu0 %7060
        %7062 = vrot.lane.b32.xlu0 %v6360, 40
        %v7063 = vpop.permute.xlu0 %7062
        %7064 = vrot.lane.b32.xlu0 %v6361, 40
        %v7065 = vpop.permute.xlu0 %7064
        %7066 = vrot.lane.b32.xlu0 %v6362, 40
        %v7067 = vpop.permute.xlu0 %7066
        %7132 = vrot.lane.b32.xlu0 %v6364, 48
        %v7133 = vpop.permute.xlu0 %7132
        %7134 = vrot.lane.b32.xlu0 %v6365, 48
        %v7135 = vpop.permute.xlu0 %7134
        %7136 = vrot.lane.b32.xlu0 %v6366, 48
        %v7137 = vpop.permute.xlu0 %7136
        %7138 = vrot.lane.b32.xlu0 %v6367, 48
        %v7139 = vpop.permute.xlu0 %7138
        %7140 = vrot.lane.b32.xlu0 %v6368, 48
        %v7141 = vpop.permute.xlu0 %7140
        %7142 = vrot.lane.b32.xlu0 %v6369, 48
        %v7143 = vpop.permute.xlu0 %7142
        %7144 = vrot.lane.b32.xlu0 %v6370, 48
        %v7145 = vpop.permute.xlu0 %7144
        %7146 = vrot.lane.b32.xlu0 %v6371, 48
        %v7147 = vpop.permute.xlu0 %7146
        %7148 = vrot.lane.b32.xlu0 %v6372, 48
        %v7149 = vpop.permute.xlu0 %7148
        %7150 = vrot.lane.b32.xlu0 %v6373, 48
        %v7151 = vpop.permute.xlu0 %7150
        %7152 = vrot.lane.b32.xlu0 %v6374, 48
        %v7153 = vpop.permute.xlu0 %7152
        %7154 = vrot.lane.b32.xlu0 %v6375, 48
        %v7155 = vpop.permute.xlu0 %7154
        %7156 = vrot.lane.b32.xlu0 %v6376, 48
        %v7157 = vpop.permute.xlu0 %7156
        %7158 = vrot.lane.b32.xlu0 %v6377, 48
        %v7159 = vpop.permute.xlu0 %7158
        %7160 = vrot.lane.b32.xlu0 %v6378, 48
        %v7161 = vpop.permute.xlu0 %7160
        %7162 = vrot.lane.b32.xlu0 %v6379, 48
        %v7163 = vpop.permute.xlu0 %7162
        %7164 = vrot.lane.b32.xlu0 %v6380, 48
        %v7165 = vpop.permute.xlu0 %7164
        %7166 = vrot.lane.b32.xlu0 %v6381, 48
        %v7167 = vpop.permute.xlu0 %7166
        %7168 = vrot.lane.b32.xlu0 %v6382, 48
        %v7169 = vpop.permute.xlu0 %7168
        %7170 = vrot.lane.b32.xlu0 %v6383, 48
        %v7171 = vpop.permute.xlu0 %7170
        %7172 = vrot.lane.b32.xlu0 %v6384, 48
        %v7173 = vpop.permute.xlu0 %7172
        %7174 = vrot.lane.b32.xlu0 %v6385, 48
        %v7175 = vpop.permute.xlu0 %7174
        %7176 = vrot.lane.b32.xlu0 %v6386, 48
        %v7177 = vpop.permute.xlu0 %7176
        %7178 = vrot.lane.b32.xlu0 %v6387, 48
        %v7179 = vpop.permute.xlu0 %7178
        %7180 = vrot.lane.b32.xlu0 %v6388, 48
        %v7181 = vpop.permute.xlu0 %7180
        %7182 = vrot.lane.b32.xlu0 %v6389, 48
        %v7183 = vpop.permute.xlu0 %7182
        %7184 = vrot.lane.b32.xlu0 %v6390, 48
        %v7185 = vpop.permute.xlu0 %7184
        %7186 = vrot.lane.b32.xlu0 %v6391, 48
        %v7187 = vpop.permute.xlu0 %7186
        %7188 = vrot.lane.b32.xlu0 %v6392, 48
        %v7189 = vpop.permute.xlu0 %7188
        %7190 = vrot.lane.b32.xlu0 %v6393, 48
        %v7191 = vpop.permute.xlu0 %7190
        %7192 = vrot.lane.b32.xlu0 %v6394, 48
        %v7193 = vpop.permute.xlu0 %7192
        %7194 = vrot.lane.b32.xlu0 %v6395, 48
        %v7195 = vpop.permute.xlu0 %7194
        %7260 = vrot.lane.b32.xlu0 %v6396, 56
        %v7261 = vpop.permute.xlu0 %7260
        %7262 = vrot.lane.b32.xlu0 %v6397, 56
        %v7263 = vpop.permute.xlu0 %7262
        %7264 = vrot.lane.b32.xlu0 %v6398, 56
        %v7265 = vpop.permute.xlu0 %7264
        %7266 = vrot.lane.b32.xlu0 %v6399, 56
        %v7267 = vpop.permute.xlu0 %7266
        %7268 = vrot.lane.b32.xlu0 %v6400, 56
        %v7269 = vpop.permute.xlu0 %7268
        %7270 = vrot.lane.b32.xlu0 %v6401, 56
        %v7271 = vpop.permute.xlu0 %7270
        %7272 = vrot.lane.b32.xlu0 %v6402, 56
        %v7273 = vpop.permute.xlu0 %7272
        %7274 = vrot.lane.b32.xlu0 %v6403, 56
        %v7275 = vpop.permute.xlu0 %7274
        %7276 = vrot.lane.b32.xlu0 %v6404, 56
        %v7277 = vpop.permute.xlu0 %7276
        %7278 = vrot.lane.b32.xlu0 %v6405, 56
        %v7279 = vpop.permute.xlu0 %7278
        %7280 = vrot.lane.b32.xlu0 %v6406, 56
        %v7281 = vpop.permute.xlu0 %7280
        %7282 = vrot.lane.b32.xlu0 %v6407, 56
        %v7283 = vpop.permute.xlu0 %7282
        %7284 = vrot.lane.b32.xlu0 %v6408, 56
        %v7285 = vpop.permute.xlu0 %7284
        %7286 = vrot.lane.b32.xlu0 %v6409, 56
        %v7287 = vpop.permute.xlu0 %7286
        %7288 = vrot.lane.b32.xlu0 %v6410, 56
        %v7289 = vpop.permute.xlu0 %7288
        %7290 = vrot.lane.b32.xlu0 %v6411, 56
        %v7291 = vpop.permute.xlu0 %7290
        %7292 = vrot.lane.b32.xlu0 %v6412, 56
        %v7293 = vpop.permute.xlu0 %7292
        %7294 = vrot.lane.b32.xlu0 %v6413, 56
        %v7295 = vpop.permute.xlu0 %7294
        %7296 = vrot.lane.b32.xlu0 %v6414, 56
        %v7297 = vpop.permute.xlu0 %7296
        %7298 = vrot.lane.b32.xlu0 %v6415, 56
        %v7299 = vpop.permute.xlu0 %7298
        %7300 = vrot.lane.b32.xlu0 %v6416, 56
        %v7301 = vpop.permute.xlu0 %7300
        %7302 = vrot.lane.b32.xlu0 %v6417, 56
        %v7303 = vpop.permute.xlu0 %7302
        %7304 = vrot.lane.b32.xlu0 %v6418, 56
        %v7305 = vpop.permute.xlu0 %7304
        %7306 = vrot.lane.b32.xlu0 %v6419, 56
        %v7307 = vpop.permute.xlu0 %7306
        %7308 = vrot.lane.b32.xlu0 %v6420, 56
        %v7309 = vpop.permute.xlu0 %7308
        %7310 = vrot.lane.b32.xlu0 %v6421, 56
        %v7311 = vpop.permute.xlu0 %7310
        %7312 = vrot.lane.b32.xlu0 %v6422, 56
        %v7313 = vpop.permute.xlu0 %7312
        %7314 = vrot.lane.b32.xlu0 %v6423, 56
        %v7315 = vpop.permute.xlu0 %7314
        %7316 = vrot.lane.b32.xlu0 %v6424, 56
        %v7317 = vpop.permute.xlu0 %7316
        %7318 = vrot.lane.b32.xlu0 %v6425, 56
        %v7319 = vpop.permute.xlu0 %7318
        %7320 = vrot.lane.b32.xlu0 %v6426, 56
        %v7321 = vpop.permute.xlu0 %7320
        %7322 = vrot.lane.b32.xlu0 %v6427, 56
        %v7323 = vpop.permute.xlu0 %7322
        %7388 = vrot.lane.b32.xlu0 %v6428, 64
        %v7389 = vpop.permute.xlu0 %7388
        %7390 = vrot.lane.b32.xlu0 %v6429, 64
        %v7391 = vpop.permute.xlu0 %7390
        %7392 = vrot.lane.b32.xlu0 %v6430, 64
        %v7393 = vpop.permute.xlu0 %7392
        %7394 = vrot.lane.b32.xlu0 %v6431, 64
        %v7395 = vpop.permute.xlu0 %7394
        %7396 = vrot.lane.b32.xlu0 %v6432, 64
        %v7397 = vpop.permute.xlu0 %7396
        %7398 = vrot.lane.b32.xlu0 %v6433, 64
        %v7399 = vpop.permute.xlu0 %7398
        %7400 = vrot.lane.b32.xlu0 %v6434, 64
        %v7401 = vpop.permute.xlu0 %7400
        %7402 = vrot.lane.b32.xlu0 %v6435, 64
        %v7403 = vpop.permute.xlu0 %7402
        %7404 = vrot.lane.b32.xlu0 %v6436, 64
        %v7405 = vpop.permute.xlu0 %7404
        %7406 = vrot.lane.b32.xlu0 %v6437, 64
        %v7407 = vpop.permute.xlu0 %7406
        %7408 = vrot.lane.b32.xlu0 %v6438, 64
        %v7409 = vpop.permute.xlu0 %7408
        %7410 = vrot.lane.b32.xlu0 %v6439, 64
        %v7411 = vpop.permute.xlu0 %7410
        %7412 = vrot.lane.b32.xlu0 %v6440, 64
        %v7413 = vpop.permute.xlu0 %7412
        %7414 = vrot.lane.b32.xlu0 %v6441, 64
        %v7415 = vpop.permute.xlu0 %7414
        %7416 = vrot.lane.b32.xlu0 %v6442, 64
        %v7417 = vpop.permute.xlu0 %7416
        %7418 = vrot.lane.b32.xlu0 %v6443, 64
        %v7419 = vpop.permute.xlu0 %7418
        %7420 = vrot.lane.b32.xlu0 %v6444, 64
        %v7421 = vpop.permute.xlu0 %7420
        %7422 = vrot.lane.b32.xlu0 %v6445, 64
        %v7423 = vpop.permute.xlu0 %7422
        %7424 = vrot.lane.b32.xlu0 %v6446, 64
        %v7425 = vpop.permute.xlu0 %7424
        %7426 = vrot.lane.b32.xlu0 %v6447, 64
        %v7427 = vpop.permute.xlu0 %7426
        %7428 = vrot.lane.b32.xlu0 %v6448, 64
        %v7429 = vpop.permute.xlu0 %7428
        %7430 = vrot.lane.b32.xlu0 %v6449, 64
        %v7431 = vpop.permute.xlu0 %7430
        %7432 = vrot.lane.b32.xlu0 %v6450, 64
        %v7433 = vpop.permute.xlu0 %7432
        %7434 = vrot.lane.b32.xlu0 %v6451, 64
        %v7435 = vpop.permute.xlu0 %7434
        %7436 = vrot.lane.b32.xlu0 %v6452, 64
        %v7437 = vpop.permute.xlu0 %7436
        %7438 = vrot.lane.b32.xlu0 %v6453, 64
        %v7439 = vpop.permute.xlu0 %7438
        %7440 = vrot.lane.b32.xlu0 %v6454, 64
        %v7441 = vpop.permute.xlu0 %7440
        %7442 = vrot.lane.b32.xlu0 %v6455, 64
        %v7443 = vpop.permute.xlu0 %7442
        %7444 = vrot.lane.b32.xlu0 %v6456, 64
        %v7445 = vpop.permute.xlu0 %7444
        %7446 = vrot.lane.b32.xlu0 %v6457, 64
        %v7447 = vpop.permute.xlu0 %7446
        %7448 = vrot.lane.b32.xlu0 %v6458, 64
        %v7449 = vpop.permute.xlu0 %7448
        %7450 = vrot.lane.b32.xlu0 %v6459, 64
        %v7451 = vpop.permute.xlu0 %7450
        %v7484 = vsel %vm1968, %v6170, %v6493
        %v7485 = vsel %vm1968, %v6171, %v6495
        %v7486 = vsel %vm1968, %v6172, %v6497
        %v7487 = vsel %vm1968, %v6173, %v6499
        %v7488 = vsel %vm1968, %v6174, %v6501
        %v7489 = vsel %vm1968, %v6175, %v6503
        %v7490 = vsel %vm1968, %v6176, %v6505
        %v7491 = vsel %vm1968, %v6177, %v6507
        %v7492 = vsel %vm1968, %v6178, %v6509
        %v7493 = vsel %vm1968, %v6179, %v6511
        %v7494 = vsel %vm1968, %v6180, %v6513
        %v7495 = vsel %vm1968, %v6181, %v6515
        %v7496 = vsel %vm1968, %v6182, %v6517
        %v7497 = vsel %vm1968, %v6183, %v6519
        %v7498 = vsel %vm1968, %v6184, %v6521
        %v7499 = vsel %vm1968, %v6185, %v6523
        %v7500 = vsel %vm1968, %v6186, %v6525
        %v7501 = vsel %vm1968, %v6187, %v6527
        %v7502 = vsel %vm1968, %v6188, %v6529
        %v7503 = vsel %vm1968, %v6189, %v6531
        %v7504 = vsel %vm1968, %v6190, %v6533
        %v7505 = vsel %vm1968, %v6191, %v6535
        %v7506 = vsel %vm1968, %v6192, %v6537
        %v7507 = vsel %vm1968, %v6193, %v6539
        %v7508 = vsel %vm1968, %v6194, %v6541
        %v7509 = vsel %vm1968, %v6195, %v6543
        %v7510 = vsel %vm1968, %v6196, %v6545
        %v7511 = vsel %vm1968, %v6197, %v6547
        %v7512 = vsel %vm1968, %v6198, %v6549
        %v7513 = vsel %vm1968, %v6199, %v6551
        %v7514 = vsel %vm1968, %v6200, %v6553
        %v7515 = vsel %vm1968, %v6201, %v6555
        %v7516 = vsel %vm2070, %v7484, %v6621
        %v7517 = vsel %vm2070, %v7485, %v6623
        %v7518 = vsel %vm2070, %v7486, %v6625
        %v7519 = vsel %vm2070, %v7487, %v6627
        %v7520 = vsel %vm2070, %v7488, %v6629
        %v7521 = vsel %vm2070, %v7489, %v6631
        %v7522 = vsel %vm2070, %v7490, %v6633
        %v7523 = vsel %vm2070, %v7491, %v6635
        %v7524 = vsel %vm2070, %v7492, %v6637
        %v7525 = vsel %vm2070, %v7493, %v6639
        %v7526 = vsel %vm2070, %v7494, %v6641
        %v7527 = vsel %vm2070, %v7495, %v6643
        %v7528 = vsel %vm2070, %v7496, %v6645
        %v7529 = vsel %vm2070, %v7497, %v6647
        %v7530 = vsel %vm2070, %v7498, %v6649
        %v7531 = vsel %vm2070, %v7499, %v6651
        %v7532 = vsel %vm2070, %v7500, %v6653
        %v7533 = vsel %vm2070, %v7501, %v6655
        %v7534 = vsel %vm2070, %v7502, %v6657
        %v7535 = vsel %vm2070, %v7503, %v6659
        %v7536 = vsel %vm2070, %v7504, %v6661
        %v7537 = vsel %vm2070, %v7505, %v6663
        %v7538 = vsel %vm2070, %v7506, %v6665
        %v7539 = vsel %vm2070, %v7507, %v6667
        %v7540 = vsel %vm2070, %v7508, %v6669
        %v7541 = vsel %vm2070, %v7509, %v6671
        %v7542 = vsel %vm2070, %v7510, %v6673
        %v7543 = vsel %vm2070, %v7511, %v6675
        %v7544 = vsel %vm2070, %v7512, %v6677
        %v7545 = vsel %vm2070, %v7513, %v6679
        %v7546 = vsel %vm2070, %v7514, %v6681
        %v7547 = vsel %vm2070, %v7515, %v6683
        %v7548 = vsel %vm2172, %v7516, %v6749
        %v7549 = vsel %vm2172, %v7517, %v6751
        %v7550 = vsel %vm2172, %v7518, %v6753
        %v7551 = vsel %vm2172, %v7519, %v6755
        %v7552 = vsel %vm2172, %v7520, %v6757
        %v7553 = vsel %vm2172, %v7521, %v6759
        %v7554 = vsel %vm2172, %v7522, %v6761
        %v7555 = vsel %vm2172, %v7523, %v6763
        %v7556 = vsel %vm2172, %v7524, %v6765
        %v7557 = vsel %vm2172, %v7525, %v6767
        %v7558 = vsel %vm2172, %v7526, %v6769
        %v7559 = vsel %vm2172, %v7527, %v6771
        %v7560 = vsel %vm2172, %v7528, %v6773
        %v7561 = vsel %vm2172, %v7529, %v6775
        %v7562 = vsel %vm2172, %v7530, %v6777
        %v7563 = vsel %vm2172, %v7531, %v6779
        %v7564 = vsel %vm2172, %v7532, %v6781
        %v7565 = vsel %vm2172, %v7533, %v6783
        %v7566 = vsel %vm2172, %v7534, %v6785
        %v7567 = vsel %vm2172, %v7535, %v6787
        %v7568 = vsel %vm2172, %v7536, %v6789
        %v7569 = vsel %vm2172, %v7537, %v6791
        %v7570 = vsel %vm2172, %v7538, %v6793
        %v7571 = vsel %vm2172, %v7539, %v6795
        %v7572 = vsel %vm2172, %v7540, %v6797
        %v7573 = vsel %vm2172, %v7541, %v6799
        %v7574 = vsel %vm2172, %v7542, %v6801
        %v7575 = vsel %vm2172, %v7543, %v6803
        %v7576 = vsel %vm2172, %v7544, %v6805
        %v7577 = vsel %vm2172, %v7545, %v6807
        %v7578 = vsel %vm2172, %v7546, %v6809
        %v7579 = vsel %vm2172, %v7547, %v6811
        %v7580 = vsel %vm2274, %v7548, %v6877
        %v7581 = vsel %vm2274, %v7549, %v6879
        %v7582 = vsel %vm2274, %v7550, %v6881
        %v7583 = vsel %vm2274, %v7551, %v6883
        %v7584 = vsel %vm2274, %v7552, %v6885
        %v7585 = vsel %vm2274, %v7553, %v6887
        %v7586 = vsel %vm2274, %v7554, %v6889
        %v7587 = vsel %vm2274, %v7555, %v6891
        %v7588 = vsel %vm2274, %v7556, %v6893
        %v7589 = vsel %vm2274, %v7557, %v6895
        %v7590 = vsel %vm2274, %v7558, %v6897
        %v7591 = vsel %vm2274, %v7559, %v6899
        %v7592 = vsel %vm2274, %v7560, %v6901
        %v7593 = vsel %vm2274, %v7561, %v6903
        %v7594 = vsel %vm2274, %v7562, %v6905
        %v7595 = vsel %vm2274, %v7563, %v6907
        %v7596 = vsel %vm2274, %v7564, %v6909
        %v7597 = vsel %vm2274, %v7565, %v6911
        %v7598 = vsel %vm2274, %v7566, %v6913
        %v7599 = vsel %vm2274, %v7567, %v6915
        %v7600 = vsel %vm2274, %v7568, %v6917
        %v7601 = vsel %vm2274, %v7569, %v6919
        %v7602 = vsel %vm2274, %v7570, %v6921
        %v7603 = vsel %vm2274, %v7571, %v6923
        %v7604 = vsel %vm2274, %v7572, %v6925
        %v7605 = vsel %vm2274, %v7573, %v6927
        %v7606 = vsel %vm2274, %v7574, %v6929
        %v7607 = vsel %vm2274, %v7575, %v6931
        %v7608 = vsel %vm2274, %v7576, %v6933
        %v7609 = vsel %vm2274, %v7577, %v6935
        %v7610 = vsel %vm2274, %v7578, %v6937
        %v7611 = vsel %vm2274, %v7579, %v6939
        %vm7612 = vcmask 326656
        %v7613 = vsel %vm7612, %v7580, %v7005
        %v7614 = vsel %vm7612, %v7581, %v7007
        %v7615 = vsel %vm7612, %v7582, %v7009
        %v7616 = vsel %vm7612, %v7583, %v7011
        %v7617 = vsel %vm7612, %v7584, %v7013
        %v7618 = vsel %vm7612, %v7585, %v7015
        %v7619 = vsel %vm7612, %v7586, %v7017
        %v7620 = vsel %vm7612, %v7587, %v7019
        %v7621 = vsel %vm7612, %v7588, %v7021
        %v7622 = vsel %vm7612, %v7589, %v7023
        %v7623 = vsel %vm7612, %v7590, %v7025
        %v7624 = vsel %vm7612, %v7591, %v7027
        %v7625 = vsel %vm7612, %v7592, %v7029
        %v7626 = vsel %vm7612, %v7593, %v7031
        %v7627 = vsel %vm7612, %v7594, %v7033
        %v7628 = vsel %vm7612, %v7595, %v7035
        %v7629 = vsel %vm7612, %v7596, %v7037
        %v7630 = vsel %vm7612, %v7597, %v7039
        %v7631 = vsel %vm7612, %v7598, %v7041
        %v7632 = vsel %vm7612, %v7599, %v7043
        %v7633 = vsel %vm7612, %v7600, %v7045
        %v7634 = vsel %vm7612, %v7601, %v7047
        %v7635 = vsel %vm7612, %v7602, %v7049
        %v7636 = vsel %vm7612, %v7603, %v7051
        %v7637 = vsel %vm7612, %v7604, %v7053
        %v7638 = vsel %vm7612, %v7605, %v7055
        %v7639 = vsel %vm7612, %v7606, %v7057
        %v7640 = vsel %vm7612, %v7607, %v7059
        %v7641 = vsel %vm7612, %v7608, %v7061
        %v7642 = vsel %vm7612, %v7609, %v7063
        %v7643 = vsel %vm7612, %v7610, %v7065
        %v7644 = vsel %vm7612, %v7611, %v7067
        %vm7645 = vcmask 392192
        %v7646 = vsel %vm7645, %v7613, %v7133
        %v7647 = vsel %vm7645, %v7614, %v7135
        %v7648 = vsel %vm7645, %v7615, %v7137
        %v7649 = vsel %vm7645, %v7616, %v7139
        %v7650 = vsel %vm7645, %v7617, %v7141
        %v7651 = vsel %vm7645, %v7618, %v7143
        %v7652 = vsel %vm7645, %v7619, %v7145
        %v7653 = vsel %vm7645, %v7620, %v7147
        %v7654 = vsel %vm7645, %v7621, %v7149
        %v7655 = vsel %vm7645, %v7622, %v7151
        %v7656 = vsel %vm7645, %v7623, %v7153
        %v7657 = vsel %vm7645, %v7624, %v7155
        %v7658 = vsel %vm7645, %v7625, %v7157
        %v7659 = vsel %vm7645, %v7626, %v7159
        %v7660 = vsel %vm7645, %v7627, %v7161
        %v7661 = vsel %vm7645, %v7628, %v7163
        %v7662 = vsel %vm7645, %v7629, %v7165
        %v7663 = vsel %vm7645, %v7630, %v7167
        %v7664 = vsel %vm7645, %v7631, %v7169
        %v7665 = vsel %vm7645, %v7632, %v7171
        %v7666 = vsel %vm7645, %v7633, %v7173
        %v7667 = vsel %vm7645, %v7634, %v7175
        %v7668 = vsel %vm7645, %v7635, %v7177
        %v7669 = vsel %vm7645, %v7636, %v7179
        %v7670 = vsel %vm7645, %v7637, %v7181
        %v7671 = vsel %vm7645, %v7638, %v7183
        %v7672 = vsel %vm7645, %v7639, %v7185
        %v7673 = vsel %vm7645, %v7640, %v7187
        %v7674 = vsel %vm7645, %v7641, %v7189
        %v7675 = vsel %vm7645, %v7642, %v7191
        %v7676 = vsel %vm7645, %v7643, %v7193
        %v7677 = vsel %vm7645, %v7644, %v7195
        %vm7678 = vcmask 457728
        %v7679 = vsel %vm7678, %v7646, %v7261
        %v7680 = vsel %vm7678, %v7647, %v7263
        %v7681 = vsel %vm7678, %v7648, %v7265
        %v7682 = vsel %vm7678, %v7649, %v7267
        %v7683 = vsel %vm7678, %v7650, %v7269
        %v7684 = vsel %vm7678, %v7651, %v7271
        %v7685 = vsel %vm7678, %v7652, %v7273
        %v7686 = vsel %vm7678, %v7653, %v7275
        %v7687 = vsel %vm7678, %v7654, %v7277
        %v7688 = vsel %vm7678, %v7655, %v7279
        %v7689 = vsel %vm7678, %v7656, %v7281
        %v7690 = vsel %vm7678, %v7657, %v7283
        %v7691 = vsel %vm7678, %v7658, %v7285
        %v7692 = vsel %vm7678, %v7659, %v7287
        %v7693 = vsel %vm7678, %v7660, %v7289
        %v7694 = vsel %vm7678, %v7661, %v7291
        %v7695 = vsel %vm7678, %v7662, %v7293
        %v7696 = vsel %vm7678, %v7663, %v7295
        %v7697 = vsel %vm7678, %v7664, %v7297
        %v7698 = vsel %vm7678, %v7665, %v7299
        %v7699 = vsel %vm7678, %v7666, %v7301
        %v7700 = vsel %vm7678, %v7667, %v7303
        %v7701 = vsel %vm7678, %v7668, %v7305
        %v7702 = vsel %vm7678, %v7669, %v7307
        %v7703 = vsel %vm7678, %v7670, %v7309
        %v7704 = vsel %vm7678, %v7671, %v7311
        %v7705 = vsel %vm7678, %v7672, %v7313
        %v7706 = vsel %vm7678, %v7673, %v7315
        %v7707 = vsel %vm7678, %v7674, %v7317
        %v7708 = vsel %vm7678, %v7675, %v7319
        %v7709 = vsel %vm7678, %v7676, %v7321
        %v7710 = vsel %vm7678, %v7677, %v7323
        %vm7711 = vcmask 523264
        %v7712 = vsel %vm7711, %v7679, %v7389
        %v7713 = vsel %vm7711, %v7680, %v7391
        %v7714 = vsel %vm7711, %v7681, %v7393
        %v7715 = vsel %vm7711, %v7682, %v7395
        %v7716 = vsel %vm7711, %v7683, %v7397
        %v7717 = vsel %vm7711, %v7684, %v7399
        %v7718 = vsel %vm7711, %v7685, %v7401
        %v7719 = vsel %vm7711, %v7686, %v7403
        %v7720 = vsel %vm7711, %v7687, %v7405
        %v7721 = vsel %vm7711, %v7688, %v7407
        %v7722 = vsel %vm7711, %v7689, %v7409
        %v7723 = vsel %vm7711, %v7690, %v7411
        %v7724 = vsel %vm7711, %v7691, %v7413
        %v7725 = vsel %vm7711, %v7692, %v7415
        %v7726 = vsel %vm7711, %v7693, %v7417
        %v7727 = vsel %vm7711, %v7694, %v7419
        %v7728 = vsel %vm7711, %v7695, %v7421
        %v7729 = vsel %vm7711, %v7696, %v7423
        %v7730 = vsel %vm7711, %v7697, %v7425
        %v7731 = vsel %vm7711, %v7698, %v7427
        %v7732 = vsel %vm7711, %v7699, %v7429
        %v7733 = vsel %vm7711, %v7700, %v7431
        %v7734 = vsel %vm7711, %v7701, %v7433
        %v7735 = vsel %vm7711, %v7702, %v7435
        %v7736 = vsel %vm7711, %v7703, %v7437
        %v7737 = vsel %vm7711, %v7704, %v7439
        %v7738 = vsel %vm7711, %v7705, %v7441
        %v7739 = vsel %vm7711, %v7706, %v7443
        %v7740 = vsel %vm7711, %v7707, %v7445
        %v7741 = vsel %vm7711, %v7708, %v7447
        %v7742 = vsel %vm7711, %v7709, %v7449
        %v7743 = vsel %vm7711, %v7710, %v7451
        %v7744 = vpack.c.bf16 %v7713, %v7712
        %v7745 = vpack.c.bf16 %v7715, %v7714
        %v7746 = vpack.c.bf16 %v7717, %v7716
        %v7747 = vpack.c.bf16 %v7719, %v7718
        %v7748 = vpack.c.bf16 %v7721, %v7720
        %v7749 = vpack.c.bf16 %v7723, %v7722
        %v7750 = vpack.c.bf16 %v7725, %v7724
        %v7751 = vpack.c.bf16 %v7727, %v7726
        %v7752 = vpack.c.bf16 %v7729, %v7728
        %v7753 = vpack.c.bf16 %v7731, %v7730
        %v7754 = vpack.c.bf16 %v7733, %v7732
        %v7755 = vpack.c.bf16 %v7735, %v7734
        %v7756 = vpack.c.bf16 %v7737, %v7736
        %v7757 = vpack.c.bf16 %v7739, %v7738
        %v7758 = vpack.c.bf16 %v7741, %v7740
        %v7759 = vpack.c.bf16 %v7743, %v7742
        %v7760 = vld [vmem:[%s3] sm:$0xf]
        %vm7761 = vcmask 588800
        %v7763 = vsel %vm7761, %v7760, 0
        %v7766 = vsel %vm7761, %v7744, 0
        %v7769 = vsel %vm7761, %v7745, 0
        %v7772 = vsel %vm7761, %v7746, 0
        %v7775 = vsel %vm7761, %v7747, 0
        %v7778 = vsel %vm7761, %v7748, 0
        %v7781 = vsel %vm7761, %v7749, 0
        %v7784 = vsel %vm7761, %v7750, 0
        %v7787 = vsel %vm7761, %v7751, 0
        %v7790 = vsel %vm7761, %v7752, 0
        %v7793 = vsel %vm7761, %v7753, 0
        %v7796 = vsel %vm7761, %v7754, 0
        %v7799 = vsel %vm7761, %v7755, 0
        %v7802 = vsel %vm7761, %v7756, 0
        %v7805 = vsel %vm7761, %v7757, 0
        %v7808 = vsel %vm7761, %v7758, 0
        %v7811 = vsel %vm7761, %v7759, 0
        %7813 = vmatprep.subr.bf16.mxu0 0
        %7814 = vmatpush1.bf16.xpose.msra.mxu0 %v7787
        %7815 = vmatprep.subr.bf16.mxu0 0
        %7816 = vmatpush1.bf16.xpose.msra.mxu0 %v7784
        %7817 = vmatprep.subr.bf16.mxu0 0
        %7818 = vmatpush1.bf16.xpose.msra.mxu0 %v7781
        %7819 = vmatprep.subr.bf16.mxu0 0
        %7820 = vmatpush1.bf16.xpose.msra.mxu0 %v7778
        %7821 = vmatprep.subr.bf16.mxu0 0
        %7822 = vmatpush1.bf16.xpose.msra.mxu0 %v7775
        %7823 = vmatprep.subr.bf16.mxu0 0
        %7824 = vmatpush1.bf16.xpose.msra.mxu0 %v7772
        %7825 = vmatprep.subr.bf16.mxu0 0
        %7826 = vmatpush1.bf16.xpose.msra.mxu0 %v7769
        %7827 = vmatprep.subr.bf16.mxu0 0
        %7828 = vmatpush1.bf16.xpose.msra.mxu0 %v7766
        %7829 = vmatprep.subr.bf16.mxu0 0
        %7830 = vmatpush2.bf16.xpose.msra.mxu0 %v7811
        %7831 = vmatprep.subr.bf16.mxu0 0
        %7832 = vmatpush2.bf16.xpose.msra.mxu0 %v7808
        %7833 = vmatprep.subr.bf16.mxu0 0
        %7834 = vmatpush2.bf16.xpose.msra.mxu0 %v7805
        %7835 = vmatprep.subr.bf16.mxu0 0
        %7836 = vmatpush2.bf16.xpose.msra.mxu0 %v7802
        %7837 = vmatprep.subr.bf16.mxu0 0
        %7838 = vmatpush2.bf16.xpose.msra.mxu0 %v7799
        %7839 = vmatprep.subr.bf16.mxu0 0
        %7840 = vmatpush2.bf16.xpose.msra.mxu0 %v7796
        %7841 = vmatprep.subr.bf16.mxu0 0
        %7842 = vmatpush2.bf16.xpose.msra.mxu0 %v7793
        %7843 = vmatprep.subr.bf16.mxu0 0
        %7844 = vmatpush2.bf16.xpose.msra.mxu0 %v7790
        %7845 = vmatprep.mubr.bf16.mxu0 0
        %7846 = vmatmul.mubr.bf16.gmra.mxu0 %v7763
        %v7847 = vpop.f32.mrf.mxu0
        %v7848 = vadd.f32 0.0, %v7847
        %v7849 = vpop.f32.mrf.mxu0
        %v7850 = vadd.f32 0.0, %v7849
        %v7851 = vpop.f32.mrf.mxu0
        %v7852 = vpop.f32.mrf.mxu0
        %7853 = vdwg.mxu0
        %7855 = vset.pattern.permute.xlu0 0
        %7856 = vperm.xlu0 %7855, %v315
        %v7857 = vpop.permute.xlu0 %7856
        %v7859 = vmul.f32 %v7848, %v7857
        %v7860 = vmul.f32 %v7850, %v7857
        %7861 = vset.pattern.permute.xlu0 1
        %7862 = vperm.xlu0 %7861, %v315
        %v7863 = vpop.permute.xlu0 %7862
        %v7865 = vadd.f32 %v7859, %v7863
        %v7866 = vadd.f32 %v7860, %v7863
        %s7867 = smul.addr %s316, 4
        %s7868 = scalar_lea.vmem %s310, %s7867
        %v7869 = vld [vmem:[%s7868] sm:$0xf]
        %v7870 = vld [vmem:[%s7868 + $0x4] sm:$0xf]
        %v7871 = vld [vmem:[%s7868 + $0x8] sm:$0xf]
        %v7872 = vld [vmem:[%s7868 + $0xc] sm:$0xf]
        %v7873 = vld [vmem:[%s7868 + $0x10] sm:$0x3]
        %v7874 = vld [vmem:[%s7868 + $0x14] sm:$0xf]
        %v7875 = vld [vmem:[%s7868 + $0x18] sm:$0xf]
        %v7876 = vld [vmem:[%s7868 + $0x1c] sm:$0xf]
        %v7877 = vld [vmem:[%s7868 + $0x20] sm:$0xf]
        %v7878 = vld [vmem:[%s7868 + $0x24] sm:$0x3]
        %v7879 = vld [vmem:[%s7868 + $0x28] sm:$0xf]
        %v7880 = vld [vmem:[%s7868 + $0x2c] sm:$0xf]
        %v7881 = vld [vmem:[%s7868 + $0x30] sm:$0xf]
        %v7882 = vld [vmem:[%s7868 + $0x34] sm:$0xf]
        %v7883 = vld [vmem:[%s7868 + $0x38] sm:$0x3]
        %v7884 = vld [vmem:[%s7868 + $0x3c] sm:$0xf]
        %v7885 = vld [vmem:[%s7868 + $0x40] sm:$0xf]
        %v7886 = vld [vmem:[%s7868 + $0x44] sm:$0xf]
        %v7887 = vld [vmem:[%s7868 + $0x48] sm:$0xf]
        %v7888 = vld [vmem:[%s7868 + $0x4c] sm:$0x3]
        %v7889 = vld [vmem:[%s7868 + $0x50] sm:$0xf]
        %v7890 = vld [vmem:[%s7868 + $0x54] sm:$0xf]
        %v7891 = vld [vmem:[%s7868 + $0x58] sm:$0xf]
        %v7892 = vld [vmem:[%s7868 + $0x5c] sm:$0xf]
        %v7893 = vld [vmem:[%s7868 + $0x60] sm:$0x3]
        %v7894 = vld [vmem:[%s7868 + $0x64] sm:$0xf]
        %v7895 = vld [vmem:[%s7868 + $0x68] sm:$0xf]
        %v7896 = vld [vmem:[%s7868 + $0x6c] sm:$0xf]
        %v7897 = vld [vmem:[%s7868 + $0x70] sm:$0xf]
        %v7898 = vld [vmem:[%s7868 + $0x74] sm:$0x3]
        %v7899 = vld [vmem:[%s7868 + $0x78] sm:$0xf]
        %v7900 = vld [vmem:[%s7868 + $0x7c] sm:$0xf]
        %v7901 = vld [vmem:[%s7868 + $0x80] sm:$0xf]
        %v7902 = vld [vmem:[%s7868 + $0x84] sm:$0xf]
        %v7903 = vld [vmem:[%s7868 + $0x88] sm:$0x3]
        %v7904 = vld [vmem:[%s7868 + $0x8c] sm:$0xf]
        %v7905 = vld [vmem:[%s7868 + $0x90] sm:$0xf]
        %v7906 = vld [vmem:[%s7868 + $0x94] sm:$0xf]
        %v7907 = vld [vmem:[%s7868 + $0x98] sm:$0xf]
        %v7908 = vld [vmem:[%s7868 + $0x9c] sm:$0x3]
        %v7909 = vld [vmem:[%s7868 + $0xa0] sm:$0xf]
        %v7910 = vld [vmem:[%s7868 + $0xa4] sm:$0xf]
        %v7911 = vld [vmem:[%s7868 + $0xa8] sm:$0xf]
        %v7912 = vld [vmem:[%s7868 + $0xac] sm:$0xf]
        %v7913 = vld [vmem:[%s7868 + $0xb0] sm:$0x3]
        %v7914 = vld [vmem:[%s7868 + $0xb4] sm:$0xf]
        %v7915 = vld [vmem:[%s7868 + $0xb8] sm:$0xf]
        %v7916 = vld [vmem:[%s7868 + $0xbc] sm:$0xf]
        %v7917 = vld [vmem:[%s7868 + $0xc0] sm:$0xf]
        %v7918 = vld [vmem:[%s7868 + $0xc4] sm:$0x3]
        %v7919 = vld [vmem:[%s7868 + $0xc8] sm:$0xf]
        %v7920 = vld [vmem:[%s7868 + $0xcc] sm:$0xf]
        %v7921 = vld [vmem:[%s7868 + $0xd0] sm:$0xf]
        %v7922 = vld [vmem:[%s7868 + $0xd4] sm:$0xf]
        %v7923 = vld [vmem:[%s7868 + $0xd8] sm:$0x3]
        %v7924 = vunpack.c.l.bf16 %v7869
        %v7925 = vunpack.c.l.bf16 %v7870
        %v7926 = vunpack.c.l.bf16 %v7871
        %v7927 = vunpack.c.l.bf16 %v7872
        %v7928 = vunpack.c.l.bf16 %v7873
        %v7929 = vunpack.c.l.bf16 %v7874
        %v7930 = vunpack.c.l.bf16 %v7875
        %v7931 = vunpack.c.l.bf16 %v7876
        %v7932 = vunpack.c.l.bf16 %v7877
        %v7933 = vunpack.c.l.bf16 %v7878
        %v7934 = vunpack.c.l.bf16 %v7879
        %v7935 = vunpack.c.l.bf16 %v7880
        %v7936 = vunpack.c.l.bf16 %v7881
        %v7937 = vunpack.c.l.bf16 %v7882
        %v7938 = vunpack.c.l.bf16 %v7883
        %v7939 = vunpack.c.l.bf16 %v7884
        %v7940 = vunpack.c.l.bf16 %v7885
        %v7941 = vunpack.c.l.bf16 %v7886
        %v7942 = vunpack.c.l.bf16 %v7887
        %v7943 = vunpack.c.l.bf16 %v7888
        %v7944 = vunpack.c.l.bf16 %v7889
        %v7945 = vunpack.c.l.bf16 %v7890
        %v7946 = vunpack.c.l.bf16 %v7891
        %v7947 = vunpack.c.l.bf16 %v7892
        %v7948 = vunpack.c.l.bf16 %v7893
        %v7949 = vunpack.c.l.bf16 %v7894
        %v7950 = vunpack.c.l.bf16 %v7895
        %v7951 = vunpack.c.l.bf16 %v7896
        %v7952 = vunpack.c.l.bf16 %v7897
        %v7953 = vunpack.c.l.bf16 %v7898
        %v7954 = vunpack.c.l.bf16 %v7899
        %v7955 = vunpack.c.l.bf16 %v7900
        %v7956 = vunpack.c.l.bf16 %v7901
        %v7957 = vunpack.c.l.bf16 %v7902
        %v7958 = vunpack.c.l.bf16 %v7903
        %v7959 = vunpack.c.l.bf16 %v7904
        %v7960 = vunpack.c.l.bf16 %v7905
        %v7961 = vunpack.c.l.bf16 %v7906
        %v7962 = vunpack.c.l.bf16 %v7907
        %v7963 = vunpack.c.l.bf16 %v7908
        %v7964 = vunpack.c.l.bf16 %v7909
        %v7965 = vunpack.c.l.bf16 %v7910
        %v7966 = vunpack.c.l.bf16 %v7911
        %v7967 = vunpack.c.l.bf16 %v7912
        %v7968 = vunpack.c.l.bf16 %v7913
        %v7969 = vunpack.c.l.bf16 %v7914
        %v7970 = vunpack.c.l.bf16 %v7915
        %v7971 = vunpack.c.l.bf16 %v7916
        %v7972 = vunpack.c.l.bf16 %v7917
        %v7973 = vunpack.c.l.bf16 %v7918
        %v7974 = vunpack.c.l.bf16 %v7919
        %v7975 = vunpack.c.l.bf16 %v7920
        %v7976 = vunpack.c.l.bf16 %v7921
        %v7977 = vunpack.c.l.bf16 %v7922
        %v7978 = vunpack.c.l.bf16 %v7923
        %v8019 = vrot.slane %v7924, 1
        %v8020 = vrot.slane %v7925, 1
        %v8021 = vsel %vm489, %v8019, %v8020
        %v8022 = vrot.slane %v7926, 1
        %v8023 = vsel %vm489, %v8020, %v8022
        %v8024 = vrot.slane %v7927, 1
        %v8025 = vsel %vm489, %v8022, %v8024
        %v8026 = vrot.slane %v7928, 1
        %v8027 = vsel %vm489, %v8024, %v8026
        %v8028 = vrot.slane %v7929, 1
        %v8029 = vrot.slane %v7930, 1
        %v8030 = vsel %vm489, %v8028, %v8029
        %v8031 = vrot.slane %v7931, 1
        %v8032 = vsel %vm489, %v8029, %v8031
        %v8033 = vrot.slane %v7932, 1
        %v8034 = vsel %vm489, %v8031, %v8033
        %v8035 = vrot.slane %v7933, 1
        %v8036 = vsel %vm489, %v8033, %v8035
        %v8037 = vrot.slane %v7934, 1
        %v8038 = vrot.slane %v7935, 1
        %v8039 = vsel %vm489, %v8037, %v8038
        %v8040 = vrot.slane %v7936, 1
        %v8041 = vsel %vm489, %v8038, %v8040
        %v8042 = vrot.slane %v7937, 1
        %v8043 = vsel %vm489, %v8040, %v8042
        %v8044 = vrot.slane %v7938, 1
        %v8045 = vsel %vm489, %v8042, %v8044
        %v8046 = vrot.slane %v7939, 1
        %v8047 = vrot.slane %v7940, 1
        %v8048 = vsel %vm489, %v8046, %v8047
        %v8049 = vrot.slane %v7941, 1
        %v8050 = vsel %vm489, %v8047, %v8049
        %v8051 = vrot.slane %v7942, 1
        %v8052 = vsel %vm489, %v8049, %v8051
        %v8053 = vrot.slane %v7943, 1
        %v8054 = vsel %vm489, %v8051, %v8053
        %v8055 = vrot.slane %v7944, 1
        %v8056 = vrot.slane %v7945, 1
        %v8057 = vsel %vm489, %v8055, %v8056
        %v8058 = vrot.slane %v7946, 1
        %v8059 = vsel %vm489, %v8056, %v8058
        %v8060 = vrot.slane %v7947, 1
        %v8061 = vsel %vm489, %v8058, %v8060
        %v8062 = vrot.slane %v7948, 1
        %v8063 = vsel %vm489, %v8060, %v8062
        %v8064 = vrot.slane %v7949, 1
        %v8065 = vrot.slane %v7950, 1
        %v8066 = vsel %vm489, %v8064, %v8065
        %v8067 = vrot.slane %v7951, 1
        %v8068 = vsel %vm489, %v8065, %v8067
        %v8069 = vrot.slane %v7952, 1
        %v8070 = vsel %vm489, %v8067, %v8069
        %v8071 = vrot.slane %v7953, 1
        %v8072 = vsel %vm489, %v8069, %v8071
        %v8073 = vrot.slane %v7954, 1
        %v8074 = vrot.slane %v7955, 1
        %v8075 = vsel %vm489, %v8073, %v8074
        %v8076 = vrot.slane %v7956, 1
        %v8077 = vsel %vm489, %v8074, %v8076
        %v8078 = vrot.slane %v7957, 1
        %v8079 = vsel %vm489, %v8076, %v8078
        %v8080 = vrot.slane %v7958, 1
        %v8081 = vsel %vm489, %v8078, %v8080
        %v8082 = vrot.slane %v7959, 1
        %v8083 = vrot.slane %v7960, 1
        %v8084 = vsel %vm489, %v8082, %v8083
        %v8085 = vrot.slane %v7961, 1
        %v8086 = vsel %vm489, %v8083, %v8085
        %v8087 = vrot.slane %v7962, 1
        %v8088 = vsel %vm489, %v8085, %v8087
        %v8089 = vrot.slane %v7963, 1
        %v8090 = vsel %vm489, %v8087, %v8089
        %8091 = vrot.lane.b32.xlu0 %v8021, 4
        %v8092 = vpop.permute.xlu0 %8091
        %8093 = vrot.lane.b32.xlu0 %v8023, 4
        %v8094 = vpop.permute.xlu0 %8093
        %8095 = vrot.lane.b32.xlu0 %v8025, 4
        %v8096 = vpop.permute.xlu0 %8095
        %8097 = vrot.lane.b32.xlu0 %v8027, 4
        %v8098 = vpop.permute.xlu0 %8097
        %8099 = vrot.lane.b32.xlu0 %v8030, 4
        %v8100 = vpop.permute.xlu0 %8099
        %8101 = vrot.lane.b32.xlu0 %v8032, 4
        %v8102 = vpop.permute.xlu0 %8101
        %8103 = vrot.lane.b32.xlu0 %v8034, 4
        %v8104 = vpop.permute.xlu0 %8103
        %8105 = vrot.lane.b32.xlu0 %v8036, 4
        %v8106 = vpop.permute.xlu0 %8105
        %8107 = vrot.lane.b32.xlu0 %v8039, 4
        %v8108 = vpop.permute.xlu0 %8107
        %8109 = vrot.lane.b32.xlu0 %v8041, 4
        %v8110 = vpop.permute.xlu0 %8109
        %8111 = vrot.lane.b32.xlu0 %v8043, 4
        %v8112 = vpop.permute.xlu0 %8111
        %8113 = vrot.lane.b32.xlu0 %v8045, 4
        %v8114 = vpop.permute.xlu0 %8113
        %8115 = vrot.lane.b32.xlu0 %v8048, 4
        %v8116 = vpop.permute.xlu0 %8115
        %8117 = vrot.lane.b32.xlu0 %v8050, 4
        %v8118 = vpop.permute.xlu0 %8117
        %8119 = vrot.lane.b32.xlu0 %v8052, 4
        %v8120 = vpop.permute.xlu0 %8119
        %8121 = vrot.lane.b32.xlu0 %v8054, 4
        %v8122 = vpop.permute.xlu0 %8121
        %8123 = vrot.lane.b32.xlu0 %v8057, 4
        %v8124 = vpop.permute.xlu0 %8123
        %8125 = vrot.lane.b32.xlu0 %v8059, 4
        %v8126 = vpop.permute.xlu0 %8125
        %8127 = vrot.lane.b32.xlu0 %v8061, 4
        %v8128 = vpop.permute.xlu0 %8127
        %8129 = vrot.lane.b32.xlu0 %v8063, 4
        %v8130 = vpop.permute.xlu0 %8129
        %8131 = vrot.lane.b32.xlu0 %v8066, 4
        %v8132 = vpop.permute.xlu0 %8131
        %8133 = vrot.lane.b32.xlu0 %v8068, 4
        %v8134 = vpop.permute.xlu0 %8133
        %8135 = vrot.lane.b32.xlu0 %v8070, 4
        %v8136 = vpop.permute.xlu0 %8135
        %8137 = vrot.lane.b32.xlu0 %v8072, 4
        %v8138 = vpop.permute.xlu0 %8137
        %8139 = vrot.lane.b32.xlu0 %v8075, 4
        %v8140 = vpop.permute.xlu0 %8139
        %8141 = vrot.lane.b32.xlu0 %v8077, 4
        %v8142 = vpop.permute.xlu0 %8141
        %8143 = vrot.lane.b32.xlu0 %v8079, 4
        %v8144 = vpop.permute.xlu0 %8143
        %8145 = vrot.lane.b32.xlu0 %v8081, 4
        %v8146 = vpop.permute.xlu0 %8145
        %8147 = vrot.lane.b32.xlu0 %v8084, 4
        %v8148 = vpop.permute.xlu0 %8147
        %8149 = vrot.lane.b32.xlu0 %v8086, 4
        %v8150 = vpop.permute.xlu0 %8149
        %8151 = vrot.lane.b32.xlu0 %v8088, 4
        %v8152 = vpop.permute.xlu0 %8151
        %8153 = vrot.lane.b32.xlu0 %v8090, 4
        %v8154 = vpop.permute.xlu0 %8153
        %v8187 = vrot.slane %v7924, 2
        %v8188 = vrot.slane %v7925, 2
        %v8189 = vsel %vm730, %v8187, %v8188
        %v8190 = vrot.slane %v7926, 2
        %v8191 = vsel %vm730, %v8188, %v8190
        %v8192 = vrot.slane %v7927, 2
        %v8193 = vsel %vm730, %v8190, %v8192
        %v8194 = vrot.slane %v7928, 2
        %v8195 = vsel %vm730, %v8192, %v8194
        %v8196 = vrot.slane %v7929, 2
        %v8197 = vrot.slane %v7930, 2
        %v8198 = vsel %vm730, %v8196, %v8197
        %v8199 = vrot.slane %v7931, 2
        %v8200 = vsel %vm730, %v8197, %v8199
        %v8201 = vrot.slane %v7932, 2
        %v8202 = vsel %vm730, %v8199, %v8201
        %v8203 = vrot.slane %v7933, 2
        %v8204 = vsel %vm730, %v8201, %v8203
        %v8205 = vrot.slane %v7934, 2
        %v8206 = vrot.slane %v7935, 2
        %v8207 = vsel %vm730, %v8205, %v8206
        %v8208 = vrot.slane %v7936, 2
        %v8209 = vsel %vm730, %v8206, %v8208
        %v8210 = vrot.slane %v7937, 2
        %v8211 = vsel %vm730, %v8208, %v8210
        %v8212 = vrot.slane %v7938, 2
        %v8213 = vsel %vm730, %v8210, %v8212
        %v8214 = vrot.slane %v7939, 2
        %v8215 = vrot.slane %v7940, 2
        %v8216 = vsel %vm730, %v8214, %v8215
        %v8217 = vrot.slane %v7941, 2
        %v8218 = vsel %vm730, %v8215, %v8217
        %v8219 = vrot.slane %v7942, 2
        %v8220 = vsel %vm730, %v8217, %v8219
        %v8221 = vrot.slane %v7943, 2
        %v8222 = vsel %vm730, %v8219, %v8221
        %v8223 = vrot.slane %v7944, 2
        %v8224 = vrot.slane %v7945, 2
        %v8225 = vsel %vm730, %v8223, %v8224
        %v8226 = vrot.slane %v7946, 2
        %v8227 = vsel %vm730, %v8224, %v8226
        %v8228 = vrot.slane %v7947, 2
        %v8229 = vsel %vm730, %v8226, %v8228
        %v8230 = vrot.slane %v7948, 2
        %v8231 = vsel %vm730, %v8228, %v8230
        %v8232 = vrot.slane %v7949, 2
        %v8233 = vrot.slane %v7950, 2
        %v8234 = vsel %vm730, %v8232, %v8233
        %v8235 = vrot.slane %v7951, 2
        %v8236 = vsel %vm730, %v8233, %v8235
        %v8237 = vrot.slane %v7952, 2
        %v8238 = vsel %vm730, %v8235, %v8237
        %v8239 = vrot.slane %v7953, 2
        %v8240 = vsel %vm730, %v8237, %v8239
        %v8241 = vrot.slane %v7954, 2
        %v8242 = vrot.slane %v7955, 2
        %v8243 = vsel %vm730, %v8241, %v8242
        %v8244 = vrot.slane %v7956, 2
        %v8245 = vsel %vm730, %v8242, %v8244
        %v8246 = vrot.slane %v7957, 2
        %v8247 = vsel %vm730, %v8244, %v8246
        %v8248 = vrot.slane %v7958, 2
        %v8249 = vsel %vm730, %v8246, %v8248
        %v8250 = vrot.slane %v7959, 2
        %v8251 = vrot.slane %v7960, 2
        %v8252 = vsel %vm730, %v8250, %v8251
        %v8253 = vrot.slane %v7961, 2
        %v8254 = vsel %vm730, %v8251, %v8253
        %v8255 = vrot.slane %v7962, 2
        %v8256 = vsel %vm730, %v8253, %v8255
        %v8257 = vrot.slane %v7963, 2
        %v8258 = vsel %vm730, %v8255, %v8257
        %8259 = vrot.lane.b32.xlu0 %v8189, 8
        %v8260 = vpop.permute.xlu0 %8259
        %8261 = vrot.lane.b32.xlu0 %v8191, 8
        %v8262 = vpop.permute.xlu0 %8261
        %8263 = vrot.lane.b32.xlu0 %v8193, 8
        %v8264 = vpop.permute.xlu0 %8263
        %8265 = vrot.lane.b32.xlu0 %v8195, 8
        %v8266 = vpop.permute.xlu0 %8265
        %8267 = vrot.lane.b32.xlu0 %v8198, 8
        %v8268 = vpop.permute.xlu0 %8267
        %8269 = vrot.lane.b32.xlu0 %v8200, 8
        %v8270 = vpop.permute.xlu0 %8269
        %8271 = vrot.lane.b32.xlu0 %v8202, 8
        %v8272 = vpop.permute.xlu0 %8271
        %8273 = vrot.lane.b32.xlu0 %v8204, 8
        %v8274 = vpop.permute.xlu0 %8273
        %8275 = vrot.lane.b32.xlu0 %v8207, 8
        %v8276 = vpop.permute.xlu0 %8275
        %8277 = vrot.lane.b32.xlu0 %v8209, 8
        %v8278 = vpop.permute.xlu0 %8277
        %8279 = vrot.lane.b32.xlu0 %v8211, 8
        %v8280 = vpop.permute.xlu0 %8279
        %8281 = vrot.lane.b32.xlu0 %v8213, 8
        %v8282 = vpop.permute.xlu0 %8281
        %8283 = vrot.lane.b32.xlu0 %v8216, 8
        %v8284 = vpop.permute.xlu0 %8283
        %8285 = vrot.lane.b32.xlu0 %v8218, 8
        %v8286 = vpop.permute.xlu0 %8285
        %8287 = vrot.lane.b32.xlu0 %v8220, 8
        %v8288 = vpop.permute.xlu0 %8287
        %8289 = vrot.lane.b32.xlu0 %v8222, 8
        %v8290 = vpop.permute.xlu0 %8289
        %8291 = vrot.lane.b32.xlu0 %v8225, 8
        %v8292 = vpop.permute.xlu0 %8291
        %8293 = vrot.lane.b32.xlu0 %v8227, 8
        %v8294 = vpop.permute.xlu0 %8293
        %8295 = vrot.lane.b32.xlu0 %v8229, 8
        %v8296 = vpop.permute.xlu0 %8295
        %8297 = vrot.lane.b32.xlu0 %v8231, 8
        %v8298 = vpop.permute.xlu0 %8297
        %8299 = vrot.lane.b32.xlu0 %v8234, 8
        %v8300 = vpop.permute.xlu0 %8299
        %8301 = vrot.lane.b32.xlu0 %v8236, 8
        %v8302 = vpop.permute.xlu0 %8301
        %8303 = vrot.lane.b32.xlu0 %v8238, 8
        %v8304 = vpop.permute.xlu0 %8303
        %8305 = vrot.lane.b32.xlu0 %v8240, 8
        %v8306 = vpop.permute.xlu0 %8305
        %8307 = vrot.lane.b32.xlu0 %v8243, 8
        %v8308 = vpop.permute.xlu0 %8307
        %8309 = vrot.lane.b32.xlu0 %v8245, 8
        %v8310 = vpop.permute.xlu0 %8309
        %8311 = vrot.lane.b32.xlu0 %v8247, 8
        %v8312 = vpop.permute.xlu0 %8311
        %8313 = vrot.lane.b32.xlu0 %v8249, 8
        %v8314 = vpop.permute.xlu0 %8313
        %8315 = vrot.lane.b32.xlu0 %v8252, 8
        %v8316 = vpop.permute.xlu0 %8315
        %8317 = vrot.lane.b32.xlu0 %v8254, 8
        %v8318 = vpop.permute.xlu0 %8317
        %8319 = vrot.lane.b32.xlu0 %v8256, 8
        %v8320 = vpop.permute.xlu0 %8319
        %8321 = vrot.lane.b32.xlu0 %v8258, 8
        %v8322 = vpop.permute.xlu0 %8321
        %vm8355 = vcmask 1044480
        %v8356 = vrot.slane %v7924, 3
        %v8357 = vrot.slane %v7925, 3
        %v8358 = vsel %vm8355, %v8356, %v8357
        %v8359 = vrot.slane %v7926, 3
        %v8360 = vsel %vm8355, %v8357, %v8359
        %v8361 = vrot.slane %v7927, 3
        %v8362 = vsel %vm8355, %v8359, %v8361
        %v8363 = vrot.slane %v7928, 3
        %v8364 = vsel %vm8355, %v8361, %v8363
        %v8365 = vrot.slane %v7929, 3
        %v8366 = vrot.slane %v7930, 3
        %v8367 = vsel %vm8355, %v8365, %v8366
        %v8368 = vrot.slane %v7931, 3
        %v8369 = vsel %vm8355, %v8366, %v8368
        %v8370 = vrot.slane %v7932, 3
        %v8371 = vsel %vm8355, %v8368, %v8370
        %v8372 = vrot.slane %v7933, 3
        %v8373 = vsel %vm8355, %v8370, %v8372
        %v8374 = vrot.slane %v7934, 3
        %v8375 = vrot.slane %v7935, 3
        %v8376 = vsel %vm8355, %v8374, %v8375
        %v8377 = vrot.slane %v7936, 3
        %v8378 = vsel %vm8355, %v8375, %v8377
        %v8379 = vrot.slane %v7937, 3
        %v8380 = vsel %vm8355, %v8377, %v8379
        %v8381 = vrot.slane %v7938, 3
        %v8382 = vsel %vm8355, %v8379, %v8381
        %v8383 = vrot.slane %v7939, 3
        %v8384 = vrot.slane %v7940, 3
        %v8385 = vsel %vm8355, %v8383, %v8384
        %v8386 = vrot.slane %v7941, 3
        %v8387 = vsel %vm8355, %v8384, %v8386
        %v8388 = vrot.slane %v7942, 3
        %v8389 = vsel %vm8355, %v8386, %v8388
        %v8390 = vrot.slane %v7943, 3
        %v8391 = vsel %vm8355, %v8388, %v8390
        %v8392 = vrot.slane %v7944, 3
        %v8393 = vrot.slane %v7945, 3
        %v8394 = vsel %vm8355, %v8392, %v8393
        %v8395 = vrot.slane %v7946, 3
        %v8396 = vsel %vm8355, %v8393, %v8395
        %v8397 = vrot.slane %v7947, 3
        %v8398 = vsel %vm8355, %v8395, %v8397
        %v8399 = vrot.slane %v7948, 3
        %v8400 = vsel %vm8355, %v8397, %v8399
        %v8401 = vrot.slane %v7949, 3
        %v8402 = vrot.slane %v7950, 3
        %v8403 = vsel %vm8355, %v8401, %v8402
        %v8404 = vrot.slane %v7951, 3
        %v8405 = vsel %vm8355, %v8402, %v8404
        %v8406 = vrot.slane %v7952, 3
        %v8407 = vsel %vm8355, %v8404, %v8406
        %v8408 = vrot.slane %v7953, 3
        %v8409 = vsel %vm8355, %v8406, %v8408
        %v8410 = vrot.slane %v7954, 3
        %v8411 = vrot.slane %v7955, 3
        %v8412 = vsel %vm8355, %v8410, %v8411
        %v8413 = vrot.slane %v7956, 3
        %v8414 = vsel %vm8355, %v8411, %v8413
        %v8415 = vrot.slane %v7957, 3
        %v8416 = vsel %vm8355, %v8413, %v8415
        %v8417 = vrot.slane %v7958, 3
        %v8418 = vsel %vm8355, %v8415, %v8417
        %v8419 = vrot.slane %v7959, 3
        %v8420 = vrot.slane %v7960, 3
        %v8421 = vsel %vm8355, %v8419, %v8420
        %v8422 = vrot.slane %v7961, 3
        %v8423 = vsel %vm8355, %v8420, %v8422
        %v8424 = vrot.slane %v7962, 3
        %v8425 = vsel %vm8355, %v8422, %v8424
        %v8426 = vrot.slane %v7963, 3
        %v8427 = vsel %vm8355, %v8424, %v8426
        %8428 = vrot.lane.b32.xlu0 %v8358, 12
        %v8429 = vpop.permute.xlu0 %8428
        %8430 = vrot.lane.b32.xlu0 %v8360, 12
        %v8431 = vpop.permute.xlu0 %8430
        %8432 = vrot.lane.b32.xlu0 %v8362, 12
        %v8433 = vpop.permute.xlu0 %8432
        %8434 = vrot.lane.b32.xlu0 %v8364, 12
        %v8435 = vpop.permute.xlu0 %8434
        %8436 = vrot.lane.b32.xlu0 %v8367, 12
        %v8437 = vpop.permute.xlu0 %8436
        %8438 = vrot.lane.b32.xlu0 %v8369, 12
        %v8439 = vpop.permute.xlu0 %8438
        %8440 = vrot.lane.b32.xlu0 %v8371, 12
        %v8441 = vpop.permute.xlu0 %8440
        %8442 = vrot.lane.b32.xlu0 %v8373, 12
        %v8443 = vpop.permute.xlu0 %8442
        %8444 = vrot.lane.b32.xlu0 %v8376, 12
        %v8445 = vpop.permute.xlu0 %8444
        %8446 = vrot.lane.b32.xlu0 %v8378, 12
        %v8447 = vpop.permute.xlu0 %8446
        %8448 = vrot.lane.b32.xlu0 %v8380, 12
        %v8449 = vpop.permute.xlu0 %8448
        %8450 = vrot.lane.b32.xlu0 %v8382, 12
        %v8451 = vpop.permute.xlu0 %8450
        %8452 = vrot.lane.b32.xlu0 %v8385, 12
        %v8453 = vpop.permute.xlu0 %8452
        %8454 = vrot.lane.b32.xlu0 %v8387, 12
        %v8455 = vpop.permute.xlu0 %8454
        %8456 = vrot.lane.b32.xlu0 %v8389, 12
        %v8457 = vpop.permute.xlu0 %8456
        %8458 = vrot.lane.b32.xlu0 %v8391, 12
        %v8459 = vpop.permute.xlu0 %8458
        %8460 = vrot.lane.b32.xlu0 %v8394, 12
        %v8461 = vpop.permute.xlu0 %8460
        %8462 = vrot.lane.b32.xlu0 %v8396, 12
        %v8463 = vpop.permute.xlu0 %8462
        %8464 = vrot.lane.b32.xlu0 %v8398, 12
        %v8465 = vpop.permute.xlu0 %8464
        %8466 = vrot.lane.b32.xlu0 %v8400, 12
        %v8467 = vpop.permute.xlu0 %8466
        %8468 = vrot.lane.b32.xlu0 %v8403, 12
        %v8469 = vpop.permute.xlu0 %8468
        %8470 = vrot.lane.b32.xlu0 %v8405, 12
        %v8471 = vpop.permute.xlu0 %8470
        %8472 = vrot.lane.b32.xlu0 %v8407, 12
        %v8473 = vpop.permute.xlu0 %8472
        %8474 = vrot.lane.b32.xlu0 %v8409, 12
        %v8475 = vpop.permute.xlu0 %8474
        %8476 = vrot.lane.b32.xlu0 %v8412, 12
        %v8477 = vpop.permute.xlu0 %8476
        %8478 = vrot.lane.b32.xlu0 %v8414, 12
        %v8479 = vpop.permute.xlu0 %8478
        %8480 = vrot.lane.b32.xlu0 %v8416, 12
        %v8481 = vpop.permute.xlu0 %8480
        %8482 = vrot.lane.b32.xlu0 %v8418, 12
        %v8483 = vpop.permute.xlu0 %8482
        %8484 = vrot.lane.b32.xlu0 %v8421, 12
        %v8485 = vpop.permute.xlu0 %8484
        %8486 = vrot.lane.b32.xlu0 %v8423, 12
        %v8487 = vpop.permute.xlu0 %8486
        %8488 = vrot.lane.b32.xlu0 %v8425, 12
        %v8489 = vpop.permute.xlu0 %8488
        %8490 = vrot.lane.b32.xlu0 %v8427, 12
        %v8491 = vpop.permute.xlu0 %8490
        %8528 = vrot.lane.b32.xlu0 %v7929, 16
        %v8529 = vpop.permute.xlu0 %8528
        %8530 = vrot.lane.b32.xlu0 %v7930, 16
        %v8531 = vpop.permute.xlu0 %8530
        %8532 = vrot.lane.b32.xlu0 %v7931, 16
        %v8533 = vpop.permute.xlu0 %8532
        %8534 = vrot.lane.b32.xlu0 %v7932, 16
        %v8535 = vpop.permute.xlu0 %8534
        %8536 = vrot.lane.b32.xlu0 %v7934, 16
        %v8537 = vpop.permute.xlu0 %8536
        %8538 = vrot.lane.b32.xlu0 %v7935, 16
        %v8539 = vpop.permute.xlu0 %8538
        %8540 = vrot.lane.b32.xlu0 %v7936, 16
        %v8541 = vpop.permute.xlu0 %8540
        %8542 = vrot.lane.b32.xlu0 %v7937, 16
        %v8543 = vpop.permute.xlu0 %8542
        %8544 = vrot.lane.b32.xlu0 %v7939, 16
        %v8545 = vpop.permute.xlu0 %8544
        %8546 = vrot.lane.b32.xlu0 %v7940, 16
        %v8547 = vpop.permute.xlu0 %8546
        %8548 = vrot.lane.b32.xlu0 %v7941, 16
        %v8549 = vpop.permute.xlu0 %8548
        %8550 = vrot.lane.b32.xlu0 %v7942, 16
        %v8551 = vpop.permute.xlu0 %8550
        %8552 = vrot.lane.b32.xlu0 %v7944, 16
        %v8553 = vpop.permute.xlu0 %8552
        %8554 = vrot.lane.b32.xlu0 %v7945, 16
        %v8555 = vpop.permute.xlu0 %8554
        %8556 = vrot.lane.b32.xlu0 %v7946, 16
        %v8557 = vpop.permute.xlu0 %8556
        %8558 = vrot.lane.b32.xlu0 %v7947, 16
        %v8559 = vpop.permute.xlu0 %8558
        %8560 = vrot.lane.b32.xlu0 %v7949, 16
        %v8561 = vpop.permute.xlu0 %8560
        %8562 = vrot.lane.b32.xlu0 %v7950, 16
        %v8563 = vpop.permute.xlu0 %8562
        %8564 = vrot.lane.b32.xlu0 %v7951, 16
        %v8565 = vpop.permute.xlu0 %8564
        %8566 = vrot.lane.b32.xlu0 %v7952, 16
        %v8567 = vpop.permute.xlu0 %8566
        %8568 = vrot.lane.b32.xlu0 %v7954, 16
        %v8569 = vpop.permute.xlu0 %8568
        %8570 = vrot.lane.b32.xlu0 %v7955, 16
        %v8571 = vpop.permute.xlu0 %8570
        %8572 = vrot.lane.b32.xlu0 %v7956, 16
        %v8573 = vpop.permute.xlu0 %8572
        %8574 = vrot.lane.b32.xlu0 %v7957, 16
        %v8575 = vpop.permute.xlu0 %8574
        %8576 = vrot.lane.b32.xlu0 %v7959, 16
        %v8577 = vpop.permute.xlu0 %8576
        %8578 = vrot.lane.b32.xlu0 %v7960, 16
        %v8579 = vpop.permute.xlu0 %8578
        %8580 = vrot.lane.b32.xlu0 %v7961, 16
        %v8581 = vpop.permute.xlu0 %8580
        %8582 = vrot.lane.b32.xlu0 %v7962, 16
        %v8583 = vpop.permute.xlu0 %8582
        %8584 = vrot.lane.b32.xlu0 %v7964, 16
        %v8585 = vpop.permute.xlu0 %8584
        %8586 = vrot.lane.b32.xlu0 %v7965, 16
        %v8587 = vpop.permute.xlu0 %8586
        %8588 = vrot.lane.b32.xlu0 %v7966, 16
        %v8589 = vpop.permute.xlu0 %8588
        %8590 = vrot.lane.b32.xlu0 %v7967, 16
        %v8591 = vpop.permute.xlu0 %8590
        %v8625 = vrot.slane %v7964, 1
        %v8626 = vrot.slane %v7965, 1
        %v8627 = vsel %vm489, %v8625, %v8626
        %v8628 = vrot.slane %v7966, 1
        %v8629 = vsel %vm489, %v8626, %v8628
        %v8630 = vrot.slane %v7967, 1
        %v8631 = vsel %vm489, %v8628, %v8630
        %v8632 = vrot.slane %v7968, 1
        %v8633 = vsel %vm489, %v8630, %v8632
        %8634 = vrot.lane.b32.xlu0 %v8030, 20
        %v8635 = vpop.permute.xlu0 %8634
        %8636 = vrot.lane.b32.xlu0 %v8032, 20
        %v8637 = vpop.permute.xlu0 %8636
        %8638 = vrot.lane.b32.xlu0 %v8034, 20
        %v8639 = vpop.permute.xlu0 %8638
        %8640 = vrot.lane.b32.xlu0 %v8036, 20
        %v8641 = vpop.permute.xlu0 %8640
        %8642 = vrot.lane.b32.xlu0 %v8039, 20
        %v8643 = vpop.permute.xlu0 %8642
        %8644 = vrot.lane.b32.xlu0 %v8041, 20
        %v8645 = vpop.permute.xlu0 %8644
        %8646 = vrot.lane.b32.xlu0 %v8043, 20
        %v8647 = vpop.permute.xlu0 %8646
        %8648 = vrot.lane.b32.xlu0 %v8045, 20
        %v8649 = vpop.permute.xlu0 %8648
        %8650 = vrot.lane.b32.xlu0 %v8048, 20
        %v8651 = vpop.permute.xlu0 %8650
        %8652 = vrot.lane.b32.xlu0 %v8050, 20
        %v8653 = vpop.permute.xlu0 %8652
        %8654 = vrot.lane.b32.xlu0 %v8052, 20
        %v8655 = vpop.permute.xlu0 %8654
        %8656 = vrot.lane.b32.xlu0 %v8054, 20
        %v8657 = vpop.permute.xlu0 %8656
        %8658 = vrot.lane.b32.xlu0 %v8057, 20
        %v8659 = vpop.permute.xlu0 %8658
        %8660 = vrot.lane.b32.xlu0 %v8059, 20
        %v8661 = vpop.permute.xlu0 %8660
        %8662 = vrot.lane.b32.xlu0 %v8061, 20
        %v8663 = vpop.permute.xlu0 %8662
        %8664 = vrot.lane.b32.xlu0 %v8063, 20
        %v8665 = vpop.permute.xlu0 %8664
        %8666 = vrot.lane.b32.xlu0 %v8066, 20
        %v8667 = vpop.permute.xlu0 %8666
        %8668 = vrot.lane.b32.xlu0 %v8068, 20
        %v8669 = vpop.permute.xlu0 %8668
        %8670 = vrot.lane.b32.xlu0 %v8070, 20
        %v8671 = vpop.permute.xlu0 %8670
        %8672 = vrot.lane.b32.xlu0 %v8072, 20
        %v8673 = vpop.permute.xlu0 %8672
        %8674 = vrot.lane.b32.xlu0 %v8075, 20
        %v8675 = vpop.permute.xlu0 %8674
        %8676 = vrot.lane.b32.xlu0 %v8077, 20
        %v8677 = vpop.permute.xlu0 %8676
        %8678 = vrot.lane.b32.xlu0 %v8079, 20
        %v8679 = vpop.permute.xlu0 %8678
        %8680 = vrot.lane.b32.xlu0 %v8081, 20
        %v8681 = vpop.permute.xlu0 %8680
        %8682 = vrot.lane.b32.xlu0 %v8084, 20
        %v8683 = vpop.permute.xlu0 %8682
        %8684 = vrot.lane.b32.xlu0 %v8086, 20
        %v8685 = vpop.permute.xlu0 %8684
        %8686 = vrot.lane.b32.xlu0 %v8088, 20
        %v8687 = vpop.permute.xlu0 %8686
        %8688 = vrot.lane.b32.xlu0 %v8090, 20
        %v8689 = vpop.permute.xlu0 %8688
        %8690 = vrot.lane.b32.xlu0 %v8627, 20
        %v8691 = vpop.permute.xlu0 %8690
        %8692 = vrot.lane.b32.xlu0 %v8629, 20
        %v8693 = vpop.permute.xlu0 %8692
        %8694 = vrot.lane.b32.xlu0 %v8631, 20
        %v8695 = vpop.permute.xlu0 %8694
        %8696 = vrot.lane.b32.xlu0 %v8633, 20
        %v8697 = vpop.permute.xlu0 %8696
        %v8730 = vrot.slane %v7964, 2
        %v8731 = vrot.slane %v7965, 2
        %v8732 = vsel %vm730, %v8730, %v8731
        %v8733 = vrot.slane %v7966, 2
        %v8734 = vsel %vm730, %v8731, %v8733
        %v8735 = vrot.slane %v7967, 2
        %v8736 = vsel %vm730, %v8733, %v8735
        %v8737 = vrot.slane %v7968, 2
        %v8738 = vsel %vm730, %v8735, %v8737
        %8739 = vrot.lane.b32.xlu0 %v8198, 24
        %v8740 = vpop.permute.xlu0 %8739
        %8741 = vrot.lane.b32.xlu0 %v8200, 24
        %v8742 = vpop.permute.xlu0 %8741
        %8743 = vrot.lane.b32.xlu0 %v8202, 24
        %v8744 = vpop.permute.xlu0 %8743
        %8745 = vrot.lane.b32.xlu0 %v8204, 24
        %v8746 = vpop.permute.xlu0 %8745
        %8747 = vrot.lane.b32.xlu0 %v8207, 24
        %v8748 = vpop.permute.xlu0 %8747
        %8749 = vrot.lane.b32.xlu0 %v8209, 24
        %v8750 = vpop.permute.xlu0 %8749
        %8751 = vrot.lane.b32.xlu0 %v8211, 24
        %v8752 = vpop.permute.xlu0 %8751
        %8753 = vrot.lane.b32.xlu0 %v8213, 24
        %v8754 = vpop.permute.xlu0 %8753
        %8755 = vrot.lane.b32.xlu0 %v8216, 24
        %v8756 = vpop.permute.xlu0 %8755
        %8757 = vrot.lane.b32.xlu0 %v8218, 24
        %v8758 = vpop.permute.xlu0 %8757
        %8759 = vrot.lane.b32.xlu0 %v8220, 24
        %v8760 = vpop.permute.xlu0 %8759
        %8761 = vrot.lane.b32.xlu0 %v8222, 24
        %v8762 = vpop.permute.xlu0 %8761
        %8763 = vrot.lane.b32.xlu0 %v8225, 24
        %v8764 = vpop.permute.xlu0 %8763
        %8765 = vrot.lane.b32.xlu0 %v8227, 24
        %v8766 = vpop.permute.xlu0 %8765
        %8767 = vrot.lane.b32.xlu0 %v8229, 24
        %v8768 = vpop.permute.xlu0 %8767
        %8769 = vrot.lane.b32.xlu0 %v8231, 24
        %v8770 = vpop.permute.xlu0 %8769
        %8771 = vrot.lane.b32.xlu0 %v8234, 24
        %v8772 = vpop.permute.xlu0 %8771
        %8773 = vrot.lane.b32.xlu0 %v8236, 24
        %v8774 = vpop.permute.xlu0 %8773
        %8775 = vrot.lane.b32.xlu0 %v8238, 24
        %v8776 = vpop.permute.xlu0 %8775
        %8777 = vrot.lane.b32.xlu0 %v8240, 24
        %v8778 = vpop.permute.xlu0 %8777
        %8779 = vrot.lane.b32.xlu0 %v8243, 24
        %v8780 = vpop.permute.xlu0 %8779
        %8781 = vrot.lane.b32.xlu0 %v8245, 24
        %v8782 = vpop.permute.xlu0 %8781
        %8783 = vrot.lane.b32.xlu0 %v8247, 24
        %v8784 = vpop.permute.xlu0 %8783
        %8785 = vrot.lane.b32.xlu0 %v8249, 24
        %v8786 = vpop.permute.xlu0 %8785
        %8787 = vrot.lane.b32.xlu0 %v8252, 24
        %v8788 = vpop.permute.xlu0 %8787
        %8789 = vrot.lane.b32.xlu0 %v8254, 24
        %v8790 = vpop.permute.xlu0 %8789
        %8791 = vrot.lane.b32.xlu0 %v8256, 24
        %v8792 = vpop.permute.xlu0 %8791
        %8793 = vrot.lane.b32.xlu0 %v8258, 24
        %v8794 = vpop.permute.xlu0 %8793
        %8795 = vrot.lane.b32.xlu0 %v8732, 24
        %v8796 = vpop.permute.xlu0 %8795
        %8797 = vrot.lane.b32.xlu0 %v8734, 24
        %v8798 = vpop.permute.xlu0 %8797
        %8799 = vrot.lane.b32.xlu0 %v8736, 24
        %v8800 = vpop.permute.xlu0 %8799
        %8801 = vrot.lane.b32.xlu0 %v8738, 24
        %v8802 = vpop.permute.xlu0 %8801
        %v8835 = vrot.slane %v7964, 3
        %v8836 = vrot.slane %v7965, 3
        %v8837 = vsel %vm8355, %v8835, %v8836
        %v8838 = vrot.slane %v7966, 3
        %v8839 = vsel %vm8355, %v8836, %v8838
        %v8840 = vrot.slane %v7967, 3
        %v8841 = vsel %vm8355, %v8838, %v8840
        %v8842 = vrot.slane %v7968, 3
        %v8843 = vsel %vm8355, %v8840, %v8842
        %8844 = vrot.lane.b32.xlu0 %v8367, 28
        %v8845 = vpop.permute.xlu0 %8844
        %8846 = vrot.lane.b32.xlu0 %v8369, 28
        %v8847 = vpop.permute.xlu0 %8846
        %8848 = vrot.lane.b32.xlu0 %v8371, 28
        %v8849 = vpop.permute.xlu0 %8848
        %8850 = vrot.lane.b32.xlu0 %v8373, 28
        %v8851 = vpop.permute.xlu0 %8850
        %8852 = vrot.lane.b32.xlu0 %v8376, 28
        %v8853 = vpop.permute.xlu0 %8852
        %8854 = vrot.lane.b32.xlu0 %v8378, 28
        %v8855 = vpop.permute.xlu0 %8854
        %8856 = vrot.lane.b32.xlu0 %v8380, 28
        %v8857 = vpop.permute.xlu0 %8856
        %8858 = vrot.lane.b32.xlu0 %v8382, 28
        %v8859 = vpop.permute.xlu0 %8858
        %8860 = vrot.lane.b32.xlu0 %v8385, 28
        %v8861 = vpop.permute.xlu0 %8860
        %8862 = vrot.lane.b32.xlu0 %v8387, 28
        %v8863 = vpop.permute.xlu0 %8862
        %8864 = vrot.lane.b32.xlu0 %v8389, 28
        %v8865 = vpop.permute.xlu0 %8864
        %8866 = vrot.lane.b32.xlu0 %v8391, 28
        %v8867 = vpop.permute.xlu0 %8866
        %8868 = vrot.lane.b32.xlu0 %v8394, 28
        %v8869 = vpop.permute.xlu0 %8868
        %8870 = vrot.lane.b32.xlu0 %v8396, 28
        %v8871 = vpop.permute.xlu0 %8870
        %8872 = vrot.lane.b32.xlu0 %v8398, 28
        %v8873 = vpop.permute.xlu0 %8872
        %8874 = vrot.lane.b32.xlu0 %v8400, 28
        %v8875 = vpop.permute.xlu0 %8874
        %8876 = vrot.lane.b32.xlu0 %v8403, 28
        %v8877 = vpop.permute.xlu0 %8876
        %8878 = vrot.lane.b32.xlu0 %v8405, 28
        %v8879 = vpop.permute.xlu0 %8878
        %8880 = vrot.lane.b32.xlu0 %v8407, 28
        %v8881 = vpop.permute.xlu0 %8880
        %8882 = vrot.lane.b32.xlu0 %v8409, 28
        %v8883 = vpop.permute.xlu0 %8882
        %8884 = vrot.lane.b32.xlu0 %v8412, 28
        %v8885 = vpop.permute.xlu0 %8884
        %8886 = vrot.lane.b32.xlu0 %v8414, 28
        %v8887 = vpop.permute.xlu0 %8886
        %8888 = vrot.lane.b32.xlu0 %v8416, 28
        %v8889 = vpop.permute.xlu0 %8888
        %8890 = vrot.lane.b32.xlu0 %v8418, 28
        %v8891 = vpop.permute.xlu0 %8890
        %8892 = vrot.lane.b32.xlu0 %v8421, 28
        %v8893 = vpop.permute.xlu0 %8892
        %8894 = vrot.lane.b32.xlu0 %v8423, 28
        %v8895 = vpop.permute.xlu0 %8894
        %8896 = vrot.lane.b32.xlu0 %v8425, 28
        %v8897 = vpop.permute.xlu0 %8896
        %8898 = vrot.lane.b32.xlu0 %v8427, 28
        %v8899 = vpop.permute.xlu0 %8898
        %8900 = vrot.lane.b32.xlu0 %v8837, 28
        %v8901 = vpop.permute.xlu0 %8900
        %8902 = vrot.lane.b32.xlu0 %v8839, 28
        %v8903 = vpop.permute.xlu0 %8902
        %8904 = vrot.lane.b32.xlu0 %v8841, 28
        %v8905 = vpop.permute.xlu0 %8904
        %8906 = vrot.lane.b32.xlu0 %v8843, 28
        %v8907 = vpop.permute.xlu0 %8906
        %8944 = vrot.lane.b32.xlu0 %v7934, 32
        %v8945 = vpop.permute.xlu0 %8944
        %8946 = vrot.lane.b32.xlu0 %v7935, 32
        %v8947 = vpop.permute.xlu0 %8946
        %8948 = vrot.lane.b32.xlu0 %v7936, 32
        %v8949 = vpop.permute.xlu0 %8948
        %8950 = vrot.lane.b32.xlu0 %v7937, 32
        %v8951 = vpop.permute.xlu0 %8950
        %8952 = vrot.lane.b32.xlu0 %v7939, 32
        %v8953 = vpop.permute.xlu0 %8952
        %8954 = vrot.lane.b32.xlu0 %v7940, 32
        %v8955 = vpop.permute.xlu0 %8954
        %8956 = vrot.lane.b32.xlu0 %v7941, 32
        %v8957 = vpop.permute.xlu0 %8956
        %8958 = vrot.lane.b32.xlu0 %v7942, 32
        %v8959 = vpop.permute.xlu0 %8958
        %8960 = vrot.lane.b32.xlu0 %v7944, 32
        %v8961 = vpop.permute.xlu0 %8960
        %8962 = vrot.lane.b32.xlu0 %v7945, 32
        %v8963 = vpop.permute.xlu0 %8962
        %8964 = vrot.lane.b32.xlu0 %v7946, 32
        %v8965 = vpop.permute.xlu0 %8964
        %8966 = vrot.lane.b32.xlu0 %v7947, 32
        %v8967 = vpop.permute.xlu0 %8966
        %8968 = vrot.lane.b32.xlu0 %v7949, 32
        %v8969 = vpop.permute.xlu0 %8968
        %8970 = vrot.lane.b32.xlu0 %v7950, 32
        %v8971 = vpop.permute.xlu0 %8970
        %8972 = vrot.lane.b32.xlu0 %v7951, 32
        %v8973 = vpop.permute.xlu0 %8972
        %8974 = vrot.lane.b32.xlu0 %v7952, 32
        %v8975 = vpop.permute.xlu0 %8974
        %8976 = vrot.lane.b32.xlu0 %v7954, 32
        %v8977 = vpop.permute.xlu0 %8976
        %8978 = vrot.lane.b32.xlu0 %v7955, 32
        %v8979 = vpop.permute.xlu0 %8978
        %8980 = vrot.lane.b32.xlu0 %v7956, 32
        %v8981 = vpop.permute.xlu0 %8980
        %8982 = vrot.lane.b32.xlu0 %v7957, 32
        %v8983 = vpop.permute.xlu0 %8982
        %8984 = vrot.lane.b32.xlu0 %v7959, 32
        %v8985 = vpop.permute.xlu0 %8984
        %8986 = vrot.lane.b32.xlu0 %v7960, 32
        %v8987 = vpop.permute.xlu0 %8986
        %8988 = vrot.lane.b32.xlu0 %v7961, 32
        %v8989 = vpop.permute.xlu0 %8988
        %8990 = vrot.lane.b32.xlu0 %v7962, 32
        %v8991 = vpop.permute.xlu0 %8990
        %8992 = vrot.lane.b32.xlu0 %v7964, 32
        %v8993 = vpop.permute.xlu0 %8992
        %8994 = vrot.lane.b32.xlu0 %v7965, 32
        %v8995 = vpop.permute.xlu0 %8994
        %8996 = vrot.lane.b32.xlu0 %v7966, 32
        %v8997 = vpop.permute.xlu0 %8996
        %8998 = vrot.lane.b32.xlu0 %v7967, 32
        %v8999 = vpop.permute.xlu0 %8998
        %9000 = vrot.lane.b32.xlu0 %v7969, 32
        %v9001 = vpop.permute.xlu0 %9000
        %9002 = vrot.lane.b32.xlu0 %v7970, 32
        %v9003 = vpop.permute.xlu0 %9002
        %9004 = vrot.lane.b32.xlu0 %v7971, 32
        %v9005 = vpop.permute.xlu0 %9004
        %9006 = vrot.lane.b32.xlu0 %v7972, 32
        %v9007 = vpop.permute.xlu0 %9006
        %v9041 = vrot.slane %v7969, 1
        %v9042 = vrot.slane %v7970, 1
        %v9043 = vsel %vm489, %v9041, %v9042
        %v9044 = vrot.slane %v7971, 1
        %v9045 = vsel %vm489, %v9042, %v9044
        %v9046 = vrot.slane %v7972, 1
        %v9047 = vsel %vm489, %v9044, %v9046
        %v9048 = vrot.slane %v7973, 1
        %v9049 = vsel %vm489, %v9046, %v9048
        %9050 = vrot.lane.b32.xlu0 %v8039, 36
        %v9051 = vpop.permute.xlu0 %9050
        %9052 = vrot.lane.b32.xlu0 %v8041, 36
        %v9053 = vpop.permute.xlu0 %9052
        %9054 = vrot.lane.b32.xlu0 %v8043, 36
        %v9055 = vpop.permute.xlu0 %9054
        %9056 = vrot.lane.b32.xlu0 %v8045, 36
        %v9057 = vpop.permute.xlu0 %9056
        %9058 = vrot.lane.b32.xlu0 %v8048, 36
        %v9059 = vpop.permute.xlu0 %9058
        %9060 = vrot.lane.b32.xlu0 %v8050, 36
        %v9061 = vpop.permute.xlu0 %9060
        %9062 = vrot.lane.b32.xlu0 %v8052, 36
        %v9063 = vpop.permute.xlu0 %9062
        %9064 = vrot.lane.b32.xlu0 %v8054, 36
        %v9065 = vpop.permute.xlu0 %9064
        %9066 = vrot.lane.b32.xlu0 %v8057, 36
        %v9067 = vpop.permute.xlu0 %9066
        %9068 = vrot.lane.b32.xlu0 %v8059, 36
        %v9069 = vpop.permute.xlu0 %9068
        %9070 = vrot.lane.b32.xlu0 %v8061, 36
        %v9071 = vpop.permute.xlu0 %9070
        %9072 = vrot.lane.b32.xlu0 %v8063, 36
        %v9073 = vpop.permute.xlu0 %9072
        %9074 = vrot.lane.b32.xlu0 %v8066, 36
        %v9075 = vpop.permute.xlu0 %9074
        %9076 = vrot.lane.b32.xlu0 %v8068, 36
        %v9077 = vpop.permute.xlu0 %9076
        %9078 = vrot.lane.b32.xlu0 %v8070, 36
        %v9079 = vpop.permute.xlu0 %9078
        %9080 = vrot.lane.b32.xlu0 %v8072, 36
        %v9081 = vpop.permute.xlu0 %9080
        %9082 = vrot.lane.b32.xlu0 %v8075, 36
        %v9083 = vpop.permute.xlu0 %9082
        %9084 = vrot.lane.b32.xlu0 %v8077, 36
        %v9085 = vpop.permute.xlu0 %9084
        %9086 = vrot.lane.b32.xlu0 %v8079, 36
        %v9087 = vpop.permute.xlu0 %9086
        %9088 = vrot.lane.b32.xlu0 %v8081, 36
        %v9089 = vpop.permute.xlu0 %9088
        %9090 = vrot.lane.b32.xlu0 %v8084, 36
        %v9091 = vpop.permute.xlu0 %9090
        %9092 = vrot.lane.b32.xlu0 %v8086, 36
        %v9093 = vpop.permute.xlu0 %9092
        %9094 = vrot.lane.b32.xlu0 %v8088, 36
        %v9095 = vpop.permute.xlu0 %9094
        %9096 = vrot.lane.b32.xlu0 %v8090, 36
        %v9097 = vpop.permute.xlu0 %9096
        %9098 = vrot.lane.b32.xlu0 %v8627, 36
        %v9099 = vpop.permute.xlu0 %9098
        %9100 = vrot.lane.b32.xlu0 %v8629, 36
        %v9101 = vpop.permute.xlu0 %9100
        %9102 = vrot.lane.b32.xlu0 %v8631, 36
        %v9103 = vpop.permute.xlu0 %9102
        %9104 = vrot.lane.b32.xlu0 %v8633, 36
        %v9105 = vpop.permute.xlu0 %9104
        %9106 = vrot.lane.b32.xlu0 %v9043, 36
        %v9107 = vpop.permute.xlu0 %9106
        %9108 = vrot.lane.b32.xlu0 %v9045, 36
        %v9109 = vpop.permute.xlu0 %9108
        %9110 = vrot.lane.b32.xlu0 %v9047, 36
        %v9111 = vpop.permute.xlu0 %9110
        %9112 = vrot.lane.b32.xlu0 %v9049, 36
        %v9113 = vpop.permute.xlu0 %9112
        %v9146 = vrot.slane %v7969, 2
        %v9147 = vrot.slane %v7970, 2
        %v9148 = vsel %vm730, %v9146, %v9147
        %v9149 = vrot.slane %v7971, 2
        %v9150 = vsel %vm730, %v9147, %v9149
        %v9151 = vrot.slane %v7972, 2
        %v9152 = vsel %vm730, %v9149, %v9151
        %v9153 = vrot.slane %v7973, 2
        %v9154 = vsel %vm730, %v9151, %v9153
        %9155 = vrot.lane.b32.xlu0 %v8207, 40
        %v9156 = vpop.permute.xlu0 %9155
        %9157 = vrot.lane.b32.xlu0 %v8209, 40
        %v9158 = vpop.permute.xlu0 %9157
        %9159 = vrot.lane.b32.xlu0 %v8211, 40
        %v9160 = vpop.permute.xlu0 %9159
        %9161 = vrot.lane.b32.xlu0 %v8213, 40
        %v9162 = vpop.permute.xlu0 %9161
        %9163 = vrot.lane.b32.xlu0 %v8216, 40
        %v9164 = vpop.permute.xlu0 %9163
        %9165 = vrot.lane.b32.xlu0 %v8218, 40
        %v9166 = vpop.permute.xlu0 %9165
        %9167 = vrot.lane.b32.xlu0 %v8220, 40
        %v9168 = vpop.permute.xlu0 %9167
        %9169 = vrot.lane.b32.xlu0 %v8222, 40
        %v9170 = vpop.permute.xlu0 %9169
        %9171 = vrot.lane.b32.xlu0 %v8225, 40
        %v9172 = vpop.permute.xlu0 %9171
        %9173 = vrot.lane.b32.xlu0 %v8227, 40
        %v9174 = vpop.permute.xlu0 %9173
        %9175 = vrot.lane.b32.xlu0 %v8229, 40
        %v9176 = vpop.permute.xlu0 %9175
        %9177 = vrot.lane.b32.xlu0 %v8231, 40
        %v9178 = vpop.permute.xlu0 %9177
        %9179 = vrot.lane.b32.xlu0 %v8234, 40
        %v9180 = vpop.permute.xlu0 %9179
        %9181 = vrot.lane.b32.xlu0 %v8236, 40
        %v9182 = vpop.permute.xlu0 %9181
        %9183 = vrot.lane.b32.xlu0 %v8238, 40
        %v9184 = vpop.permute.xlu0 %9183
        %9185 = vrot.lane.b32.xlu0 %v8240, 40
        %v9186 = vpop.permute.xlu0 %9185
        %9187 = vrot.lane.b32.xlu0 %v8243, 40
        %v9188 = vpop.permute.xlu0 %9187
        %9189 = vrot.lane.b32.xlu0 %v8245, 40
        %v9190 = vpop.permute.xlu0 %9189
        %9191 = vrot.lane.b32.xlu0 %v8247, 40
        %v9192 = vpop.permute.xlu0 %9191
        %9193 = vrot.lane.b32.xlu0 %v8249, 40
        %v9194 = vpop.permute.xlu0 %9193
        %9195 = vrot.lane.b32.xlu0 %v8252, 40
        %v9196 = vpop.permute.xlu0 %9195
        %9197 = vrot.lane.b32.xlu0 %v8254, 40
        %v9198 = vpop.permute.xlu0 %9197
        %9199 = vrot.lane.b32.xlu0 %v8256, 40
        %v9200 = vpop.permute.xlu0 %9199
        %9201 = vrot.lane.b32.xlu0 %v8258, 40
        %v9202 = vpop.permute.xlu0 %9201
        %9203 = vrot.lane.b32.xlu0 %v8732, 40
        %v9204 = vpop.permute.xlu0 %9203
        %9205 = vrot.lane.b32.xlu0 %v8734, 40
        %v9206 = vpop.permute.xlu0 %9205
        %9207 = vrot.lane.b32.xlu0 %v8736, 40
        %v9208 = vpop.permute.xlu0 %9207
        %9209 = vrot.lane.b32.xlu0 %v8738, 40
        %v9210 = vpop.permute.xlu0 %9209
        %9211 = vrot.lane.b32.xlu0 %v9148, 40
        %v9212 = vpop.permute.xlu0 %9211
        %9213 = vrot.lane.b32.xlu0 %v9150, 40
        %v9214 = vpop.permute.xlu0 %9213
        %9215 = vrot.lane.b32.xlu0 %v9152, 40
        %v9216 = vpop.permute.xlu0 %9215
        %9217 = vrot.lane.b32.xlu0 %v9154, 40
        %v9218 = vpop.permute.xlu0 %9217
        %v9251 = vrot.slane %v7969, 3
        %v9252 = vrot.slane %v7970, 3
        %v9253 = vsel %vm8355, %v9251, %v9252
        %v9254 = vrot.slane %v7971, 3
        %v9255 = vsel %vm8355, %v9252, %v9254
        %v9256 = vrot.slane %v7972, 3
        %v9257 = vsel %vm8355, %v9254, %v9256
        %v9258 = vrot.slane %v7973, 3
        %v9259 = vsel %vm8355, %v9256, %v9258
        %9260 = vrot.lane.b32.xlu0 %v8376, 44
        %v9261 = vpop.permute.xlu0 %9260
        %9262 = vrot.lane.b32.xlu0 %v8378, 44
        %v9263 = vpop.permute.xlu0 %9262
        %9264 = vrot.lane.b32.xlu0 %v8380, 44
        %v9265 = vpop.permute.xlu0 %9264
        %9266 = vrot.lane.b32.xlu0 %v8382, 44
        %v9267 = vpop.permute.xlu0 %9266
        %9268 = vrot.lane.b32.xlu0 %v8385, 44
        %v9269 = vpop.permute.xlu0 %9268
        %9270 = vrot.lane.b32.xlu0 %v8387, 44
        %v9271 = vpop.permute.xlu0 %9270
        %9272 = vrot.lane.b32.xlu0 %v8389, 44
        %v9273 = vpop.permute.xlu0 %9272
        %9274 = vrot.lane.b32.xlu0 %v8391, 44
        %v9275 = vpop.permute.xlu0 %9274
        %9276 = vrot.lane.b32.xlu0 %v8394, 44
        %v9277 = vpop.permute.xlu0 %9276
        %9278 = vrot.lane.b32.xlu0 %v8396, 44
        %v9279 = vpop.permute.xlu0 %9278
        %9280 = vrot.lane.b32.xlu0 %v8398, 44
        %v9281 = vpop.permute.xlu0 %9280
        %9282 = vrot.lane.b32.xlu0 %v8400, 44
        %v9283 = vpop.permute.xlu0 %9282
        %9284 = vrot.lane.b32.xlu0 %v8403, 44
        %v9285 = vpop.permute.xlu0 %9284
        %9286 = vrot.lane.b32.xlu0 %v8405, 44
        %v9287 = vpop.permute.xlu0 %9286
        %9288 = vrot.lane.b32.xlu0 %v8407, 44
        %v9289 = vpop.permute.xlu0 %9288
        %9290 = vrot.lane.b32.xlu0 %v8409, 44
        %v9291 = vpop.permute.xlu0 %9290
        %9292 = vrot.lane.b32.xlu0 %v8412, 44
        %v9293 = vpop.permute.xlu0 %9292
        %9294 = vrot.lane.b32.xlu0 %v8414, 44
        %v9295 = vpop.permute.xlu0 %9294
        %9296 = vrot.lane.b32.xlu0 %v8416, 44
        %v9297 = vpop.permute.xlu0 %9296
        %9298 = vrot.lane.b32.xlu0 %v8418, 44
        %v9299 = vpop.permute.xlu0 %9298
        %9300 = vrot.lane.b32.xlu0 %v8421, 44
        %v9301 = vpop.permute.xlu0 %9300
        %9302 = vrot.lane.b32.xlu0 %v8423, 44
        %v9303 = vpop.permute.xlu0 %9302
        %9304 = vrot.lane.b32.xlu0 %v8425, 44
        %v9305 = vpop.permute.xlu0 %9304
        %9306 = vrot.lane.b32.xlu0 %v8427, 44
        %v9307 = vpop.permute.xlu0 %9306
        %9308 = vrot.lane.b32.xlu0 %v8837, 44
        %v9309 = vpop.permute.xlu0 %9308
        %9310 = vrot.lane.b32.xlu0 %v8839, 44
        %v9311 = vpop.permute.xlu0 %9310
        %9312 = vrot.lane.b32.xlu0 %v8841, 44
        %v9313 = vpop.permute.xlu0 %9312
        %9314 = vrot.lane.b32.xlu0 %v8843, 44
        %v9315 = vpop.permute.xlu0 %9314
        %9316 = vrot.lane.b32.xlu0 %v9253, 44
        %v9317 = vpop.permute.xlu0 %9316
        %9318 = vrot.lane.b32.xlu0 %v9255, 44
        %v9319 = vpop.permute.xlu0 %9318
        %9320 = vrot.lane.b32.xlu0 %v9257, 44
        %v9321 = vpop.permute.xlu0 %9320
        %9322 = vrot.lane.b32.xlu0 %v9259, 44
        %v9323 = vpop.permute.xlu0 %9322
        %9360 = vrot.lane.b32.xlu0 %v7939, 48
        %v9361 = vpop.permute.xlu0 %9360
        %9362 = vrot.lane.b32.xlu0 %v7940, 48
        %v9363 = vpop.permute.xlu0 %9362
        %9364 = vrot.lane.b32.xlu0 %v7941, 48
        %v9365 = vpop.permute.xlu0 %9364
        %9366 = vrot.lane.b32.xlu0 %v7942, 48
        %v9367 = vpop.permute.xlu0 %9366
        %9368 = vrot.lane.b32.xlu0 %v7944, 48
        %v9369 = vpop.permute.xlu0 %9368
        %9370 = vrot.lane.b32.xlu0 %v7945, 48
        %v9371 = vpop.permute.xlu0 %9370
        %9372 = vrot.lane.b32.xlu0 %v7946, 48
        %v9373 = vpop.permute.xlu0 %9372
        %9374 = vrot.lane.b32.xlu0 %v7947, 48
        %v9375 = vpop.permute.xlu0 %9374
        %9376 = vrot.lane.b32.xlu0 %v7949, 48
        %v9377 = vpop.permute.xlu0 %9376
        %9378 = vrot.lane.b32.xlu0 %v7950, 48
        %v9379 = vpop.permute.xlu0 %9378
        %9380 = vrot.lane.b32.xlu0 %v7951, 48
        %v9381 = vpop.permute.xlu0 %9380
        %9382 = vrot.lane.b32.xlu0 %v7952, 48
        %v9383 = vpop.permute.xlu0 %9382
        %9384 = vrot.lane.b32.xlu0 %v7954, 48
        %v9385 = vpop.permute.xlu0 %9384
        %9386 = vrot.lane.b32.xlu0 %v7955, 48
        %v9387 = vpop.permute.xlu0 %9386
        %9388 = vrot.lane.b32.xlu0 %v7956, 48
        %v9389 = vpop.permute.xlu0 %9388
        %9390 = vrot.lane.b32.xlu0 %v7957, 48
        %v9391 = vpop.permute.xlu0 %9390
        %9392 = vrot.lane.b32.xlu0 %v7959, 48
        %v9393 = vpop.permute.xlu0 %9392
        %9394 = vrot.lane.b32.xlu0 %v7960, 48
        %v9395 = vpop.permute.xlu0 %9394
        %9396 = vrot.lane.b32.xlu0 %v7961, 48
        %v9397 = vpop.permute.xlu0 %9396
        %9398 = vrot.lane.b32.xlu0 %v7962, 48
        %v9399 = vpop.permute.xlu0 %9398
        %9400 = vrot.lane.b32.xlu0 %v7964, 48
        %v9401 = vpop.permute.xlu0 %9400
        %9402 = vrot.lane.b32.xlu0 %v7965, 48
        %v9403 = vpop.permute.xlu0 %9402
        %9404 = vrot.lane.b32.xlu0 %v7966, 48
        %v9405 = vpop.permute.xlu0 %9404
        %9406 = vrot.lane.b32.xlu0 %v7967, 48
        %v9407 = vpop.permute.xlu0 %9406
        %9408 = vrot.lane.b32.xlu0 %v7969, 48
        %v9409 = vpop.permute.xlu0 %9408
        %9410 = vrot.lane.b32.xlu0 %v7970, 48
        %v9411 = vpop.permute.xlu0 %9410
        %9412 = vrot.lane.b32.xlu0 %v7971, 48
        %v9413 = vpop.permute.xlu0 %9412
        %9414 = vrot.lane.b32.xlu0 %v7972, 48
        %v9415 = vpop.permute.xlu0 %9414
        %9416 = vrot.lane.b32.xlu0 %v7974, 48
        %v9417 = vpop.permute.xlu0 %9416
        %9418 = vrot.lane.b32.xlu0 %v7975, 48
        %v9419 = vpop.permute.xlu0 %9418
        %9420 = vrot.lane.b32.xlu0 %v7976, 48
        %v9421 = vpop.permute.xlu0 %9420
        %9422 = vrot.lane.b32.xlu0 %v7977, 48
        %v9423 = vpop.permute.xlu0 %9422
        %v9457 = vrot.slane %v7974, 1
        %v9458 = vrot.slane %v7975, 1
        %v9459 = vsel %vm489, %v9457, %v9458
        %v9460 = vrot.slane %v7976, 1
        %v9461 = vsel %vm489, %v9458, %v9460
        %v9462 = vrot.slane %v7977, 1
        %v9463 = vsel %vm489, %v9460, %v9462
        %v9464 = vrot.slane %v7978, 1
        %v9465 = vsel %vm489, %v9462, %v9464
        %9466 = vrot.lane.b32.xlu0 %v8048, 52
        %v9467 = vpop.permute.xlu0 %9466
        %9468 = vrot.lane.b32.xlu0 %v8050, 52
        %v9469 = vpop.permute.xlu0 %9468
        %9470 = vrot.lane.b32.xlu0 %v8052, 52
        %v9471 = vpop.permute.xlu0 %9470
        %9472 = vrot.lane.b32.xlu0 %v8054, 52
        %v9473 = vpop.permute.xlu0 %9472
        %9474 = vrot.lane.b32.xlu0 %v8057, 52
        %v9475 = vpop.permute.xlu0 %9474
        %9476 = vrot.lane.b32.xlu0 %v8059, 52
        %v9477 = vpop.permute.xlu0 %9476
        %9478 = vrot.lane.b32.xlu0 %v8061, 52
        %v9479 = vpop.permute.xlu0 %9478
        %9480 = vrot.lane.b32.xlu0 %v8063, 52
        %v9481 = vpop.permute.xlu0 %9480
        %9482 = vrot.lane.b32.xlu0 %v8066, 52
        %v9483 = vpop.permute.xlu0 %9482
        %9484 = vrot.lane.b32.xlu0 %v8068, 52
        %v9485 = vpop.permute.xlu0 %9484
        %9486 = vrot.lane.b32.xlu0 %v8070, 52
        %v9487 = vpop.permute.xlu0 %9486
        %9488 = vrot.lane.b32.xlu0 %v8072, 52
        %v9489 = vpop.permute.xlu0 %9488
        %9490 = vrot.lane.b32.xlu0 %v8075, 52
        %v9491 = vpop.permute.xlu0 %9490
        %9492 = vrot.lane.b32.xlu0 %v8077, 52
        %v9493 = vpop.permute.xlu0 %9492
        %9494 = vrot.lane.b32.xlu0 %v8079, 52
        %v9495 = vpop.permute.xlu0 %9494
        %9496 = vrot.lane.b32.xlu0 %v8081, 52
        %v9497 = vpop.permute.xlu0 %9496
        %9498 = vrot.lane.b32.xlu0 %v8084, 52
        %v9499 = vpop.permute.xlu0 %9498
        %9500 = vrot.lane.b32.xlu0 %v8086, 52
        %v9501 = vpop.permute.xlu0 %9500
        %9502 = vrot.lane.b32.xlu0 %v8088, 52
        %v9503 = vpop.permute.xlu0 %9502
        %9504 = vrot.lane.b32.xlu0 %v8090, 52
        %v9505 = vpop.permute.xlu0 %9504
        %9506 = vrot.lane.b32.xlu0 %v8627, 52
        %v9507 = vpop.permute.xlu0 %9506
        %9508 = vrot.lane.b32.xlu0 %v8629, 52
        %v9509 = vpop.permute.xlu0 %9508
        %9510 = vrot.lane.b32.xlu0 %v8631, 52
        %v9511 = vpop.permute.xlu0 %9510
        %9512 = vrot.lane.b32.xlu0 %v8633, 52
        %v9513 = vpop.permute.xlu0 %9512
        %9514 = vrot.lane.b32.xlu0 %v9043, 52
        %v9515 = vpop.permute.xlu0 %9514
        %9516 = vrot.lane.b32.xlu0 %v9045, 52
        %v9517 = vpop.permute.xlu0 %9516
        %9518 = vrot.lane.b32.xlu0 %v9047, 52
        %v9519 = vpop.permute.xlu0 %9518
        %9520 = vrot.lane.b32.xlu0 %v9049, 52
        %v9521 = vpop.permute.xlu0 %9520
        %9522 = vrot.lane.b32.xlu0 %v9459, 52
        %v9523 = vpop.permute.xlu0 %9522
        %9524 = vrot.lane.b32.xlu0 %v9461, 52
        %v9525 = vpop.permute.xlu0 %9524
        %9526 = vrot.lane.b32.xlu0 %v9463, 52
        %v9527 = vpop.permute.xlu0 %9526
        %9528 = vrot.lane.b32.xlu0 %v9465, 52
        %v9529 = vpop.permute.xlu0 %9528
        %v9562 = vrot.slane %v7974, 2
        %v9563 = vrot.slane %v7975, 2
        %v9564 = vsel %vm730, %v9562, %v9563
        %v9565 = vrot.slane %v7976, 2
        %v9566 = vsel %vm730, %v9563, %v9565
        %v9567 = vrot.slane %v7977, 2
        %v9568 = vsel %vm730, %v9565, %v9567
        %v9569 = vrot.slane %v7978, 2
        %v9570 = vsel %vm730, %v9567, %v9569
        %9571 = vrot.lane.b32.xlu0 %v8216, 56
        %v9572 = vpop.permute.xlu0 %9571
        %9573 = vrot.lane.b32.xlu0 %v8218, 56
        %v9574 = vpop.permute.xlu0 %9573
        %9575 = vrot.lane.b32.xlu0 %v8220, 56
        %v9576 = vpop.permute.xlu0 %9575
        %9577 = vrot.lane.b32.xlu0 %v8222, 56
        %v9578 = vpop.permute.xlu0 %9577
        %9579 = vrot.lane.b32.xlu0 %v8225, 56
        %v9580 = vpop.permute.xlu0 %9579
        %9581 = vrot.lane.b32.xlu0 %v8227, 56
        %v9582 = vpop.permute.xlu0 %9581
        %9583 = vrot.lane.b32.xlu0 %v8229, 56
        %v9584 = vpop.permute.xlu0 %9583
        %9585 = vrot.lane.b32.xlu0 %v8231, 56
        %v9586 = vpop.permute.xlu0 %9585
        %9587 = vrot.lane.b32.xlu0 %v8234, 56
        %v9588 = vpop.permute.xlu0 %9587
        %9589 = vrot.lane.b32.xlu0 %v8236, 56
        %v9590 = vpop.permute.xlu0 %9589
        %9591 = vrot.lane.b32.xlu0 %v8238, 56
        %v9592 = vpop.permute.xlu0 %9591
        %9593 = vrot.lane.b32.xlu0 %v8240, 56
        %v9594 = vpop.permute.xlu0 %9593
        %9595 = vrot.lane.b32.xlu0 %v8243, 56
        %v9596 = vpop.permute.xlu0 %9595
        %9597 = vrot.lane.b32.xlu0 %v8245, 56
        %v9598 = vpop.permute.xlu0 %9597
        %9599 = vrot.lane.b32.xlu0 %v8247, 56
        %v9600 = vpop.permute.xlu0 %9599
        %9601 = vrot.lane.b32.xlu0 %v8249, 56
        %v9602 = vpop.permute.xlu0 %9601
        %9603 = vrot.lane.b32.xlu0 %v8252, 56
        %v9604 = vpop.permute.xlu0 %9603
        %9605 = vrot.lane.b32.xlu0 %v8254, 56
        %v9606 = vpop.permute.xlu0 %9605
        %9607 = vrot.lane.b32.xlu0 %v8256, 56
        %v9608 = vpop.permute.xlu0 %9607
        %9609 = vrot.lane.b32.xlu0 %v8258, 56
        %v9610 = vpop.permute.xlu0 %9609
        %9611 = vrot.lane.b32.xlu0 %v8732, 56
        %v9612 = vpop.permute.xlu0 %9611
        %9613 = vrot.lane.b32.xlu0 %v8734, 56
        %v9614 = vpop.permute.xlu0 %9613
        %9615 = vrot.lane.b32.xlu0 %v8736, 56
        %v9616 = vpop.permute.xlu0 %9615
        %9617 = vrot.lane.b32.xlu0 %v8738, 56
        %v9618 = vpop.permute.xlu0 %9617
        %9619 = vrot.lane.b32.xlu0 %v9148, 56
        %v9620 = vpop.permute.xlu0 %9619
        %9621 = vrot.lane.b32.xlu0 %v9150, 56
        %v9622 = vpop.permute.xlu0 %9621
        %9623 = vrot.lane.b32.xlu0 %v9152, 56
        %v9624 = vpop.permute.xlu0 %9623
        %9625 = vrot.lane.b32.xlu0 %v9154, 56
        %v9626 = vpop.permute.xlu0 %9625
        %9627 = vrot.lane.b32.xlu0 %v9564, 56
        %v9628 = vpop.permute.xlu0 %9627
        %9629 = vrot.lane.b32.xlu0 %v9566, 56
        %v9630 = vpop.permute.xlu0 %9629
        %9631 = vrot.lane.b32.xlu0 %v9568, 56
        %v9632 = vpop.permute.xlu0 %9631
        %9633 = vrot.lane.b32.xlu0 %v9570, 56
        %v9634 = vpop.permute.xlu0 %9633
        %v9667 = vrot.slane %v7974, 3
        %v9668 = vrot.slane %v7975, 3
        %v9669 = vsel %vm8355, %v9667, %v9668
        %v9670 = vrot.slane %v7976, 3
        %v9671 = vsel %vm8355, %v9668, %v9670
        %v9672 = vrot.slane %v7977, 3
        %v9673 = vsel %vm8355, %v9670, %v9672
        %v9674 = vrot.slane %v7978, 3
        %v9675 = vsel %vm8355, %v9672, %v9674
        %9676 = vrot.lane.b32.xlu0 %v8385, 60
        %v9677 = vpop.permute.xlu0 %9676
        %9678 = vrot.lane.b32.xlu0 %v8387, 60
        %v9679 = vpop.permute.xlu0 %9678
        %9680 = vrot.lane.b32.xlu0 %v8389, 60
        %v9681 = vpop.permute.xlu0 %9680
        %9682 = vrot.lane.b32.xlu0 %v8391, 60
        %v9683 = vpop.permute.xlu0 %9682
        %9684 = vrot.lane.b32.xlu0 %v8394, 60
        %v9685 = vpop.permute.xlu0 %9684
        %9686 = vrot.lane.b32.xlu0 %v8396, 60
        %v9687 = vpop.permute.xlu0 %9686
        %9688 = vrot.lane.b32.xlu0 %v8398, 60
        %v9689 = vpop.permute.xlu0 %9688
        %9690 = vrot.lane.b32.xlu0 %v8400, 60
        %v9691 = vpop.permute.xlu0 %9690
        %9692 = vrot.lane.b32.xlu0 %v8403, 60
        %v9693 = vpop.permute.xlu0 %9692
        %9694 = vrot.lane.b32.xlu0 %v8405, 60
        %v9695 = vpop.permute.xlu0 %9694
        %9696 = vrot.lane.b32.xlu0 %v8407, 60
        %v9697 = vpop.permute.xlu0 %9696
        %9698 = vrot.lane.b32.xlu0 %v8409, 60
        %v9699 = vpop.permute.xlu0 %9698
        %9700 = vrot.lane.b32.xlu0 %v8412, 60
        %v9701 = vpop.permute.xlu0 %9700
        %9702 = vrot.lane.b32.xlu0 %v8414, 60
        %v9703 = vpop.permute.xlu0 %9702
        %9704 = vrot.lane.b32.xlu0 %v8416, 60
        %v9705 = vpop.permute.xlu0 %9704
        %9706 = vrot.lane.b32.xlu0 %v8418, 60
        %v9707 = vpop.permute.xlu0 %9706
        %9708 = vrot.lane.b32.xlu0 %v8421, 60
        %v9709 = vpop.permute.xlu0 %9708
        %9710 = vrot.lane.b32.xlu0 %v8423, 60
        %v9711 = vpop.permute.xlu0 %9710
        %9712 = vrot.lane.b32.xlu0 %v8425, 60
        %v9713 = vpop.permute.xlu0 %9712
        %9714 = vrot.lane.b32.xlu0 %v8427, 60
        %v9715 = vpop.permute.xlu0 %9714
        %9716 = vrot.lane.b32.xlu0 %v8837, 60
        %v9717 = vpop.permute.xlu0 %9716
        %9718 = vrot.lane.b32.xlu0 %v8839, 60
        %v9719 = vpop.permute.xlu0 %9718
        %9720 = vrot.lane.b32.xlu0 %v8841, 60
        %v9721 = vpop.permute.xlu0 %9720
        %9722 = vrot.lane.b32.xlu0 %v8843, 60
        %v9723 = vpop.permute.xlu0 %9722
        %9724 = vrot.lane.b32.xlu0 %v9253, 60
        %v9725 = vpop.permute.xlu0 %9724
        %9726 = vrot.lane.b32.xlu0 %v9255, 60
        %v9727 = vpop.permute.xlu0 %9726
        %9728 = vrot.lane.b32.xlu0 %v9257, 60
        %v9729 = vpop.permute.xlu0 %9728
        %9730 = vrot.lane.b32.xlu0 %v9259, 60
        %v9731 = vpop.permute.xlu0 %9730
        %9732 = vrot.lane.b32.xlu0 %v9669, 60
        %v9733 = vpop.permute.xlu0 %9732
        %9734 = vrot.lane.b32.xlu0 %v9671, 60
        %v9735 = vpop.permute.xlu0 %9734
        %9736 = vrot.lane.b32.xlu0 %v9673, 60
        %v9737 = vpop.permute.xlu0 %9736
        %9738 = vrot.lane.b32.xlu0 %v9675, 60
        %v9739 = vpop.permute.xlu0 %9738
        %v9772 = vsel %vm1917, %v7924, %v8092
        %v9773 = vsel %vm1917, %v7925, %v8094
        %v9774 = vsel %vm1917, %v7926, %v8096
        %v9775 = vsel %vm1917, %v7927, %v8098
        %v9776 = vsel %vm1917, %v7929, %v8100
        %v9777 = vsel %vm1917, %v7930, %v8102
        %v9778 = vsel %vm1917, %v7931, %v8104
        %v9779 = vsel %vm1917, %v7932, %v8106
        %v9780 = vsel %vm1917, %v7934, %v8108
        %v9781 = vsel %vm1917, %v7935, %v8110
        %v9782 = vsel %vm1917, %v7936, %v8112
        %v9783 = vsel %vm1917, %v7937, %v8114
        %v9784 = vsel %vm1917, %v7939, %v8116
        %v9785 = vsel %vm1917, %v7940, %v8118
        %v9786 = vsel %vm1917, %v7941, %v8120
        %v9787 = vsel %vm1917, %v7942, %v8122
        %v9788 = vsel %vm1917, %v7944, %v8124
        %v9789 = vsel %vm1917, %v7945, %v8126
        %v9790 = vsel %vm1917, %v7946, %v8128
        %v9791 = vsel %vm1917, %v7947, %v8130
        %v9792 = vsel %vm1917, %v7949, %v8132
        %v9793 = vsel %vm1917, %v7950, %v8134
        %v9794 = vsel %vm1917, %v7951, %v8136
        %v9795 = vsel %vm1917, %v7952, %v8138
        %v9796 = vsel %vm1917, %v7954, %v8140
        %v9797 = vsel %vm1917, %v7955, %v8142
        %v9798 = vsel %vm1917, %v7956, %v8144
        %v9799 = vsel %vm1917, %v7957, %v8146
        %v9800 = vsel %vm1917, %v7959, %v8148
        %v9801 = vsel %vm1917, %v7960, %v8150
        %v9802 = vsel %vm1917, %v7961, %v8152
        %v9803 = vsel %vm1917, %v7962, %v8154
        %v9804 = vsel %vm1968, %v9772, %v8260
        %v9805 = vsel %vm1968, %v9773, %v8262
        %v9806 = vsel %vm1968, %v9774, %v8264
        %v9807 = vsel %vm1968, %v9775, %v8266
        %v9808 = vsel %vm1968, %v9776, %v8268
        %v9809 = vsel %vm1968, %v9777, %v8270
        %v9810 = vsel %vm1968, %v9778, %v8272
        %v9811 = vsel %vm1968, %v9779, %v8274
        %v9812 = vsel %vm1968, %v9780, %v8276
        %v9813 = vsel %vm1968, %v9781, %v8278
        %v9814 = vsel %vm1968, %v9782, %v8280
        %v9815 = vsel %vm1968, %v9783, %v8282
        %v9816 = vsel %vm1968, %v9784, %v8284
        %v9817 = vsel %vm1968, %v9785, %v8286
        %v9818 = vsel %vm1968, %v9786, %v8288
        %v9819 = vsel %vm1968, %v9787, %v8290
        %v9820 = vsel %vm1968, %v9788, %v8292
        %v9821 = vsel %vm1968, %v9789, %v8294
        %v9822 = vsel %vm1968, %v9790, %v8296
        %v9823 = vsel %vm1968, %v9791, %v8298
        %v9824 = vsel %vm1968, %v9792, %v8300
        %v9825 = vsel %vm1968, %v9793, %v8302
        %v9826 = vsel %vm1968, %v9794, %v8304
        %v9827 = vsel %vm1968, %v9795, %v8306
        %v9828 = vsel %vm1968, %v9796, %v8308
        %v9829 = vsel %vm1968, %v9797, %v8310
        %v9830 = vsel %vm1968, %v9798, %v8312
        %v9831 = vsel %vm1968, %v9799, %v8314
        %v9832 = vsel %vm1968, %v9800, %v8316
        %v9833 = vsel %vm1968, %v9801, %v8318
        %v9834 = vsel %vm1968, %v9802, %v8320
        %v9835 = vsel %vm1968, %v9803, %v8322
        %v9836 = vsel %vm2019, %v9804, %v8429
        %v9837 = vsel %vm2019, %v9805, %v8431
        %v9838 = vsel %vm2019, %v9806, %v8433
        %v9839 = vsel %vm2019, %v9807, %v8435
        %v9840 = vsel %vm2019, %v9808, %v8437
        %v9841 = vsel %vm2019, %v9809, %v8439
        %v9842 = vsel %vm2019, %v9810, %v8441
        %v9843 = vsel %vm2019, %v9811, %v8443
        %v9844 = vsel %vm2019, %v9812, %v8445
        %v9845 = vsel %vm2019, %v9813, %v8447
        %v9846 = vsel %vm2019, %v9814, %v8449
        %v9847 = vsel %vm2019, %v9815, %v8451
        %v9848 = vsel %vm2019, %v9816, %v8453
        %v9849 = vsel %vm2019, %v9817, %v8455
        %v9850 = vsel %vm2019, %v9818, %v8457
        %v9851 = vsel %vm2019, %v9819, %v8459
        %v9852 = vsel %vm2019, %v9820, %v8461
        %v9853 = vsel %vm2019, %v9821, %v8463
        %v9854 = vsel %vm2019, %v9822, %v8465
        %v9855 = vsel %vm2019, %v9823, %v8467
        %v9856 = vsel %vm2019, %v9824, %v8469
        %v9857 = vsel %vm2019, %v9825, %v8471
        %v9858 = vsel %vm2019, %v9826, %v8473
        %v9859 = vsel %vm2019, %v9827, %v8475
        %v9860 = vsel %vm2019, %v9828, %v8477
        %v9861 = vsel %vm2019, %v9829, %v8479
        %v9862 = vsel %vm2019, %v9830, %v8481
        %v9863 = vsel %vm2019, %v9831, %v8483
        %v9864 = vsel %vm2019, %v9832, %v8485
        %v9865 = vsel %vm2019, %v9833, %v8487
        %v9866 = vsel %vm2019, %v9834, %v8489
        %v9867 = vsel %vm2019, %v9835, %v8491
        %v9868 = vsel %vm2070, %v9836, %v8529
        %v9869 = vsel %vm2070, %v9837, %v8531
        %v9870 = vsel %vm2070, %v9838, %v8533
        %v9871 = vsel %vm2070, %v9839, %v8535
        %v9872 = vsel %vm2070, %v9840, %v8537
        %v9873 = vsel %vm2070, %v9841, %v8539
        %v9874 = vsel %vm2070, %v9842, %v8541
        %v9875 = vsel %vm2070, %v9843, %v8543
        %v9876 = vsel %vm2070, %v9844, %v8545
        %v9877 = vsel %vm2070, %v9845, %v8547
        %v9878 = vsel %vm2070, %v9846, %v8549
        %v9879 = vsel %vm2070, %v9847, %v8551
        %v9880 = vsel %vm2070, %v9848, %v8553
        %v9881 = vsel %vm2070, %v9849, %v8555
        %v9882 = vsel %vm2070, %v9850, %v8557
        %v9883 = vsel %vm2070, %v9851, %v8559
        %v9884 = vsel %vm2070, %v9852, %v8561
        %v9885 = vsel %vm2070, %v9853, %v8563
        %v9886 = vsel %vm2070, %v9854, %v8565
        %v9887 = vsel %vm2070, %v9855, %v8567
        %v9888 = vsel %vm2070, %v9856, %v8569
        %v9889 = vsel %vm2070, %v9857, %v8571
        %v9890 = vsel %vm2070, %v9858, %v8573
        %v9891 = vsel %vm2070, %v9859, %v8575
        %v9892 = vsel %vm2070, %v9860, %v8577
        %v9893 = vsel %vm2070, %v9861, %v8579
        %v9894 = vsel %vm2070, %v9862, %v8581
        %v9895 = vsel %vm2070, %v9863, %v8583
        %v9896 = vsel %vm2070, %v9864, %v8585
        %v9897 = vsel %vm2070, %v9865, %v8587
        %v9898 = vsel %vm2070, %v9866, %v8589
        %v9899 = vsel %vm2070, %v9867, %v8591
        %v9900 = vsel %vm2121, %v9868, %v8635
        %v9901 = vsel %vm2121, %v9869, %v8637
        %v9902 = vsel %vm2121, %v9870, %v8639
        %v9903 = vsel %vm2121, %v9871, %v8641
        %v9904 = vsel %vm2121, %v9872, %v8643
        %v9905 = vsel %vm2121, %v9873, %v8645
        %v9906 = vsel %vm2121, %v9874, %v8647
        %v9907 = vsel %vm2121, %v9875, %v8649
        %v9908 = vsel %vm2121, %v9876, %v8651
        %v9909 = vsel %vm2121, %v9877, %v8653
        %v9910 = vsel %vm2121, %v9878, %v8655
        %v9911 = vsel %vm2121, %v9879, %v8657
        %v9912 = vsel %vm2121, %v9880, %v8659
        %v9913 = vsel %vm2121, %v9881, %v8661
        %v9914 = vsel %vm2121, %v9882, %v8663
        %v9915 = vsel %vm2121, %v9883, %v8665
        %v9916 = vsel %vm2121, %v9884, %v8667
        %v9917 = vsel %vm2121, %v9885, %v8669
        %v9918 = vsel %vm2121, %v9886, %v8671
        %v9919 = vsel %vm2121, %v9887, %v8673
        %v9920 = vsel %vm2121, %v9888, %v8675
        %v9921 = vsel %vm2121, %v9889, %v8677
        %v9922 = vsel %vm2121, %v9890, %v8679
        %v9923 = vsel %vm2121, %v9891, %v8681
        %v9924 = vsel %vm2121, %v9892, %v8683
        %v9925 = vsel %vm2121, %v9893, %v8685
        %v9926 = vsel %vm2121, %v9894, %v8687
        %v9927 = vsel %vm2121, %v9895, %v8689
        %v9928 = vsel %vm2121, %v9896, %v8691
        %v9929 = vsel %vm2121, %v9897, %v8693
        %v9930 = vsel %vm2121, %v9898, %v8695
        %v9931 = vsel %vm2121, %v9899, %v8697
        %v9932 = vsel %vm2172, %v9900, %v8740
        %v9933 = vsel %vm2172, %v9901, %v8742
        %v9934 = vsel %vm2172, %v9902, %v8744
        %v9935 = vsel %vm2172, %v9903, %v8746
        %v9936 = vsel %vm2172, %v9904, %v8748
        %v9937 = vsel %vm2172, %v9905, %v8750
        %v9938 = vsel %vm2172, %v9906, %v8752
        %v9939 = vsel %vm2172, %v9907, %v8754
        %v9940 = vsel %vm2172, %v9908, %v8756
        %v9941 = vsel %vm2172, %v9909, %v8758
        %v9942 = vsel %vm2172, %v9910, %v8760
        %v9943 = vsel %vm2172, %v9911, %v8762
        %v9944 = vsel %vm2172, %v9912, %v8764
        %v9945 = vsel %vm2172, %v9913, %v8766
        %v9946 = vsel %vm2172, %v9914, %v8768
        %v9947 = vsel %vm2172, %v9915, %v8770
        %v9948 = vsel %vm2172, %v9916, %v8772
        %v9949 = vsel %vm2172, %v9917, %v8774
        %v9950 = vsel %vm2172, %v9918, %v8776
        %v9951 = vsel %vm2172, %v9919, %v8778
        %v9952 = vsel %vm2172, %v9920, %v8780
        %v9953 = vsel %vm2172, %v9921, %v8782
        %v9954 = vsel %vm2172, %v9922, %v8784
        %v9955 = vsel %vm2172, %v9923, %v8786
        %v9956 = vsel %vm2172, %v9924, %v8788
        %v9957 = vsel %vm2172, %v9925, %v8790
        %v9958 = vsel %vm2172, %v9926, %v8792
        %v9959 = vsel %vm2172, %v9927, %v8794
        %v9960 = vsel %vm2172, %v9928, %v8796
        %v9961 = vsel %vm2172, %v9929, %v8798
        %v9962 = vsel %vm2172, %v9930, %v8800
        %v9963 = vsel %vm2172, %v9931, %v8802
        %v9964 = vsel %vm2223, %v9932, %v8845
        %v9965 = vsel %vm2223, %v9933, %v8847
        %v9966 = vsel %vm2223, %v9934, %v8849
        %v9967 = vsel %vm2223, %v9935, %v8851
        %v9968 = vsel %vm2223, %v9936, %v8853
        %v9969 = vsel %vm2223, %v9937, %v8855
        %v9970 = vsel %vm2223, %v9938, %v8857
        %v9971 = vsel %vm2223, %v9939, %v8859
        %v9972 = vsel %vm2223, %v9940, %v8861
        %v9973 = vsel %vm2223, %v9941, %v8863
        %v9974 = vsel %vm2223, %v9942, %v8865
        %v9975 = vsel %vm2223, %v9943, %v8867
        %v9976 = vsel %vm2223, %v9944, %v8869
        %v9977 = vsel %vm2223, %v9945, %v8871
        %v9978 = vsel %vm2223, %v9946, %v8873
        %v9979 = vsel %vm2223, %v9947, %v8875
        %v9980 = vsel %vm2223, %v9948, %v8877
        %v9981 = vsel %vm2223, %v9949, %v8879
        %v9982 = vsel %vm2223, %v9950, %v8881
        %v9983 = vsel %vm2223, %v9951, %v8883
        %v9984 = vsel %vm2223, %v9952, %v8885
        %v9985 = vsel %vm2223, %v9953, %v8887
        %v9986 = vsel %vm2223, %v9954, %v8889
        %v9987 = vsel %vm2223, %v9955, %v8891
        %v9988 = vsel %vm2223, %v9956, %v8893
        %v9989 = vsel %vm2223, %v9957, %v8895
        %v9990 = vsel %vm2223, %v9958, %v8897
        %v9991 = vsel %vm2223, %v9959, %v8899
        %v9992 = vsel %vm2223, %v9960, %v8901
        %v9993 = vsel %vm2223, %v9961, %v8903
        %v9994 = vsel %vm2223, %v9962, %v8905
        %v9995 = vsel %vm2223, %v9963, %v8907
        %v9996 = vsel %vm2274, %v9964, %v8945
        %v9997 = vsel %vm2274, %v9965, %v8947
        %v9998 = vsel %vm2274, %v9966, %v8949
        %v9999 = vsel %vm2274, %v9967, %v8951
        %v10000 = vsel %vm2274, %v9968, %v8953
        %v10001 = vsel %vm2274, %v9969, %v8955
        %v10002 = vsel %vm2274, %v9970, %v8957
        %v10003 = vsel %vm2274, %v9971, %v8959
        %v10004 = vsel %vm2274, %v9972, %v8961
        %v10005 = vsel %vm2274, %v9973, %v8963
        %v10006 = vsel %vm2274, %v9974, %v8965
        %v10007 = vsel %vm2274, %v9975, %v8967
        %v10008 = vsel %vm2274, %v9976, %v8969
        %v10009 = vsel %vm2274, %v9977, %v8971
        %v10010 = vsel %vm2274, %v9978, %v8973
        %v10011 = vsel %vm2274, %v9979, %v8975
        %v10012 = vsel %vm2274, %v9980, %v8977
        %v10013 = vsel %vm2274, %v9981, %v8979
        %v10014 = vsel %vm2274, %v9982, %v8981
        %v10015 = vsel %vm2274, %v9983, %v8983
        %v10016 = vsel %vm2274, %v9984, %v8985
        %v10017 = vsel %vm2274, %v9985, %v8987
        %v10018 = vsel %vm2274, %v9986, %v8989
        %v10019 = vsel %vm2274, %v9987, %v8991
        %v10020 = vsel %vm2274, %v9988, %v8993
        %v10021 = vsel %vm2274, %v9989, %v8995
        %v10022 = vsel %vm2274, %v9990, %v8997
        %v10023 = vsel %vm2274, %v9991, %v8999
        %v10024 = vsel %vm2274, %v9992, %v9001
        %v10025 = vsel %vm2274, %v9993, %v9003
        %v10026 = vsel %vm2274, %v9994, %v9005
        %v10027 = vsel %vm2274, %v9995, %v9007
        %v10028 = vsel %vm3932, %v9996, %v9051
        %v10029 = vsel %vm3932, %v9997, %v9053
        %v10030 = vsel %vm3932, %v9998, %v9055
        %v10031 = vsel %vm3932, %v9999, %v9057
        %v10032 = vsel %vm3932, %v10000, %v9059
        %v10033 = vsel %vm3932, %v10001, %v9061
        %v10034 = vsel %vm3932, %v10002, %v9063
        %v10035 = vsel %vm3932, %v10003, %v9065
        %v10036 = vsel %vm3932, %v10004, %v9067
        %v10037 = vsel %vm3932, %v10005, %v9069
        %v10038 = vsel %vm3932, %v10006, %v9071
        %v10039 = vsel %vm3932, %v10007, %v9073
        %v10040 = vsel %vm3932, %v10008, %v9075
        %v10041 = vsel %vm3932, %v10009, %v9077
        %v10042 = vsel %vm3932, %v10010, %v9079
        %v10043 = vsel %vm3932, %v10011, %v9081
        %v10044 = vsel %vm3932, %v10012, %v9083
        %v10045 = vsel %vm3932, %v10013, %v9085
        %v10046 = vsel %vm3932, %v10014, %v9087
        %v10047 = vsel %vm3932, %v10015, %v9089
        %v10048 = vsel %vm3932, %v10016, %v9091
        %v10049 = vsel %vm3932, %v10017, %v9093
        %v10050 = vsel %vm3932, %v10018, %v9095
        %v10051 = vsel %vm3932, %v10019, %v9097
        %v10052 = vsel %vm3932, %v10020, %v9099
        %v10053 = vsel %vm3932, %v10021, %v9101
        %v10054 = vsel %vm3932, %v10022, %v9103
        %v10055 = vsel %vm3932, %v10023, %v9105
        %v10056 = vsel %vm3932, %v10024, %v9107
        %v10057 = vsel %vm3932, %v10025, %v9109
        %v10058 = vsel %vm3932, %v10026, %v9111
        %v10059 = vsel %vm3932, %v10027, %v9113
        %v10060 = vsel %vm7612, %v10028, %v9156
        %v10061 = vsel %vm7612, %v10029, %v9158
        %v10062 = vsel %vm7612, %v10030, %v9160
        %v10063 = vsel %vm7612, %v10031, %v9162
        %v10064 = vsel %vm7612, %v10032, %v9164
        %v10065 = vsel %vm7612, %v10033, %v9166
        %v10066 = vsel %vm7612, %v10034, %v9168
        %v10067 = vsel %vm7612, %v10035, %v9170
        %v10068 = vsel %vm7612, %v10036, %v9172
        %v10069 = vsel %vm7612, %v10037, %v9174
        %v10070 = vsel %vm7612, %v10038, %v9176
        %v10071 = vsel %vm7612, %v10039, %v9178
        %v10072 = vsel %vm7612, %v10040, %v9180
        %v10073 = vsel %vm7612, %v10041, %v9182
        %v10074 = vsel %vm7612, %v10042, %v9184
        %v10075 = vsel %vm7612, %v10043, %v9186
        %v10076 = vsel %vm7612, %v10044, %v9188
        %v10077 = vsel %vm7612, %v10045, %v9190
        %v10078 = vsel %vm7612, %v10046, %v9192
        %v10079 = vsel %vm7612, %v10047, %v9194
        %v10080 = vsel %vm7612, %v10048, %v9196
        %v10081 = vsel %vm7612, %v10049, %v9198
        %v10082 = vsel %vm7612, %v10050, %v9200
        %v10083 = vsel %vm7612, %v10051, %v9202
        %v10084 = vsel %vm7612, %v10052, %v9204
        %v10085 = vsel %vm7612, %v10053, %v9206
        %v10086 = vsel %vm7612, %v10054, %v9208
        %v10087 = vsel %vm7612, %v10055, %v9210
        %v10088 = vsel %vm7612, %v10056, %v9212
        %v10089 = vsel %vm7612, %v10057, %v9214
        %v10090 = vsel %vm7612, %v10058, %v9216
        %v10091 = vsel %vm7612, %v10059, %v9218
        %vm10092 = vcmask 359424
        %v10093 = vsel %vm10092, %v10060, %v9261
        %v10094 = vsel %vm10092, %v10061, %v9263
        %v10095 = vsel %vm10092, %v10062, %v9265
        %v10096 = vsel %vm10092, %v10063, %v9267
        %v10097 = vsel %vm10092, %v10064, %v9269
        %v10098 = vsel %vm10092, %v10065, %v9271
        %v10099 = vsel %vm10092, %v10066, %v9273
        %v10100 = vsel %vm10092, %v10067, %v9275
        %v10101 = vsel %vm10092, %v10068, %v9277
        %v10102 = vsel %vm10092, %v10069, %v9279
        %v10103 = vsel %vm10092, %v10070, %v9281
        %v10104 = vsel %vm10092, %v10071, %v9283
        %v10105 = vsel %vm10092, %v10072, %v9285
        %v10106 = vsel %vm10092, %v10073, %v9287
        %v10107 = vsel %vm10092, %v10074, %v9289
        %v10108 = vsel %vm10092, %v10075, %v9291
        %v10109 = vsel %vm10092, %v10076, %v9293
        %v10110 = vsel %vm10092, %v10077, %v9295
        %v10111 = vsel %vm10092, %v10078, %v9297
        %v10112 = vsel %vm10092, %v10079, %v9299
        %v10113 = vsel %vm10092, %v10080, %v9301
        %v10114 = vsel %vm10092, %v10081, %v9303
        %v10115 = vsel %vm10092, %v10082, %v9305
        %v10116 = vsel %vm10092, %v10083, %v9307
        %v10117 = vsel %vm10092, %v10084, %v9309
        %v10118 = vsel %vm10092, %v10085, %v9311
        %v10119 = vsel %vm10092, %v10086, %v9313
        %v10120 = vsel %vm10092, %v10087, %v9315
        %v10121 = vsel %vm10092, %v10088, %v9317
        %v10122 = vsel %vm10092, %v10089, %v9319
        %v10123 = vsel %vm10092, %v10090, %v9321
        %v10124 = vsel %vm10092, %v10091, %v9323
        %v10125 = vsel %vm7645, %v10093, %v9361
        %v10126 = vsel %vm7645, %v10094, %v9363
        %v10127 = vsel %vm7645, %v10095, %v9365
        %v10128 = vsel %vm7645, %v10096, %v9367
        %v10129 = vsel %vm7645, %v10097, %v9369
        %v10130 = vsel %vm7645, %v10098, %v9371
        %v10131 = vsel %vm7645, %v10099, %v9373
        %v10132 = vsel %vm7645, %v10100, %v9375
        %v10133 = vsel %vm7645, %v10101, %v9377
        %v10134 = vsel %vm7645, %v10102, %v9379
        %v10135 = vsel %vm7645, %v10103, %v9381
        %v10136 = vsel %vm7645, %v10104, %v9383
        %v10137 = vsel %vm7645, %v10105, %v9385
        %v10138 = vsel %vm7645, %v10106, %v9387
        %v10139 = vsel %vm7645, %v10107, %v9389
        %v10140 = vsel %vm7645, %v10108, %v9391
        %v10141 = vsel %vm7645, %v10109, %v9393
        %v10142 = vsel %vm7645, %v10110, %v9395
        %v10143 = vsel %vm7645, %v10111, %v9397
        %v10144 = vsel %vm7645, %v10112, %v9399
        %v10145 = vsel %vm7645, %v10113, %v9401
        %v10146 = vsel %vm7645, %v10114, %v9403
        %v10147 = vsel %vm7645, %v10115, %v9405
        %v10148 = vsel %vm7645, %v10116, %v9407
        %v10149 = vsel %vm7645, %v10117, %v9409
        %v10150 = vsel %vm7645, %v10118, %v9411
        %v10151 = vsel %vm7645, %v10119, %v9413
        %v10152 = vsel %vm7645, %v10120, %v9415
        %v10153 = vsel %vm7645, %v10121, %v9417
        %v10154 = vsel %vm7645, %v10122, %v9419
        %v10155 = vsel %vm7645, %v10123, %v9421
        %v10156 = vsel %vm7645, %v10124, %v9423
        %vm10157 = vcmask 424960
        %v10158 = vsel %vm10157, %v10125, %v9467
        %v10159 = vsel %vm10157, %v10126, %v9469
        %v10160 = vsel %vm10157, %v10127, %v9471
        %v10161 = vsel %vm10157, %v10128, %v9473
        %v10162 = vsel %vm10157, %v10129, %v9475
        %v10163 = vsel %vm10157, %v10130, %v9477
        %v10164 = vsel %vm10157, %v10131, %v9479
        %v10165 = vsel %vm10157, %v10132, %v9481
        %v10166 = vsel %vm10157, %v10133, %v9483
        %v10167 = vsel %vm10157, %v10134, %v9485
        %v10168 = vsel %vm10157, %v10135, %v9487
        %v10169 = vsel %vm10157, %v10136, %v9489
        %v10170 = vsel %vm10157, %v10137, %v9491
        %v10171 = vsel %vm10157, %v10138, %v9493
        %v10172 = vsel %vm10157, %v10139, %v9495
        %v10173 = vsel %vm10157, %v10140, %v9497
        %v10174 = vsel %vm10157, %v10141, %v9499
        %v10175 = vsel %vm10157, %v10142, %v9501
        %v10176 = vsel %vm10157, %v10143, %v9503
        %v10177 = vsel %vm10157, %v10144, %v9505
        %v10178 = vsel %vm10157, %v10145, %v9507
        %v10179 = vsel %vm10157, %v10146, %v9509
        %v10180 = vsel %vm10157, %v10147, %v9511
        %v10181 = vsel %vm10157, %v10148, %v9513
        %v10182 = vsel %vm10157, %v10149, %v9515
        %v10183 = vsel %vm10157, %v10150, %v9517
        %v10184 = vsel %vm10157, %v10151, %v9519
        %v10185 = vsel %vm10157, %v10152, %v9521
        %v10186 = vsel %vm10157, %v10153, %v9523
        %v10187 = vsel %vm10157, %v10154, %v9525
        %v10188 = vsel %vm10157, %v10155, %v9527
        %v10189 = vsel %vm10157, %v10156, %v9529
        %v10190 = vsel %vm7678, %v10158, %v9572
        %v10191 = vsel %vm7678, %v10159, %v9574
        %v10192 = vsel %vm7678, %v10160, %v9576
        %v10193 = vsel %vm7678, %v10161, %v9578
        %v10194 = vsel %vm7678, %v10162, %v9580
        %v10195 = vsel %vm7678, %v10163, %v9582
        %v10196 = vsel %vm7678, %v10164, %v9584
        %v10197 = vsel %vm7678, %v10165, %v9586
        %v10198 = vsel %vm7678, %v10166, %v9588
        %v10199 = vsel %vm7678, %v10167, %v9590
        %v10200 = vsel %vm7678, %v10168, %v9592
        %v10201 = vsel %vm7678, %v10169, %v9594
        %v10202 = vsel %vm7678, %v10170, %v9596
        %v10203 = vsel %vm7678, %v10171, %v9598
        %v10204 = vsel %vm7678, %v10172, %v9600
        %v10205 = vsel %vm7678, %v10173, %v9602
        %v10206 = vsel %vm7678, %v10174, %v9604
        %v10207 = vsel %vm7678, %v10175, %v9606
        %v10208 = vsel %vm7678, %v10176, %v9608
        %v10209 = vsel %vm7678, %v10177, %v9610
        %v10210 = vsel %vm7678, %v10178, %v9612
        %v10211 = vsel %vm7678, %v10179, %v9614
        %v10212 = vsel %vm7678, %v10180, %v9616
        %v10213 = vsel %vm7678, %v10181, %v9618
        %v10214 = vsel %vm7678, %v10182, %v9620
        %v10215 = vsel %vm7678, %v10183, %v9622
        %v10216 = vsel %vm7678, %v10184, %v9624
        %v10217 = vsel %vm7678, %v10185, %v9626
        %v10218 = vsel %vm7678, %v10186, %v9628
        %v10219 = vsel %vm7678, %v10187, %v9630
        %v10220 = vsel %vm7678, %v10188, %v9632
        %v10221 = vsel %vm7678, %v10189, %v9634
        %vm10222 = vcmask 490496
        %v10223 = vsel %vm10222, %v10190, %v9677
        %v10224 = vsel %vm10222, %v10191, %v9679
        %v10225 = vsel %vm10222, %v10192, %v9681
        %v10226 = vsel %vm10222, %v10193, %v9683
        %v10227 = vsel %vm10222, %v10194, %v9685
        %v10228 = vsel %vm10222, %v10195, %v9687
        %v10229 = vsel %vm10222, %v10196, %v9689
        %v10230 = vsel %vm10222, %v10197, %v9691
        %v10231 = vsel %vm10222, %v10198, %v9693
        %v10232 = vsel %vm10222, %v10199, %v9695
        %v10233 = vsel %vm10222, %v10200, %v9697
        %v10234 = vsel %vm10222, %v10201, %v9699
        %v10235 = vsel %vm10222, %v10202, %v9701
        %v10236 = vsel %vm10222, %v10203, %v9703
        %v10237 = vsel %vm10222, %v10204, %v9705
        %v10238 = vsel %vm10222, %v10205, %v9707
        %v10239 = vsel %vm10222, %v10206, %v9709
        %v10240 = vsel %vm10222, %v10207, %v9711
        %v10241 = vsel %vm10222, %v10208, %v9713
        %v10242 = vsel %vm10222, %v10209, %v9715
        %v10243 = vsel %vm10222, %v10210, %v9717
        %v10244 = vsel %vm10222, %v10211, %v9719
        %v10245 = vsel %vm10222, %v10212, %v9721
        %v10246 = vsel %vm10222, %v10213, %v9723
        %v10247 = vsel %vm10222, %v10214, %v9725
        %v10248 = vsel %vm10222, %v10215, %v9727
        %v10249 = vsel %vm10222, %v10216, %v9729
        %v10250 = vsel %vm10222, %v10217, %v9731
        %v10251 = vsel %vm10222, %v10218, %v9733
        %v10252 = vsel %vm10222, %v10219, %v9735
        %v10253 = vsel %vm10222, %v10220, %v9737
        %v10254 = vsel %vm10222, %v10221, %v9739
        %v10255 = vpack.c.bf16 %v10224, %v10223
        %v10256 = vpack.c.bf16 %v10226, %v10225
        %v10257 = vpack.c.bf16 %v10228, %v10227
        %v10258 = vpack.c.bf16 %v10230, %v10229
        %v10259 = vpack.c.bf16 %v10232, %v10231
        %v10260 = vpack.c.bf16 %v10234, %v10233
        %v10261 = vpack.c.bf16 %v10236, %v10235
        %v10262 = vpack.c.bf16 %v10238, %v10237
        %v10263 = vpack.c.bf16 %v10240, %v10239
        %v10264 = vpack.c.bf16 %v10242, %v10241
        %v10265 = vpack.c.bf16 %v10244, %v10243
        %v10266 = vpack.c.bf16 %v10246, %v10245
        %v10267 = vpack.c.bf16 %v10248, %v10247
        %v10268 = vpack.c.bf16 %v10250, %v10249
        %v10269 = vpack.c.bf16 %v10252, %v10251
        %v10270 = vpack.c.bf16 %v10254, %v10253
        %v10271 = vld [vmem:[%s4] sm:$0xf]
        %v10273 = vsel %vm7711, %v10271, 0
        %v10276 = vsel %vm7711, %v10255, 0
        %v10279 = vsel %vm7711, %v10256, 0
        %v10282 = vsel %vm7711, %v10257, 0
        %v10285 = vsel %vm7711, %v10258, 0
        %v10288 = vsel %vm7711, %v10259, 0
        %v10291 = vsel %vm7711, %v10260, 0
        %v10294 = vsel %vm7711, %v10261, 0
        %v10297 = vsel %vm7711, %v10262, 0
        %v10300 = vsel %vm7711, %v10263, 0
        %v10303 = vsel %vm7711, %v10264, 0
        %v10306 = vsel %vm7711, %v10265, 0
        %v10309 = vsel %vm7711, %v10266, 0
        %v10312 = vsel %vm7711, %v10267, 0
        %v10315 = vsel %vm7711, %v10268, 0
        %v10318 = vsel %vm7711, %v10269, 0
        %v10321 = vsel %vm7711, %v10270, 0
        %10323 = vmatprep.subr.bf16.mxu0 0
        %10324 = vmatpush1.bf16.xpose.msra.mxu0 %v10297
        %10325 = vmatprep.subr.bf16.mxu0 0
        %10326 = vmatpush1.bf16.xpose.msra.mxu0 %v10294
        %10327 = vmatprep.subr.bf16.mxu0 0
        %10328 = vmatpush1.bf16.xpose.msra.mxu0 %v10291
        %10329 = vmatprep.subr.bf16.mxu0 0
        %10330 = vmatpush1.bf16.xpose.msra.mxu0 %v10288
        %10331 = vmatprep.subr.bf16.mxu0 0
        %10332 = vmatpush1.bf16.xpose.msra.mxu0 %v10285
        %10333 = vmatprep.subr.bf16.mxu0 0
        %10334 = vmatpush1.bf16.xpose.msra.mxu0 %v10282
        %10335 = vmatprep.subr.bf16.mxu0 0
        %10336 = vmatpush1.bf16.xpose.msra.mxu0 %v10279
        %10337 = vmatprep.subr.bf16.mxu0 0
        %10338 = vmatpush1.bf16.xpose.msra.mxu0 %v10276
        %10339 = vmatprep.subr.bf16.mxu0 0
        %10340 = vmatpush2.bf16.xpose.msra.mxu0 %v10321
        %10341 = vmatprep.subr.bf16.mxu0 0
        %10342 = vmatpush2.bf16.xpose.msra.mxu0 %v10318
        %10343 = vmatprep.subr.bf16.mxu0 0
        %10344 = vmatpush2.bf16.xpose.msra.mxu0 %v10315
        %10345 = vmatprep.subr.bf16.mxu0 0
        %10346 = vmatpush2.bf16.xpose.msra.mxu0 %v10312
        %10347 = vmatprep.subr.bf16.mxu0 0
        %10348 = vmatpush2.bf16.xpose.msra.mxu0 %v10309
        %10349 = vmatprep.subr.bf16.mxu0 0
        %10350 = vmatpush2.bf16.xpose.msra.mxu0 %v10306
        %10351 = vmatprep.subr.bf16.mxu0 0
        %10352 = vmatpush2.bf16.xpose.msra.mxu0 %v10303
        %10353 = vmatprep.subr.bf16.mxu0 0
        %10354 = vmatpush2.bf16.xpose.msra.mxu0 %v10300
        %10355 = vmatprep.mubr.bf16.mxu0 0
        %10356 = vmatmul.mubr.bf16.gmra.mxu0 %v10273
        %v10357 = vpop.f32.mrf.mxu0
        %v10358 = vadd.f32 0.0, %v10357
        %v10359 = vpop.f32.mrf.mxu0
        %v10360 = vadd.f32 0.0, %v10359
        %v10361 = vpop.f32.mrf.mxu0
        %v10362 = vpop.f32.mrf.mxu0
        %10363 = vdwg.mxu0
        %10364 = vset.pattern.permute.xlu0 2
        %10365 = vperm.xlu0 %10364, %v315
        %v10366 = vpop.permute.xlu0 %10365
        %v10368 = vmul.f32 %v10358, %v10366
        %v10369 = vmul.f32 %v10360, %v10366
        %10370 = vset.pattern.permute.xlu0 3
        %10371 = vperm.xlu0 %10370, %v315
        %v10372 = vpop.permute.xlu0 %10371
        %v10374 = vadd.f32 %v10368, %v10372
        %v10375 = vadd.f32 %v10369, %v10372
        %v10376 = vadd.f32 %v7865, %v10374
        %v10377 = vadd.f32 %v7866, %v10375
        %v10378 = vmax.f32 %v10376, 0.0
        %v10379 = vmax.f32 %v10377, 0.0
        %v10380 = vpack.c.bf16 %v10378, %v10378
        %v10381 = vpack.c.bf16 %v10379, %v10379
        %v10384 = vunpack.c.l.b16 %v10380
        %v10385 = vunpack.c.l.b16 %v10381
        %v10386 = vpack.c.b16 %v10385, %v10384
        %10388 = vst [vmem:[%s300] sm:$0xff] %v10386
        %s10389 = sand.u32 %s200, 1
        %s10390 = scalar_lea.sflag [#allocation4], %s10389
        %s10391 = sand.u32 %s200, 1
        %s10392 = smul.addr %s10391, 8
        %s10393 = scalar_lea.vmem [#allocation3], %s10392
        // Predicated region
        $region49: #{tpu_custom_call.1} parent=47 // pred_check
          %p10394 = pneg %p210
        $region50: #{tpu_custom_call.1} parent=47 // pred_check_branch
          %10396 = sbr.rel (%p10394) target = $region52
        $region51: #{tpu_custom_call.1} parent=47 // pred_region
          %s10397 = smul.u32 2, %s26
          %s10399 = ssub.s32 128, 128
          %10400 = vsyncadd %s10390, %s10399
          %s10401 = smul.addr %s25, 8
          %s10402 = sadd.s32 %s10397, %s10401
          %s10403 = smul.addr %s10402, 64
          %s10404 = scalar_lea.hbm %s7, %s10403
          %s10406 = sshll.u32 %s10393, 4
          %s10407 = int_to_ptr.vmem [resolvable:$true] %s10406
          %10409 = dma.vmem_to_hbm [thread:$0]  %s10407, 128, %s10404, %s10390
        $region52: #{tpu_custom_call.1} parent=47 // pred_fallthru
          _
      $region48: #{tpu_custom_call.1} parent=5 // pred_fallthru
        _
      %p10410 = scmp.le.s32.totalorder 2, %s16
      // Predicated region
      $region53: #{tpu_custom_call.1} parent=5 // pred_check
        %p10411 = pneg %p10410
      $region54: #{tpu_custom_call.1} parent=5 // pred_check_branch
        %10413 = sbr.rel (%p10411) target = $region56
      $region55: #{tpu_custom_call.1} parent=5 // pred_region
        %s10414 = ssub.s32 %s16, 2
        // Predicated region
        $region57: #{tpu_custom_call.1} parent=55 // pred_check
          %p10415 = pneg %p216
        $region58: #{tpu_custom_call.1} parent=55 // pred_check_branch
          %10417 = sbr.rel (%p10415) target = $region60
        $region59: #{tpu_custom_call.1} parent=55 // pred_region
          %s10418 = sand.u32 %s201, 1
          %s10419 = scalar_lea.sflag [#allocation4], %s10418
          %s10420 = sand.u32 %s201, 1
          %s10421 = smul.addr %s10420, 8
          %s10422 = scalar_lea.vmem [#allocation3], %s10421
          %10423 = dma.done %s10419, 128
        $region60: #{tpu_custom_call.1} parent=55 // pred_fallthru
          _
      $region56: #{tpu_custom_call.1} parent=5 // pred_fallthru
        _
    $region6: #{tpu_custom_call.1} parent=1 // loop_footer
      %s20 = sadd.s32 1, %s16
    $region7: #{tpu_custom_call.1} parent=1 // loop_footer_branch
      %15 = sbr.rel target = $region3
    $region8: #{tpu_custom_call.1} parent=1 // loop_exit
      _
    %10424 = vsyncpa [#allocation4], 1
    %s10425 = scalar_lea.sflag [#allocation4], 1
    %10426 = vsyncpa %s10425, 1

</llo_original>
